<compile_context>
chip_gen: v7x
topology: tpu7x:2x2x1
jax: 0.10.0
libtpu: 0.0.40
codegen_flags: <defaults>
</compile_context>

<pallas_src>
import functools

import jax
import jax.numpy as jnp
from jax.experimental import pallas as pl
from jax.experimental.pallas import tpu as pltpu


def _round_up(x, m):
    return ((x + m - 1) // m) * m


# ----------------------------------------------------------------------------
# Pallas kernels
# ----------------------------------------------------------------------------
def _conv_gemm_kernel(x_ref, w_ref, s_ref, b_ref, o_ref):
    # Single-step GEMM with fused per-channel affine (conv bias + BN) + ReLU.
    y = jnp.dot(x_ref[...], w_ref[...], preferred_element_type=jnp.float32)
    o_ref[...] = jnp.maximum(y * s_ref[...] + b_ref[...], 0.0)


def _fc_fused_kernel(x_ref, w1_ref, w2_ref, o_ref):
    # fc1 (bf16 weight, f32 accumulate) -> ReLU -> fc2, all in one invocation.
    h = jnp.dot(
        x_ref[...].astype(jnp.bfloat16), w1_ref[...],
        preferred_element_type=jnp.float32,
    )
    h = jnp.maximum(h, 0.0)
    o_ref[...] = jnp.dot(h, w2_ref[...], preferred_element_type=jnp.float32)


# ----------------------------------------------------------------------------
# Wrappers
# ----------------------------------------------------------------------------
def conv_gemm(x, wp, sp, bp):
    """y = relu((x @ wp) * sp + bp); wp/sp/bp are pre-padded constants."""
    M, K = x.shape
    Kp, Np = wp.shape
    Mp = _round_up(max(M, 8), 8)
    if Mp != M or Kp != K:
        x = jnp.pad(x, ((0, Mp - M), (0, Kp - K)))
    return pl.pallas_call(
        _conv_gemm_kernel,
        out_shape=jax.ShapeDtypeStruct((Mp, Np), jnp.float32),
        grid=(1,),
        in_specs=[
            pl.BlockSpec((Mp, Kp), lambda i: (0, 0)),
            pl.BlockSpec((Kp, Np), lambda i: (0, 0)),
            pl.BlockSpec((1, Np), lambda i: (0, 0)),
            pl.BlockSpec((1, Np), lambda i: (0, 0)),
        ],
        out_specs=pl.BlockSpec((Mp, Np), lambda i: (0, 0)),
        compiler_params=pltpu.CompilerParams(
            dimension_semantics=("arbitrary",),
            vmem_limit_bytes=8 * 1024 * 1024,
        ),
    )(x, wp, sp, bp)


def fc1_relu_fc2(x, w1_bf16, w2_f32):
    """out = relu(x @ w1) @ w2 as a single fused pallas_call."""
    M, K1 = x.shape
    _, N1 = w1_bf16.shape
    K2, N2 = w2_f32.shape
    assert K2 == N1
    Mp = _round_up(max(M, 8), 8)
    if Mp != M:
        x = jnp.pad(x, ((0, Mp - M), (0, 0)))
    out = pl.pallas_call(
        _fc_fused_kernel,
        out_shape=jax.ShapeDtypeStruct((Mp, N2), jnp.float32),
        grid=(1,),
        in_specs=[
            pl.BlockSpec((Mp, K1), lambda i: (0, 0)),
            pl.BlockSpec((K1, N1), lambda i: (0, 0)),
            pl.BlockSpec((K2, N2), lambda i: (0, 0)),
        ],
        out_specs=pl.BlockSpec((Mp, N2), lambda i: (0, 0)),
        compiler_params=pltpu.CompilerParams(
            dimension_semantics=("arbitrary",),
            vmem_limit_bytes=24 * 1024 * 1024,
        ),
    )(x, w1_bf16, w2_f32)
    return out[:M]


def conv_bn_relu(x, wp, sp, bp, *, out_ch, k, stride, padding):
    """NHWC conv + folded BN + ReLU via im2col + the Pallas GEMM kernel."""
    B, H, W, C = x.shape
    OH = (H + 2 * padding - k) // stride + 1
    OW = (W + 2 * padding - k) // stride + 1
    xp = jnp.pad(x, ((0, 0), (padding, padding), (padding, padding), (0, 0)))
    cols = []
    for i in range(k):              # small static loops; pure im2col glue
        for j in range(k):
            cols.append(xp[:, i:i + stride * OH:stride, j:j + stride * OW:stride, :])
    patches = jnp.stack(cols, axis=3)                   # (B, OH, OW, k*k, C)
    patches = patches.reshape(B * OH * OW, k * k * C)   # reduction order (kh, kw, c)
    y = conv_gemm(patches, wp, sp, bp)                  # (Mp, Np) f32
    return y[:B * OH * OW, :out_ch].reshape(B, OH, OW, out_ch)


# ----------------------------------------------------------------------------
# One-time parameter preparation (folding / reshaping / padding, hoisted out of
# the per-forward path)
# ----------------------------------------------------------------------------
def prepare_params(p, eps=1e-5):
    def fold_conv(w, b, g, be, m, v):
        O, C, KH, KW = w.shape
        K = KH * KW * C
        Kp = _round_up(K, 128)
        Np = _round_up(O, 128)
        # (kh, kw, c, o) flattening matches the im2col reduction order above.
        wmat = w.transpose(2, 3, 1, 0).reshape(K, O).astype(jnp.float32)
        wp = jnp.pad(wmat, ((0, Kp - K), (0, Np - O)))
        inv_std = 1.0 / jnp.sqrt(v.astype(jnp.float32) + eps)
        scale = g.astype(jnp.float32) * inv_std
        bias = scale * (b.astype(jnp.float32) - m.astype(jnp.float32)) + be.astype(jnp.float32)
        sp = jnp.pad(scale, (0, Np - O)).reshape(1, Np)
        bp = jnp.pad(bias, (0, Np - O)).reshape(1, Np)
        return wp, sp, bp

    pp = {}
    pp["w1"], pp["s1"], pp["b1"] = fold_conv(p["w1"], p["b1"], p["g1"], p["be1"], p["m1"], p["v1"])
    pp["w2"], pp["s2"], pp["b2"] = fold_conv(p["w2"], p["b2"], p["g2"], p["be2"], p["m2"], p["v2"])
    pp["w3"], pp["s3"], pp["b3"] = fold_conv(p["w3"], p["b3"], p["g3"], p["be3"], p["m3"], p["v3"])

    # fc1 consumes the NCHW (c, h, w) flatten of the (64, 10, 9) conv3 output;
    # permute its columns to the NHWC (h, w, c) order used internally and store
    # the streamed weight in bf16 (f32 accumulation in-kernel).
    C3, H3, W3 = 64, 10, 9
    fc1 = p["fc1"].reshape(512, C3, H3, W3).transpose(0, 2, 3, 1).reshape(512, C3 * H3 * W3)
    pp["fc1"] = fc1.T.astype(jnp.bfloat16)                                  # (5760, 512)

    E = p["fc2"].shape[0]
    Ep = _round_up(E, 128)
    pp["fc2"] = jnp.pad(p["fc2"].T.astype(jnp.float32), ((0, 0), (0, Ep - E)))  # (512, Ep)
    return pp


# ----------------------------------------------------------------------------
# Full forward (matches DeepDoubleSarsa.forward; Linear layers have bias=False)
# ----------------------------------------------------------------------------
@functools.partial(jax.jit, static_argnames=("exitus",))
def deep_double_sarsa_forward(x_nchw, pp, *, exitus):
    x = jnp.transpose(x_nchw, (0, 2, 3, 1))   # single boundary NCHW -> NHWC transpose
    q = conv_bn_relu(x, pp["w1"], pp["s1"], pp["b1"], out_ch=32, k=8, stride=4, padding=1)
    q = conv_bn_relu(q, pp["w2"], pp["s2"], pp["b2"], out_ch=64, k=4, stride=2, padding=1)
    q = conv_bn_relu(q, pp["w3"], pp["s3"], pp["b3"], out_ch=64, k=3, stride=1, padding=1)
    B = q.shape[0]
    q = q.reshape(B, -1)                      # NHWC flatten; fc1 columns pre-permuted to match
    q = fc1_relu_fc2(q, pp["fc1"], pp["fc2"])
    return q[:, :exitus]


# ----------------------------------------------------------------------------
# Pure-JAX reference (correctness check only; follows the PyTorch NCHW module)
# ----------------------------------------------------------------------------
def reference_forward(x, p, eps=1e-5):
    hi = jax.lax.Precision.HIGHEST

    def cbr(x, w, b, g, be, m, v, stride, pad):
        y = jax.lax.conv_general_dilated(
            x, w, (stride, stride), [(pad, pad), (pad, pad)],
            dimension_numbers=("NCHW", "OIHW", "NCHW"), precision=hi)
        y = y + b[None, :, None, None]
        y = (y - m[None, :, None, None]) / jnp.sqrt(v[None, :, None, None] + eps)
        y = y * g[None, :, None, None] + be[None, :, None, None]
        return jnp.maximum(y, 0.0)

    q = cbr(x, p["w1"], p["b1"], p["g1"], p["be1"], p["m1"], p["v1"], 4, 1)
    q = cbr(q, p["w2"], p["b2"], p["g2"], p["be2"], p["m2"], p["v2"], 2, 1)
    q = cbr(q, p["w3"], p["b3"], p["g3"], p["be3"], p["m3"], p["v3"], 1, 1)
    q = q.reshape(q.shape[0], -1)
    q = jnp.maximum(jnp.matmul(q, p["fc1"].T, precision=hi), 0.0)
    q = jnp.matmul(q, p["fc2"].T, precision=hi)
    return q


# ----------------------------------------------------------------------------
# Deterministic synthetic parameters (shapes from DeepDoubleSarsa.__init__)
# ----------------------------------------------------------------------------
def make_params(key, exitus):
    ks = jax.random.split(key, 16)

    def nrm(k, shape, s):
        return (s * jax.random.normal(k, shape)).astype(jnp.float32)

    p = {}
    # Conv2d(1, 32, k=8, s=4, p=1) + BatchNorm2d(32)
    p["w1"] = nrm(ks[0], (32, 1, 8, 8), 0.05)
    p["b1"] = nrm(ks[1], (32,), 0.05)
    p["g1"] = 1.0 + 0.1 * jax.random.normal(ks[2], (32,)).astype(jnp.float32)
    p["be1"] = nrm(ks[3], (32,), 0.05)
    p["m1"] = nrm(ks[4], (32,), 0.05)
    p["v1"] = jax.random.uniform(ks[5], (32,), minval=0.5, maxval=1.5).astype(jnp.float32)
    # Conv2d(32, 64, k=4, s=2, p=1) + BatchNorm2d(64)
    p["w2"] = nrm(ks[6], (64, 32, 4, 4), 0.03)
    p["b2"] = nrm(ks[7], (64,), 0.05)
    p["g2"] = 1.0 + 0.1 * jax.random.normal(ks[8], (64,)).astype(jnp.float32)
    p["be2"] = nrm(ks[9], (64,), 0.05)
    p["m2"] = nrm(ks[10], (64,), 0.05)
    p["v2"] = jax.random.uniform(ks[11], (64,), minval=0.5, maxval=1.5).astype(jnp.float32)
    # Conv2d(64, 64, k=3, s=1, p=1) + BatchNorm2d(64)
    p["w3"] = nrm(ks[12], (64, 64, 3, 3), 0.03)
    p["b3"] = nrm(ks[13], (64,), 0.05)
    k2 = jax.random.split(ks[14], 6)
    p["g3"] = 1.0 + 0.1 * jax.random.normal(k2[0], (64,)).astype(jnp.float32)
    p["be3"] = nrm(k2[1], (64,), 0.05)
    p["m3"] = nrm(k2[2], (64,), 0.05)
    p["v3"] = jax.random.uniform(k2[3], (64,), minval=0.5, maxval=1.5).astype(jnp.float32)
    # Linear(5760, 512, bias=False), Linear(512, exitus, bias=False)
    p["fc1"] = nrm(k2[4], (512, 5760), 0.02)
    p["fc2"] = nrm(k2[5], (exitus, 512), 0.05)
    return p
    # TODO(synk): update()/RMSprop optimizer step and save/load are training /
    # I/O utilities, not part of the forward pass, and are not implemented.


if __name__ == "__main__":
    key = jax.random.PRNGKey(0)
    kx, kp = jax.random.split(key)

    exitus = 6
    # Input shape implied by update(): s.view(-1, 1, 84, 80); batch=2.
    x = jax.random.uniform(kx, (2, 1, 84, 80), dtype=jnp.float32)
    params = make_params(kp, exitus)

    # All weight folding / padding / bf16 casting happens once, outside jit.
    prepared = prepare_params(params)

    out = deep_double_sarsa_forward(x, prepared, exitus=exitus)
    out = jax.block_until_ready(out)

    ref = reference_forward(x, params)
    assert out.shape == (2, exitus), out.shape
    assert jnp.allclose(out, ref, rtol=5e-3, atol=5e-3), (
        float(jnp.max(jnp.abs(out - ref)))
    )

    print("KERNEL_OK")
</pallas_src>

<mosaic_0001>
module attributes {stable_mosaic.version = 11 : i64} {
  func.func @_conv_gemm_kernel(%arg0: i32, %arg1: memref<760x128xf32, #tpu.memory_space<vmem>>, %arg2: memref<128x128xf32, #tpu.memory_space<vmem>>, %arg3: memref<1x128xf32, #tpu.memory_space<vmem>>, %arg4: memref<1x128xf32, #tpu.memory_space<vmem>>, %arg5: memref<760x128xf32, #tpu.memory_space<vmem>>) attributes {dimension_semantics = [#tpu.dimension_semantics<arbitrary>], iteration_bounds = array<i64: 1>, scalar_prefetch = 0 : i64, scratch_operands = 0 : i64, tpu.core_type = #tpu.core_type<tc>, window_params = [{pipeline_mode = #tpu.pipeline_mode<synchronous>, transform_indices = @transform_0, window_bounds = array<i64: 760, 128>}, {pipeline_mode = #tpu.pipeline_mode<synchronous>, transform_indices = @transform_1, window_bounds = array<i64: 128, 128>}, {pipeline_mode = #tpu.pipeline_mode<synchronous>, transform_indices = @transform_2, window_bounds = array<i64: 1, 128>}, {pipeline_mode = #tpu.pipeline_mode<synchronous>, transform_indices = @transform_3, window_bounds = array<i64: 1, 128>}, {pipeline_mode = #tpu.pipeline_mode<synchronous>, transform_indices = @transform_4, window_bounds = array<i64: 760, 128>}]} {
    %c0 = arith.constant 0 : index
    %c0_0 = arith.constant 0 : index
    %0 = vector.load %arg1[%c0, %c0_0] : memref<760x128xf32, #tpu.memory_space<vmem>>, vector<760x128xf32>
    %c0_1 = arith.constant 0 : index
    %c0_2 = arith.constant 0 : index
    %1 = vector.load %arg2[%c0_1, %c0_2] : memref<128x128xf32, #tpu.memory_space<vmem>>, vector<128x128xf32>
    %cst = arith.constant dense<0.000000e+00> : vector<760x128xf32>
    %2 = tpu.matmul %0, %1, %cst {dimension_numbers = #tpu.dot_dimension_numbers<[1], [0], [0], [1], [0, 0, 1, 1], [], []>} : vector<760x128xf32>, vector<128x128xf32>, vector<760x128xf32> -> vector<760x128xf32>
    %c0_3 = arith.constant 0 : index
    %c0_4 = arith.constant 0 : index
    %3 = vector.load %arg3[%c0_3, %c0_4] : memref<1x128xf32, #tpu.memory_space<vmem>>, vector<1x128xf32>
    %4 = vector.broadcast %3 : vector<1x128xf32> to vector<760x128xf32>
    %5 = arith.mulf %2, %4 : vector<760x128xf32>
    %c0_5 = arith.constant 0 : index
    %c0_6 = arith.constant 0 : index
    %6 = vector.load %arg4[%c0_5, %c0_6] : memref<1x128xf32, #tpu.memory_space<vmem>>, vector<1x128xf32>
    %7 = vector.broadcast %6 : vector<1x128xf32> to vector<760x128xf32>
    %8 = arith.addf %5, %7 : vector<760x128xf32>
    %cst_7 = arith.constant 0.000000e+00 : f32
    %9 = vector.broadcast %cst_7 : f32 to vector<760x128xf32>
    %10 = arith.maximumf %8, %9 : vector<760x128xf32>
    %c0_8 = arith.constant 0 : index
    %c0_9 = arith.constant 0 : index
    %11 = vector.load %arg5[%c0_8, %c0_9] : memref<760x128xf32, #tpu.memory_space<vmem>>, vector<760x128xf32>
    tpu.vector_store %arg5[%c0_8, %c0_9], %10 {strides = array<i32>} : memref<760x128xf32, #tpu.memory_space<vmem>>, vector<760x128xf32>,
    return
  }
  func.func @transform_0(%arg0: i32) -> (i32, i32) {
    %c0_i32 = arith.constant 0 : i32
    %c0_i32_0 = arith.constant 0 : i32
    %c0_i32_1 = arith.constant 0 : i32
    return %c0_i32, %c0_i32_0 : i32, i32
  }
  func.func @transform_1(%arg0: i32) -> (i32, i32) {
    %c0_i32 = arith.constant 0 : i32
    %c0_i32_0 = arith.constant 0 : i32
    %c0_i32_1 = arith.constant 0 : i32
    return %c0_i32, %c0_i32_0 : i32, i32
  }
  func.func @transform_2(%arg0: i32) -> (i32, i32) {
    %c0_i32 = arith.constant 0 : i32
    %c0_i32_0 = arith.constant 0 : i32
    %c0_i32_1 = arith.constant 0 : i32
    return %c0_i32, %c0_i32_0 : i32, i32
  }
  func.func @transform_3(%arg0: i32) -> (i32, i32) {
    %c0_i32 = arith.constant 0 : i32
    %c0_i32_0 = arith.constant 0 : i32
    %c0_i32_1 = arith.constant 0 : i32
    return %c0_i32, %c0_i32_0 : i32, i32
  }
  func.func @transform_4(%arg0: i32) -> (i32, i32) {
    %c0_i32 = arith.constant 0 : i32
    %c0_i32_0 = arith.constant 0 : i32
    %c0_i32_1 = arith.constant 0 : i32
    return %c0_i32, %c0_i32_0 : i32, i32
  }
}

module attributes {stable_mosaic.version = 11 : i64} {
  func.func @_conv_gemm_kernel(%arg0: i32, %arg1: memref<184x512xf32, #tpu.memory_space<vmem>>, %arg2: memref<512x128xf32, #tpu.memory_space<vmem>>, %arg3: memref<1x128xf32, #tpu.memory_space<vmem>>, %arg4: memref<1x128xf32, #tpu.memory_space<vmem>>, %arg5: memref<184x128xf32, #tpu.memory_space<vmem>>) attributes {dimension_semantics = [#tpu.dimension_semantics<arbitrary>], iteration_bounds = array<i64: 1>, scalar_prefetch = 0 : i64, scratch_operands = 0 : i64, tpu.core_type = #tpu.core_type<tc>, window_params = [{pipeline_mode = #tpu.pipeline_mode<synchronous>, transform_indices = @transform_0, window_bounds = array<i64: 184, 512>}, {pipeline_mode = #tpu.pipeline_mode<synchronous>, transform_indices = @transform_1, window_bounds = array<i64: 512, 128>}, {pipeline_mode = #tpu.pipeline_mode<synchronous>, transform_indices = @transform_2, window_bounds = array<i64: 1, 128>}, {pipeline_mode = #tpu.pipeline_mode<synchronous>, transform_indices = @transform_3, window_bounds = array<i64: 1, 128>}, {pipeline_mode = #tpu.pipeline_mode<synchronous>, transform_indices = @transform_4, window_bounds = array<i64: 184, 128>}]} {
    %c0 = arith.constant 0 : index
    %c0_0 = arith.constant 0 : index
    %0 = vector.load %arg1[%c0, %c0_0] : memref<184x512xf32, #tpu.memory_space<vmem>>, vector<184x512xf32>
    %c0_1 = arith.constant 0 : index
    %c0_2 = arith.constant 0 : index
    %1 = vector.load %arg2[%c0_1, %c0_2] : memref<512x128xf32, #tpu.memory_space<vmem>>, vector<512x128xf32>
    %cst = arith.constant dense<0.000000e+00> : vector<184x128xf32>
    %2 = tpu.matmul %0, %1, %cst {dimension_numbers = #tpu.dot_dimension_numbers<[1], [0], [0], [1], [0, 0, 1, 1], [], []>} : vector<184x512xf32>, vector<512x128xf32>, vector<184x128xf32> -> vector<184x128xf32>
    %c0_3 = arith.constant 0 : index
    %c0_4 = arith.constant 0 : index
    %3 = vector.load %arg3[%c0_3, %c0_4] : memref<1x128xf32, #tpu.memory_space<vmem>>, vector<1x128xf32>
    %4 = vector.broadcast %3 : vector<1x128xf32> to vector<184x128xf32>
    %5 = arith.mulf %2, %4 : vector<184x128xf32>
    %c0_5 = arith.constant 0 : index
    %c0_6 = arith.constant 0 : index
    %6 = vector.load %arg4[%c0_5, %c0_6] : memref<1x128xf32, #tpu.memory_space<vmem>>, vector<1x128xf32>
    %7 = vector.broadcast %6 : vector<1x128xf32> to vector<184x128xf32>
    %8 = arith.addf %5, %7 : vector<184x128xf32>
    %cst_7 = arith.constant 0.000000e+00 : f32
    %9 = vector.broadcast %cst_7 : f32 to vector<184x128xf32>
    %10 = arith.maximumf %8, %9 : vector<184x128xf32>
    %c0_8 = arith.constant 0 : index
    %c0_9 = arith.constant 0 : index
    %11 = vector.load %arg5[%c0_8, %c0_9] : memref<184x128xf32, #tpu.memory_space<vmem>>, vector<184x128xf32>
    tpu.vector_store %arg5[%c0_8, %c0_9], %10 {strides = array<i32>} : memref<184x128xf32, #tpu.memory_space<vmem>>, vector<184x128xf32>,
    return
  }
  func.func @transform_0(%arg0: i32) -> (i32, i32) {
    %c0_i32 = arith.constant 0 : i32
    %c0_i32_0 = arith.constant 0 : i32
    %c0_i32_1 = arith.constant 0 : i32
    return %c0_i32, %c0_i32_0 : i32, i32
  }
  func.func @transform_1(%arg0: i32) -> (i32, i32) {
    %c0_i32 = arith.constant 0 : i32
    %c0_i32_0 = arith.constant 0 : i32
    %c0_i32_1 = arith.constant 0 : i32
    return %c0_i32, %c0_i32_0 : i32, i32
  }
  func.func @transform_2(%arg0: i32) -> (i32, i32) {
    %c0_i32 = arith.constant 0 : i32
    %c0_i32_0 = arith.constant 0 : i32
    %c0_i32_1 = arith.constant 0 : i32
    return %c0_i32, %c0_i32_0 : i32, i32
  }
  func.func @transform_3(%arg0: i32) -> (i32, i32) {
    %c0_i32 = arith.constant 0 : i32
    %c0_i32_0 = arith.constant 0 : i32
    %c0_i32_1 = arith.constant 0 : i32
    return %c0_i32, %c0_i32_0 : i32, i32
  }
  func.func @transform_4(%arg0: i32) -> (i32, i32) {
    %c0_i32 = arith.constant 0 : i32
    %c0_i32_0 = arith.constant 0 : i32
    %c0_i32_1 = arith.constant 0 : i32
    return %c0_i32, %c0_i32_0 : i32, i32
  }
}

module attributes {stable_mosaic.version = 11 : i64} {
  func.func @_conv_gemm_kernel(%arg0: i32, %arg1: memref<184x640xf32, #tpu.memory_space<vmem>>, %arg2: memref<640x128xf32, #tpu.memory_space<vmem>>, %arg3: memref<1x128xf32, #tpu.memory_space<vmem>>, %arg4: memref<1x128xf32, #tpu.memory_space<vmem>>, %arg5: memref<184x128xf32, #tpu.memory_space<vmem>>) attributes {dimension_semantics = [#tpu.dimension_semantics<arbitrary>], iteration_bounds = array<i64: 1>, scalar_prefetch = 0 : i64, scratch_operands = 0 : i64, tpu.core_type = #tpu.core_type<tc>, window_params = [{pipeline_mode = #tpu.pipeline_mode<synchronous>, transform_indices = @transform_0, window_bounds = array<i64: 184, 640>}, {pipeline_mode = #tpu.pipeline_mode<synchronous>, transform_indices = @transform_1, window_bounds = array<i64: 640, 128>}, {pipeline_mode = #tpu.pipeline_mode<synchronous>, transform_indices = @transform_2, window_bounds = array<i64: 1, 128>}, {pipeline_mode = #tpu.pipeline_mode<synchronous>, transform_indices = @transform_3, window_bounds = array<i64: 1, 128>}, {pipeline_mode = #tpu.pipeline_mode<synchronous>, transform_indices = @transform_4, window_bounds = array<i64: 184, 128>}]} {
    %c0 = arith.constant 0 : index
    %c0_0 = arith.constant 0 : index
    %0 = vector.load %arg1[%c0, %c0_0] : memref<184x640xf32, #tpu.memory_space<vmem>>, vector<184x640xf32>
    %c0_1 = arith.constant 0 : index
    %c0_2 = arith.constant 0 : index
    %1 = vector.load %arg2[%c0_1, %c0_2] : memref<640x128xf32, #tpu.memory_space<vmem>>, vector<640x128xf32>
    %cst = arith.constant dense<0.000000e+00> : vector<184x128xf32>
    %2 = tpu.matmul %0, %1, %cst {dimension_numbers = #tpu.dot_dimension_numbers<[1], [0], [0], [1], [0, 0, 1, 1], [], []>} : vector<184x640xf32>, vector<640x128xf32>, vector<184x128xf32> -> vector<184x128xf32>
    %c0_3 = arith.constant 0 : index
    %c0_4 = arith.constant 0 : index
    %3 = vector.load %arg3[%c0_3, %c0_4] : memref<1x128xf32, #tpu.memory_space<vmem>>, vector<1x128xf32>
    %4 = vector.broadcast %3 : vector<1x128xf32> to vector<184x128xf32>
    %5 = arith.mulf %2, %4 : vector<184x128xf32>
    %c0_5 = arith.constant 0 : index
    %c0_6 = arith.constant 0 : index
    %6 = vector.load %arg4[%c0_5, %c0_6] : memref<1x128xf32, #tpu.memory_space<vmem>>, vector<1x128xf32>
    %7 = vector.broadcast %6 : vector<1x128xf32> to vector<184x128xf32>
    %8 = arith.addf %5, %7 : vector<184x128xf32>
    %cst_7 = arith.constant 0.000000e+00 : f32
    %9 = vector.broadcast %cst_7 : f32 to vector<184x128xf32>
    %10 = arith.maximumf %8, %9 : vector<184x128xf32>
    %c0_8 = arith.constant 0 : index
    %c0_9 = arith.constant 0 : index
    %11 = vector.load %arg5[%c0_8, %c0_9] : memref<184x128xf32, #tpu.memory_space<vmem>>, vector<184x128xf32>
    tpu.vector_store %arg5[%c0_8, %c0_9], %10 {strides = array<i32>} : memref<184x128xf32, #tpu.memory_space<vmem>>, vector<184x128xf32>,
    return
  }
  func.func @transform_0(%arg0: i32) -> (i32, i32) {
    %c0_i32 = arith.constant 0 : i32
    %c0_i32_0 = arith.constant 0 : i32
    %c0_i32_1 = arith.constant 0 : i32
    return %c0_i32, %c0_i32_0 : i32, i32
  }
  func.func @transform_1(%arg0: i32) -> (i32, i32) {
    %c0_i32 = arith.constant 0 : i32
    %c0_i32_0 = arith.constant 0 : i32
    %c0_i32_1 = arith.constant 0 : i32
    return %c0_i32, %c0_i32_0 : i32, i32
  }
  func.func @transform_2(%arg0: i32) -> (i32, i32) {
    %c0_i32 = arith.constant 0 : i32
    %c0_i32_0 = arith.constant 0 : i32
    %c0_i32_1 = arith.constant 0 : i32
    return %c0_i32, %c0_i32_0 : i32, i32
  }
  func.func @transform_3(%arg0: i32) -> (i32, i32) {
    %c0_i32 = arith.constant 0 : i32
    %c0_i32_0 = arith.constant 0 : i32
    %c0_i32_1 = arith.constant 0 : i32
    return %c0_i32, %c0_i32_0 : i32, i32
  }
  func.func @transform_4(%arg0: i32) -> (i32, i32) {
    %c0_i32 = arith.constant 0 : i32
    %c0_i32_0 = arith.constant 0 : i32
    %c0_i32_1 = arith.constant 0 : i32
    return %c0_i32, %c0_i32_0 : i32, i32
  }
}

module attributes {stable_mosaic.version = 11 : i64} {
  func.func @_fc_fused_kernel(%arg0: i32, %arg1: memref<8x5760xf32, #tpu.memory_space<vmem>>, %arg2: memref<5760x512xbf16, #tpu.memory_space<vmem>>, %arg3: memref<512x128xf32, #tpu.memory_space<vmem>>, %arg4: memref<8x128xf32, #tpu.memory_space<vmem>>) attributes {dimension_semantics = [#tpu.dimension_semantics<arbitrary>], iteration_bounds = array<i64: 1>, scalar_prefetch = 0 : i64, scratch_operands = 0 : i64, tpu.core_type = #tpu.core_type<tc>, window_params = [{pipeline_mode = #tpu.pipeline_mode<synchronous>, transform_indices = @transform_0, window_bounds = array<i64: 8, 5760>}, {pipeline_mode = #tpu.pipeline_mode<synchronous>, transform_indices = @transform_1, window_bounds = array<i64: 5760, 512>}, {pipeline_mode = #tpu.pipeline_mode<synchronous>, transform_indices = @transform_2, window_bounds = array<i64: 512, 128>}, {pipeline_mode = #tpu.pipeline_mode<synchronous>, transform_indices = @transform_3, window_bounds = array<i64: 8, 128>}]} {
    %c0 = arith.constant 0 : index
    %c0_0 = arith.constant 0 : index
    %0 = vector.load %arg1[%c0, %c0_0] : memref<8x5760xf32, #tpu.memory_space<vmem>>, vector<8x5760xf32>
    %1 = arith.truncf %0 : vector<8x5760xf32> to vector<8x5760xbf16>
    %c0_1 = arith.constant 0 : index
    %c0_2 = arith.constant 0 : index
    %2 = vector.load %arg2[%c0_1, %c0_2] : memref<5760x512xbf16, #tpu.memory_space<vmem>>, vector<5760x512xbf16>
    %cst = arith.constant dense<0.000000e+00> : vector<8x512xf32>
    %3 = tpu.matmul %1, %2, %cst {dimension_numbers = #tpu.dot_dimension_numbers<[1], [0], [0], [1], [0, 0, 1, 1], [], []>} : vector<8x5760xbf16>, vector<5760x512xbf16>, vector<8x512xf32> -> vector<8x512xf32>
    %cst_3 = arith.constant 0.000000e+00 : f32
    %4 = vector.broadcast %cst_3 : f32 to vector<8x512xf32>
    %5 = arith.maximumf %3, %4 : vector<8x512xf32>
    %c0_4 = arith.constant 0 : index
    %c0_5 = arith.constant 0 : index
    %6 = vector.load %arg3[%c0_4, %c0_5] : memref<512x128xf32, #tpu.memory_space<vmem>>, vector<512x128xf32>
    %cst_6 = arith.constant dense<0.000000e+00> : vector<8x128xf32>
    %7 = tpu.matmul %5, %6, %cst_6 {dimension_numbers = #tpu.dot_dimension_numbers<[1], [0], [0], [1], [0, 0, 1, 1], [], []>} : vector<8x512xf32>, vector<512x128xf32>, vector<8x128xf32> -> vector<8x128xf32>
    %c0_7 = arith.constant 0 : index
    %c0_8 = arith.constant 0 : index
    %8 = vector.load %arg4[%c0_7, %c0_8] : memref<8x128xf32, #tpu.memory_space<vmem>>, vector<8x128xf32>
    tpu.vector_store %arg4[%c0_7, %c0_8], %7 {strides = array<i32>} : memref<8x128xf32, #tpu.memory_space<vmem>>, vector<8x128xf32>,
    return
  }
  func.func @transform_0(%arg0: i32) -> (i32, i32) {
    %c0_i32 = arith.constant 0 : i32
    %c0_i32_0 = arith.constant 0 : i32
    %c0_i32_1 = arith.constant 0 : i32
    return %c0_i32, %c0_i32_0 : i32, i32
  }
  func.func @transform_1(%arg0: i32) -> (i32, i32) {
    %c0_i32 = arith.constant 0 : i32
    %c0_i32_0 = arith.constant 0 : i32
    %c0_i32_1 = arith.constant 0 : i32
    return %c0_i32, %c0_i32_0 : i32, i32
  }
  func.func @transform_2(%arg0: i32) -> (i32, i32) {
    %c0_i32 = arith.constant 0 : i32
    %c0_i32_0 = arith.constant 0 : i32
    %c0_i32_1 = arith.constant 0 : i32
    return %c0_i32, %c0_i32_0 : i32, i32
  }
  func.func @transform_3(%arg0: i32) -> (i32, i32) {
    %c0_i32 = arith.constant 0 : i32
    %c0_i32_0 = arith.constant 0 : i32
    %c0_i32_1 = arith.constant 0 : i32
    return %c0_i32, %c0_i32_0 : i32, i32
  }
}

</mosaic_0001>

<llo_original>
// kernel: deep_double_sarsa_forward.4
$region0: #{deep_double_sarsa_forward.4}
  #allocation0 [shape = 'u32[]', space=smem, size = 0x4, offset = 0x4, fixed_abs, tag = 'smem constant byte address 0x4 - core index']
  #allocation1 [shape = 'u32[144,128]{1,0:T(1,128)}', space=vmem, size = 0x12000, scoped, tag = 'internal scratch']
  %s0 = inlined_call_operand.vmem [shape: f32[760,128], index: 0, kind: input, shape index: {}]
  %s1 = inlined_call_operand.vmem [shape: f32[128,128], index: 1, kind: input, shape index: {}]
  %s2 = inlined_call_operand.vmem [shape: f32[1,128], index: 2, kind: input, shape index: {}]
  %s3 = inlined_call_operand.vmem [shape: f32[1,128], index: 3, kind: input, shape index: {}]
  %s4 = inlined_call_operand.vmem [shape: f32[760,128], index: 4, kind: output, shape index: {}]
  %s5 = sld [smem:[#allocation0]]
  $region26: #{deep_double_sarsa_forward.4} parent=0
    _
  %s7 = ssub.s32 1, %s5
  %s8 = scalar_select 0, %s7, %s5
  // Predicated region
  $region2: #{deep_double_sarsa_forward.4} parent=0 // pred_check
    _
  $region3: #{deep_double_sarsa_forward.4} parent=0 // pred_check_branch
    %10 = sbr.rel (0) target = $region5
  $region4: #{deep_double_sarsa_forward.4} parent=0 // pred_region
    _
  $region5: #{deep_double_sarsa_forward.4} parent=0 // pred_fallthru
    _
  // Predicated region
  $region6: #{deep_double_sarsa_forward.4} parent=0 // pred_check
    _
  $region7: #{deep_double_sarsa_forward.4} parent=0 // pred_check_branch
    %12 = sbr.rel (0) target = $region9
  $region8: #{deep_double_sarsa_forward.4} parent=0 // pred_region
    _
  $region9: #{deep_double_sarsa_forward.4} parent=0 // pred_fallthru
    _
  // Predicated region
  $region10: #{deep_double_sarsa_forward.4} parent=0 // pred_check
    _
  $region11: #{deep_double_sarsa_forward.4} parent=0 // pred_check_branch
    %14 = sbr.rel (0) target = $region13
  $region12: #{deep_double_sarsa_forward.4} parent=0 // pred_region
    _
  $region13: #{deep_double_sarsa_forward.4} parent=0 // pred_fallthru
    _
  // Predicated region
  $region14: #{deep_double_sarsa_forward.4} parent=0 // pred_check
    _
  $region15: #{deep_double_sarsa_forward.4} parent=0 // pred_check_branch
    %16 = sbr.rel (0) target = $region17
  $region16: #{deep_double_sarsa_forward.4} parent=0 // pred_region
    _
  $region17: #{deep_double_sarsa_forward.4} parent=0 // pred_fallthru
    _
  %v17 = vld [vmem:[%s0] sm:$0xff]
  %v18 = vld [vmem:[%s0 + $0x8] sm:$0xff]
  %v19 = vld [vmem:[%s0 + $0x10] sm:$0xff]
  %v20 = vld [vmem:[%s0 + $0x18] sm:$0xff]
  %v21 = vld [vmem:[%s0 + $0x20] sm:$0xff]
  %v22 = vld [vmem:[%s0 + $0x28] sm:$0xff]
  %v23 = vld [vmem:[%s0 + $0x30] sm:$0xff]
  %v24 = vld [vmem:[%s0 + $0x38] sm:$0xff]
  %v25 = vld [vmem:[%s0 + $0x40] sm:$0xff]
  %v26 = vld [vmem:[%s0 + $0x48] sm:$0xff]
  %v27 = vld [vmem:[%s0 + $0x50] sm:$0xff]
  %v28 = vld [vmem:[%s0 + $0x58] sm:$0xff]
  %v29 = vld [vmem:[%s0 + $0x60] sm:$0xff]
  %v30 = vld [vmem:[%s0 + $0x68] sm:$0xff]
  %v31 = vld [vmem:[%s0 + $0x70] sm:$0xff]
  %v32 = vld [vmem:[%s0 + $0x78] sm:$0xff]
  %v33 = vld [vmem:[%s0 + $0x80] sm:$0xff]
  %v34 = vld [vmem:[%s0 + $0x88] sm:$0xff]
  %v35 = vld [vmem:[%s0 + $0x90] sm:$0xff]
  %v36 = vld [vmem:[%s0 + $0x98] sm:$0xff]
  %v37 = vld [vmem:[%s0 + $0xa0] sm:$0xff]
  %v38 = vld [vmem:[%s0 + $0xa8] sm:$0xff]
  %v39 = vld [vmem:[%s0 + $0xb0] sm:$0xff]
  %v40 = vld [vmem:[%s0 + $0xb8] sm:$0xff]
  %v41 = vld [vmem:[%s0 + $0xc0] sm:$0xff]
  %v42 = vld [vmem:[%s0 + $0xc8] sm:$0xff]
  %v43 = vld [vmem:[%s0 + $0xd0] sm:$0xff]
  %v44 = vld [vmem:[%s0 + $0xd8] sm:$0xff]
  %v45 = vld [vmem:[%s0 + $0xe0] sm:$0xff]
  %v46 = vld [vmem:[%s0 + $0xe8] sm:$0xff]
  %v47 = vld [vmem:[%s0 + $0xf0] sm:$0xff]
  %v48 = vld [vmem:[%s0 + $0xf8] sm:$0xff]
  %v49 = vld [vmem:[%s0 + $0x100] sm:$0xff]
  %v50 = vld [vmem:[%s0 + $0x108] sm:$0xff]
  %v51 = vld [vmem:[%s0 + $0x110] sm:$0xff]
  %v52 = vld [vmem:[%s0 + $0x118] sm:$0xff]
  %v53 = vld [vmem:[%s0 + $0x120] sm:$0xff]
  %v54 = vld [vmem:[%s0 + $0x128] sm:$0xff]
  %v55 = vld [vmem:[%s0 + $0x130] sm:$0xff]
  %v56 = vld [vmem:[%s0 + $0x138] sm:$0xff]
  %v57 = vld [vmem:[%s0 + $0x140] sm:$0xff]
  %v58 = vld [vmem:[%s0 + $0x148] sm:$0xff]
  %v59 = vld [vmem:[%s0 + $0x150] sm:$0xff]
  %v60 = vld [vmem:[%s0 + $0x158] sm:$0xff]
  %v61 = vld [vmem:[%s0 + $0x160] sm:$0xff]
  %v62 = vld [vmem:[%s0 + $0x168] sm:$0xff]
  %v63 = vld [vmem:[%s0 + $0x170] sm:$0xff]
  %v64 = vld [vmem:[%s0 + $0x178] sm:$0xff]
  %v65 = vld [vmem:[%s0 + $0x180] sm:$0xff]
  %v66 = vld [vmem:[%s0 + $0x188] sm:$0xff]
  %v67 = vld [vmem:[%s0 + $0x190] sm:$0xff]
  %v68 = vld [vmem:[%s0 + $0x198] sm:$0xff]
  %v69 = vld [vmem:[%s0 + $0x1a0] sm:$0xff]
  %v70 = vld [vmem:[%s0 + $0x1a8] sm:$0xff]
  %v71 = vld [vmem:[%s0 + $0x1b0] sm:$0xff]
  %v72 = vld [vmem:[%s0 + $0x1b8] sm:$0xff]
  %v73 = vld [vmem:[%s0 + $0x1c0] sm:$0xff]
  %v74 = vld [vmem:[%s0 + $0x1c8] sm:$0xff]
  %v75 = vld [vmem:[%s0 + $0x1d0] sm:$0xff]
  %v76 = vld [vmem:[%s0 + $0x1d8] sm:$0xff]
  %v77 = vld [vmem:[%s0 + $0x1e0] sm:$0xff]
  %v78 = vld [vmem:[%s0 + $0x1e8] sm:$0xff]
  %v79 = vld [vmem:[%s0 + $0x1f0] sm:$0xff]
  %v80 = vld [vmem:[%s0 + $0x1f8] sm:$0xff]
  %v81 = vld [vmem:[%s0 + $0x200] sm:$0xff]
  %v82 = vld [vmem:[%s0 + $0x208] sm:$0xff]
  %v83 = vld [vmem:[%s0 + $0x210] sm:$0xff]
  %v84 = vld [vmem:[%s0 + $0x218] sm:$0xff]
  %v85 = vld [vmem:[%s0 + $0x220] sm:$0xff]
  %v86 = vld [vmem:[%s0 + $0x228] sm:$0xff]
  %v87 = vld [vmem:[%s0 + $0x230] sm:$0xff]
  %v88 = vld [vmem:[%s0 + $0x238] sm:$0xff]
  %v89 = vld [vmem:[%s0 + $0x240] sm:$0xff]
  %v90 = vld [vmem:[%s0 + $0x248] sm:$0xff]
  %v91 = vld [vmem:[%s0 + $0x250] sm:$0xff]
  %v92 = vld [vmem:[%s0 + $0x258] sm:$0xff]
  %v93 = vld [vmem:[%s0 + $0x260] sm:$0xff]
  %v94 = vld [vmem:[%s0 + $0x268] sm:$0xff]
  %v95 = vld [vmem:[%s0 + $0x270] sm:$0xff]
  %v96 = vld [vmem:[%s0 + $0x278] sm:$0xff]
  %v97 = vld [vmem:[%s0 + $0x280] sm:$0xff]
  %v98 = vld [vmem:[%s0 + $0x288] sm:$0xff]
  %v99 = vld [vmem:[%s0 + $0x290] sm:$0xff]
  %v100 = vld [vmem:[%s0 + $0x298] sm:$0xff]
  %v101 = vld [vmem:[%s0 + $0x2a0] sm:$0xff]
  %v102 = vld [vmem:[%s0 + $0x2a8] sm:$0xff]
  %v103 = vld [vmem:[%s0 + $0x2b0] sm:$0xff]
  %v104 = vld [vmem:[%s0 + $0x2b8] sm:$0xff]
  %v105 = vld [vmem:[%s0 + $0x2c0] sm:$0xff]
  %v106 = vld [vmem:[%s0 + $0x2c8] sm:$0xff]
  %v107 = vld [vmem:[%s0 + $0x2d0] sm:$0xff]
  %v108 = vld [vmem:[%s0 + $0x2d8] sm:$0xff]
  %v109 = vld [vmem:[%s0 + $0x2e0] sm:$0xff]
  %v110 = vld [vmem:[%s0 + $0x2e8] sm:$0xff]
  %v111 = vld [vmem:[%s0 + $0x2f0] sm:$0xff]
  %v112 = vld [vmem:[%s1] sm:$0xff]
  %v113 = vld [vmem:[%s1 + $0x8] sm:$0xff]
  %v114 = vld [vmem:[%s1 + $0x10] sm:$0xff]
  %v115 = vld [vmem:[%s1 + $0x18] sm:$0xff]
  %v116 = vld [vmem:[%s1 + $0x20] sm:$0xff]
  %v117 = vld [vmem:[%s1 + $0x28] sm:$0xff]
  %v118 = vld [vmem:[%s1 + $0x30] sm:$0xff]
  %v119 = vld [vmem:[%s1 + $0x38] sm:$0xff]
  %v120 = vld [vmem:[%s1 + $0x40] sm:$0xff]
  %v121 = vld [vmem:[%s1 + $0x48] sm:$0xff]
  %v122 = vld [vmem:[%s1 + $0x50] sm:$0xff]
  %v123 = vld [vmem:[%s1 + $0x58] sm:$0xff]
  %v124 = vld [vmem:[%s1 + $0x60] sm:$0xff]
  %v125 = vld [vmem:[%s1 + $0x68] sm:$0xff]
  %v126 = vld [vmem:[%s1 + $0x70] sm:$0xff]
  %v127 = vld [vmem:[%s1 + $0x78] sm:$0xff]
  %128 = vmatprep.subr.mxu0 0.0
  %129 = vmatpush1.msra.mxu0 %v112
  %130 = vmatprep.subr.mxu0 0.0
  %131 = vmatpush1.msra.mxu0 %v113
  %132 = vmatprep.subr.mxu0 0.0
  %133 = vmatpush1.msra.mxu0 %v114
  %134 = vmatprep.subr.mxu0 0.0
  %135 = vmatpush1.msra.mxu0 %v115
  %136 = vmatprep.subr.mxu0 0.0
  %137 = vmatpush1.msra.mxu0 %v116
  %138 = vmatprep.subr.mxu0 0.0
  %139 = vmatpush1.msra.mxu0 %v117
  %140 = vmatprep.subr.mxu0 0.0
  %141 = vmatpush1.msra.mxu0 %v118
  %142 = vmatprep.subr.mxu0 0.0
  %143 = vmatpush1.msra.mxu0 %v119
  %144 = vmatprep.subr.mxu0 0.0
  %145 = vmatpush1.msra.mxu0 %v120
  %146 = vmatprep.subr.mxu0 0.0
  %147 = vmatpush1.msra.mxu0 %v121
  %148 = vmatprep.subr.mxu0 0.0
  %149 = vmatpush1.msra.mxu0 %v122
  %150 = vmatprep.subr.mxu0 0.0
  %151 = vmatpush1.msra.mxu0 %v123
  %152 = vmatprep.subr.mxu0 0.0
  %153 = vmatpush1.msra.mxu0 %v124
  %154 = vmatprep.subr.mxu0 0.0
  %155 = vmatpush1.msra.mxu0 %v125
  %156 = vmatprep.subr.mxu0 0.0
  %157 = vmatpush1.msra.mxu0 %v126
  %158 = vmatprep.subr.mxu0 0.0
  %159 = vmatpush1.msra.mxu0 %v127
  %160 = vmatprep.subr.mxu0 0.0
  %161 = vmatpush1.msra.mxu0 0.0
  %162 = vmatprep.subr.mxu0 0.0
  %163 = vmatpush1.msra.mxu0 0.0
  %164 = vmatprep.subr.mxu0 0.0
  %165 = vmatpush1.msra.mxu0 0.0
  %166 = vmatprep.subr.mxu0 0.0
  %167 = vmatpush1.msra.mxu0 0.0
  %168 = vmatprep.subr.mxu0 0.0
  %169 = vmatpush1.msra.mxu0 0.0
  %170 = vmatprep.subr.mxu0 0.0
  %171 = vmatpush1.msra.mxu0 0.0
  %172 = vmatprep.subr.mxu0 0.0
  %173 = vmatpush1.msra.mxu0 0.0
  %174 = vmatprep.subr.mxu0 0.0
  %175 = vmatpush1.msra.mxu0 0.0
  %176 = vmatprep.subr.mxu0 0.0
  %177 = vmatpush1.msra.mxu0 0.0
  %178 = vmatprep.subr.mxu0 0.0
  %179 = vmatpush1.msra.mxu0 0.0
  %180 = vmatprep.subr.mxu0 0.0
  %181 = vmatpush1.msra.mxu0 0.0
  %182 = vmatprep.subr.mxu0 0.0
  %183 = vmatpush1.msra.mxu0 0.0
  %184 = vmatprep.subr.mxu0 0.0
  %185 = vmatpush1.msra.mxu0 0.0
  %186 = vmatprep.subr.mxu0 0.0
  %187 = vmatpush1.msra.mxu0 0.0
  %188 = vmatprep.subr.mxu0 0.0
  %189 = vmatpush1.msra.mxu0 0.0
  %190 = vmatprep.subr.mxu0 0.0
  %191 = vmatpush1.msra.mxu0 0.0
  %192 = vmatprep.mubr.f32.mxu0 0.0
  %193 = vmatmul.mubr.f32.gmra.mrb[0].mxu0 %v17
  %v194 = vpop.f32.mrb[0].mxu0
  %v195 = vadd.f32 0.0, %v194
  %v196 = vpop.f32.mrb[0].mxu0
  %197 = vmatprep.mubr.f32.mxu0 0.0
  %198 = vmatmul.mubr.f32.gmra.mrb[0].mxu0 %v18
  %v199 = vpop.f32.mrb[0].mxu0
  %v200 = vadd.f32 0.0, %v199
  %v201 = vpop.f32.mrb[0].mxu0
  %202 = vmatprep.mubr.f32.mxu0 0.0
  %203 = vmatmul.mubr.f32.gmra.mrb[0].mxu0 %v19
  %v204 = vpop.f32.mrb[0].mxu0
  %v205 = vadd.f32 0.0, %v204
  %v206 = vpop.f32.mrb[0].mxu0
  %207 = vmatprep.mubr.f32.mxu0 0.0
  %208 = vmatmul.mubr.f32.gmra.mrb[0].mxu0 %v20
  %v209 = vpop.f32.mrb[0].mxu0
  %v210 = vadd.f32 0.0, %v209
  %v211 = vpop.f32.mrb[0].mxu0
  %212 = vmatprep.mubr.f32.mxu0 0.0
  %213 = vmatmul.mubr.f32.gmra.mrb[0].mxu0 %v21
  %v214 = vpop.f32.mrb[0].mxu0
  %v215 = vadd.f32 0.0, %v214
  %v216 = vpop.f32.mrb[0].mxu0
  %217 = vmatprep.mubr.f32.mxu0 0.0
  %218 = vmatmul.mubr.f32.gmra.mrb[0].mxu0 %v22
  %v219 = vpop.f32.mrb[0].mxu0
  %v220 = vadd.f32 0.0, %v219
  %v221 = vpop.f32.mrb[0].mxu0
  %222 = vmatprep.mubr.f32.mxu0 0.0
  %223 = vmatmul.mubr.f32.gmra.mrb[0].mxu0 %v23
  %v224 = vpop.f32.mrb[0].mxu0
  %v225 = vadd.f32 0.0, %v224
  %v226 = vpop.f32.mrb[0].mxu0
  %227 = vmatprep.mubr.f32.mxu0 0.0
  %228 = vmatmul.mubr.f32.gmra.mrb[0].mxu0 %v24
  %v229 = vpop.f32.mrb[0].mxu0
  %v230 = vadd.f32 0.0, %v229
  %v231 = vpop.f32.mrb[0].mxu0
  %232 = vmatprep.mubr.f32.mxu0 0.0
  %233 = vmatmul.mubr.f32.gmra.mrb[0].mxu0 %v25
  %v234 = vpop.f32.mrb[0].mxu0
  %v235 = vadd.f32 0.0, %v234
  %v236 = vpop.f32.mrb[0].mxu0
  %237 = vmatprep.mubr.f32.mxu0 0.0
  %238 = vmatmul.mubr.f32.gmra.mrb[0].mxu0 %v26
  %v239 = vpop.f32.mrb[0].mxu0
  %v240 = vadd.f32 0.0, %v239
  %v241 = vpop.f32.mrb[0].mxu0
  %242 = vmatprep.mubr.f32.mxu0 0.0
  %243 = vmatmul.mubr.f32.gmra.mrb[0].mxu0 %v27
  %v244 = vpop.f32.mrb[0].mxu0
  %v245 = vadd.f32 0.0, %v244
  %v246 = vpop.f32.mrb[0].mxu0
  %247 = vmatprep.mubr.f32.mxu0 0.0
  %248 = vmatmul.mubr.f32.gmra.mrb[0].mxu0 %v28
  %v249 = vpop.f32.mrb[0].mxu0
  %v250 = vadd.f32 0.0, %v249
  %v251 = vpop.f32.mrb[0].mxu0
  %252 = vmatprep.mubr.f32.mxu0 0.0
  %253 = vmatmul.mubr.f32.gmra.mrb[0].mxu0 %v29
  %v254 = vpop.f32.mrb[0].mxu0
  %v255 = vadd.f32 0.0, %v254
  %v256 = vpop.f32.mrb[0].mxu0
  %257 = vmatprep.mubr.f32.mxu0 0.0
  %258 = vmatmul.mubr.f32.gmra.mrb[0].mxu0 %v30
  %v259 = vpop.f32.mrb[0].mxu0
  %v260 = vadd.f32 0.0, %v259
  %v261 = vpop.f32.mrb[0].mxu0
  %262 = vmatprep.mubr.f32.mxu0 0.0
  %263 = vmatmul.mubr.f32.gmra.mrb[0].mxu0 %v31
  %v264 = vpop.f32.mrb[0].mxu0
  %v265 = vadd.f32 0.0, %v264
  %v266 = vpop.f32.mrb[0].mxu0
  %267 = vmatprep.mubr.f32.mxu0 0.0
  %268 = vmatmul.mubr.f32.gmra.mrb[0].mxu0 %v32
  %v269 = vpop.f32.mrb[0].mxu0
  %v270 = vadd.f32 0.0, %v269
  %v271 = vpop.f32.mrb[0].mxu0
  %272 = vmatprep.mubr.f32.mxu0 0.0
  %273 = vmatmul.mubr.f32.gmra.mrb[0].mxu0 %v33
  %v274 = vpop.f32.mrb[0].mxu0
  %v275 = vadd.f32 0.0, %v274
  %v276 = vpop.f32.mrb[0].mxu0
  %277 = vmatprep.mubr.f32.mxu0 0.0
  %278 = vmatmul.mubr.f32.gmra.mrb[0].mxu0 %v34
  %v279 = vpop.f32.mrb[0].mxu0
  %v280 = vadd.f32 0.0, %v279
  %v281 = vpop.f32.mrb[0].mxu0
  %282 = vmatprep.mubr.f32.mxu0 0.0
  %283 = vmatmul.mubr.f32.gmra.mrb[0].mxu0 %v35
  %v284 = vpop.f32.mrb[0].mxu0
  %v285 = vadd.f32 0.0, %v284
  %v286 = vpop.f32.mrb[0].mxu0
  %287 = vmatprep.mubr.f32.mxu0 0.0
  %288 = vmatmul.mubr.f32.gmra.mrb[0].mxu0 %v36
  %v289 = vpop.f32.mrb[0].mxu0
  %v290 = vadd.f32 0.0, %v289
  %v291 = vpop.f32.mrb[0].mxu0
  %292 = vmatprep.mubr.f32.mxu0 0.0
  %293 = vmatmul.mubr.f32.gmra.mrb[0].mxu0 %v37
  %v294 = vpop.f32.mrb[0].mxu0
  %v295 = vadd.f32 0.0, %v294
  %v296 = vpop.f32.mrb[0].mxu0
  %297 = vmatprep.mubr.f32.mxu0 0.0
  %298 = vmatmul.mubr.f32.gmra.mrb[0].mxu0 %v38
  %v299 = vpop.f32.mrb[0].mxu0
  %v300 = vadd.f32 0.0, %v299
  %v301 = vpop.f32.mrb[0].mxu0
  %302 = vmatprep.mubr.f32.mxu0 0.0
  %303 = vmatmul.mubr.f32.gmra.mrb[0].mxu0 %v39
  %v304 = vpop.f32.mrb[0].mxu0
  %v305 = vadd.f32 0.0, %v304
  %v306 = vpop.f32.mrb[0].mxu0
  %307 = vmatprep.mubr.f32.mxu0 0.0
  %308 = vmatmul.mubr.f32.gmra.mrb[0].mxu0 %v40
  %v309 = vpop.f32.mrb[0].mxu0
  %v310 = vadd.f32 0.0, %v309
  %v311 = vpop.f32.mrb[0].mxu0
  %312 = vmatprep.mubr.f32.mxu0 0.0
  %313 = vmatmul.mubr.f32.gmra.mrb[0].mxu0 %v41
  %v314 = vpop.f32.mrb[0].mxu0
  %v315 = vadd.f32 0.0, %v314
  %v316 = vpop.f32.mrb[0].mxu0
  %317 = vmatprep.mubr.f32.mxu0 0.0
  %318 = vmatmul.mubr.f32.gmra.mrb[0].mxu0 %v42
  %v319 = vpop.f32.mrb[0].mxu0
  %v320 = vadd.f32 0.0, %v319
  %v321 = vpop.f32.mrb[0].mxu0
  %322 = vmatprep.mubr.f32.mxu0 0.0
  %323 = vmatmul.mubr.f32.gmra.mrb[0].mxu0 %v43
  %v324 = vpop.f32.mrb[0].mxu0
  %v325 = vadd.f32 0.0, %v324
  %v326 = vpop.f32.mrb[0].mxu0
  %327 = vmatprep.mubr.f32.mxu0 0.0
  %328 = vmatmul.mubr.f32.gmra.mrb[0].mxu0 %v44
  %v329 = vpop.f32.mrb[0].mxu0
  %v330 = vadd.f32 0.0, %v329
  %v331 = vpop.f32.mrb[0].mxu0
  %332 = vmatprep.mubr.f32.mxu0 0.0
  %333 = vmatmul.mubr.f32.gmra.mrb[0].mxu0 %v45
  %v334 = vpop.f32.mrb[0].mxu0
  %v335 = vadd.f32 0.0, %v334
  %v336 = vpop.f32.mrb[0].mxu0
  %337 = vmatprep.mubr.f32.mxu0 0.0
  %338 = vmatmul.mubr.f32.gmra.mrb[0].mxu0 %v46
  %v339 = vpop.f32.mrb[0].mxu0
  %v340 = vadd.f32 0.0, %v339
  %v341 = vpop.f32.mrb[0].mxu0
  %342 = vmatprep.mubr.f32.mxu0 0.0
  %343 = vmatmul.mubr.f32.gmra.mrb[0].mxu0 %v47
  %v344 = vpop.f32.mrb[0].mxu0
  %v345 = vadd.f32 0.0, %v344
  %v346 = vpop.f32.mrb[0].mxu0
  %347 = vmatprep.mubr.f32.mxu0 0.0
  %348 = vmatmul.mubr.f32.gmra.mrb[0].mxu0 %v48
  %v349 = vpop.f32.mrb[0].mxu0
  %v350 = vadd.f32 0.0, %v349
  %v351 = vpop.f32.mrb[0].mxu0
  %352 = vmatprep.mubr.f32.mxu0 0.0
  %353 = vmatmul.mubr.f32.gmra.mrb[0].mxu0 %v49
  %v354 = vpop.f32.mrb[0].mxu0
  %v355 = vadd.f32 0.0, %v354
  %v356 = vpop.f32.mrb[0].mxu0
  %357 = vmatprep.mubr.f32.mxu0 0.0
  %358 = vmatmul.mubr.f32.gmra.mrb[0].mxu0 %v50
  %v359 = vpop.f32.mrb[0].mxu0
  %v360 = vadd.f32 0.0, %v359
  %v361 = vpop.f32.mrb[0].mxu0
  %362 = vmatprep.mubr.f32.mxu0 0.0
  %363 = vmatmul.mubr.f32.gmra.mrb[0].mxu0 %v51
  %v364 = vpop.f32.mrb[0].mxu0
  %v365 = vadd.f32 0.0, %v364
  %v366 = vpop.f32.mrb[0].mxu0
  %367 = vmatprep.mubr.f32.mxu0 0.0
  %368 = vmatmul.mubr.f32.gmra.mrb[0].mxu0 %v52
  %v369 = vpop.f32.mrb[0].mxu0
  %v370 = vadd.f32 0.0, %v369
  %v371 = vpop.f32.mrb[0].mxu0
  %372 = vmatprep.mubr.f32.mxu0 0.0
  %373 = vmatmul.mubr.f32.gmra.mrb[0].mxu0 %v53
  %v374 = vpop.f32.mrb[0].mxu0
  %v375 = vadd.f32 0.0, %v374
  %v376 = vpop.f32.mrb[0].mxu0
  %377 = vmatprep.mubr.f32.mxu0 0.0
  %378 = vmatmul.mubr.f32.gmra.mrb[0].mxu0 %v54
  %v379 = vpop.f32.mrb[0].mxu0
  %v380 = vadd.f32 0.0, %v379
  %v381 = vpop.f32.mrb[0].mxu0
  %382 = vmatprep.mubr.f32.mxu0 0.0
  %383 = vmatmul.mubr.f32.gmra.mrb[0].mxu0 %v55
  %v384 = vpop.f32.mrb[0].mxu0
  %v385 = vadd.f32 0.0, %v384
  %v386 = vpop.f32.mrb[0].mxu0
  %387 = vmatprep.mubr.f32.mxu0 0.0
  %388 = vmatmul.mubr.f32.gmra.mrb[0].mxu0 %v56
  %v389 = vpop.f32.mrb[0].mxu0
  %v390 = vadd.f32 0.0, %v389
  %v391 = vpop.f32.mrb[0].mxu0
  %392 = vmatprep.mubr.f32.mxu0 0.0
  %393 = vmatmul.mubr.f32.gmra.mrb[0].mxu0 %v57
  %v394 = vpop.f32.mrb[0].mxu0
  %v395 = vadd.f32 0.0, %v394
  %v396 = vpop.f32.mrb[0].mxu0
  %397 = vmatprep.mubr.f32.mxu0 0.0
  %398 = vmatmul.mubr.f32.gmra.mrb[0].mxu0 %v58
  %v399 = vpop.f32.mrb[0].mxu0
  %v400 = vadd.f32 0.0, %v399
  %v401 = vpop.f32.mrb[0].mxu0
  %402 = vmatprep.mubr.f32.mxu0 0.0
  %403 = vmatmul.mubr.f32.gmra.mrb[0].mxu0 %v59
  %v404 = vpop.f32.mrb[0].mxu0
  %v405 = vadd.f32 0.0, %v404
  %v406 = vpop.f32.mrb[0].mxu0
  %407 = vmatprep.mubr.f32.mxu0 0.0
  %408 = vmatmul.mubr.f32.gmra.mrb[0].mxu0 %v60
  %v409 = vpop.f32.mrb[0].mxu0
  %v410 = vadd.f32 0.0, %v409
  %v411 = vpop.f32.mrb[0].mxu0
  %412 = vmatprep.mubr.f32.mxu0 0.0
  %413 = vmatmul.mubr.f32.gmra.mrb[0].mxu0 %v61
  %v414 = vpop.f32.mrb[0].mxu0
  %v415 = vadd.f32 0.0, %v414
  %v416 = vpop.f32.mrb[0].mxu0
  %417 = vmatprep.mubr.f32.mxu0 0.0
  %418 = vmatmul.mubr.f32.gmra.mrb[0].mxu0 %v62
  %v419 = vpop.f32.mrb[0].mxu0
  %v420 = vadd.f32 0.0, %v419
  %v421 = vpop.f32.mrb[0].mxu0
  %422 = vmatprep.mubr.f32.mxu0 0.0
  %423 = vmatmul.mubr.f32.gmra.mrb[0].mxu0 %v63
  %v424 = vpop.f32.mrb[0].mxu0
  %v425 = vadd.f32 0.0, %v424
  %v426 = vpop.f32.mrb[0].mxu0
  %427 = vmatprep.mubr.f32.mxu0 0.0
  %428 = vmatmul.mubr.f32.gmra.mrb[0].mxu0 %v64
  %v429 = vpop.f32.mrb[0].mxu0
  %v430 = vadd.f32 0.0, %v429
  %v431 = vpop.f32.mrb[0].mxu0
  %432 = vmatprep.mubr.f32.mxu0 0.0
  %433 = vmatmul.mubr.f32.gmra.mrb[0].mxu0 %v65
  %v434 = vpop.f32.mrb[0].mxu0
  %v435 = vadd.f32 0.0, %v434
  %v436 = vpop.f32.mrb[0].mxu0
  %437 = vmatprep.mubr.f32.mxu0 0.0
  %438 = vmatmul.mubr.f32.gmra.mrb[0].mxu0 %v66
  %v439 = vpop.f32.mrb[0].mxu0
  %v440 = vadd.f32 0.0, %v439
  %v441 = vpop.f32.mrb[0].mxu0
  %442 = vmatprep.mubr.f32.mxu0 0.0
  %443 = vmatmul.mubr.f32.gmra.mrb[0].mxu0 %v67
  %v444 = vpop.f32.mrb[0].mxu0
  %v445 = vadd.f32 0.0, %v444
  %v446 = vpop.f32.mrb[0].mxu0
  %447 = vmatprep.mubr.f32.mxu0 0.0
  %448 = vmatmul.mubr.f32.gmra.mrb[0].mxu0 %v68
  %v449 = vpop.f32.mrb[0].mxu0
  %v450 = vadd.f32 0.0, %v449
  %v451 = vpop.f32.mrb[0].mxu0
  %452 = vmatprep.mubr.f32.mxu0 0.0
  %453 = vmatmul.mubr.f32.gmra.mrb[0].mxu0 %v69
  %v454 = vpop.f32.mrb[0].mxu0
  %v455 = vadd.f32 0.0, %v454
  %v456 = vpop.f32.mrb[0].mxu0
  %457 = vmatprep.mubr.f32.mxu0 0.0
  %458 = vmatmul.mubr.f32.gmra.mrb[0].mxu0 %v70
  %v459 = vpop.f32.mrb[0].mxu0
  %v460 = vadd.f32 0.0, %v459
  %v461 = vpop.f32.mrb[0].mxu0
  %462 = vmatprep.mubr.f32.mxu0 0.0
  %463 = vmatmul.mubr.f32.gmra.mrb[0].mxu0 %v71
  %v464 = vpop.f32.mrb[0].mxu0
  %v465 = vadd.f32 0.0, %v464
  %v466 = vpop.f32.mrb[0].mxu0
  %467 = vmatprep.mubr.f32.mxu0 0.0
  %468 = vmatmul.mubr.f32.gmra.mrb[0].mxu0 %v72
  %v469 = vpop.f32.mrb[0].mxu0
  %v470 = vadd.f32 0.0, %v469
  %v471 = vpop.f32.mrb[0].mxu0
  %472 = vmatprep.mubr.f32.mxu0 0.0
  %473 = vmatmul.mubr.f32.gmra.mrb[0].mxu0 %v73
  %v474 = vpop.f32.mrb[0].mxu0
  %v475 = vadd.f32 0.0, %v474
  %v476 = vpop.f32.mrb[0].mxu0
  %477 = vmatprep.mubr.f32.mxu0 0.0
  %478 = vmatmul.mubr.f32.gmra.mrb[0].mxu0 %v74
  %v479 = vpop.f32.mrb[0].mxu0
  %v480 = vadd.f32 0.0, %v479
  %v481 = vpop.f32.mrb[0].mxu0
  %482 = vmatprep.mubr.f32.mxu0 0.0
  %483 = vmatmul.mubr.f32.gmra.mrb[0].mxu0 %v75
  %v484 = vpop.f32.mrb[0].mxu0
  %v485 = vadd.f32 0.0, %v484
  %v486 = vpop.f32.mrb[0].mxu0
  %487 = vmatprep.mubr.f32.mxu0 0.0
  %488 = vmatmul.mubr.f32.gmra.mrb[0].mxu0 %v76
  %v489 = vpop.f32.mrb[0].mxu0
  %v490 = vadd.f32 0.0, %v489
  %v491 = vpop.f32.mrb[0].mxu0
  %492 = vmatprep.mubr.f32.mxu0 0.0
  %493 = vmatmul.mubr.f32.gmra.mrb[0].mxu0 %v77
  %v494 = vpop.f32.mrb[0].mxu0
  %v495 = vadd.f32 0.0, %v494
  %v496 = vpop.f32.mrb[0].mxu0
  %497 = vmatprep.mubr.f32.mxu0 0.0
  %498 = vmatmul.mubr.f32.gmra.mrb[0].mxu0 %v78
  %v499 = vpop.f32.mrb[0].mxu0
  %v500 = vadd.f32 0.0, %v499
  %v501 = vpop.f32.mrb[0].mxu0
  %502 = vmatprep.mubr.f32.mxu0 0.0
  %503 = vmatmul.mubr.f32.gmra.mrb[0].mxu0 %v79
  %v504 = vpop.f32.mrb[0].mxu0
  %v505 = vadd.f32 0.0, %v504
  %v506 = vpop.f32.mrb[0].mxu0
  %507 = vmatprep.mubr.f32.mxu0 0.0
  %508 = vmatmul.mubr.f32.gmra.mrb[0].mxu0 %v80
  %v509 = vpop.f32.mrb[0].mxu0
  %v510 = vadd.f32 0.0, %v509
  %v511 = vpop.f32.mrb[0].mxu0
  %512 = vmatprep.mubr.f32.mxu0 0.0
  %513 = vmatmul.mubr.f32.gmra.mrb[0].mxu0 %v81
  %v514 = vpop.f32.mrb[0].mxu0
  %v515 = vadd.f32 0.0, %v514
  %v516 = vpop.f32.mrb[0].mxu0
  %517 = vmatprep.mubr.f32.mxu0 0.0
  %518 = vmatmul.mubr.f32.gmra.mrb[0].mxu0 %v82
  %v519 = vpop.f32.mrb[0].mxu0
  %v520 = vadd.f32 0.0, %v519
  %v521 = vpop.f32.mrb[0].mxu0
  %522 = vmatprep.mubr.f32.mxu0 0.0
  %523 = vmatmul.mubr.f32.gmra.mrb[0].mxu0 %v83
  %v524 = vpop.f32.mrb[0].mxu0
  %v525 = vadd.f32 0.0, %v524
  %v526 = vpop.f32.mrb[0].mxu0
  %527 = vmatprep.mubr.f32.mxu0 0.0
  %528 = vmatmul.mubr.f32.gmra.mrb[0].mxu0 %v84
  %v529 = vpop.f32.mrb[0].mxu0
  %v530 = vadd.f32 0.0, %v529
  %v531 = vpop.f32.mrb[0].mxu0
  %532 = vmatprep.mubr.f32.mxu0 0.0
  %533 = vmatmul.mubr.f32.gmra.mrb[0].mxu0 %v85
  %v534 = vpop.f32.mrb[0].mxu0
  %v535 = vadd.f32 0.0, %v534
  %v536 = vpop.f32.mrb[0].mxu0
  %537 = vmatprep.mubr.f32.mxu0 0.0
  %538 = vmatmul.mubr.f32.gmra.mrb[0].mxu0 %v86
  %v539 = vpop.f32.mrb[0].mxu0
  %v540 = vadd.f32 0.0, %v539
  %v541 = vpop.f32.mrb[0].mxu0
  %542 = vmatprep.mubr.f32.mxu0 0.0
  %543 = vmatmul.mubr.f32.gmra.mrb[0].mxu0 %v87
  %v544 = vpop.f32.mrb[0].mxu0
  %v545 = vadd.f32 0.0, %v544
  %v546 = vpop.f32.mrb[0].mxu0
  %547 = vmatprep.mubr.f32.mxu0 0.0
  %548 = vmatmul.mubr.f32.gmra.mrb[0].mxu0 %v88
  %v549 = vpop.f32.mrb[0].mxu0
  %v550 = vadd.f32 0.0, %v549
  %v551 = vpop.f32.mrb[0].mxu0
  %552 = vmatprep.mubr.f32.mxu0 0.0
  %553 = vmatmul.mubr.f32.gmra.mrb[0].mxu0 %v89
  %v554 = vpop.f32.mrb[0].mxu0
  %v555 = vadd.f32 0.0, %v554
  %v556 = vpop.f32.mrb[0].mxu0
  %557 = vmatprep.mubr.f32.mxu0 0.0
  %558 = vmatmul.mubr.f32.gmra.mrb[0].mxu0 %v90
  %v559 = vpop.f32.mrb[0].mxu0
  %v560 = vadd.f32 0.0, %v559
  %v561 = vpop.f32.mrb[0].mxu0
  %562 = vmatprep.mubr.f32.mxu0 0.0
  %563 = vmatmul.mubr.f32.gmra.mrb[0].mxu0 %v91
  %v564 = vpop.f32.mrb[0].mxu0
  %v565 = vadd.f32 0.0, %v564
  %v566 = vpop.f32.mrb[0].mxu0
  %567 = vmatprep.mubr.f32.mxu0 0.0
  %568 = vmatmul.mubr.f32.gmra.mrb[0].mxu0 %v92
  %v569 = vpop.f32.mrb[0].mxu0
  %v570 = vadd.f32 0.0, %v569
  %v571 = vpop.f32.mrb[0].mxu0
  %572 = vmatprep.mubr.f32.mxu0 0.0
  %573 = vmatmul.mubr.f32.gmra.mrb[0].mxu0 %v93
  %v574 = vpop.f32.mrb[0].mxu0
  %v575 = vadd.f32 0.0, %v574
  %v576 = vpop.f32.mrb[0].mxu0
  %577 = vmatprep.mubr.f32.mxu0 0.0
  %578 = vmatmul.mubr.f32.gmra.mrb[0].mxu0 %v94
  %v579 = vpop.f32.mrb[0].mxu0
  %v580 = vadd.f32 0.0, %v579
  %v581 = vpop.f32.mrb[0].mxu0
  %582 = vmatprep.mubr.f32.mxu0 0.0
  %583 = vmatmul.mubr.f32.gmra.mrb[0].mxu0 %v95
  %v584 = vpop.f32.mrb[0].mxu0
  %v585 = vadd.f32 0.0, %v584
  %v586 = vpop.f32.mrb[0].mxu0
  %587 = vmatprep.mubr.f32.mxu0 0.0
  %588 = vmatmul.mubr.f32.gmra.mrb[0].mxu0 %v96
  %v589 = vpop.f32.mrb[0].mxu0
  %v590 = vadd.f32 0.0, %v589
  %v591 = vpop.f32.mrb[0].mxu0
  %592 = vmatprep.mubr.f32.mxu0 0.0
  %593 = vmatmul.mubr.f32.gmra.mrb[0].mxu0 %v97
  %v594 = vpop.f32.mrb[0].mxu0
  %v595 = vadd.f32 0.0, %v594
  %v596 = vpop.f32.mrb[0].mxu0
  %597 = vmatprep.mubr.f32.mxu0 0.0
  %598 = vmatmul.mubr.f32.gmra.mrb[0].mxu0 %v98
  %v599 = vpop.f32.mrb[0].mxu0
  %v600 = vadd.f32 0.0, %v599
  %v601 = vpop.f32.mrb[0].mxu0
  %602 = vmatprep.mubr.f32.mxu0 0.0
  %603 = vmatmul.mubr.f32.gmra.mrb[0].mxu0 %v99
  %v604 = vpop.f32.mrb[0].mxu0
  %v605 = vadd.f32 0.0, %v604
  %v606 = vpop.f32.mrb[0].mxu0
  %607 = vmatprep.mubr.f32.mxu0 0.0
  %608 = vmatmul.mubr.f32.gmra.mrb[0].mxu0 %v100
  %v609 = vpop.f32.mrb[0].mxu0
  %v610 = vadd.f32 0.0, %v609
  %v611 = vpop.f32.mrb[0].mxu0
  %612 = vmatprep.mubr.f32.mxu0 0.0
  %613 = vmatmul.mubr.f32.gmra.mrb[0].mxu0 %v101
  %v614 = vpop.f32.mrb[0].mxu0
  %v615 = vadd.f32 0.0, %v614
  %v616 = vpop.f32.mrb[0].mxu0
  %617 = vmatprep.mubr.f32.mxu0 0.0
  %618 = vmatmul.mubr.f32.gmra.mrb[0].mxu0 %v102
  %v619 = vpop.f32.mrb[0].mxu0
  %v620 = vadd.f32 0.0, %v619
  %v621 = vpop.f32.mrb[0].mxu0
  %622 = vmatprep.mubr.f32.mxu0 0.0
  %623 = vmatmul.mubr.f32.gmra.mrb[0].mxu0 %v103
  %v624 = vpop.f32.mrb[0].mxu0
  %v625 = vadd.f32 0.0, %v624
  %v626 = vpop.f32.mrb[0].mxu0
  %627 = vmatprep.mubr.f32.mxu0 0.0
  %628 = vmatmul.mubr.f32.gmra.mrb[0].mxu0 %v104
  %v629 = vpop.f32.mrb[0].mxu0
  %v630 = vadd.f32 0.0, %v629
  %v631 = vpop.f32.mrb[0].mxu0
  %632 = vmatprep.mubr.f32.mxu0 0.0
  %633 = vmatmul.mubr.f32.gmra.mrb[0].mxu0 %v105
  %v634 = vpop.f32.mrb[0].mxu0
  %v635 = vadd.f32 0.0, %v634
  %v636 = vpop.f32.mrb[0].mxu0
  %637 = vmatprep.mubr.f32.mxu0 0.0
  %638 = vmatmul.mubr.f32.gmra.mrb[0].mxu0 %v106
  %v639 = vpop.f32.mrb[0].mxu0
  %v640 = vadd.f32 0.0, %v639
  %v641 = vpop.f32.mrb[0].mxu0
  %642 = vmatprep.mubr.f32.mxu0 0.0
  %643 = vmatmul.mubr.f32.gmra.mrb[0].mxu0 %v107
  %v644 = vpop.f32.mrb[0].mxu0
  %v645 = vadd.f32 0.0, %v644
  %v646 = vpop.f32.mrb[0].mxu0
  %647 = vmatprep.mubr.f32.mxu0 0.0
  %648 = vmatmul.mubr.f32.gmra.mrb[0].mxu0 %v108
  %v649 = vpop.f32.mrb[0].mxu0
  %v650 = vadd.f32 0.0, %v649
  %v651 = vpop.f32.mrb[0].mxu0
  %652 = vmatprep.mubr.f32.mxu0 0.0
  %653 = vmatmul.mubr.f32.gmra.mrb[0].mxu0 %v109
  %v654 = vpop.f32.mrb[0].mxu0
  %v655 = vadd.f32 0.0, %v654
  %v656 = vpop.f32.mrb[0].mxu0
  %657 = vmatprep.mubr.f32.mxu0 0.0
  %658 = vmatmul.mubr.f32.gmra.mrb[0].mxu0 %v110
  %v659 = vpop.f32.mrb[0].mxu0
  %v660 = vadd.f32 0.0, %v659
  %v661 = vpop.f32.mrb[0].mxu0
  %662 = vmatprep.mubr.f32.mxu0 0.0
  %663 = vmatmul.mubr.f32.gmra.mrb[0].mxu0 %v111
  %v664 = vpop.f32.mrb[0].mxu0
  %v665 = vadd.f32 0.0, %v664
  %v666 = vpop.f32.mrb[0].mxu0
  %667 = vdwg.mxu0
  %v668 = vld [vmem:[%s2] sm:$0x1]
  %v670 = vlaneseq
  %v671 = vshrl.u32 %v670, 7
  %v672 = vsub.s32 0, %v671
  %v673 = vrot.slane %v668, %v672
  %v675 = vmul.f32 %v195, %v673
  %v676 = vmul.f32 %v200, %v673
  %v677 = vmul.f32 %v205, %v673
  %v678 = vmul.f32 %v210, %v673
  %v679 = vmul.f32 %v215, %v673
  %v680 = vmul.f32 %v220, %v673
  %v681 = vmul.f32 %v225, %v673
  %v682 = vmul.f32 %v230, %v673
  %v683 = vmul.f32 %v235, %v673
  %v684 = vmul.f32 %v240, %v673
  %v685 = vmul.f32 %v245, %v673
  %v686 = vmul.f32 %v250, %v673
  %v687 = vmul.f32 %v255, %v673
  %v688 = vmul.f32 %v260, %v673
  %v689 = vmul.f32 %v265, %v673
  %v690 = vmul.f32 %v270, %v673
  %v691 = vmul.f32 %v275, %v673
  %v692 = vmul.f32 %v280, %v673
  %v693 = vmul.f32 %v285, %v673
  %v694 = vmul.f32 %v290, %v673
  %v695 = vmul.f32 %v295, %v673
  %v696 = vmul.f32 %v300, %v673
  %v697 = vmul.f32 %v305, %v673
  %v698 = vmul.f32 %v310, %v673
  %v699 = vmul.f32 %v315, %v673
  %v700 = vmul.f32 %v320, %v673
  %v701 = vmul.f32 %v325, %v673
  %v702 = vmul.f32 %v330, %v673
  %v703 = vmul.f32 %v335, %v673
  %v704 = vmul.f32 %v340, %v673
  %v705 = vmul.f32 %v345, %v673
  %v706 = vmul.f32 %v350, %v673
  %v707 = vmul.f32 %v355, %v673
  %v708 = vmul.f32 %v360, %v673
  %v709 = vmul.f32 %v365, %v673
  %v710 = vmul.f32 %v370, %v673
  %v711 = vmul.f32 %v375, %v673
  %v712 = vmul.f32 %v380, %v673
  %v713 = vmul.f32 %v385, %v673
  %v714 = vmul.f32 %v390, %v673
  %v715 = vmul.f32 %v395, %v673
  %v716 = vmul.f32 %v400, %v673
  %v717 = vmul.f32 %v405, %v673
  %v718 = vmul.f32 %v410, %v673
  %v719 = vmul.f32 %v415, %v673
  %v720 = vmul.f32 %v420, %v673
  %v721 = vmul.f32 %v425, %v673
  %v722 = vmul.f32 %v430, %v673
  %v723 = vmul.f32 %v435, %v673
  %v724 = vmul.f32 %v440, %v673
  %v725 = vmul.f32 %v445, %v673
  %v726 = vmul.f32 %v450, %v673
  %v727 = vmul.f32 %v455, %v673
  %v728 = vmul.f32 %v460, %v673
  %v729 = vmul.f32 %v465, %v673
  %v730 = vmul.f32 %v470, %v673
  %v731 = vmul.f32 %v475, %v673
  %v732 = vmul.f32 %v480, %v673
  %v733 = vmul.f32 %v485, %v673
  %v734 = vmul.f32 %v490, %v673
  %v735 = vmul.f32 %v495, %v673
  %v736 = vmul.f32 %v500, %v673
  %v737 = vmul.f32 %v505, %v673
  %v738 = vmul.f32 %v510, %v673
  %v739 = vmul.f32 %v515, %v673
  %v740 = vmul.f32 %v520, %v673
  %v741 = vmul.f32 %v525, %v673
  %v742 = vmul.f32 %v530, %v673
  %v743 = vmul.f32 %v535, %v673
  %v744 = vmul.f32 %v540, %v673
  %v745 = vmul.f32 %v545, %v673
  %v746 = vmul.f32 %v550, %v673
  %v747 = vmul.f32 %v555, %v673
  %v748 = vmul.f32 %v560, %v673
  %v749 = vmul.f32 %v565, %v673
  %v750 = vmul.f32 %v570, %v673
  %v751 = vmul.f32 %v575, %v673
  %v752 = vmul.f32 %v580, %v673
  %v753 = vmul.f32 %v585, %v673
  %v754 = vmul.f32 %v590, %v673
  %v755 = vmul.f32 %v595, %v673
  %v756 = vmul.f32 %v600, %v673
  %v757 = vmul.f32 %v605, %v673
  %v758 = vmul.f32 %v610, %v673
  %v759 = vmul.f32 %v615, %v673
  %v760 = vmul.f32 %v620, %v673
  %v761 = vmul.f32 %v625, %v673
  %v762 = vmul.f32 %v630, %v673
  %v763 = vmul.f32 %v635, %v673
  %v764 = vmul.f32 %v640, %v673
  %v765 = vmul.f32 %v645, %v673
  %v766 = vmul.f32 %v650, %v673
  %v767 = vmul.f32 %v655, %v673
  %v768 = vmul.f32 %v660, %v673
  %v769 = vmul.f32 %v665, %v673
  %v770 = vld [vmem:[%s3] sm:$0x1]
  %v772 = vlaneseq
  %v773 = vshrl.u32 %v772, 7
  %v774 = vsub.s32 0, %v773
  %v775 = vrot.slane %v770, %v774
  %v777 = vadd.f32 %v675, %v775
  %v778 = vadd.f32 %v676, %v775
  %v779 = vadd.f32 %v677, %v775
  %v780 = vadd.f32 %v678, %v775
  %v781 = vadd.f32 %v679, %v775
  %v782 = vadd.f32 %v680, %v775
  %v783 = vadd.f32 %v681, %v775
  %v784 = vadd.f32 %v682, %v775
  %v785 = vadd.f32 %v683, %v775
  %v786 = vadd.f32 %v684, %v775
  %v787 = vadd.f32 %v685, %v775
  %v788 = vadd.f32 %v686, %v775
  %v789 = vadd.f32 %v687, %v775
  %v790 = vadd.f32 %v688, %v775
  %v791 = vadd.f32 %v689, %v775
  %v792 = vadd.f32 %v690, %v775
  %v793 = vadd.f32 %v691, %v775
  %v794 = vadd.f32 %v692, %v775
  %v795 = vadd.f32 %v693, %v775
  %v796 = vadd.f32 %v694, %v775
  %v797 = vadd.f32 %v695, %v775
  %v798 = vadd.f32 %v696, %v775
  %v799 = vadd.f32 %v697, %v775
  %v800 = vadd.f32 %v698, %v775
  %v801 = vadd.f32 %v699, %v775
  %v802 = vadd.f32 %v700, %v775
  %v803 = vadd.f32 %v701, %v775
  %v804 = vadd.f32 %v702, %v775
  %v805 = vadd.f32 %v703, %v775
  %v806 = vadd.f32 %v704, %v775
  %v807 = vadd.f32 %v705, %v775
  %v808 = vadd.f32 %v706, %v775
  %v809 = vadd.f32 %v707, %v775
  %v810 = vadd.f32 %v708, %v775
  %v811 = vadd.f32 %v709, %v775
  %v812 = vadd.f32 %v710, %v775
  %v813 = vadd.f32 %v711, %v775
  %v814 = vadd.f32 %v712, %v775
  %v815 = vadd.f32 %v713, %v775
  %v816 = vadd.f32 %v714, %v775
  %v817 = vadd.f32 %v715, %v775
  %v818 = vadd.f32 %v716, %v775
  %v819 = vadd.f32 %v717, %v775
  %v820 = vadd.f32 %v718, %v775
  %v821 = vadd.f32 %v719, %v775
  %v822 = vadd.f32 %v720, %v775
  %v823 = vadd.f32 %v721, %v775
  %v824 = vadd.f32 %v722, %v775
  %v825 = vadd.f32 %v723, %v775
  %v826 = vadd.f32 %v724, %v775
  %v827 = vadd.f32 %v725, %v775
  %v828 = vadd.f32 %v726, %v775
  %v829 = vadd.f32 %v727, %v775
  %v830 = vadd.f32 %v728, %v775
  %v831 = vadd.f32 %v729, %v775
  %v832 = vadd.f32 %v730, %v775
  %v833 = vadd.f32 %v731, %v775
  %v834 = vadd.f32 %v732, %v775
  %v835 = vadd.f32 %v733, %v775
  %v836 = vadd.f32 %v734, %v775
  %v837 = vadd.f32 %v735, %v775
  %v838 = vadd.f32 %v736, %v775
  %v839 = vadd.f32 %v737, %v775
  %v840 = vadd.f32 %v738, %v775
  %v841 = vadd.f32 %v739, %v775
  %v842 = vadd.f32 %v740, %v775
  %v843 = vadd.f32 %v741, %v775
  %v844 = vadd.f32 %v742, %v775
  %v845 = vadd.f32 %v743, %v775
  %v846 = vadd.f32 %v744, %v775
  %v847 = vadd.f32 %v745, %v775
  %v848 = vadd.f32 %v746, %v775
  %v849 = vadd.f32 %v747, %v775
  %v850 = vadd.f32 %v748, %v775
  %v851 = vadd.f32 %v749, %v775
  %v852 = vadd.f32 %v750, %v775
  %v853 = vadd.f32 %v751, %v775
  %v854 = vadd.f32 %v752, %v775
  %v855 = vadd.f32 %v753, %v775
  %v856 = vadd.f32 %v754, %v775
  %v857 = vadd.f32 %v755, %v775
  %v858 = vadd.f32 %v756, %v775
  %v859 = vadd.f32 %v757, %v775
  %v860 = vadd.f32 %v758, %v775
  %v861 = vadd.f32 %v759, %v775
  %v862 = vadd.f32 %v760, %v775
  %v863 = vadd.f32 %v761, %v775
  %v864 = vadd.f32 %v762, %v775
  %v865 = vadd.f32 %v763, %v775
  %v866 = vadd.f32 %v764, %v775
  %v867 = vadd.f32 %v765, %v775
  %v868 = vadd.f32 %v766, %v775
  %v869 = vadd.f32 %v767, %v775
  %v870 = vadd.f32 %v768, %v775
  %v871 = vadd.f32 %v769, %v775
  %v872 = vmax.f32 %v777, 0.0
  %v873 = vmax.f32 %v778, 0.0
  %v874 = vmax.f32 %v779, 0.0
  %v875 = vmax.f32 %v780, 0.0
  %v876 = vmax.f32 %v781, 0.0
  %v877 = vmax.f32 %v782, 0.0
  %v878 = vmax.f32 %v783, 0.0
  %v879 = vmax.f32 %v784, 0.0
  %v880 = vmax.f32 %v785, 0.0
  %v881 = vmax.f32 %v786, 0.0
  %v882 = vmax.f32 %v787, 0.0
  %v883 = vmax.f32 %v788, 0.0
  %v884 = vmax.f32 %v789, 0.0
  %v885 = vmax.f32 %v790, 0.0
  %v886 = vmax.f32 %v791, 0.0
  %v887 = vmax.f32 %v792, 0.0
  %v888 = vmax.f32 %v793, 0.0
  %v889 = vmax.f32 %v794, 0.0
  %v890 = vmax.f32 %v795, 0.0
  %v891 = vmax.f32 %v796, 0.0
  %v892 = vmax.f32 %v797, 0.0
  %v893 = vmax.f32 %v798, 0.0
  %v894 = vmax.f32 %v799, 0.0
  %v895 = vmax.f32 %v800, 0.0
  %v896 = vmax.f32 %v801, 0.0
  %v897 = vmax.f32 %v802, 0.0
  %v898 = vmax.f32 %v803, 0.0
  %v899 = vmax.f32 %v804, 0.0
  %v900 = vmax.f32 %v805, 0.0
  %v901 = vmax.f32 %v806, 0.0
  %v902 = vmax.f32 %v807, 0.0
  %v903 = vmax.f32 %v808, 0.0
  %v904 = vmax.f32 %v809, 0.0
  %v905 = vmax.f32 %v810, 0.0
  %v906 = vmax.f32 %v811, 0.0
  %v907 = vmax.f32 %v812, 0.0
  %v908 = vmax.f32 %v813, 0.0
  %v909 = vmax.f32 %v814, 0.0
  %v910 = vmax.f32 %v815, 0.0
  %v911 = vmax.f32 %v816, 0.0
  %v912 = vmax.f32 %v817, 0.0
  %v913 = vmax.f32 %v818, 0.0
  %v914 = vmax.f32 %v819, 0.0
  %v915 = vmax.f32 %v820, 0.0
  %v916 = vmax.f32 %v821, 0.0
  %v917 = vmax.f32 %v822, 0.0
  %v918 = vmax.f32 %v823, 0.0
  %v919 = vmax.f32 %v824, 0.0
  %v920 = vmax.f32 %v825, 0.0
  %v921 = vmax.f32 %v826, 0.0
  %v922 = vmax.f32 %v827, 0.0
  %v923 = vmax.f32 %v828, 0.0
  %v924 = vmax.f32 %v829, 0.0
  %v925 = vmax.f32 %v830, 0.0
  %v926 = vmax.f32 %v831, 0.0
  %v927 = vmax.f32 %v832, 0.0
  %v928 = vmax.f32 %v833, 0.0
  %v929 = vmax.f32 %v834, 0.0
  %v930 = vmax.f32 %v835, 0.0
  %v931 = vmax.f32 %v836, 0.0
  %v932 = vmax.f32 %v837, 0.0
  %v933 = vmax.f32 %v838, 0.0
  %v934 = vmax.f32 %v839, 0.0
  %v935 = vmax.f32 %v840, 0.0
  %v936 = vmax.f32 %v841, 0.0
  %v937 = vmax.f32 %v842, 0.0
  %v938 = vmax.f32 %v843, 0.0
  %v939 = vmax.f32 %v844, 0.0
  %v940 = vmax.f32 %v845, 0.0
  %v941 = vmax.f32 %v846, 0.0
  %v942 = vmax.f32 %v847, 0.0
  %v943 = vmax.f32 %v848, 0.0
  %v944 = vmax.f32 %v849, 0.0
  %v945 = vmax.f32 %v850, 0.0
  %v946 = vmax.f32 %v851, 0.0
  %v947 = vmax.f32 %v852, 0.0
  %v948 = vmax.f32 %v853, 0.0
  %v949 = vmax.f32 %v854, 0.0
  %v950 = vmax.f32 %v855, 0.0
  %v951 = vmax.f32 %v856, 0.0
  %v952 = vmax.f32 %v857, 0.0
  %v953 = vmax.f32 %v858, 0.0
  %v954 = vmax.f32 %v859, 0.0
  %v955 = vmax.f32 %v860, 0.0
  %v956 = vmax.f32 %v861, 0.0
  %v957 = vmax.f32 %v862, 0.0
  %v958 = vmax.f32 %v863, 0.0
  %v959 = vmax.f32 %v864, 0.0
  %v960 = vmax.f32 %v865, 0.0
  %v961 = vmax.f32 %v866, 0.0
  %v962 = vmax.f32 %v867, 0.0
  %v963 = vmax.f32 %v868, 0.0
  %v964 = vmax.f32 %v869, 0.0
  %v965 = vmax.f32 %v870, 0.0
  %v966 = vmax.f32 %v871, 0.0
  %967 = vst [vmem:[%s4] sm:$0xff] %v872
  %968 = vst [vmem:[%s4 + $0x8] sm:$0xff] %v873
  %969 = vst [vmem:[%s4 + $0x10] sm:$0xff] %v874
  %970 = vst [vmem:[%s4 + $0x18] sm:$0xff] %v875
  %971 = vst [vmem:[%s4 + $0x20] sm:$0xff] %v876
  %972 = vst [vmem:[%s4 + $0x28] sm:$0xff] %v877
  %973 = vst [vmem:[%s4 + $0x30] sm:$0xff] %v878
  %974 = vst [vmem:[%s4 + $0x38] sm:$0xff] %v879
  %975 = vst [vmem:[%s4 + $0x40] sm:$0xff] %v880
  %976 = vst [vmem:[%s4 + $0x48] sm:$0xff] %v881
  %977 = vst [vmem:[%s4 + $0x50] sm:$0xff] %v882
  %978 = vst [vmem:[%s4 + $0x58] sm:$0xff] %v883
  %979 = vst [vmem:[%s4 + $0x60] sm:$0xff] %v884
  %980 = vst [vmem:[%s4 + $0x68] sm:$0xff] %v885
  %981 = vst [vmem:[%s4 + $0x70] sm:$0xff] %v886
  %982 = vst [vmem:[%s4 + $0x78] sm:$0xff] %v887
  %983 = vst [vmem:[%s4 + $0x80] sm:$0xff] %v888
  %984 = vst [vmem:[%s4 + $0x88] sm:$0xff] %v889
  %985 = vst [vmem:[%s4 + $0x90] sm:$0xff] %v890
  %986 = vst [vmem:[%s4 + $0x98] sm:$0xff] %v891
  %987 = vst [vmem:[%s4 + $0xa0] sm:$0xff] %v892
  %988 = vst [vmem:[%s4 + $0xa8] sm:$0xff] %v893
  %989 = vst [vmem:[%s4 + $0xb0] sm:$0xff] %v894
  %990 = vst [vmem:[%s4 + $0xb8] sm:$0xff] %v895
  %991 = vst [vmem:[%s4 + $0xc0] sm:$0xff] %v896
  %992 = vst [vmem:[%s4 + $0xc8] sm:$0xff] %v897
  %993 = vst [vmem:[%s4 + $0xd0] sm:$0xff] %v898
  %994 = vst [vmem:[%s4 + $0xd8] sm:$0xff] %v899
  %995 = vst [vmem:[%s4 + $0xe0] sm:$0xff] %v900
  %996 = vst [vmem:[%s4 + $0xe8] sm:$0xff] %v901
  %997 = vst [vmem:[%s4 + $0xf0] sm:$0xff] %v902
  %998 = vst [vmem:[%s4 + $0xf8] sm:$0xff] %v903
  %999 = vst [vmem:[%s4 + $0x100] sm:$0xff] %v904
  %1000 = vst [vmem:[%s4 + $0x108] sm:$0xff] %v905
  %1001 = vst [vmem:[%s4 + $0x110] sm:$0xff] %v906
  %1002 = vst [vmem:[%s4 + $0x118] sm:$0xff] %v907
  %1003 = vst [vmem:[%s4 + $0x120] sm:$0xff] %v908
  %1004 = vst [vmem:[%s4 + $0x128] sm:$0xff] %v909
  %1005 = vst [vmem:[%s4 + $0x130] sm:$0xff] %v910
  %1006 = vst [vmem:[%s4 + $0x138] sm:$0xff] %v911
  %1007 = vst [vmem:[%s4 + $0x140] sm:$0xff] %v912
  %1008 = vst [vmem:[%s4 + $0x148] sm:$0xff] %v913
  %1009 = vst [vmem:[%s4 + $0x150] sm:$0xff] %v914
  %1010 = vst [vmem:[%s4 + $0x158] sm:$0xff] %v915
  %1011 = vst [vmem:[%s4 + $0x160] sm:$0xff] %v916
  %1012 = vst [vmem:[%s4 + $0x168] sm:$0xff] %v917
  %1013 = vst [vmem:[%s4 + $0x170] sm:$0xff] %v918
  %1014 = vst [vmem:[%s4 + $0x178] sm:$0xff] %v919
  %1015 = vst [vmem:[%s4 + $0x180] sm:$0xff] %v920
  %1016 = vst [vmem:[%s4 + $0x188] sm:$0xff] %v921
  %1017 = vst [vmem:[%s4 + $0x190] sm:$0xff] %v922
  %1018 = vst [vmem:[%s4 + $0x198] sm:$0xff] %v923
  %1019 = vst [vmem:[%s4 + $0x1a0] sm:$0xff] %v924
  %1020 = vst [vmem:[%s4 + $0x1a8] sm:$0xff] %v925
  %1021 = vst [vmem:[%s4 + $0x1b0] sm:$0xff] %v926
  %1022 = vst [vmem:[%s4 + $0x1b8] sm:$0xff] %v927
  %1023 = vst [vmem:[%s4 + $0x1c0] sm:$0xff] %v928
  %1024 = vst [vmem:[%s4 + $0x1c8] sm:$0xff] %v929
  %1025 = vst [vmem:[%s4 + $0x1d0] sm:$0xff] %v930
  %1026 = vst [vmem:[%s4 + $0x1d8] sm:$0xff] %v931
  %1027 = vst [vmem:[%s4 + $0x1e0] sm:$0xff] %v932
  %1028 = vst [vmem:[%s4 + $0x1e8] sm:$0xff] %v933
  %1029 = vst [vmem:[%s4 + $0x1f0] sm:$0xff] %v934
  %1030 = vst [vmem:[%s4 + $0x1f8] sm:$0xff] %v935
  %1031 = vst [vmem:[%s4 + $0x200] sm:$0xff] %v936
  %1032 = vst [vmem:[%s4 + $0x208] sm:$0xff] %v937
  %1033 = vst [vmem:[%s4 + $0x210] sm:$0xff] %v938
  %1034 = vst [vmem:[%s4 + $0x218] sm:$0xff] %v939
  %1035 = vst [vmem:[%s4 + $0x220] sm:$0xff] %v940
  %1036 = vst [vmem:[%s4 + $0x228] sm:$0xff] %v941
  %1037 = vst [vmem:[%s4 + $0x230] sm:$0xff] %v942
  %1038 = vst [vmem:[%s4 + $0x238] sm:$0xff] %v943
  %1039 = vst [vmem:[%s4 + $0x240] sm:$0xff] %v944
  %1040 = vst [vmem:[%s4 + $0x248] sm:$0xff] %v945
  %1041 = vst [vmem:[%s4 + $0x250] sm:$0xff] %v946
  %1042 = vst [vmem:[%s4 + $0x258] sm:$0xff] %v947
  %1043 = vst [vmem:[%s4 + $0x260] sm:$0xff] %v948
  %1044 = vst [vmem:[%s4 + $0x268] sm:$0xff] %v949
  %1045 = vst [vmem:[%s4 + $0x270] sm:$0xff] %v950
  %1046 = vst [vmem:[%s4 + $0x278] sm:$0xff] %v951
  %1047 = vst [vmem:[%s4 + $0x280] sm:$0xff] %v952
  %1048 = vst [vmem:[%s4 + $0x288] sm:$0xff] %v953
  %1049 = vst [vmem:[%s4 + $0x290] sm:$0xff] %v954
  %1050 = vst [vmem:[%s4 + $0x298] sm:$0xff] %v955
  %1051 = vst [vmem:[%s4 + $0x2a0] sm:$0xff] %v956
  %1052 = vst [vmem:[%s4 + $0x2a8] sm:$0xff] %v957
  %1053 = vst [vmem:[%s4 + $0x2b0] sm:$0xff] %v958
  %1054 = vst [vmem:[%s4 + $0x2b8] sm:$0xff] %v959
  %1055 = vst [vmem:[%s4 + $0x2c0] sm:$0xff] %v960
  %1056 = vst [vmem:[%s4 + $0x2c8] sm:$0xff] %v961
  %1057 = vst [vmem:[%s4 + $0x2d0] sm:$0xff] %v962
  %1058 = vst [vmem:[%s4 + $0x2d8] sm:$0xff] %v963
  %1059 = vst [vmem:[%s4 + $0x2e0] sm:$0xff] %v964
  %1060 = vst [vmem:[%s4 + $0x2e8] sm:$0xff] %v965
  %1061 = vst [vmem:[%s4 + $0x2f0] sm:$0xff] %v966
  // Predicated region
  $region18: #{deep_double_sarsa_forward.4} parent=0 // pred_check
    _
  $region19: #{deep_double_sarsa_forward.4} parent=0 // pred_check_branch
    %1063 = sbr.rel (0) target = $region21
  $region20: #{deep_double_sarsa_forward.4} parent=0 // pred_region
    _
  $region21: #{deep_double_sarsa_forward.4} parent=0 // pred_fallthru
    _
  // Predicated region
  $region22: #{deep_double_sarsa_forward.4} parent=0 // pred_check
    _
  $region23: #{deep_double_sarsa_forward.4} parent=0 // pred_check_branch
    %1065 = sbr.rel (0) target = $region25
  $region24: #{deep_double_sarsa_forward.4} parent=0 // pred_region
    _
  $region25: #{deep_double_sarsa_forward.4} parent=0 // pred_fallthru
    _

// kernel: deep_double_sarsa_forward.5
$region0: #{deep_double_sarsa_forward.5}
  #allocation0 [shape = 'u32[]', space=smem, size = 0x4, offset = 0x4, fixed_abs, tag = 'smem constant byte address 0x4 - core index']
  #allocation1 [shape = 'u32[144,128]{1,0:T(1,128)}', space=vmem, size = 0x12000, scoped, tag = 'internal scratch']
  %s0 = inlined_call_operand.vmem [shape: f32[184,512], index: 0, kind: input, shape index: {}]
  %s1 = inlined_call_operand.vmem [shape: f32[512,128], index: 1, kind: input, shape index: {}]
  %s2 = inlined_call_operand.vmem [shape: f32[1,128], index: 2, kind: input, shape index: {}]
  %s3 = inlined_call_operand.vmem [shape: f32[1,128], index: 3, kind: input, shape index: {}]
  %s4 = inlined_call_operand.vmem [shape: f32[184,128], index: 4, kind: output, shape index: {}]
  %s5 = sld [smem:[#allocation0]]
  $region26: #{deep_double_sarsa_forward.5} parent=0
    _
  %s7 = ssub.s32 1, %s5
  %s8 = scalar_select 0, %s7, %s5
  // Predicated region
  $region2: #{deep_double_sarsa_forward.5} parent=0 // pred_check
    _
  $region3: #{deep_double_sarsa_forward.5} parent=0 // pred_check_branch
    %10 = sbr.rel (0) target = $region5
  $region4: #{deep_double_sarsa_forward.5} parent=0 // pred_region
    _
  $region5: #{deep_double_sarsa_forward.5} parent=0 // pred_fallthru
    _
  // Predicated region
  $region6: #{deep_double_sarsa_forward.5} parent=0 // pred_check
    _
  $region7: #{deep_double_sarsa_forward.5} parent=0 // pred_check_branch
    %12 = sbr.rel (0) target = $region9
  $region8: #{deep_double_sarsa_forward.5} parent=0 // pred_region
    _
  $region9: #{deep_double_sarsa_forward.5} parent=0 // pred_fallthru
    _
  // Predicated region
  $region10: #{deep_double_sarsa_forward.5} parent=0 // pred_check
    _
  $region11: #{deep_double_sarsa_forward.5} parent=0 // pred_check_branch
    %14 = sbr.rel (0) target = $region13
  $region12: #{deep_double_sarsa_forward.5} parent=0 // pred_region
    _
  $region13: #{deep_double_sarsa_forward.5} parent=0 // pred_fallthru
    _
  // Predicated region
  $region14: #{deep_double_sarsa_forward.5} parent=0 // pred_check
    _
  $region15: #{deep_double_sarsa_forward.5} parent=0 // pred_check_branch
    %16 = sbr.rel (0) target = $region17
  $region16: #{deep_double_sarsa_forward.5} parent=0 // pred_region
    _
  $region17: #{deep_double_sarsa_forward.5} parent=0 // pred_fallthru
    _
  %v17 = vld [vmem:[%s0] sm:$0xff]
  %v18 = vld [vmem:[%s0 + $0x8] sm:$0xff]
  %v19 = vld [vmem:[%s0 + $0x10] sm:$0xff]
  %v20 = vld [vmem:[%s0 + $0x18] sm:$0xff]
  %v21 = vld [vmem:[%s0 + $0x20] sm:$0xff]
  %v22 = vld [vmem:[%s0 + $0x28] sm:$0xff]
  %v23 = vld [vmem:[%s0 + $0x30] sm:$0xff]
  %v24 = vld [vmem:[%s0 + $0x38] sm:$0xff]
  %v25 = vld [vmem:[%s0 + $0x40] sm:$0xff]
  %v26 = vld [vmem:[%s0 + $0x48] sm:$0xff]
  %v27 = vld [vmem:[%s0 + $0x50] sm:$0xff]
  %v28 = vld [vmem:[%s0 + $0x58] sm:$0xff]
  %v29 = vld [vmem:[%s0 + $0x60] sm:$0xff]
  %v30 = vld [vmem:[%s0 + $0x68] sm:$0xff]
  %v31 = vld [vmem:[%s0 + $0x70] sm:$0xff]
  %v32 = vld [vmem:[%s0 + $0x78] sm:$0xff]
  %v33 = vld [vmem:[%s0 + $0x80] sm:$0xff]
  %v34 = vld [vmem:[%s0 + $0x88] sm:$0xff]
  %v35 = vld [vmem:[%s0 + $0x90] sm:$0xff]
  %v36 = vld [vmem:[%s0 + $0x98] sm:$0xff]
  %v37 = vld [vmem:[%s0 + $0xa0] sm:$0xff]
  %v38 = vld [vmem:[%s0 + $0xa8] sm:$0xff]
  %v39 = vld [vmem:[%s0 + $0xb0] sm:$0xff]
  %v40 = vld [vmem:[%s0 + $0xb8] sm:$0xff]
  %v41 = vld [vmem:[%s0 + $0xc0] sm:$0xff]
  %v42 = vld [vmem:[%s0 + $0xc8] sm:$0xff]
  %v43 = vld [vmem:[%s0 + $0xd0] sm:$0xff]
  %v44 = vld [vmem:[%s0 + $0xd8] sm:$0xff]
  %v45 = vld [vmem:[%s0 + $0xe0] sm:$0xff]
  %v46 = vld [vmem:[%s0 + $0xe8] sm:$0xff]
  %v47 = vld [vmem:[%s0 + $0xf0] sm:$0xff]
  %v48 = vld [vmem:[%s0 + $0xf8] sm:$0xff]
  %v49 = vld [vmem:[%s0 + $0x100] sm:$0xff]
  %v50 = vld [vmem:[%s0 + $0x108] sm:$0xff]
  %v51 = vld [vmem:[%s0 + $0x110] sm:$0xff]
  %v52 = vld [vmem:[%s0 + $0x118] sm:$0xff]
  %v53 = vld [vmem:[%s0 + $0x120] sm:$0xff]
  %v54 = vld [vmem:[%s0 + $0x128] sm:$0xff]
  %v55 = vld [vmem:[%s0 + $0x130] sm:$0xff]
  %v56 = vld [vmem:[%s0 + $0x138] sm:$0xff]
  %v57 = vld [vmem:[%s0 + $0x140] sm:$0xff]
  %v58 = vld [vmem:[%s0 + $0x148] sm:$0xff]
  %v59 = vld [vmem:[%s0 + $0x150] sm:$0xff]
  %v60 = vld [vmem:[%s0 + $0x158] sm:$0xff]
  %v61 = vld [vmem:[%s0 + $0x160] sm:$0xff]
  %v62 = vld [vmem:[%s0 + $0x168] sm:$0xff]
  %v63 = vld [vmem:[%s0 + $0x170] sm:$0xff]
  %v64 = vld [vmem:[%s0 + $0x178] sm:$0xff]
  %v65 = vld [vmem:[%s0 + $0x180] sm:$0xff]
  %v66 = vld [vmem:[%s0 + $0x188] sm:$0xff]
  %v67 = vld [vmem:[%s0 + $0x190] sm:$0xff]
  %v68 = vld [vmem:[%s0 + $0x198] sm:$0xff]
  %v69 = vld [vmem:[%s0 + $0x1a0] sm:$0xff]
  %v70 = vld [vmem:[%s0 + $0x1a8] sm:$0xff]
  %v71 = vld [vmem:[%s0 + $0x1b0] sm:$0xff]
  %v72 = vld [vmem:[%s0 + $0x1b8] sm:$0xff]
  %v73 = vld [vmem:[%s0 + $0x1c0] sm:$0xff]
  %v74 = vld [vmem:[%s0 + $0x1c8] sm:$0xff]
  %v75 = vld [vmem:[%s0 + $0x1d0] sm:$0xff]
  %v76 = vld [vmem:[%s0 + $0x1d8] sm:$0xff]
  %v77 = vld [vmem:[%s0 + $0x1e0] sm:$0xff]
  %v78 = vld [vmem:[%s0 + $0x1e8] sm:$0xff]
  %v79 = vld [vmem:[%s0 + $0x1f0] sm:$0xff]
  %v80 = vld [vmem:[%s0 + $0x1f8] sm:$0xff]
  %v81 = vld [vmem:[%s0 + $0x200] sm:$0xff]
  %v82 = vld [vmem:[%s0 + $0x208] sm:$0xff]
  %v83 = vld [vmem:[%s0 + $0x210] sm:$0xff]
  %v84 = vld [vmem:[%s0 + $0x218] sm:$0xff]
  %v85 = vld [vmem:[%s0 + $0x220] sm:$0xff]
  %v86 = vld [vmem:[%s0 + $0x228] sm:$0xff]
  %v87 = vld [vmem:[%s0 + $0x230] sm:$0xff]
  %v88 = vld [vmem:[%s0 + $0x238] sm:$0xff]
  %v89 = vld [vmem:[%s0 + $0x240] sm:$0xff]
  %v90 = vld [vmem:[%s0 + $0x248] sm:$0xff]
  %v91 = vld [vmem:[%s0 + $0x250] sm:$0xff]
  %v92 = vld [vmem:[%s0 + $0x258] sm:$0xff]
  %v93 = vld [vmem:[%s0 + $0x260] sm:$0xff]
  %v94 = vld [vmem:[%s0 + $0x268] sm:$0xff]
  %v95 = vld [vmem:[%s0 + $0x270] sm:$0xff]
  %v96 = vld [vmem:[%s0 + $0x278] sm:$0xff]
  %v97 = vld [vmem:[%s0 + $0x280] sm:$0xff]
  %v98 = vld [vmem:[%s0 + $0x288] sm:$0xff]
  %v99 = vld [vmem:[%s0 + $0x290] sm:$0xff]
  %v100 = vld [vmem:[%s0 + $0x298] sm:$0xff]
  %v101 = vld [vmem:[%s0 + $0x2a0] sm:$0xff]
  %v102 = vld [vmem:[%s0 + $0x2a8] sm:$0xff]
  %v103 = vld [vmem:[%s0 + $0x2b0] sm:$0xff]
  %v104 = vld [vmem:[%s0 + $0x2b8] sm:$0xff]
  %v105 = vld [vmem:[%s0 + $0x2c0] sm:$0xff]
  %v106 = vld [vmem:[%s0 + $0x2c8] sm:$0xff]
  %v107 = vld [vmem:[%s0 + $0x2d0] sm:$0xff]
  %v108 = vld [vmem:[%s0 + $0x2d8] sm:$0xff]
  %v109 = vld [vmem:[%s1] sm:$0xff]
  %v110 = vld [vmem:[%s1 + $0x8] sm:$0xff]
  %v111 = vld [vmem:[%s1 + $0x10] sm:$0xff]
  %v112 = vld [vmem:[%s1 + $0x18] sm:$0xff]
  %v113 = vld [vmem:[%s1 + $0x20] sm:$0xff]
  %v114 = vld [vmem:[%s1 + $0x28] sm:$0xff]
  %v115 = vld [vmem:[%s1 + $0x30] sm:$0xff]
  %v116 = vld [vmem:[%s1 + $0x38] sm:$0xff]
  %v117 = vld [vmem:[%s1 + $0x40] sm:$0xff]
  %v118 = vld [vmem:[%s1 + $0x48] sm:$0xff]
  %v119 = vld [vmem:[%s1 + $0x50] sm:$0xff]
  %v120 = vld [vmem:[%s1 + $0x58] sm:$0xff]
  %v121 = vld [vmem:[%s1 + $0x60] sm:$0xff]
  %v122 = vld [vmem:[%s1 + $0x68] sm:$0xff]
  %v123 = vld [vmem:[%s1 + $0x70] sm:$0xff]
  %v124 = vld [vmem:[%s1 + $0x78] sm:$0xff]
  %v125 = vld [vmem:[%s1 + $0x80] sm:$0xff]
  %v126 = vld [vmem:[%s1 + $0x88] sm:$0xff]
  %v127 = vld [vmem:[%s1 + $0x90] sm:$0xff]
  %v128 = vld [vmem:[%s1 + $0x98] sm:$0xff]
  %v129 = vld [vmem:[%s1 + $0xa0] sm:$0xff]
  %v130 = vld [vmem:[%s1 + $0xa8] sm:$0xff]
  %v131 = vld [vmem:[%s1 + $0xb0] sm:$0xff]
  %v132 = vld [vmem:[%s1 + $0xb8] sm:$0xff]
  %v133 = vld [vmem:[%s1 + $0xc0] sm:$0xff]
  %v134 = vld [vmem:[%s1 + $0xc8] sm:$0xff]
  %v135 = vld [vmem:[%s1 + $0xd0] sm:$0xff]
  %v136 = vld [vmem:[%s1 + $0xd8] sm:$0xff]
  %v137 = vld [vmem:[%s1 + $0xe0] sm:$0xff]
  %v138 = vld [vmem:[%s1 + $0xe8] sm:$0xff]
  %v139 = vld [vmem:[%s1 + $0xf0] sm:$0xff]
  %v140 = vld [vmem:[%s1 + $0xf8] sm:$0xff]
  %v141 = vld [vmem:[%s1 + $0x100] sm:$0xff]
  %v142 = vld [vmem:[%s1 + $0x108] sm:$0xff]
  %v143 = vld [vmem:[%s1 + $0x110] sm:$0xff]
  %v144 = vld [vmem:[%s1 + $0x118] sm:$0xff]
  %v145 = vld [vmem:[%s1 + $0x120] sm:$0xff]
  %v146 = vld [vmem:[%s1 + $0x128] sm:$0xff]
  %v147 = vld [vmem:[%s1 + $0x130] sm:$0xff]
  %v148 = vld [vmem:[%s1 + $0x138] sm:$0xff]
  %v149 = vld [vmem:[%s1 + $0x140] sm:$0xff]
  %v150 = vld [vmem:[%s1 + $0x148] sm:$0xff]
  %v151 = vld [vmem:[%s1 + $0x150] sm:$0xff]
  %v152 = vld [vmem:[%s1 + $0x158] sm:$0xff]
  %v153 = vld [vmem:[%s1 + $0x160] sm:$0xff]
  %v154 = vld [vmem:[%s1 + $0x168] sm:$0xff]
  %v155 = vld [vmem:[%s1 + $0x170] sm:$0xff]
  %v156 = vld [vmem:[%s1 + $0x178] sm:$0xff]
  %v157 = vld [vmem:[%s1 + $0x180] sm:$0xff]
  %v158 = vld [vmem:[%s1 + $0x188] sm:$0xff]
  %v159 = vld [vmem:[%s1 + $0x190] sm:$0xff]
  %v160 = vld [vmem:[%s1 + $0x198] sm:$0xff]
  %v161 = vld [vmem:[%s1 + $0x1a0] sm:$0xff]
  %v162 = vld [vmem:[%s1 + $0x1a8] sm:$0xff]
  %v163 = vld [vmem:[%s1 + $0x1b0] sm:$0xff]
  %v164 = vld [vmem:[%s1 + $0x1b8] sm:$0xff]
  %v165 = vld [vmem:[%s1 + $0x1c0] sm:$0xff]
  %v166 = vld [vmem:[%s1 + $0x1c8] sm:$0xff]
  %v167 = vld [vmem:[%s1 + $0x1d0] sm:$0xff]
  %v168 = vld [vmem:[%s1 + $0x1d8] sm:$0xff]
  %v169 = vld [vmem:[%s1 + $0x1e0] sm:$0xff]
  %v170 = vld [vmem:[%s1 + $0x1e8] sm:$0xff]
  %v171 = vld [vmem:[%s1 + $0x1f0] sm:$0xff]
  %v172 = vld [vmem:[%s1 + $0x1f8] sm:$0xff]
  %173 = vmatprep.subr.mxu0 0.0
  %174 = vmatpush1.msra.mxu0 %v109
  %175 = vmatprep.subr.mxu0 0.0
  %176 = vmatpush1.msra.mxu0 %v110
  %177 = vmatprep.subr.mxu0 0.0
  %178 = vmatpush1.msra.mxu0 %v111
  %179 = vmatprep.subr.mxu0 0.0
  %180 = vmatpush1.msra.mxu0 %v112
  %181 = vmatprep.subr.mxu0 0.0
  %182 = vmatpush1.msra.mxu0 %v113
  %183 = vmatprep.subr.mxu0 0.0
  %184 = vmatpush1.msra.mxu0 %v114
  %185 = vmatprep.subr.mxu0 0.0
  %186 = vmatpush1.msra.mxu0 %v115
  %187 = vmatprep.subr.mxu0 0.0
  %188 = vmatpush1.msra.mxu0 %v116
  %189 = vmatprep.subr.mxu0 0.0
  %190 = vmatpush1.msra.mxu0 %v117
  %191 = vmatprep.subr.mxu0 0.0
  %192 = vmatpush1.msra.mxu0 %v118
  %193 = vmatprep.subr.mxu0 0.0
  %194 = vmatpush1.msra.mxu0 %v119
  %195 = vmatprep.subr.mxu0 0.0
  %196 = vmatpush1.msra.mxu0 %v120
  %197 = vmatprep.subr.mxu0 0.0
  %198 = vmatpush1.msra.mxu0 %v121
  %199 = vmatprep.subr.mxu0 0.0
  %200 = vmatpush1.msra.mxu0 %v122
  %201 = vmatprep.subr.mxu0 0.0
  %202 = vmatpush1.msra.mxu0 %v123
  %203 = vmatprep.subr.mxu0 0.0
  %204 = vmatpush1.msra.mxu0 %v124
  %205 = vmatprep.subr.mxu0 0.0
  %206 = vmatpush1.msra.mxu0 %v125
  %207 = vmatprep.subr.mxu0 0.0
  %208 = vmatpush1.msra.mxu0 %v126
  %209 = vmatprep.subr.mxu0 0.0
  %210 = vmatpush1.msra.mxu0 %v127
  %211 = vmatprep.subr.mxu0 0.0
  %212 = vmatpush1.msra.mxu0 %v128
  %213 = vmatprep.subr.mxu0 0.0
  %214 = vmatpush1.msra.mxu0 %v129
  %215 = vmatprep.subr.mxu0 0.0
  %216 = vmatpush1.msra.mxu0 %v130
  %217 = vmatprep.subr.mxu0 0.0
  %218 = vmatpush1.msra.mxu0 %v131
  %219 = vmatprep.subr.mxu0 0.0
  %220 = vmatpush1.msra.mxu0 %v132
  %221 = vmatprep.subr.mxu0 0.0
  %222 = vmatpush1.msra.mxu0 %v133
  %223 = vmatprep.subr.mxu0 0.0
  %224 = vmatpush1.msra.mxu0 %v134
  %225 = vmatprep.subr.mxu0 0.0
  %226 = vmatpush1.msra.mxu0 %v135
  %227 = vmatprep.subr.mxu0 0.0
  %228 = vmatpush1.msra.mxu0 %v136
  %229 = vmatprep.subr.mxu0 0.0
  %230 = vmatpush1.msra.mxu0 %v137
  %231 = vmatprep.subr.mxu0 0.0
  %232 = vmatpush1.msra.mxu0 %v138
  %233 = vmatprep.subr.mxu0 0.0
  %234 = vmatpush1.msra.mxu0 %v139
  %235 = vmatprep.subr.mxu0 0.0
  %236 = vmatpush1.msra.mxu0 %v140
  %237 = vmatprep.mubr.f32.mxu0 %v18
  %238 = vmatmul.mubr.f32.gmra.mrb[0].mxu0 %v17
  %v239 = vpop.f32.mrb[0].mxu0
  %v240 = vadd.f32 0.0, %v239
  %v241 = vpop.f32.mrb[0].mxu0
  %242 = vmatprep.mubr.f32.mxu0 %v22
  %243 = vmatmul.mubr.f32.gmra.mrb[0].mxu0 %v21
  %v244 = vpop.f32.mrb[0].mxu0
  %v245 = vadd.f32 0.0, %v244
  %v246 = vpop.f32.mrb[0].mxu0
  %247 = vmatprep.mubr.f32.mxu0 %v26
  %248 = vmatmul.mubr.f32.gmra.mrb[0].mxu0 %v25
  %v249 = vpop.f32.mrb[0].mxu0
  %v250 = vadd.f32 0.0, %v249
  %v251 = vpop.f32.mrb[0].mxu0
  %252 = vmatprep.mubr.f32.mxu0 %v30
  %253 = vmatmul.mubr.f32.gmra.mrb[0].mxu0 %v29
  %v254 = vpop.f32.mrb[0].mxu0
  %v255 = vadd.f32 0.0, %v254
  %v256 = vpop.f32.mrb[0].mxu0
  %257 = vmatprep.mubr.f32.mxu0 %v34
  %258 = vmatmul.mubr.f32.gmra.mrb[0].mxu0 %v33
  %v259 = vpop.f32.mrb[0].mxu0
  %v260 = vadd.f32 0.0, %v259
  %v261 = vpop.f32.mrb[0].mxu0
  %262 = vmatprep.mubr.f32.mxu0 %v38
  %263 = vmatmul.mubr.f32.gmra.mrb[0].mxu0 %v37
  %v264 = vpop.f32.mrb[0].mxu0
  %v265 = vadd.f32 0.0, %v264
  %v266 = vpop.f32.mrb[0].mxu0
  %267 = vmatprep.mubr.f32.mxu0 %v42
  %268 = vmatmul.mubr.f32.gmra.mrb[0].mxu0 %v41
  %v269 = vpop.f32.mrb[0].mxu0
  %v270 = vadd.f32 0.0, %v269
  %v271 = vpop.f32.mrb[0].mxu0
  %272 = vmatprep.mubr.f32.mxu0 %v46
  %273 = vmatmul.mubr.f32.gmra.mrb[0].mxu0 %v45
  %v274 = vpop.f32.mrb[0].mxu0
  %v275 = vadd.f32 0.0, %v274
  %v276 = vpop.f32.mrb[0].mxu0
  %277 = vmatprep.mubr.f32.mxu0 %v50
  %278 = vmatmul.mubr.f32.gmra.mrb[0].mxu0 %v49
  %v279 = vpop.f32.mrb[0].mxu0
  %v280 = vadd.f32 0.0, %v279
  %v281 = vpop.f32.mrb[0].mxu0
  %282 = vmatprep.mubr.f32.mxu0 %v54
  %283 = vmatmul.mubr.f32.gmra.mrb[0].mxu0 %v53
  %v284 = vpop.f32.mrb[0].mxu0
  %v285 = vadd.f32 0.0, %v284
  %v286 = vpop.f32.mrb[0].mxu0
  %287 = vmatprep.mubr.f32.mxu0 %v58
  %288 = vmatmul.mubr.f32.gmra.mrb[0].mxu0 %v57
  %v289 = vpop.f32.mrb[0].mxu0
  %v290 = vadd.f32 0.0, %v289
  %v291 = vpop.f32.mrb[0].mxu0
  %292 = vmatprep.mubr.f32.mxu0 %v62
  %293 = vmatmul.mubr.f32.gmra.mrb[0].mxu0 %v61
  %v294 = vpop.f32.mrb[0].mxu0
  %v295 = vadd.f32 0.0, %v294
  %v296 = vpop.f32.mrb[0].mxu0
  %297 = vmatprep.mubr.f32.mxu0 %v66
  %298 = vmatmul.mubr.f32.gmra.mrb[0].mxu0 %v65
  %v299 = vpop.f32.mrb[0].mxu0
  %v300 = vadd.f32 0.0, %v299
  %v301 = vpop.f32.mrb[0].mxu0
  %302 = vmatprep.mubr.f32.mxu0 %v70
  %303 = vmatmul.mubr.f32.gmra.mrb[0].mxu0 %v69
  %v304 = vpop.f32.mrb[0].mxu0
  %v305 = vadd.f32 0.0, %v304
  %v306 = vpop.f32.mrb[0].mxu0
  %307 = vmatprep.mubr.f32.mxu0 %v74
  %308 = vmatmul.mubr.f32.gmra.mrb[0].mxu0 %v73
  %v309 = vpop.f32.mrb[0].mxu0
  %v310 = vadd.f32 0.0, %v309
  %v311 = vpop.f32.mrb[0].mxu0
  %312 = vmatprep.mubr.f32.mxu0 %v78
  %313 = vmatmul.mubr.f32.gmra.mrb[0].mxu0 %v77
  %v314 = vpop.f32.mrb[0].mxu0
  %v315 = vadd.f32 0.0, %v314
  %v316 = vpop.f32.mrb[0].mxu0
  %317 = vmatprep.mubr.f32.mxu0 %v82
  %318 = vmatmul.mubr.f32.gmra.mrb[0].mxu0 %v81
  %v319 = vpop.f32.mrb[0].mxu0
  %v320 = vadd.f32 0.0, %v319
  %v321 = vpop.f32.mrb[0].mxu0
  %322 = vmatprep.mubr.f32.mxu0 %v86
  %323 = vmatmul.mubr.f32.gmra.mrb[0].mxu0 %v85
  %v324 = vpop.f32.mrb[0].mxu0
  %v325 = vadd.f32 0.0, %v324
  %v326 = vpop.f32.mrb[0].mxu0
  %327 = vmatprep.mubr.f32.mxu0 %v90
  %328 = vmatmul.mubr.f32.gmra.mrb[0].mxu0 %v89
  %v329 = vpop.f32.mrb[0].mxu0
  %v330 = vadd.f32 0.0, %v329
  %v331 = vpop.f32.mrb[0].mxu0
  %332 = vmatprep.mubr.f32.mxu0 %v94
  %333 = vmatmul.mubr.f32.gmra.mrb[0].mxu0 %v93
  %v334 = vpop.f32.mrb[0].mxu0
  %v335 = vadd.f32 0.0, %v334
  %v336 = vpop.f32.mrb[0].mxu0
  %337 = vmatprep.mubr.f32.mxu0 %v98
  %338 = vmatmul.mubr.f32.gmra.mrb[0].mxu0 %v97
  %v339 = vpop.f32.mrb[0].mxu0
  %v340 = vadd.f32 0.0, %v339
  %v341 = vpop.f32.mrb[0].mxu0
  %342 = vmatprep.mubr.f32.mxu0 %v102
  %343 = vmatmul.mubr.f32.gmra.mrb[0].mxu0 %v101
  %v344 = vpop.f32.mrb[0].mxu0
  %v345 = vadd.f32 0.0, %v344
  %v346 = vpop.f32.mrb[0].mxu0
  %347 = vmatprep.mubr.f32.mxu0 %v106
  %348 = vmatmul.mubr.f32.gmra.mrb[0].mxu0 %v105
  %v349 = vpop.f32.mrb[0].mxu0
  %v350 = vadd.f32 0.0, %v349
  %v351 = vpop.f32.mrb[0].mxu0
  %352 = vdwg.mxu0
  %353 = vmatprep.subr.mxu0 0.0
  %354 = vmatpush1.msra.mxu0 %v141
  %355 = vmatprep.subr.mxu0 0.0
  %356 = vmatpush1.msra.mxu0 %v142
  %357 = vmatprep.subr.mxu0 0.0
  %358 = vmatpush1.msra.mxu0 %v143
  %359 = vmatprep.subr.mxu0 0.0
  %360 = vmatpush1.msra.mxu0 %v144
  %361 = vmatprep.subr.mxu0 0.0
  %362 = vmatpush1.msra.mxu0 %v145
  %363 = vmatprep.subr.mxu0 0.0
  %364 = vmatpush1.msra.mxu0 %v146
  %365 = vmatprep.subr.mxu0 0.0
  %366 = vmatpush1.msra.mxu0 %v147
  %367 = vmatprep.subr.mxu0 0.0
  %368 = vmatpush1.msra.mxu0 %v148
  %369 = vmatprep.subr.mxu0 0.0
  %370 = vmatpush1.msra.mxu0 %v149
  %371 = vmatprep.subr.mxu0 0.0
  %372 = vmatpush1.msra.mxu0 %v150
  %373 = vmatprep.subr.mxu0 0.0
  %374 = vmatpush1.msra.mxu0 %v151
  %375 = vmatprep.subr.mxu0 0.0
  %376 = vmatpush1.msra.mxu0 %v152
  %377 = vmatprep.subr.mxu0 0.0
  %378 = vmatpush1.msra.mxu0 %v153
  %379 = vmatprep.subr.mxu0 0.0
  %380 = vmatpush1.msra.mxu0 %v154
  %381 = vmatprep.subr.mxu0 0.0
  %382 = vmatpush1.msra.mxu0 %v155
  %383 = vmatprep.subr.mxu0 0.0
  %384 = vmatpush1.msra.mxu0 %v156
  %385 = vmatprep.subr.mxu0 0.0
  %386 = vmatpush1.msra.mxu0 %v157
  %387 = vmatprep.subr.mxu0 0.0
  %388 = vmatpush1.msra.mxu0 %v158
  %389 = vmatprep.subr.mxu0 0.0
  %390 = vmatpush1.msra.mxu0 %v159
  %391 = vmatprep.subr.mxu0 0.0
  %392 = vmatpush1.msra.mxu0 %v160
  %393 = vmatprep.subr.mxu0 0.0
  %394 = vmatpush1.msra.mxu0 %v161
  %395 = vmatprep.subr.mxu0 0.0
  %396 = vmatpush1.msra.mxu0 %v162
  %397 = vmatprep.subr.mxu0 0.0
  %398 = vmatpush1.msra.mxu0 %v163
  %399 = vmatprep.subr.mxu0 0.0
  %400 = vmatpush1.msra.mxu0 %v164
  %401 = vmatprep.subr.mxu0 0.0
  %402 = vmatpush1.msra.mxu0 %v165
  %403 = vmatprep.subr.mxu0 0.0
  %404 = vmatpush1.msra.mxu0 %v166
  %405 = vmatprep.subr.mxu0 0.0
  %406 = vmatpush1.msra.mxu0 %v167
  %407 = vmatprep.subr.mxu0 0.0
  %408 = vmatpush1.msra.mxu0 %v168
  %409 = vmatprep.subr.mxu0 0.0
  %410 = vmatpush1.msra.mxu0 %v169
  %411 = vmatprep.subr.mxu0 0.0
  %412 = vmatpush1.msra.mxu0 %v170
  %413 = vmatprep.subr.mxu0 0.0
  %414 = vmatpush1.msra.mxu0 %v171
  %415 = vmatprep.subr.mxu0 0.0
  %416 = vmatpush1.msra.mxu0 %v172
  %417 = vmatprep.mubr.f32.mxu0 %v20
  %418 = vmatmul.mubr.f32.gmra.mrb[0].mxu0 %v19
  %v419 = vpop.f32.mrb[0].mxu0
  %v420 = vadd.f32 %v240, %v419
  %v421 = vpop.f32.mrb[0].mxu0
  %422 = vmatprep.mubr.f32.mxu0 %v24
  %423 = vmatmul.mubr.f32.gmra.mrb[0].mxu0 %v23
  %v424 = vpop.f32.mrb[0].mxu0
  %v425 = vadd.f32 %v245, %v424
  %v426 = vpop.f32.mrb[0].mxu0
  %427 = vmatprep.mubr.f32.mxu0 %v28
  %428 = vmatmul.mubr.f32.gmra.mrb[0].mxu0 %v27
  %v429 = vpop.f32.mrb[0].mxu0
  %v430 = vadd.f32 %v250, %v429
  %v431 = vpop.f32.mrb[0].mxu0
  %432 = vmatprep.mubr.f32.mxu0 %v32
  %433 = vmatmul.mubr.f32.gmra.mrb[0].mxu0 %v31
  %v434 = vpop.f32.mrb[0].mxu0
  %v435 = vadd.f32 %v255, %v434
  %v436 = vpop.f32.mrb[0].mxu0
  %437 = vmatprep.mubr.f32.mxu0 %v36
  %438 = vmatmul.mubr.f32.gmra.mrb[0].mxu0 %v35
  %v439 = vpop.f32.mrb[0].mxu0
  %v440 = vadd.f32 %v260, %v439
  %v441 = vpop.f32.mrb[0].mxu0
  %442 = vmatprep.mubr.f32.mxu0 %v40
  %443 = vmatmul.mubr.f32.gmra.mrb[0].mxu0 %v39
  %v444 = vpop.f32.mrb[0].mxu0
  %v445 = vadd.f32 %v265, %v444
  %v446 = vpop.f32.mrb[0].mxu0
  %447 = vmatprep.mubr.f32.mxu0 %v44
  %448 = vmatmul.mubr.f32.gmra.mrb[0].mxu0 %v43
  %v449 = vpop.f32.mrb[0].mxu0
  %v450 = vadd.f32 %v270, %v449
  %v451 = vpop.f32.mrb[0].mxu0
  %452 = vmatprep.mubr.f32.mxu0 %v48
  %453 = vmatmul.mubr.f32.gmra.mrb[0].mxu0 %v47
  %v454 = vpop.f32.mrb[0].mxu0
  %v455 = vadd.f32 %v275, %v454
  %v456 = vpop.f32.mrb[0].mxu0
  %457 = vmatprep.mubr.f32.mxu0 %v52
  %458 = vmatmul.mubr.f32.gmra.mrb[0].mxu0 %v51
  %v459 = vpop.f32.mrb[0].mxu0
  %v460 = vadd.f32 %v280, %v459
  %v461 = vpop.f32.mrb[0].mxu0
  %462 = vmatprep.mubr.f32.mxu0 %v56
  %463 = vmatmul.mubr.f32.gmra.mrb[0].mxu0 %v55
  %v464 = vpop.f32.mrb[0].mxu0
  %v465 = vadd.f32 %v285, %v464
  %v466 = vpop.f32.mrb[0].mxu0
  %467 = vmatprep.mubr.f32.mxu0 %v60
  %468 = vmatmul.mubr.f32.gmra.mrb[0].mxu0 %v59
  %v469 = vpop.f32.mrb[0].mxu0
  %v470 = vadd.f32 %v290, %v469
  %v471 = vpop.f32.mrb[0].mxu0
  %472 = vmatprep.mubr.f32.mxu0 %v64
  %473 = vmatmul.mubr.f32.gmra.mrb[0].mxu0 %v63
  %v474 = vpop.f32.mrb[0].mxu0
  %v475 = vadd.f32 %v295, %v474
  %v476 = vpop.f32.mrb[0].mxu0
  %477 = vmatprep.mubr.f32.mxu0 %v68
  %478 = vmatmul.mubr.f32.gmra.mrb[0].mxu0 %v67
  %v479 = vpop.f32.mrb[0].mxu0
  %v480 = vadd.f32 %v300, %v479
  %v481 = vpop.f32.mrb[0].mxu0
  %482 = vmatprep.mubr.f32.mxu0 %v72
  %483 = vmatmul.mubr.f32.gmra.mrb[0].mxu0 %v71
  %v484 = vpop.f32.mrb[0].mxu0
  %v485 = vadd.f32 %v305, %v484
  %v486 = vpop.f32.mrb[0].mxu0
  %487 = vmatprep.mubr.f32.mxu0 %v76
  %488 = vmatmul.mubr.f32.gmra.mrb[0].mxu0 %v75
  %v489 = vpop.f32.mrb[0].mxu0
  %v490 = vadd.f32 %v310, %v489
  %v491 = vpop.f32.mrb[0].mxu0
  %492 = vmatprep.mubr.f32.mxu0 %v80
  %493 = vmatmul.mubr.f32.gmra.mrb[0].mxu0 %v79
  %v494 = vpop.f32.mrb[0].mxu0
  %v495 = vadd.f32 %v315, %v494
  %v496 = vpop.f32.mrb[0].mxu0
  %497 = vmatprep.mubr.f32.mxu0 %v84
  %498 = vmatmul.mubr.f32.gmra.mrb[0].mxu0 %v83
  %v499 = vpop.f32.mrb[0].mxu0
  %v500 = vadd.f32 %v320, %v499
  %v501 = vpop.f32.mrb[0].mxu0
  %502 = vmatprep.mubr.f32.mxu0 %v88
  %503 = vmatmul.mubr.f32.gmra.mrb[0].mxu0 %v87
  %v504 = vpop.f32.mrb[0].mxu0
  %v505 = vadd.f32 %v325, %v504
  %v506 = vpop.f32.mrb[0].mxu0
  %507 = vmatprep.mubr.f32.mxu0 %v92
  %508 = vmatmul.mubr.f32.gmra.mrb[0].mxu0 %v91
  %v509 = vpop.f32.mrb[0].mxu0
  %v510 = vadd.f32 %v330, %v509
  %v511 = vpop.f32.mrb[0].mxu0
  %512 = vmatprep.mubr.f32.mxu0 %v96
  %513 = vmatmul.mubr.f32.gmra.mrb[0].mxu0 %v95
  %v514 = vpop.f32.mrb[0].mxu0
  %v515 = vadd.f32 %v335, %v514
  %v516 = vpop.f32.mrb[0].mxu0
  %517 = vmatprep.mubr.f32.mxu0 %v100
  %518 = vmatmul.mubr.f32.gmra.mrb[0].mxu0 %v99
  %v519 = vpop.f32.mrb[0].mxu0
  %v520 = vadd.f32 %v340, %v519
  %v521 = vpop.f32.mrb[0].mxu0
  %522 = vmatprep.mubr.f32.mxu0 %v104
  %523 = vmatmul.mubr.f32.gmra.mrb[0].mxu0 %v103
  %v524 = vpop.f32.mrb[0].mxu0
  %v525 = vadd.f32 %v345, %v524
  %v526 = vpop.f32.mrb[0].mxu0
  %527 = vmatprep.mubr.f32.mxu0 %v108
  %528 = vmatmul.mubr.f32.gmra.mrb[0].mxu0 %v107
  %v529 = vpop.f32.mrb[0].mxu0
  %v530 = vadd.f32 %v350, %v529
  %v531 = vpop.f32.mrb[0].mxu0
  %532 = vdwg.mxu0
  %v533 = vld [vmem:[%s2] sm:$0x1]
  %v535 = vlaneseq
  %v536 = vshrl.u32 %v535, 7
  %v537 = vsub.s32 0, %v536
  %v538 = vrot.slane %v533, %v537
  %v540 = vmul.f32 %v420, %v538
  %v541 = vmul.f32 %v425, %v538
  %v542 = vmul.f32 %v430, %v538
  %v543 = vmul.f32 %v435, %v538
  %v544 = vmul.f32 %v440, %v538
  %v545 = vmul.f32 %v445, %v538
  %v546 = vmul.f32 %v450, %v538
  %v547 = vmul.f32 %v455, %v538
  %v548 = vmul.f32 %v460, %v538
  %v549 = vmul.f32 %v465, %v538
  %v550 = vmul.f32 %v470, %v538
  %v551 = vmul.f32 %v475, %v538
  %v552 = vmul.f32 %v480, %v538
  %v553 = vmul.f32 %v485, %v538
  %v554 = vmul.f32 %v490, %v538
  %v555 = vmul.f32 %v495, %v538
  %v556 = vmul.f32 %v500, %v538
  %v557 = vmul.f32 %v505, %v538
  %v558 = vmul.f32 %v510, %v538
  %v559 = vmul.f32 %v515, %v538
  %v560 = vmul.f32 %v520, %v538
  %v561 = vmul.f32 %v525, %v538
  %v562 = vmul.f32 %v530, %v538
  %v563 = vld [vmem:[%s3] sm:$0x1]
  %v565 = vlaneseq
  %v566 = vshrl.u32 %v565, 7
  %v567 = vsub.s32 0, %v566
  %v568 = vrot.slane %v563, %v567
  %v570 = vadd.f32 %v540, %v568
  %v571 = vadd.f32 %v541, %v568
  %v572 = vadd.f32 %v542, %v568
  %v573 = vadd.f32 %v543, %v568
  %v574 = vadd.f32 %v544, %v568
  %v575 = vadd.f32 %v545, %v568
  %v576 = vadd.f32 %v546, %v568
  %v577 = vadd.f32 %v547, %v568
  %v578 = vadd.f32 %v548, %v568
  %v579 = vadd.f32 %v549, %v568
  %v580 = vadd.f32 %v550, %v568
  %v581 = vadd.f32 %v551, %v568
  %v582 = vadd.f32 %v552, %v568
  %v583 = vadd.f32 %v553, %v568
  %v584 = vadd.f32 %v554, %v568
  %v585 = vadd.f32 %v555, %v568
  %v586 = vadd.f32 %v556, %v568
  %v587 = vadd.f32 %v557, %v568
  %v588 = vadd.f32 %v558, %v568
  %v589 = vadd.f32 %v559, %v568
  %v590 = vadd.f32 %v560, %v568
  %v591 = vadd.f32 %v561, %v568
  %v592 = vadd.f32 %v562, %v568
  %v593 = vmax.f32 %v570, 0.0
  %v594 = vmax.f32 %v571, 0.0
  %v595 = vmax.f32 %v572, 0.0
  %v596 = vmax.f32 %v573, 0.0
  %v597 = vmax.f32 %v574, 0.0
  %v598 = vmax.f32 %v575, 0.0
  %v599 = vmax.f32 %v576, 0.0
  %v600 = vmax.f32 %v577, 0.0
  %v601 = vmax.f32 %v578, 0.0
  %v602 = vmax.f32 %v579, 0.0
  %v603 = vmax.f32 %v580, 0.0
  %v604 = vmax.f32 %v581, 0.0
  %v605 = vmax.f32 %v582, 0.0
  %v606 = vmax.f32 %v583, 0.0
  %v607 = vmax.f32 %v584, 0.0
  %v608 = vmax.f32 %v585, 0.0
  %v609 = vmax.f32 %v586, 0.0
  %v610 = vmax.f32 %v587, 0.0
  %v611 = vmax.f32 %v588, 0.0
  %v612 = vmax.f32 %v589, 0.0
  %v613 = vmax.f32 %v590, 0.0
  %v614 = vmax.f32 %v591, 0.0
  %v615 = vmax.f32 %v592, 0.0
  %616 = vst [vmem:[%s4] sm:$0xff] %v593
  %617 = vst [vmem:[%s4 + $0x8] sm:$0xff] %v594
  %618 = vst [vmem:[%s4 + $0x10] sm:$0xff] %v595
  %619 = vst [vmem:[%s4 + $0x18] sm:$0xff] %v596
  %620 = vst [vmem:[%s4 + $0x20] sm:$0xff] %v597
  %621 = vst [vmem:[%s4 + $0x28] sm:$0xff] %v598
  %622 = vst [vmem:[%s4 + $0x30] sm:$0xff] %v599
  %623 = vst [vmem:[%s4 + $0x38] sm:$0xff] %v600
  %624 = vst [vmem:[%s4 + $0x40] sm:$0xff] %v601
  %625 = vst [vmem:[%s4 + $0x48] sm:$0xff] %v602
  %626 = vst [vmem:[%s4 + $0x50] sm:$0xff] %v603
  %627 = vst [vmem:[%s4 + $0x58] sm:$0xff] %v604
  %628 = vst [vmem:[%s4 + $0x60] sm:$0xff] %v605
  %629 = vst [vmem:[%s4 + $0x68] sm:$0xff] %v606
  %630 = vst [vmem:[%s4 + $0x70] sm:$0xff] %v607
  %631 = vst [vmem:[%s4 + $0x78] sm:$0xff] %v608
  %632 = vst [vmem:[%s4 + $0x80] sm:$0xff] %v609
  %633 = vst [vmem:[%s4 + $0x88] sm:$0xff] %v610
  %634 = vst [vmem:[%s4 + $0x90] sm:$0xff] %v611
  %635 = vst [vmem:[%s4 + $0x98] sm:$0xff] %v612
  %636 = vst [vmem:[%s4 + $0xa0] sm:$0xff] %v613
  %637 = vst [vmem:[%s4 + $0xa8] sm:$0xff] %v614
  %638 = vst [vmem:[%s4 + $0xb0] sm:$0xff] %v615
  // Predicated region
  $region18: #{deep_double_sarsa_forward.5} parent=0 // pred_check
    _
  $region19: #{deep_double_sarsa_forward.5} parent=0 // pred_check_branch
    %640 = sbr.rel (0) target = $region21
  $region20: #{deep_double_sarsa_forward.5} parent=0 // pred_region
    _
  $region21: #{deep_double_sarsa_forward.5} parent=0 // pred_fallthru
    _
  // Predicated region
  $region22: #{deep_double_sarsa_forward.5} parent=0 // pred_check
    _
  $region23: #{deep_double_sarsa_forward.5} parent=0 // pred_check_branch
    %642 = sbr.rel (0) target = $region25
  $region24: #{deep_double_sarsa_forward.5} parent=0 // pred_region
    _
  $region25: #{deep_double_sarsa_forward.5} parent=0 // pred_fallthru
    _

// kernel: deep_double_sarsa_forward.6
$region0: #{deep_double_sarsa_forward.6}
  #allocation0 [shape = 'u32[]', space=smem, size = 0x4, offset = 0x4, fixed_abs, tag = 'smem constant byte address 0x4 - core index']
  #allocation1 [shape = 'u32[144,128]{1,0:T(1,128)}', space=vmem, size = 0x12000, scoped, tag = 'internal scratch']
  %s0 = inlined_call_operand.vmem [shape: f32[184,640], index: 0, kind: input, shape index: {}]
  %s1 = inlined_call_operand.vmem [shape: f32[640,128], index: 1, kind: input, shape index: {}]
  %s2 = inlined_call_operand.vmem [shape: f32[1,128], index: 2, kind: input, shape index: {}]
  %s3 = inlined_call_operand.vmem [shape: f32[1,128], index: 3, kind: input, shape index: {}]
  %s4 = inlined_call_operand.vmem [shape: f32[184,128], index: 4, kind: output, shape index: {}]
  %s5 = sld [smem:[#allocation0]]
  $region26: #{deep_double_sarsa_forward.6} parent=0
    _
  %s7 = ssub.s32 1, %s5
  %s8 = scalar_select 0, %s7, %s5
  // Predicated region
  $region2: #{deep_double_sarsa_forward.6} parent=0 // pred_check
    _
  $region3: #{deep_double_sarsa_forward.6} parent=0 // pred_check_branch
    %10 = sbr.rel (0) target = $region5
  $region4: #{deep_double_sarsa_forward.6} parent=0 // pred_region
    _
  $region5: #{deep_double_sarsa_forward.6} parent=0 // pred_fallthru
    _
  // Predicated region
  $region6: #{deep_double_sarsa_forward.6} parent=0 // pred_check
    _
  $region7: #{deep_double_sarsa_forward.6} parent=0 // pred_check_branch
    %12 = sbr.rel (0) target = $region9
  $region8: #{deep_double_sarsa_forward.6} parent=0 // pred_region
    _
  $region9: #{deep_double_sarsa_forward.6} parent=0 // pred_fallthru
    _
  // Predicated region
  $region10: #{deep_double_sarsa_forward.6} parent=0 // pred_check
    _
  $region11: #{deep_double_sarsa_forward.6} parent=0 // pred_check_branch
    %14 = sbr.rel (0) target = $region13
  $region12: #{deep_double_sarsa_forward.6} parent=0 // pred_region
    _
  $region13: #{deep_double_sarsa_forward.6} parent=0 // pred_fallthru
    _
  // Predicated region
  $region14: #{deep_double_sarsa_forward.6} parent=0 // pred_check
    _
  $region15: #{deep_double_sarsa_forward.6} parent=0 // pred_check_branch
    %16 = sbr.rel (0) target = $region17
  $region16: #{deep_double_sarsa_forward.6} parent=0 // pred_region
    _
  $region17: #{deep_double_sarsa_forward.6} parent=0 // pred_fallthru
    _
  %v17 = vld [vmem:[%s0] sm:$0xff]
  %v18 = vld [vmem:[%s0 + $0x8] sm:$0xff]
  %v19 = vld [vmem:[%s0 + $0x10] sm:$0xff]
  %v20 = vld [vmem:[%s0 + $0x18] sm:$0xff]
  %v21 = vld [vmem:[%s0 + $0x20] sm:$0xff]
  %v22 = vld [vmem:[%s0 + $0x28] sm:$0xff]
  %v23 = vld [vmem:[%s0 + $0x30] sm:$0xff]
  %v24 = vld [vmem:[%s0 + $0x38] sm:$0xff]
  %v25 = vld [vmem:[%s0 + $0x40] sm:$0xff]
  %v26 = vld [vmem:[%s0 + $0x48] sm:$0xff]
  %v27 = vld [vmem:[%s0 + $0x50] sm:$0xff]
  %v28 = vld [vmem:[%s0 + $0x58] sm:$0xff]
  %v29 = vld [vmem:[%s0 + $0x60] sm:$0xff]
  %v30 = vld [vmem:[%s0 + $0x68] sm:$0xff]
  %v31 = vld [vmem:[%s0 + $0x70] sm:$0xff]
  %v32 = vld [vmem:[%s0 + $0x78] sm:$0xff]
  %v33 = vld [vmem:[%s0 + $0x80] sm:$0xff]
  %v34 = vld [vmem:[%s0 + $0x88] sm:$0xff]
  %v35 = vld [vmem:[%s0 + $0x90] sm:$0xff]
  %v36 = vld [vmem:[%s0 + $0x98] sm:$0xff]
  %v37 = vld [vmem:[%s0 + $0xa0] sm:$0xff]
  %v38 = vld [vmem:[%s0 + $0xa8] sm:$0xff]
  %v39 = vld [vmem:[%s0 + $0xb0] sm:$0xff]
  %v40 = vld [vmem:[%s0 + $0xb8] sm:$0xff]
  %v41 = vld [vmem:[%s0 + $0xc0] sm:$0xff]
  %v42 = vld [vmem:[%s0 + $0xc8] sm:$0xff]
  %v43 = vld [vmem:[%s0 + $0xd0] sm:$0xff]
  %v44 = vld [vmem:[%s0 + $0xd8] sm:$0xff]
  %v45 = vld [vmem:[%s0 + $0xe0] sm:$0xff]
  %v46 = vld [vmem:[%s0 + $0xe8] sm:$0xff]
  %v47 = vld [vmem:[%s0 + $0xf0] sm:$0xff]
  %v48 = vld [vmem:[%s0 + $0xf8] sm:$0xff]
  %v49 = vld [vmem:[%s0 + $0x100] sm:$0xff]
  %v50 = vld [vmem:[%s0 + $0x108] sm:$0xff]
  %v51 = vld [vmem:[%s0 + $0x110] sm:$0xff]
  %v52 = vld [vmem:[%s0 + $0x118] sm:$0xff]
  %v53 = vld [vmem:[%s0 + $0x120] sm:$0xff]
  %v54 = vld [vmem:[%s0 + $0x128] sm:$0xff]
  %v55 = vld [vmem:[%s0 + $0x130] sm:$0xff]
  %v56 = vld [vmem:[%s0 + $0x138] sm:$0xff]
  %v57 = vld [vmem:[%s0 + $0x140] sm:$0xff]
  %v58 = vld [vmem:[%s0 + $0x148] sm:$0xff]
  %v59 = vld [vmem:[%s0 + $0x150] sm:$0xff]
  %v60 = vld [vmem:[%s0 + $0x158] sm:$0xff]
  %v61 = vld [vmem:[%s0 + $0x160] sm:$0xff]
  %v62 = vld [vmem:[%s0 + $0x168] sm:$0xff]
  %v63 = vld [vmem:[%s0 + $0x170] sm:$0xff]
  %v64 = vld [vmem:[%s0 + $0x178] sm:$0xff]
  %v65 = vld [vmem:[%s0 + $0x180] sm:$0xff]
  %v66 = vld [vmem:[%s0 + $0x188] sm:$0xff]
  %v67 = vld [vmem:[%s0 + $0x190] sm:$0xff]
  %v68 = vld [vmem:[%s0 + $0x198] sm:$0xff]
  %v69 = vld [vmem:[%s0 + $0x1a0] sm:$0xff]
  %v70 = vld [vmem:[%s0 + $0x1a8] sm:$0xff]
  %v71 = vld [vmem:[%s0 + $0x1b0] sm:$0xff]
  %v72 = vld [vmem:[%s0 + $0x1b8] sm:$0xff]
  %v73 = vld [vmem:[%s0 + $0x1c0] sm:$0xff]
  %v74 = vld [vmem:[%s0 + $0x1c8] sm:$0xff]
  %v75 = vld [vmem:[%s0 + $0x1d0] sm:$0xff]
  %v76 = vld [vmem:[%s0 + $0x1d8] sm:$0xff]
  %v77 = vld [vmem:[%s0 + $0x1e0] sm:$0xff]
  %v78 = vld [vmem:[%s0 + $0x1e8] sm:$0xff]
  %v79 = vld [vmem:[%s0 + $0x1f0] sm:$0xff]
  %v80 = vld [vmem:[%s0 + $0x1f8] sm:$0xff]
  %v81 = vld [vmem:[%s0 + $0x200] sm:$0xff]
  %v82 = vld [vmem:[%s0 + $0x208] sm:$0xff]
  %v83 = vld [vmem:[%s0 + $0x210] sm:$0xff]
  %v84 = vld [vmem:[%s0 + $0x218] sm:$0xff]
  %v85 = vld [vmem:[%s0 + $0x220] sm:$0xff]
  %v86 = vld [vmem:[%s0 + $0x228] sm:$0xff]
  %v87 = vld [vmem:[%s0 + $0x230] sm:$0xff]
  %v88 = vld [vmem:[%s0 + $0x238] sm:$0xff]
  %v89 = vld [vmem:[%s0 + $0x240] sm:$0xff]
  %v90 = vld [vmem:[%s0 + $0x248] sm:$0xff]
  %v91 = vld [vmem:[%s0 + $0x250] sm:$0xff]
  %v92 = vld [vmem:[%s0 + $0x258] sm:$0xff]
  %v93 = vld [vmem:[%s0 + $0x260] sm:$0xff]
  %v94 = vld [vmem:[%s0 + $0x268] sm:$0xff]
  %v95 = vld [vmem:[%s0 + $0x270] sm:$0xff]
  %v96 = vld [vmem:[%s0 + $0x278] sm:$0xff]
  %v97 = vld [vmem:[%s0 + $0x280] sm:$0xff]
  %v98 = vld [vmem:[%s0 + $0x288] sm:$0xff]
  %v99 = vld [vmem:[%s0 + $0x290] sm:$0xff]
  %v100 = vld [vmem:[%s0 + $0x298] sm:$0xff]
  %v101 = vld [vmem:[%s0 + $0x2a0] sm:$0xff]
  %v102 = vld [vmem:[%s0 + $0x2a8] sm:$0xff]
  %v103 = vld [vmem:[%s0 + $0x2b0] sm:$0xff]
  %v104 = vld [vmem:[%s0 + $0x2b8] sm:$0xff]
  %v105 = vld [vmem:[%s0 + $0x2c0] sm:$0xff]
  %v106 = vld [vmem:[%s0 + $0x2c8] sm:$0xff]
  %v107 = vld [vmem:[%s0 + $0x2d0] sm:$0xff]
  %v108 = vld [vmem:[%s0 + $0x2d8] sm:$0xff]
  %v109 = vld [vmem:[%s0 + $0x2e0] sm:$0xff]
  %v110 = vld [vmem:[%s0 + $0x2e8] sm:$0xff]
  %v111 = vld [vmem:[%s0 + $0x2f0] sm:$0xff]
  %v112 = vld [vmem:[%s0 + $0x2f8] sm:$0xff]
  %v113 = vld [vmem:[%s0 + $0x300] sm:$0xff]
  %v114 = vld [vmem:[%s0 + $0x308] sm:$0xff]
  %v115 = vld [vmem:[%s0 + $0x310] sm:$0xff]
  %v116 = vld [vmem:[%s0 + $0x318] sm:$0xff]
  %v117 = vld [vmem:[%s0 + $0x320] sm:$0xff]
  %v118 = vld [vmem:[%s0 + $0x328] sm:$0xff]
  %v119 = vld [vmem:[%s0 + $0x330] sm:$0xff]
  %v120 = vld [vmem:[%s0 + $0x338] sm:$0xff]
  %v121 = vld [vmem:[%s0 + $0x340] sm:$0xff]
  %v122 = vld [vmem:[%s0 + $0x348] sm:$0xff]
  %v123 = vld [vmem:[%s0 + $0x350] sm:$0xff]
  %v124 = vld [vmem:[%s0 + $0x358] sm:$0xff]
  %v125 = vld [vmem:[%s0 + $0x360] sm:$0xff]
  %v126 = vld [vmem:[%s0 + $0x368] sm:$0xff]
  %v127 = vld [vmem:[%s0 + $0x370] sm:$0xff]
  %v128 = vld [vmem:[%s0 + $0x378] sm:$0xff]
  %v129 = vld [vmem:[%s0 + $0x380] sm:$0xff]
  %v130 = vld [vmem:[%s0 + $0x388] sm:$0xff]
  %v131 = vld [vmem:[%s0 + $0x390] sm:$0xff]
  %v132 = vld [vmem:[%s1] sm:$0xff]
  %v133 = vld [vmem:[%s1 + $0x8] sm:$0xff]
  %v134 = vld [vmem:[%s1 + $0x10] sm:$0xff]
  %v135 = vld [vmem:[%s1 + $0x18] sm:$0xff]
  %v136 = vld [vmem:[%s1 + $0x20] sm:$0xff]
  %v137 = vld [vmem:[%s1 + $0x28] sm:$0xff]
  %v138 = vld [vmem:[%s1 + $0x30] sm:$0xff]
  %v139 = vld [vmem:[%s1 + $0x38] sm:$0xff]
  %v140 = vld [vmem:[%s1 + $0x40] sm:$0xff]
  %v141 = vld [vmem:[%s1 + $0x48] sm:$0xff]
  %v142 = vld [vmem:[%s1 + $0x50] sm:$0xff]
  %v143 = vld [vmem:[%s1 + $0x58] sm:$0xff]
  %v144 = vld [vmem:[%s1 + $0x60] sm:$0xff]
  %v145 = vld [vmem:[%s1 + $0x68] sm:$0xff]
  %v146 = vld [vmem:[%s1 + $0x70] sm:$0xff]
  %v147 = vld [vmem:[%s1 + $0x78] sm:$0xff]
  %v148 = vld [vmem:[%s1 + $0x80] sm:$0xff]
  %v149 = vld [vmem:[%s1 + $0x88] sm:$0xff]
  %v150 = vld [vmem:[%s1 + $0x90] sm:$0xff]
  %v151 = vld [vmem:[%s1 + $0x98] sm:$0xff]
  %v152 = vld [vmem:[%s1 + $0xa0] sm:$0xff]
  %v153 = vld [vmem:[%s1 + $0xa8] sm:$0xff]
  %v154 = vld [vmem:[%s1 + $0xb0] sm:$0xff]
  %v155 = vld [vmem:[%s1 + $0xb8] sm:$0xff]
  %v156 = vld [vmem:[%s1 + $0xc0] sm:$0xff]
  %v157 = vld [vmem:[%s1 + $0xc8] sm:$0xff]
  %v158 = vld [vmem:[%s1 + $0xd0] sm:$0xff]
  %v159 = vld [vmem:[%s1 + $0xd8] sm:$0xff]
  %v160 = vld [vmem:[%s1 + $0xe0] sm:$0xff]
  %v161 = vld [vmem:[%s1 + $0xe8] sm:$0xff]
  %v162 = vld [vmem:[%s1 + $0xf0] sm:$0xff]
  %v163 = vld [vmem:[%s1 + $0xf8] sm:$0xff]
  %v164 = vld [vmem:[%s1 + $0x100] sm:$0xff]
  %v165 = vld [vmem:[%s1 + $0x108] sm:$0xff]
  %v166 = vld [vmem:[%s1 + $0x110] sm:$0xff]
  %v167 = vld [vmem:[%s1 + $0x118] sm:$0xff]
  %v168 = vld [vmem:[%s1 + $0x120] sm:$0xff]
  %v169 = vld [vmem:[%s1 + $0x128] sm:$0xff]
  %v170 = vld [vmem:[%s1 + $0x130] sm:$0xff]
  %v171 = vld [vmem:[%s1 + $0x138] sm:$0xff]
  %v172 = vld [vmem:[%s1 + $0x140] sm:$0xff]
  %v173 = vld [vmem:[%s1 + $0x148] sm:$0xff]
  %v174 = vld [vmem:[%s1 + $0x150] sm:$0xff]
  %v175 = vld [vmem:[%s1 + $0x158] sm:$0xff]
  %v176 = vld [vmem:[%s1 + $0x160] sm:$0xff]
  %v177 = vld [vmem:[%s1 + $0x168] sm:$0xff]
  %v178 = vld [vmem:[%s1 + $0x170] sm:$0xff]
  %v179 = vld [vmem:[%s1 + $0x178] sm:$0xff]
  %v180 = vld [vmem:[%s1 + $0x180] sm:$0xff]
  %v181 = vld [vmem:[%s1 + $0x188] sm:$0xff]
  %v182 = vld [vmem:[%s1 + $0x190] sm:$0xff]
  %v183 = vld [vmem:[%s1 + $0x198] sm:$0xff]
  %v184 = vld [vmem:[%s1 + $0x1a0] sm:$0xff]
  %v185 = vld [vmem:[%s1 + $0x1a8] sm:$0xff]
  %v186 = vld [vmem:[%s1 + $0x1b0] sm:$0xff]
  %v187 = vld [vmem:[%s1 + $0x1b8] sm:$0xff]
  %v188 = vld [vmem:[%s1 + $0x1c0] sm:$0xff]
  %v189 = vld [vmem:[%s1 + $0x1c8] sm:$0xff]
  %v190 = vld [vmem:[%s1 + $0x1d0] sm:$0xff]
  %v191 = vld [vmem:[%s1 + $0x1d8] sm:$0xff]
  %v192 = vld [vmem:[%s1 + $0x1e0] sm:$0xff]
  %v193 = vld [vmem:[%s1 + $0x1e8] sm:$0xff]
  %v194 = vld [vmem:[%s1 + $0x1f0] sm:$0xff]
  %v195 = vld [vmem:[%s1 + $0x1f8] sm:$0xff]
  %v196 = vld [vmem:[%s1 + $0x200] sm:$0xff]
  %v197 = vld [vmem:[%s1 + $0x208] sm:$0xff]
  %v198 = vld [vmem:[%s1 + $0x210] sm:$0xff]
  %v199 = vld [vmem:[%s1 + $0x218] sm:$0xff]
  %v200 = vld [vmem:[%s1 + $0x220] sm:$0xff]
  %v201 = vld [vmem:[%s1 + $0x228] sm:$0xff]
  %v202 = vld [vmem:[%s1 + $0x230] sm:$0xff]
  %v203 = vld [vmem:[%s1 + $0x238] sm:$0xff]
  %v204 = vld [vmem:[%s1 + $0x240] sm:$0xff]
  %v205 = vld [vmem:[%s1 + $0x248] sm:$0xff]
  %v206 = vld [vmem:[%s1 + $0x250] sm:$0xff]
  %v207 = vld [vmem:[%s1 + $0x258] sm:$0xff]
  %v208 = vld [vmem:[%s1 + $0x260] sm:$0xff]
  %v209 = vld [vmem:[%s1 + $0x268] sm:$0xff]
  %v210 = vld [vmem:[%s1 + $0x270] sm:$0xff]
  %v211 = vld [vmem:[%s1 + $0x278] sm:$0xff]
  %212 = vmatprep.subr.mxu0 0.0
  %213 = vmatpush1.msra.mxu0 %v132
  %214 = vmatprep.subr.mxu0 0.0
  %215 = vmatpush1.msra.mxu0 %v133
  %216 = vmatprep.subr.mxu0 0.0
  %217 = vmatpush1.msra.mxu0 %v134
  %218 = vmatprep.subr.mxu0 0.0
  %219 = vmatpush1.msra.mxu0 %v135
  %220 = vmatprep.subr.mxu0 0.0
  %221 = vmatpush1.msra.mxu0 %v136
  %222 = vmatprep.subr.mxu0 0.0
  %223 = vmatpush1.msra.mxu0 %v137
  %224 = vmatprep.subr.mxu0 0.0
  %225 = vmatpush1.msra.mxu0 %v138
  %226 = vmatprep.subr.mxu0 0.0
  %227 = vmatpush1.msra.mxu0 %v139
  %228 = vmatprep.subr.mxu0 0.0
  %229 = vmatpush1.msra.mxu0 %v140
  %230 = vmatprep.subr.mxu0 0.0
  %231 = vmatpush1.msra.mxu0 %v141
  %232 = vmatprep.subr.mxu0 0.0
  %233 = vmatpush1.msra.mxu0 %v142
  %234 = vmatprep.subr.mxu0 0.0
  %235 = vmatpush1.msra.mxu0 %v143
  %236 = vmatprep.subr.mxu0 0.0
  %237 = vmatpush1.msra.mxu0 %v144
  %238 = vmatprep.subr.mxu0 0.0
  %239 = vmatpush1.msra.mxu0 %v145
  %240 = vmatprep.subr.mxu0 0.0
  %241 = vmatpush1.msra.mxu0 %v146
  %242 = vmatprep.subr.mxu0 0.0
  %243 = vmatpush1.msra.mxu0 %v147
  %244 = vmatprep.subr.mxu0 0.0
  %245 = vmatpush1.msra.mxu0 %v148
  %246 = vmatprep.subr.mxu0 0.0
  %247 = vmatpush1.msra.mxu0 %v149
  %248 = vmatprep.subr.mxu0 0.0
  %249 = vmatpush1.msra.mxu0 %v150
  %250 = vmatprep.subr.mxu0 0.0
  %251 = vmatpush1.msra.mxu0 %v151
  %252 = vmatprep.subr.mxu0 0.0
  %253 = vmatpush1.msra.mxu0 %v152
  %254 = vmatprep.subr.mxu0 0.0
  %255 = vmatpush1.msra.mxu0 %v153
  %256 = vmatprep.subr.mxu0 0.0
  %257 = vmatpush1.msra.mxu0 %v154
  %258 = vmatprep.subr.mxu0 0.0
  %259 = vmatpush1.msra.mxu0 %v155
  %260 = vmatprep.subr.mxu0 0.0
  %261 = vmatpush1.msra.mxu0 %v156
  %262 = vmatprep.subr.mxu0 0.0
  %263 = vmatpush1.msra.mxu0 %v157
  %264 = vmatprep.subr.mxu0 0.0
  %265 = vmatpush1.msra.mxu0 %v158
  %266 = vmatprep.subr.mxu0 0.0
  %267 = vmatpush1.msra.mxu0 %v159
  %268 = vmatprep.subr.mxu0 0.0
  %269 = vmatpush1.msra.mxu0 %v160
  %270 = vmatprep.subr.mxu0 0.0
  %271 = vmatpush1.msra.mxu0 %v161
  %272 = vmatprep.subr.mxu0 0.0
  %273 = vmatpush1.msra.mxu0 %v162
  %274 = vmatprep.subr.mxu0 0.0
  %275 = vmatpush1.msra.mxu0 %v163
  %276 = vmatprep.mubr.f32.mxu0 %v18
  %277 = vmatmul.mubr.f32.gmra.mrb[0].mxu0 %v17
  %v278 = vpop.f32.mrb[0].mxu0
  %v279 = vadd.f32 0.0, %v278
  %v280 = vpop.f32.mrb[0].mxu0
  %281 = vmatprep.mubr.f32.mxu0 %v23
  %282 = vmatmul.mubr.f32.gmra.mrb[0].mxu0 %v22
  %v283 = vpop.f32.mrb[0].mxu0
  %v284 = vadd.f32 0.0, %v283
  %v285 = vpop.f32.mrb[0].mxu0
  %286 = vmatprep.mubr.f32.mxu0 %v28
  %287 = vmatmul.mubr.f32.gmra.mrb[0].mxu0 %v27
  %v288 = vpop.f32.mrb[0].mxu0
  %v289 = vadd.f32 0.0, %v288
  %v290 = vpop.f32.mrb[0].mxu0
  %291 = vmatprep.mubr.f32.mxu0 %v33
  %292 = vmatmul.mubr.f32.gmra.mrb[0].mxu0 %v32
  %v293 = vpop.f32.mrb[0].mxu0
  %v294 = vadd.f32 0.0, %v293
  %v295 = vpop.f32.mrb[0].mxu0
  %296 = vmatprep.mubr.f32.mxu0 %v38
  %297 = vmatmul.mubr.f32.gmra.mrb[0].mxu0 %v37
  %v298 = vpop.f32.mrb[0].mxu0
  %v299 = vadd.f32 0.0, %v298
  %v300 = vpop.f32.mrb[0].mxu0
  %301 = vmatprep.mubr.f32.mxu0 %v43
  %302 = vmatmul.mubr.f32.gmra.mrb[0].mxu0 %v42
  %v303 = vpop.f32.mrb[0].mxu0
  %v304 = vadd.f32 0.0, %v303
  %v305 = vpop.f32.mrb[0].mxu0
  %306 = vmatprep.mubr.f32.mxu0 %v48
  %307 = vmatmul.mubr.f32.gmra.mrb[0].mxu0 %v47
  %v308 = vpop.f32.mrb[0].mxu0
  %v309 = vadd.f32 0.0, %v308
  %v310 = vpop.f32.mrb[0].mxu0
  %311 = vmatprep.mubr.f32.mxu0 %v53
  %312 = vmatmul.mubr.f32.gmra.mrb[0].mxu0 %v52
  %v313 = vpop.f32.mrb[0].mxu0
  %v314 = vadd.f32 0.0, %v313
  %v315 = vpop.f32.mrb[0].mxu0
  %316 = vmatprep.mubr.f32.mxu0 %v58
  %317 = vmatmul.mubr.f32.gmra.mrb[0].mxu0 %v57
  %v318 = vpop.f32.mrb[0].mxu0
  %v319 = vadd.f32 0.0, %v318
  %v320 = vpop.f32.mrb[0].mxu0
  %321 = vmatprep.mubr.f32.mxu0 %v63
  %322 = vmatmul.mubr.f32.gmra.mrb[0].mxu0 %v62
  %v323 = vpop.f32.mrb[0].mxu0
  %v324 = vadd.f32 0.0, %v323
  %v325 = vpop.f32.mrb[0].mxu0
  %326 = vmatprep.mubr.f32.mxu0 %v68
  %327 = vmatmul.mubr.f32.gmra.mrb[0].mxu0 %v67
  %v328 = vpop.f32.mrb[0].mxu0
  %v329 = vadd.f32 0.0, %v328
  %v330 = vpop.f32.mrb[0].mxu0
  %331 = vmatprep.mubr.f32.mxu0 %v73
  %332 = vmatmul.mubr.f32.gmra.mrb[0].mxu0 %v72
  %v333 = vpop.f32.mrb[0].mxu0
  %v334 = vadd.f32 0.0, %v333
  %v335 = vpop.f32.mrb[0].mxu0
  %336 = vmatprep.mubr.f32.mxu0 %v78
  %337 = vmatmul.mubr.f32.gmra.mrb[0].mxu0 %v77
  %v338 = vpop.f32.mrb[0].mxu0
  %v339 = vadd.f32 0.0, %v338
  %v340 = vpop.f32.mrb[0].mxu0
  %341 = vmatprep.mubr.f32.mxu0 %v83
  %342 = vmatmul.mubr.f32.gmra.mrb[0].mxu0 %v82
  %v343 = vpop.f32.mrb[0].mxu0
  %v344 = vadd.f32 0.0, %v343
  %v345 = vpop.f32.mrb[0].mxu0
  %346 = vmatprep.mubr.f32.mxu0 %v88
  %347 = vmatmul.mubr.f32.gmra.mrb[0].mxu0 %v87
  %v348 = vpop.f32.mrb[0].mxu0
  %v349 = vadd.f32 0.0, %v348
  %v350 = vpop.f32.mrb[0].mxu0
  %351 = vmatprep.mubr.f32.mxu0 %v93
  %352 = vmatmul.mubr.f32.gmra.mrb[0].mxu0 %v92
  %v353 = vpop.f32.mrb[0].mxu0
  %v354 = vadd.f32 0.0, %v353
  %v355 = vpop.f32.mrb[0].mxu0
  %356 = vmatprep.mubr.f32.mxu0 %v98
  %357 = vmatmul.mubr.f32.gmra.mrb[0].mxu0 %v97
  %v358 = vpop.f32.mrb[0].mxu0
  %v359 = vadd.f32 0.0, %v358
  %v360 = vpop.f32.mrb[0].mxu0
  %361 = vmatprep.mubr.f32.mxu0 %v103
  %362 = vmatmul.mubr.f32.gmra.mrb[0].mxu0 %v102
  %v363 = vpop.f32.mrb[0].mxu0
  %v364 = vadd.f32 0.0, %v363
  %v365 = vpop.f32.mrb[0].mxu0
  %366 = vmatprep.mubr.f32.mxu0 %v108
  %367 = vmatmul.mubr.f32.gmra.mrb[0].mxu0 %v107
  %v368 = vpop.f32.mrb[0].mxu0
  %v369 = vadd.f32 0.0, %v368
  %v370 = vpop.f32.mrb[0].mxu0
  %371 = vmatprep.mubr.f32.mxu0 %v113
  %372 = vmatmul.mubr.f32.gmra.mrb[0].mxu0 %v112
  %v373 = vpop.f32.mrb[0].mxu0
  %v374 = vadd.f32 0.0, %v373
  %v375 = vpop.f32.mrb[0].mxu0
  %376 = vmatprep.mubr.f32.mxu0 %v118
  %377 = vmatmul.mubr.f32.gmra.mrb[0].mxu0 %v117
  %v378 = vpop.f32.mrb[0].mxu0
  %v379 = vadd.f32 0.0, %v378
  %v380 = vpop.f32.mrb[0].mxu0
  %381 = vmatprep.mubr.f32.mxu0 %v123
  %382 = vmatmul.mubr.f32.gmra.mrb[0].mxu0 %v122
  %v383 = vpop.f32.mrb[0].mxu0
  %v384 = vadd.f32 0.0, %v383
  %v385 = vpop.f32.mrb[0].mxu0
  %386 = vmatprep.mubr.f32.mxu0 %v128
  %387 = vmatmul.mubr.f32.gmra.mrb[0].mxu0 %v127
  %v388 = vpop.f32.mrb[0].mxu0
  %v389 = vadd.f32 0.0, %v388
  %v390 = vpop.f32.mrb[0].mxu0
  %391 = vdwg.mxu0
  %392 = vmatprep.subr.mxu0 0.0
  %393 = vmatpush1.msra.mxu0 %v164
  %394 = vmatprep.subr.mxu0 0.0
  %395 = vmatpush1.msra.mxu0 %v165
  %396 = vmatprep.subr.mxu0 0.0
  %397 = vmatpush1.msra.mxu0 %v166
  %398 = vmatprep.subr.mxu0 0.0
  %399 = vmatpush1.msra.mxu0 %v167
  %400 = vmatprep.subr.mxu0 0.0
  %401 = vmatpush1.msra.mxu0 %v168
  %402 = vmatprep.subr.mxu0 0.0
  %403 = vmatpush1.msra.mxu0 %v169
  %404 = vmatprep.subr.mxu0 0.0
  %405 = vmatpush1.msra.mxu0 %v170
  %406 = vmatprep.subr.mxu0 0.0
  %407 = vmatpush1.msra.mxu0 %v171
  %408 = vmatprep.subr.mxu0 0.0
  %409 = vmatpush1.msra.mxu0 %v172
  %410 = vmatprep.subr.mxu0 0.0
  %411 = vmatpush1.msra.mxu0 %v173
  %412 = vmatprep.subr.mxu0 0.0
  %413 = vmatpush1.msra.mxu0 %v174
  %414 = vmatprep.subr.mxu0 0.0
  %415 = vmatpush1.msra.mxu0 %v175
  %416 = vmatprep.subr.mxu0 0.0
  %417 = vmatpush1.msra.mxu0 %v176
  %418 = vmatprep.subr.mxu0 0.0
  %419 = vmatpush1.msra.mxu0 %v177
  %420 = vmatprep.subr.mxu0 0.0
  %421 = vmatpush1.msra.mxu0 %v178
  %422 = vmatprep.subr.mxu0 0.0
  %423 = vmatpush1.msra.mxu0 %v179
  %424 = vmatprep.subr.mxu0 0.0
  %425 = vmatpush1.msra.mxu0 %v180
  %426 = vmatprep.subr.mxu0 0.0
  %427 = vmatpush1.msra.mxu0 %v181
  %428 = vmatprep.subr.mxu0 0.0
  %429 = vmatpush1.msra.mxu0 %v182
  %430 = vmatprep.subr.mxu0 0.0
  %431 = vmatpush1.msra.mxu0 %v183
  %432 = vmatprep.subr.mxu0 0.0
  %433 = vmatpush1.msra.mxu0 %v184
  %434 = vmatprep.subr.mxu0 0.0
  %435 = vmatpush1.msra.mxu0 %v185
  %436 = vmatprep.subr.mxu0 0.0
  %437 = vmatpush1.msra.mxu0 %v186
  %438 = vmatprep.subr.mxu0 0.0
  %439 = vmatpush1.msra.mxu0 %v187
  %440 = vmatprep.subr.mxu0 0.0
  %441 = vmatpush1.msra.mxu0 %v188
  %442 = vmatprep.subr.mxu0 0.0
  %443 = vmatpush1.msra.mxu0 %v189
  %444 = vmatprep.subr.mxu0 0.0
  %445 = vmatpush1.msra.mxu0 %v190
  %446 = vmatprep.subr.mxu0 0.0
  %447 = vmatpush1.msra.mxu0 %v191
  %448 = vmatprep.subr.mxu0 0.0
  %449 = vmatpush1.msra.mxu0 %v192
  %450 = vmatprep.subr.mxu0 0.0
  %451 = vmatpush1.msra.mxu0 %v193
  %452 = vmatprep.subr.mxu0 0.0
  %453 = vmatpush1.msra.mxu0 %v194
  %454 = vmatprep.subr.mxu0 0.0
  %455 = vmatpush1.msra.mxu0 %v195
  %456 = vmatprep.mubr.f32.mxu0 %v20
  %457 = vmatmul.mubr.f32.gmra.mrb[0].mxu0 %v19
  %v458 = vpop.f32.mrb[0].mxu0
  %v459 = vadd.f32 %v279, %v458
  %v460 = vpop.f32.mrb[0].mxu0
  %461 = vmatprep.mubr.f32.mxu0 %v25
  %462 = vmatmul.mubr.f32.gmra.mrb[0].mxu0 %v24
  %v463 = vpop.f32.mrb[0].mxu0
  %v464 = vadd.f32 %v284, %v463
  %v465 = vpop.f32.mrb[0].mxu0
  %466 = vmatprep.mubr.f32.mxu0 %v30
  %467 = vmatmul.mubr.f32.gmra.mrb[0].mxu0 %v29
  %v468 = vpop.f32.mrb[0].mxu0
  %v469 = vadd.f32 %v289, %v468
  %v470 = vpop.f32.mrb[0].mxu0
  %471 = vmatprep.mubr.f32.mxu0 %v35
  %472 = vmatmul.mubr.f32.gmra.mrb[0].mxu0 %v34
  %v473 = vpop.f32.mrb[0].mxu0
  %v474 = vadd.f32 %v294, %v473
  %v475 = vpop.f32.mrb[0].mxu0
  %476 = vmatprep.mubr.f32.mxu0 %v40
  %477 = vmatmul.mubr.f32.gmra.mrb[0].mxu0 %v39
  %v478 = vpop.f32.mrb[0].mxu0
  %v479 = vadd.f32 %v299, %v478
  %v480 = vpop.f32.mrb[0].mxu0
  %481 = vmatprep.mubr.f32.mxu0 %v45
  %482 = vmatmul.mubr.f32.gmra.mrb[0].mxu0 %v44
  %v483 = vpop.f32.mrb[0].mxu0
  %v484 = vadd.f32 %v304, %v483
  %v485 = vpop.f32.mrb[0].mxu0
  %486 = vmatprep.mubr.f32.mxu0 %v50
  %487 = vmatmul.mubr.f32.gmra.mrb[0].mxu0 %v49
  %v488 = vpop.f32.mrb[0].mxu0
  %v489 = vadd.f32 %v309, %v488
  %v490 = vpop.f32.mrb[0].mxu0
  %491 = vmatprep.mubr.f32.mxu0 %v55
  %492 = vmatmul.mubr.f32.gmra.mrb[0].mxu0 %v54
  %v493 = vpop.f32.mrb[0].mxu0
  %v494 = vadd.f32 %v314, %v493
  %v495 = vpop.f32.mrb[0].mxu0
  %496 = vmatprep.mubr.f32.mxu0 %v60
  %497 = vmatmul.mubr.f32.gmra.mrb[0].mxu0 %v59
  %v498 = vpop.f32.mrb[0].mxu0
  %v499 = vadd.f32 %v319, %v498
  %v500 = vpop.f32.mrb[0].mxu0
  %501 = vmatprep.mubr.f32.mxu0 %v65
  %502 = vmatmul.mubr.f32.gmra.mrb[0].mxu0 %v64
  %v503 = vpop.f32.mrb[0].mxu0
  %v504 = vadd.f32 %v324, %v503
  %v505 = vpop.f32.mrb[0].mxu0
  %506 = vmatprep.mubr.f32.mxu0 %v70
  %507 = vmatmul.mubr.f32.gmra.mrb[0].mxu0 %v69
  %v508 = vpop.f32.mrb[0].mxu0
  %v509 = vadd.f32 %v329, %v508
  %v510 = vpop.f32.mrb[0].mxu0
  %511 = vmatprep.mubr.f32.mxu0 %v75
  %512 = vmatmul.mubr.f32.gmra.mrb[0].mxu0 %v74
  %v513 = vpop.f32.mrb[0].mxu0
  %v514 = vadd.f32 %v334, %v513
  %v515 = vpop.f32.mrb[0].mxu0
  %516 = vmatprep.mubr.f32.mxu0 %v80
  %517 = vmatmul.mubr.f32.gmra.mrb[0].mxu0 %v79
  %v518 = vpop.f32.mrb[0].mxu0
  %v519 = vadd.f32 %v339, %v518
  %v520 = vpop.f32.mrb[0].mxu0
  %521 = vmatprep.mubr.f32.mxu0 %v85
  %522 = vmatmul.mubr.f32.gmra.mrb[0].mxu0 %v84
  %v523 = vpop.f32.mrb[0].mxu0
  %v524 = vadd.f32 %v344, %v523
  %v525 = vpop.f32.mrb[0].mxu0
  %526 = vmatprep.mubr.f32.mxu0 %v90
  %527 = vmatmul.mubr.f32.gmra.mrb[0].mxu0 %v89
  %v528 = vpop.f32.mrb[0].mxu0
  %v529 = vadd.f32 %v349, %v528
  %v530 = vpop.f32.mrb[0].mxu0
  %531 = vmatprep.mubr.f32.mxu0 %v95
  %532 = vmatmul.mubr.f32.gmra.mrb[0].mxu0 %v94
  %v533 = vpop.f32.mrb[0].mxu0
  %v534 = vadd.f32 %v354, %v533
  %v535 = vpop.f32.mrb[0].mxu0
  %536 = vmatprep.mubr.f32.mxu0 %v100
  %537 = vmatmul.mubr.f32.gmra.mrb[0].mxu0 %v99
  %v538 = vpop.f32.mrb[0].mxu0
  %v539 = vadd.f32 %v359, %v538
  %v540 = vpop.f32.mrb[0].mxu0
  %541 = vmatprep.mubr.f32.mxu0 %v105
  %542 = vmatmul.mubr.f32.gmra.mrb[0].mxu0 %v104
  %v543 = vpop.f32.mrb[0].mxu0
  %v544 = vadd.f32 %v364, %v543
  %v545 = vpop.f32.mrb[0].mxu0
  %546 = vmatprep.mubr.f32.mxu0 %v110
  %547 = vmatmul.mubr.f32.gmra.mrb[0].mxu0 %v109
  %v548 = vpop.f32.mrb[0].mxu0
  %v549 = vadd.f32 %v369, %v548
  %v550 = vpop.f32.mrb[0].mxu0
  %551 = vmatprep.mubr.f32.mxu0 %v115
  %552 = vmatmul.mubr.f32.gmra.mrb[0].mxu0 %v114
  %v553 = vpop.f32.mrb[0].mxu0
  %v554 = vadd.f32 %v374, %v553
  %v555 = vpop.f32.mrb[0].mxu0
  %556 = vmatprep.mubr.f32.mxu0 %v120
  %557 = vmatmul.mubr.f32.gmra.mrb[0].mxu0 %v119
  %v558 = vpop.f32.mrb[0].mxu0
  %v559 = vadd.f32 %v379, %v558
  %v560 = vpop.f32.mrb[0].mxu0
  %561 = vmatprep.mubr.f32.mxu0 %v125
  %562 = vmatmul.mubr.f32.gmra.mrb[0].mxu0 %v124
  %v563 = vpop.f32.mrb[0].mxu0
  %v564 = vadd.f32 %v384, %v563
  %v565 = vpop.f32.mrb[0].mxu0
  %566 = vmatprep.mubr.f32.mxu0 %v130
  %567 = vmatmul.mubr.f32.gmra.mrb[0].mxu0 %v129
  %v568 = vpop.f32.mrb[0].mxu0
  %v569 = vadd.f32 %v389, %v568
  %v570 = vpop.f32.mrb[0].mxu0
  %571 = vdwg.mxu0
  %572 = vmatprep.subr.mxu0 0.0
  %573 = vmatpush1.msra.mxu0 %v196
  %574 = vmatprep.subr.mxu0 0.0
  %575 = vmatpush1.msra.mxu0 %v197
  %576 = vmatprep.subr.mxu0 0.0
  %577 = vmatpush1.msra.mxu0 %v198
  %578 = vmatprep.subr.mxu0 0.0
  %579 = vmatpush1.msra.mxu0 %v199
  %580 = vmatprep.subr.mxu0 0.0
  %581 = vmatpush1.msra.mxu0 %v200
  %582 = vmatprep.subr.mxu0 0.0
  %583 = vmatpush1.msra.mxu0 %v201
  %584 = vmatprep.subr.mxu0 0.0
  %585 = vmatpush1.msra.mxu0 %v202
  %586 = vmatprep.subr.mxu0 0.0
  %587 = vmatpush1.msra.mxu0 %v203
  %588 = vmatprep.subr.mxu0 0.0
  %589 = vmatpush1.msra.mxu0 %v204
  %590 = vmatprep.subr.mxu0 0.0
  %591 = vmatpush1.msra.mxu0 %v205
  %592 = vmatprep.subr.mxu0 0.0
  %593 = vmatpush1.msra.mxu0 %v206
  %594 = vmatprep.subr.mxu0 0.0
  %595 = vmatpush1.msra.mxu0 %v207
  %596 = vmatprep.subr.mxu0 0.0
  %597 = vmatpush1.msra.mxu0 %v208
  %598 = vmatprep.subr.mxu0 0.0
  %599 = vmatpush1.msra.mxu0 %v209
  %600 = vmatprep.subr.mxu0 0.0
  %601 = vmatpush1.msra.mxu0 %v210
  %602 = vmatprep.subr.mxu0 0.0
  %603 = vmatpush1.msra.mxu0 %v211
  %604 = vmatprep.subr.mxu0 0.0
  %605 = vmatpush1.msra.mxu0 0.0
  %606 = vmatprep.subr.mxu0 0.0
  %607 = vmatpush1.msra.mxu0 0.0
  %608 = vmatprep.subr.mxu0 0.0
  %609 = vmatpush1.msra.mxu0 0.0
  %610 = vmatprep.subr.mxu0 0.0
  %611 = vmatpush1.msra.mxu0 0.0
  %612 = vmatprep.subr.mxu0 0.0
  %613 = vmatpush1.msra.mxu0 0.0
  %614 = vmatprep.subr.mxu0 0.0
  %615 = vmatpush1.msra.mxu0 0.0
  %616 = vmatprep.subr.mxu0 0.0
  %617 = vmatpush1.msra.mxu0 0.0
  %618 = vmatprep.subr.mxu0 0.0
  %619 = vmatpush1.msra.mxu0 0.0
  %620 = vmatprep.subr.mxu0 0.0
  %621 = vmatpush1.msra.mxu0 0.0
  %622 = vmatprep.subr.mxu0 0.0
  %623 = vmatpush1.msra.mxu0 0.0
  %624 = vmatprep.subr.mxu0 0.0
  %625 = vmatpush1.msra.mxu0 0.0
  %626 = vmatprep.subr.mxu0 0.0
  %627 = vmatpush1.msra.mxu0 0.0
  %628 = vmatprep.subr.mxu0 0.0
  %629 = vmatpush1.msra.mxu0 0.0
  %630 = vmatprep.subr.mxu0 0.0
  %631 = vmatpush1.msra.mxu0 0.0
  %632 = vmatprep.subr.mxu0 0.0
  %633 = vmatpush1.msra.mxu0 0.0
  %634 = vmatprep.subr.mxu0 0.0
  %635 = vmatpush1.msra.mxu0 0.0
  %636 = vmatprep.mubr.f32.mxu0 0.0
  %637 = vmatmul.mubr.f32.gmra.mrb[0].mxu0 %v21
  %v638 = vpop.f32.mrb[0].mxu0
  %v639 = vadd.f32 %v459, %v638
  %v640 = vpop.f32.mrb[0].mxu0
  %641 = vmatprep.mubr.f32.mxu0 0.0
  %642 = vmatmul.mubr.f32.gmra.mrb[0].mxu0 %v26
  %v643 = vpop.f32.mrb[0].mxu0
  %v644 = vadd.f32 %v464, %v643
  %v645 = vpop.f32.mrb[0].mxu0
  %646 = vmatprep.mubr.f32.mxu0 0.0
  %647 = vmatmul.mubr.f32.gmra.mrb[0].mxu0 %v31
  %v648 = vpop.f32.mrb[0].mxu0
  %v649 = vadd.f32 %v469, %v648
  %v650 = vpop.f32.mrb[0].mxu0
  %651 = vmatprep.mubr.f32.mxu0 0.0
  %652 = vmatmul.mubr.f32.gmra.mrb[0].mxu0 %v36
  %v653 = vpop.f32.mrb[0].mxu0
  %v654 = vadd.f32 %v474, %v653
  %v655 = vpop.f32.mrb[0].mxu0
  %656 = vmatprep.mubr.f32.mxu0 0.0
  %657 = vmatmul.mubr.f32.gmra.mrb[0].mxu0 %v41
  %v658 = vpop.f32.mrb[0].mxu0
  %v659 = vadd.f32 %v479, %v658
  %v660 = vpop.f32.mrb[0].mxu0
  %661 = vmatprep.mubr.f32.mxu0 0.0
  %662 = vmatmul.mubr.f32.gmra.mrb[0].mxu0 %v46
  %v663 = vpop.f32.mrb[0].mxu0
  %v664 = vadd.f32 %v484, %v663
  %v665 = vpop.f32.mrb[0].mxu0
  %666 = vmatprep.mubr.f32.mxu0 0.0
  %667 = vmatmul.mubr.f32.gmra.mrb[0].mxu0 %v51
  %v668 = vpop.f32.mrb[0].mxu0
  %v669 = vadd.f32 %v489, %v668
  %v670 = vpop.f32.mrb[0].mxu0
  %671 = vmatprep.mubr.f32.mxu0 0.0
  %672 = vmatmul.mubr.f32.gmra.mrb[0].mxu0 %v56
  %v673 = vpop.f32.mrb[0].mxu0
  %v674 = vadd.f32 %v494, %v673
  %v675 = vpop.f32.mrb[0].mxu0
  %676 = vmatprep.mubr.f32.mxu0 0.0
  %677 = vmatmul.mubr.f32.gmra.mrb[0].mxu0 %v61
  %v678 = vpop.f32.mrb[0].mxu0
  %v679 = vadd.f32 %v499, %v678
  %v680 = vpop.f32.mrb[0].mxu0
  %681 = vmatprep.mubr.f32.mxu0 0.0
  %682 = vmatmul.mubr.f32.gmra.mrb[0].mxu0 %v66
  %v683 = vpop.f32.mrb[0].mxu0
  %v684 = vadd.f32 %v504, %v683
  %v685 = vpop.f32.mrb[0].mxu0
  %686 = vmatprep.mubr.f32.mxu0 0.0
  %687 = vmatmul.mubr.f32.gmra.mrb[0].mxu0 %v71
  %v688 = vpop.f32.mrb[0].mxu0
  %v689 = vadd.f32 %v509, %v688
  %v690 = vpop.f32.mrb[0].mxu0
  %691 = vmatprep.mubr.f32.mxu0 0.0
  %692 = vmatmul.mubr.f32.gmra.mrb[0].mxu0 %v76
  %v693 = vpop.f32.mrb[0].mxu0
  %v694 = vadd.f32 %v514, %v693
  %v695 = vpop.f32.mrb[0].mxu0
  %696 = vmatprep.mubr.f32.mxu0 0.0
  %697 = vmatmul.mubr.f32.gmra.mrb[0].mxu0 %v81
  %v698 = vpop.f32.mrb[0].mxu0
  %v699 = vadd.f32 %v519, %v698
  %v700 = vpop.f32.mrb[0].mxu0
  %701 = vmatprep.mubr.f32.mxu0 0.0
  %702 = vmatmul.mubr.f32.gmra.mrb[0].mxu0 %v86
  %v703 = vpop.f32.mrb[0].mxu0
  %v704 = vadd.f32 %v524, %v703
  %v705 = vpop.f32.mrb[0].mxu0
  %706 = vmatprep.mubr.f32.mxu0 0.0
  %707 = vmatmul.mubr.f32.gmra.mrb[0].mxu0 %v91
  %v708 = vpop.f32.mrb[0].mxu0
  %v709 = vadd.f32 %v529, %v708
  %v710 = vpop.f32.mrb[0].mxu0
  %711 = vmatprep.mubr.f32.mxu0 0.0
  %712 = vmatmul.mubr.f32.gmra.mrb[0].mxu0 %v96
  %v713 = vpop.f32.mrb[0].mxu0
  %v714 = vadd.f32 %v534, %v713
  %v715 = vpop.f32.mrb[0].mxu0
  %716 = vmatprep.mubr.f32.mxu0 0.0
  %717 = vmatmul.mubr.f32.gmra.mrb[0].mxu0 %v101
  %v718 = vpop.f32.mrb[0].mxu0
  %v719 = vadd.f32 %v539, %v718
  %v720 = vpop.f32.mrb[0].mxu0
  %721 = vmatprep.mubr.f32.mxu0 0.0
  %722 = vmatmul.mubr.f32.gmra.mrb[0].mxu0 %v106
  %v723 = vpop.f32.mrb[0].mxu0
  %v724 = vadd.f32 %v544, %v723
  %v725 = vpop.f32.mrb[0].mxu0
  %726 = vmatprep.mubr.f32.mxu0 0.0
  %727 = vmatmul.mubr.f32.gmra.mrb[0].mxu0 %v111
  %v728 = vpop.f32.mrb[0].mxu0
  %v729 = vadd.f32 %v549, %v728
  %v730 = vpop.f32.mrb[0].mxu0
  %731 = vmatprep.mubr.f32.mxu0 0.0
  %732 = vmatmul.mubr.f32.gmra.mrb[0].mxu0 %v116
  %v733 = vpop.f32.mrb[0].mxu0
  %v734 = vadd.f32 %v554, %v733
  %v735 = vpop.f32.mrb[0].mxu0
  %736 = vmatprep.mubr.f32.mxu0 0.0
  %737 = vmatmul.mubr.f32.gmra.mrb[0].mxu0 %v121
  %v738 = vpop.f32.mrb[0].mxu0
  %v739 = vadd.f32 %v559, %v738
  %v740 = vpop.f32.mrb[0].mxu0
  %741 = vmatprep.mubr.f32.mxu0 0.0
  %742 = vmatmul.mubr.f32.gmra.mrb[0].mxu0 %v126
  %v743 = vpop.f32.mrb[0].mxu0
  %v744 = vadd.f32 %v564, %v743
  %v745 = vpop.f32.mrb[0].mxu0
  %746 = vmatprep.mubr.f32.mxu0 0.0
  %747 = vmatmul.mubr.f32.gmra.mrb[0].mxu0 %v131
  %v748 = vpop.f32.mrb[0].mxu0
  %v749 = vadd.f32 %v569, %v748
  %v750 = vpop.f32.mrb[0].mxu0
  %751 = vdwg.mxu0
  %v752 = vld [vmem:[%s2] sm:$0x1]
  %v754 = vlaneseq
  %v755 = vshrl.u32 %v754, 7
  %v756 = vsub.s32 0, %v755
  %v757 = vrot.slane %v752, %v756
  %v759 = vmul.f32 %v639, %v757
  %v760 = vmul.f32 %v644, %v757
  %v761 = vmul.f32 %v649, %v757
  %v762 = vmul.f32 %v654, %v757
  %v763 = vmul.f32 %v659, %v757
  %v764 = vmul.f32 %v664, %v757
  %v765 = vmul.f32 %v669, %v757
  %v766 = vmul.f32 %v674, %v757
  %v767 = vmul.f32 %v679, %v757
  %v768 = vmul.f32 %v684, %v757
  %v769 = vmul.f32 %v689, %v757
  %v770 = vmul.f32 %v694, %v757
  %v771 = vmul.f32 %v699, %v757
  %v772 = vmul.f32 %v704, %v757
  %v773 = vmul.f32 %v709, %v757
  %v774 = vmul.f32 %v714, %v757
  %v775 = vmul.f32 %v719, %v757
  %v776 = vmul.f32 %v724, %v757
  %v777 = vmul.f32 %v729, %v757
  %v778 = vmul.f32 %v734, %v757
  %v779 = vmul.f32 %v739, %v757
  %v780 = vmul.f32 %v744, %v757
  %v781 = vmul.f32 %v749, %v757
  %v782 = vld [vmem:[%s3] sm:$0x1]
  %v784 = vlaneseq
  %v785 = vshrl.u32 %v784, 7
  %v786 = vsub.s32 0, %v785
  %v787 = vrot.slane %v782, %v786
  %v789 = vadd.f32 %v759, %v787
  %v790 = vadd.f32 %v760, %v787
  %v791 = vadd.f32 %v761, %v787
  %v792 = vadd.f32 %v762, %v787
  %v793 = vadd.f32 %v763, %v787
  %v794 = vadd.f32 %v764, %v787
  %v795 = vadd.f32 %v765, %v787
  %v796 = vadd.f32 %v766, %v787
  %v797 = vadd.f32 %v767, %v787
  %v798 = vadd.f32 %v768, %v787
  %v799 = vadd.f32 %v769, %v787
  %v800 = vadd.f32 %v770, %v787
  %v801 = vadd.f32 %v771, %v787
  %v802 = vadd.f32 %v772, %v787
  %v803 = vadd.f32 %v773, %v787
  %v804 = vadd.f32 %v774, %v787
  %v805 = vadd.f32 %v775, %v787
  %v806 = vadd.f32 %v776, %v787
  %v807 = vadd.f32 %v777, %v787
  %v808 = vadd.f32 %v778, %v787
  %v809 = vadd.f32 %v779, %v787
  %v810 = vadd.f32 %v780, %v787
  %v811 = vadd.f32 %v781, %v787
  %v812 = vmax.f32 %v789, 0.0
  %v813 = vmax.f32 %v790, 0.0
  %v814 = vmax.f32 %v791, 0.0
  %v815 = vmax.f32 %v792, 0.0
  %v816 = vmax.f32 %v793, 0.0
  %v817 = vmax.f32 %v794, 0.0
  %v818 = vmax.f32 %v795, 0.0
  %v819 = vmax.f32 %v796, 0.0
  %v820 = vmax.f32 %v797, 0.0
  %v821 = vmax.f32 %v798, 0.0
  %v822 = vmax.f32 %v799, 0.0
  %v823 = vmax.f32 %v800, 0.0
  %v824 = vmax.f32 %v801, 0.0
  %v825 = vmax.f32 %v802, 0.0
  %v826 = vmax.f32 %v803, 0.0
  %v827 = vmax.f32 %v804, 0.0
  %v828 = vmax.f32 %v805, 0.0
  %v829 = vmax.f32 %v806, 0.0
  %v830 = vmax.f32 %v807, 0.0
  %v831 = vmax.f32 %v808, 0.0
  %v832 = vmax.f32 %v809, 0.0
  %v833 = vmax.f32 %v810, 0.0
  %v834 = vmax.f32 %v811, 0.0
  %835 = vst [vmem:[%s4] sm:$0xff] %v812
  %836 = vst [vmem:[%s4 + $0x8] sm:$0xff] %v813
  %837 = vst [vmem:[%s4 + $0x10] sm:$0xff] %v814
  %838 = vst [vmem:[%s4 + $0x18] sm:$0xff] %v815
  %839 = vst [vmem:[%s4 + $0x20] sm:$0xff] %v816
  %840 = vst [vmem:[%s4 + $0x28] sm:$0xff] %v817
  %841 = vst [vmem:[%s4 + $0x30] sm:$0xff] %v818
  %842 = vst [vmem:[%s4 + $0x38] sm:$0xff] %v819
  %843 = vst [vmem:[%s4 + $0x40] sm:$0xff] %v820
  %844 = vst [vmem:[%s4 + $0x48] sm:$0xff] %v821
  %845 = vst [vmem:[%s4 + $0x50] sm:$0xff] %v822
  %846 = vst [vmem:[%s4 + $0x58] sm:$0xff] %v823
  %847 = vst [vmem:[%s4 + $0x60] sm:$0xff] %v824
  %848 = vst [vmem:[%s4 + $0x68] sm:$0xff] %v825
  %849 = vst [vmem:[%s4 + $0x70] sm:$0xff] %v826
  %850 = vst [vmem:[%s4 + $0x78] sm:$0xff] %v827
  %851 = vst [vmem:[%s4 + $0x80] sm:$0xff] %v828
  %852 = vst [vmem:[%s4 + $0x88] sm:$0xff] %v829
  %853 = vst [vmem:[%s4 + $0x90] sm:$0xff] %v830
  %854 = vst [vmem:[%s4 + $0x98] sm:$0xff] %v831
  %855 = vst [vmem:[%s4 + $0xa0] sm:$0xff] %v832
  %856 = vst [vmem:[%s4 + $0xa8] sm:$0xff] %v833
  %857 = vst [vmem:[%s4 + $0xb0] sm:$0xff] %v834
  // Predicated region
  $region18: #{deep_double_sarsa_forward.6} parent=0 // pred_check
    _
  $region19: #{deep_double_sarsa_forward.6} parent=0 // pred_check_branch
    %859 = sbr.rel (0) target = $region21
  $region20: #{deep_double_sarsa_forward.6} parent=0 // pred_region
    _
  $region21: #{deep_double_sarsa_forward.6} parent=0 // pred_fallthru
    _
  // Predicated region
  $region22: #{deep_double_sarsa_forward.6} parent=0 // pred_check
    _
  $region23: #{deep_double_sarsa_forward.6} parent=0 // pred_check_branch
    %861 = sbr.rel (0) target = $region25
  $region24: #{deep_double_sarsa_forward.6} parent=0 // pred_region
    _
  $region25: #{deep_double_sarsa_forward.6} parent=0 // pred_fallthru
    _

// kernel: deep_double_sarsa_forward.7
$region0: #{deep_double_sarsa_forward.7}
  #allocation0 [shape = 'u32[]', space=smem, size = 0x4, offset = 0x4, fixed_abs, tag = 'smem constant byte address 0x4 - core index']
  #allocation1 [shape = 'u32[144,128]{1,0:T(1,128)}', space=vmem, size = 0x12000, scoped, tag = 'internal scratch']
  %s0 = inlined_call_operand.vmem [shape: f32[8,5760], index: 0, kind: input, shape index: {}]
  %s1 = inlined_call_operand.vmem [shape: bf16[5760,512], index: 1, kind: input, shape index: {}]
  %s2 = inlined_call_operand.vmem [shape: f32[512,128], index: 2, kind: input, shape index: {}]
  %s3 = inlined_call_operand.vmem [shape: f32[8,128], index: 3, kind: output, shape index: {}]
  %s4 = sld [smem:[#allocation0]]
  $region22: #{deep_double_sarsa_forward.7} parent=0
    _
  %s6 = ssub.s32 1, %s4
  %s7 = scalar_select 0, %s6, %s4
  // Predicated region
  $region2: #{deep_double_sarsa_forward.7} parent=0 // pred_check
    _
  $region3: #{deep_double_sarsa_forward.7} parent=0 // pred_check_branch
    %9 = sbr.rel (0) target = $region5
  $region4: #{deep_double_sarsa_forward.7} parent=0 // pred_region
    _
  $region5: #{deep_double_sarsa_forward.7} parent=0 // pred_fallthru
    _
  // Predicated region
  $region6: #{deep_double_sarsa_forward.7} parent=0 // pred_check
    _
  $region7: #{deep_double_sarsa_forward.7} parent=0 // pred_check_branch
    %11 = sbr.rel (0) target = $region9
  $region8: #{deep_double_sarsa_forward.7} parent=0 // pred_region
    _
  $region9: #{deep_double_sarsa_forward.7} parent=0 // pred_fallthru
    _
  // Predicated region
  $region10: #{deep_double_sarsa_forward.7} parent=0 // pred_check
    _
  $region11: #{deep_double_sarsa_forward.7} parent=0 // pred_check_branch
    %13 = sbr.rel (0) target = $region13
  $region12: #{deep_double_sarsa_forward.7} parent=0 // pred_region
    _
  $region13: #{deep_double_sarsa_forward.7} parent=0 // pred_fallthru
    _
  %v15 = vld [vmem:[%s0] sm:$0xff]
  %v16 = vld [vmem:[%s0 + $0x8] sm:$0xff]
  %v17 = vld [vmem:[%s0 + $0x10] sm:$0xff]
  %v18 = vld [vmem:[%s0 + $0x18] sm:$0xff]
  %v19 = vld [vmem:[%s0 + $0x20] sm:$0xff]
  %v20 = vld [vmem:[%s0 + $0x28] sm:$0xff]
  %v21 = vld [vmem:[%s0 + $0x30] sm:$0xff]
  %v22 = vld [vmem:[%s0 + $0x38] sm:$0xff]
  %v23 = vld [vmem:[%s0 + $0x40] sm:$0xff]
  %v24 = vld [vmem:[%s0 + $0x48] sm:$0xff]
  %v25 = vld [vmem:[%s0 + $0x50] sm:$0xff]
  %v26 = vld [vmem:[%s0 + $0x58] sm:$0xff]
  %v27 = vld [vmem:[%s0 + $0x60] sm:$0xff]
  %v28 = vld [vmem:[%s0 + $0x68] sm:$0xff]
  %v29 = vld [vmem:[%s0 + $0x70] sm:$0xff]
  %v30 = vld [vmem:[%s0 + $0x78] sm:$0xff]
  %v31 = vld [vmem:[%s0 + $0x80] sm:$0xff]
  %v32 = vld [vmem:[%s0 + $0x88] sm:$0xff]
  %v33 = vld [vmem:[%s0 + $0x90] sm:$0xff]
  %v34 = vld [vmem:[%s0 + $0x98] sm:$0xff]
  %v35 = vld [vmem:[%s0 + $0xa0] sm:$0xff]
  %v36 = vld [vmem:[%s0 + $0xa8] sm:$0xff]
  %v37 = vld [vmem:[%s0 + $0xb0] sm:$0xff]
  %v38 = vld [vmem:[%s0 + $0xb8] sm:$0xff]
  %v39 = vld [vmem:[%s0 + $0xc0] sm:$0xff]
  %v40 = vld [vmem:[%s0 + $0xc8] sm:$0xff]
  %v41 = vld [vmem:[%s0 + $0xd0] sm:$0xff]
  %v42 = vld [vmem:[%s0 + $0xd8] sm:$0xff]
  %v43 = vld [vmem:[%s0 + $0xe0] sm:$0xff]
  %v44 = vld [vmem:[%s0 + $0xe8] sm:$0xff]
  %v45 = vld [vmem:[%s0 + $0xf0] sm:$0xff]
  %v46 = vld [vmem:[%s0 + $0xf8] sm:$0xff]
  %v47 = vld [vmem:[%s0 + $0x100] sm:$0xff]
  %v48 = vld [vmem:[%s0 + $0x108] sm:$0xff]
  %v49 = vld [vmem:[%s0 + $0x110] sm:$0xff]
  %v50 = vld [vmem:[%s0 + $0x118] sm:$0xff]
  %v51 = vld [vmem:[%s0 + $0x120] sm:$0xff]
  %v52 = vld [vmem:[%s0 + $0x128] sm:$0xff]
  %v53 = vld [vmem:[%s0 + $0x130] sm:$0xff]
  %v54 = vld [vmem:[%s0 + $0x138] sm:$0xff]
  %v55 = vld [vmem:[%s0 + $0x140] sm:$0xff]
  %v56 = vld [vmem:[%s0 + $0x148] sm:$0xff]
  %v57 = vld [vmem:[%s0 + $0x150] sm:$0xff]
  %v58 = vld [vmem:[%s0 + $0x158] sm:$0xff]
  %v59 = vld [vmem:[%s0 + $0x160] sm:$0xff]
  %v60 = vpack.c.bf16 %v15, %v15
  %v61 = vpack.c.bf16 %v16, %v16
  %v62 = vpack.c.bf16 %v17, %v17
  %v63 = vpack.c.bf16 %v18, %v18
  %v64 = vpack.c.bf16 %v19, %v19
  %v65 = vpack.c.bf16 %v20, %v20
  %v66 = vpack.c.bf16 %v21, %v21
  %v67 = vpack.c.bf16 %v22, %v22
  %v68 = vpack.c.bf16 %v23, %v23
  %v69 = vpack.c.bf16 %v24, %v24
  %v70 = vpack.c.bf16 %v25, %v25
  %v71 = vpack.c.bf16 %v26, %v26
  %v72 = vpack.c.bf16 %v27, %v27
  %v73 = vpack.c.bf16 %v28, %v28
  %v74 = vpack.c.bf16 %v29, %v29
  %v75 = vpack.c.bf16 %v30, %v30
  %v76 = vpack.c.bf16 %v31, %v31
  %v77 = vpack.c.bf16 %v32, %v32
  %v78 = vpack.c.bf16 %v33, %v33
  %v79 = vpack.c.bf16 %v34, %v34
  %v80 = vpack.c.bf16 %v35, %v35
  %v81 = vpack.c.bf16 %v36, %v36
  %v82 = vpack.c.bf16 %v37, %v37
  %v83 = vpack.c.bf16 %v38, %v38
  %v84 = vpack.c.bf16 %v39, %v39
  %v85 = vpack.c.bf16 %v40, %v40
  %v86 = vpack.c.bf16 %v41, %v41
  %v87 = vpack.c.bf16 %v42, %v42
  %v88 = vpack.c.bf16 %v43, %v43
  %v89 = vpack.c.bf16 %v44, %v44
  %v90 = vpack.c.bf16 %v45, %v45
  %v91 = vpack.c.bf16 %v46, %v46
  %v92 = vpack.c.bf16 %v47, %v47
  %v93 = vpack.c.bf16 %v48, %v48
  %v94 = vpack.c.bf16 %v49, %v49
  %v95 = vpack.c.bf16 %v50, %v50
  %v96 = vpack.c.bf16 %v51, %v51
  %v97 = vpack.c.bf16 %v52, %v52
  %v98 = vpack.c.bf16 %v53, %v53
  %v99 = vpack.c.bf16 %v54, %v54
  %v100 = vpack.c.bf16 %v55, %v55
  %v101 = vpack.c.bf16 %v56, %v56
  %v102 = vpack.c.bf16 %v57, %v57
  %v103 = vpack.c.bf16 %v58, %v58
  %v104 = vpack.c.bf16 %v59, %v59
  %v105 = vld [vmem:[%s1] sm:$0xff]
  %v106 = vld [vmem:[%s1 + $0x8] sm:$0xff]
  %v107 = vld [vmem:[%s1 + $0x10] sm:$0xff]
  %v108 = vld [vmem:[%s1 + $0x18] sm:$0xff]
  %v109 = vld [vmem:[%s1 + $0x20] sm:$0xff]
  %v110 = vld [vmem:[%s1 + $0x28] sm:$0xff]
  %v111 = vld [vmem:[%s1 + $0x30] sm:$0xff]
  %v112 = vld [vmem:[%s1 + $0x38] sm:$0xff]
  %v113 = vld [vmem:[%s1 + $0x40] sm:$0xff]
  %v114 = vld [vmem:[%s1 + $0x48] sm:$0xff]
  %v115 = vld [vmem:[%s1 + $0x50] sm:$0xff]
  %v116 = vld [vmem:[%s1 + $0x58] sm:$0xff]
  %v117 = vld [vmem:[%s1 + $0x60] sm:$0xff]
  %v118 = vld [vmem:[%s1 + $0x68] sm:$0xff]
  %v119 = vld [vmem:[%s1 + $0x70] sm:$0xff]
  %v120 = vld [vmem:[%s1 + $0x78] sm:$0xff]
  %v121 = vld [vmem:[%s1 + $0x80] sm:$0xff]
  %v122 = vld [vmem:[%s1 + $0x88] sm:$0xff]
  %v123 = vld [vmem:[%s1 + $0x90] sm:$0xff]
  %v124 = vld [vmem:[%s1 + $0x98] sm:$0xff]
  %v125 = vld [vmem:[%s1 + $0xa0] sm:$0xff]
  %v126 = vld [vmem:[%s1 + $0xa8] sm:$0xff]
  %v127 = vld [vmem:[%s1 + $0xb0] sm:$0xff]
  %v128 = vld [vmem:[%s1 + $0xb8] sm:$0xff]
  %v129 = vld [vmem:[%s1 + $0xc0] sm:$0xff]
  %v130 = vld [vmem:[%s1 + $0xc8] sm:$0xff]
  %v131 = vld [vmem:[%s1 + $0xd0] sm:$0xff]
  %v132 = vld [vmem:[%s1 + $0xd8] sm:$0xff]
  %v133 = vld [vmem:[%s1 + $0xe0] sm:$0xff]
  %v134 = vld [vmem:[%s1 + $0xe8] sm:$0xff]
  %v135 = vld [vmem:[%s1 + $0xf0] sm:$0xff]
  %v136 = vld [vmem:[%s1 + $0xf8] sm:$0xff]
  %v137 = vld [vmem:[%s1 + $0x100] sm:$0xff]
  %v138 = vld [vmem:[%s1 + $0x108] sm:$0xff]
  %v139 = vld [vmem:[%s1 + $0x110] sm:$0xff]
  %v140 = vld [vmem:[%s1 + $0x118] sm:$0xff]
  %v141 = vld [vmem:[%s1 + $0x120] sm:$0xff]
  %v142 = vld [vmem:[%s1 + $0x128] sm:$0xff]
  %v143 = vld [vmem:[%s1 + $0x130] sm:$0xff]
  %v144 = vld [vmem:[%s1 + $0x138] sm:$0xff]
  %v145 = vld [vmem:[%s1 + $0x140] sm:$0xff]
  %v146 = vld [vmem:[%s1 + $0x148] sm:$0xff]
  %v147 = vld [vmem:[%s1 + $0x150] sm:$0xff]
  %v148 = vld [vmem:[%s1 + $0x158] sm:$0xff]
  %v149 = vld [vmem:[%s1 + $0x160] sm:$0xff]
  %v150 = vld [vmem:[%s1 + $0x168] sm:$0xff]
  %v151 = vld [vmem:[%s1 + $0x170] sm:$0xff]
  %v152 = vld [vmem:[%s1 + $0x178] sm:$0xff]
  %v153 = vld [vmem:[%s1 + $0x180] sm:$0xff]
  %v154 = vld [vmem:[%s1 + $0x188] sm:$0xff]
  %v155 = vld [vmem:[%s1 + $0x190] sm:$0xff]
  %v156 = vld [vmem:[%s1 + $0x198] sm:$0xff]
  %v157 = vld [vmem:[%s1 + $0x1a0] sm:$0xff]
  %v158 = vld [vmem:[%s1 + $0x1a8] sm:$0xff]
  %v159 = vld [vmem:[%s1 + $0x1b0] sm:$0xff]
  %v160 = vld [vmem:[%s1 + $0x1b8] sm:$0xff]
  %v161 = vld [vmem:[%s1 + $0x1c0] sm:$0xff]
  %v162 = vld [vmem:[%s1 + $0x1c8] sm:$0xff]
  %v163 = vld [vmem:[%s1 + $0x1d0] sm:$0xff]
  %v164 = vld [vmem:[%s1 + $0x1d8] sm:$0xff]
  %v165 = vld [vmem:[%s1 + $0x1e0] sm:$0xff]
  %v166 = vld [vmem:[%s1 + $0x1e8] sm:$0xff]
  %v167 = vld [vmem:[%s1 + $0x1f0] sm:$0xff]
  %v168 = vld [vmem:[%s1 + $0x1f8] sm:$0xff]
  %v169 = vld [vmem:[%s1 + $0x200] sm:$0xff]
  %v170 = vld [vmem:[%s1 + $0x208] sm:$0xff]
  %v171 = vld [vmem:[%s1 + $0x210] sm:$0xff]
  %v172 = vld [vmem:[%s1 + $0x218] sm:$0xff]
  %v173 = vld [vmem:[%s1 + $0x220] sm:$0xff]
  %v174 = vld [vmem:[%s1 + $0x228] sm:$0xff]
  %v175 = vld [vmem:[%s1 + $0x230] sm:$0xff]
  %v176 = vld [vmem:[%s1 + $0x238] sm:$0xff]
  %v177 = vld [vmem:[%s1 + $0x240] sm:$0xff]
  %v178 = vld [vmem:[%s1 + $0x248] sm:$0xff]
  %v179 = vld [vmem:[%s1 + $0x250] sm:$0xff]
  %v180 = vld [vmem:[%s1 + $0x258] sm:$0xff]
  %v181 = vld [vmem:[%s1 + $0x260] sm:$0xff]
  %v182 = vld [vmem:[%s1 + $0x268] sm:$0xff]
  %v183 = vld [vmem:[%s1 + $0x270] sm:$0xff]
  %v184 = vld [vmem:[%s1 + $0x278] sm:$0xff]
  %v185 = vld [vmem:[%s1 + $0x280] sm:$0xff]
  %v186 = vld [vmem:[%s1 + $0x288] sm:$0xff]
  %v187 = vld [vmem:[%s1 + $0x290] sm:$0xff]
  %v188 = vld [vmem:[%s1 + $0x298] sm:$0xff]
  %v189 = vld [vmem:[%s1 + $0x2a0] sm:$0xff]
  %v190 = vld [vmem:[%s1 + $0x2a8] sm:$0xff]
  %v191 = vld [vmem:[%s1 + $0x2b0] sm:$0xff]
  %v192 = vld [vmem:[%s1 + $0x2b8] sm:$0xff]
  %v193 = vld [vmem:[%s1 + $0x2c0] sm:$0xff]
  %v194 = vld [vmem:[%s1 + $0x2c8] sm:$0xff]
  %v195 = vld [vmem:[%s1 + $0x2d0] sm:$0xff]
  %v196 = vld [vmem:[%s1 + $0x2d8] sm:$0xff]
  %v197 = vld [vmem:[%s1 + $0x2e0] sm:$0xff]
  %v198 = vld [vmem:[%s1 + $0x2e8] sm:$0xff]
  %v199 = vld [vmem:[%s1 + $0x2f0] sm:$0xff]
  %v200 = vld [vmem:[%s1 + $0x2f8] sm:$0xff]
  %v201 = vld [vmem:[%s1 + $0x300] sm:$0xff]
  %v202 = vld [vmem:[%s1 + $0x308] sm:$0xff]
  %v203 = vld [vmem:[%s1 + $0x310] sm:$0xff]
  %v204 = vld [vmem:[%s1 + $0x318] sm:$0xff]
  %v205 = vld [vmem:[%s1 + $0x320] sm:$0xff]
  %v206 = vld [vmem:[%s1 + $0x328] sm:$0xff]
  %v207 = vld [vmem:[%s1 + $0x330] sm:$0xff]
  %v208 = vld [vmem:[%s1 + $0x338] sm:$0xff]
  %v209 = vld [vmem:[%s1 + $0x340] sm:$0xff]
  %v210 = vld [vmem:[%s1 + $0x348] sm:$0xff]
  %v211 = vld [vmem:[%s1 + $0x350] sm:$0xff]
  %v212 = vld [vmem:[%s1 + $0x358] sm:$0xff]
  %v213 = vld [vmem:[%s1 + $0x360] sm:$0xff]
  %v214 = vld [vmem:[%s1 + $0x368] sm:$0xff]
  %v215 = vld [vmem:[%s1 + $0x370] sm:$0xff]
  %v216 = vld [vmem:[%s1 + $0x378] sm:$0xff]
  %v217 = vld [vmem:[%s1 + $0x380] sm:$0xff]
  %v218 = vld [vmem:[%s1 + $0x388] sm:$0xff]
  %v219 = vld [vmem:[%s1 + $0x390] sm:$0xff]
  %v220 = vld [vmem:[%s1 + $0x398] sm:$0xff]
  %v221 = vld [vmem:[%s1 + $0x3a0] sm:$0xff]
  %v222 = vld [vmem:[%s1 + $0x3a8] sm:$0xff]
  %v223 = vld [vmem:[%s1 + $0x3b0] sm:$0xff]
  %v224 = vld [vmem:[%s1 + $0x3b8] sm:$0xff]
  %v225 = vld [vmem:[%s1 + $0x3c0] sm:$0xff]
  %v226 = vld [vmem:[%s1 + $0x3c8] sm:$0xff]
  %v227 = vld [vmem:[%s1 + $0x3d0] sm:$0xff]
  %v228 = vld [vmem:[%s1 + $0x3d8] sm:$0xff]
  %v229 = vld [vmem:[%s1 + $0x3e0] sm:$0xff]
  %v230 = vld [vmem:[%s1 + $0x3e8] sm:$0xff]
  %v231 = vld [vmem:[%s1 + $0x3f0] sm:$0xff]
  %v232 = vld [vmem:[%s1 + $0x3f8] sm:$0xff]
  %v233 = vld [vmem:[%s1 + $0x400] sm:$0xff]
  %v234 = vld [vmem:[%s1 + $0x408] sm:$0xff]
  %v235 = vld [vmem:[%s1 + $0x410] sm:$0xff]
  %v236 = vld [vmem:[%s1 + $0x418] sm:$0xff]
  %v237 = vld [vmem:[%s1 + $0x420] sm:$0xff]
  %v238 = vld [vmem:[%s1 + $0x428] sm:$0xff]
  %v239 = vld [vmem:[%s1 + $0x430] sm:$0xff]
  %v240 = vld [vmem:[%s1 + $0x438] sm:$0xff]
  %v241 = vld [vmem:[%s1 + $0x440] sm:$0xff]
  %v242 = vld [vmem:[%s1 + $0x448] sm:$0xff]
  %v243 = vld [vmem:[%s1 + $0x450] sm:$0xff]
  %v244 = vld [vmem:[%s1 + $0x458] sm:$0xff]
  %v245 = vld [vmem:[%s1 + $0x460] sm:$0xff]
  %v246 = vld [vmem:[%s1 + $0x468] sm:$0xff]
  %v247 = vld [vmem:[%s1 + $0x470] sm:$0xff]
  %v248 = vld [vmem:[%s1 + $0x478] sm:$0xff]
  %v249 = vld [vmem:[%s1 + $0x480] sm:$0xff]
  %v250 = vld [vmem:[%s1 + $0x488] sm:$0xff]
  %v251 = vld [vmem:[%s1 + $0x490] sm:$0xff]
  %v252 = vld [vmem:[%s1 + $0x498] sm:$0xff]
  %v253 = vld [vmem:[%s1 + $0x4a0] sm:$0xff]
  %v254 = vld [vmem:[%s1 + $0x4a8] sm:$0xff]
  %v255 = vld [vmem:[%s1 + $0x4b0] sm:$0xff]
  %v256 = vld [vmem:[%s1 + $0x4b8] sm:$0xff]
  %v257 = vld [vmem:[%s1 + $0x4c0] sm:$0xff]
  %v258 = vld [vmem:[%s1 + $0x4c8] sm:$0xff]
  %v259 = vld [vmem:[%s1 + $0x4d0] sm:$0xff]
  %v260 = vld [vmem:[%s1 + $0x4d8] sm:$0xff]
  %v261 = vld [vmem:[%s1 + $0x4e0] sm:$0xff]
  %v262 = vld [vmem:[%s1 + $0x4e8] sm:$0xff]
  %v263 = vld [vmem:[%s1 + $0x4f0] sm:$0xff]
  %v264 = vld [vmem:[%s1 + $0x4f8] sm:$0xff]
  %v265 = vld [vmem:[%s1 + $0x500] sm:$0xff]
  %v266 = vld [vmem:[%s1 + $0x508] sm:$0xff]
  %v267 = vld [vmem:[%s1 + $0x510] sm:$0xff]
  %v268 = vld [vmem:[%s1 + $0x518] sm:$0xff]
  %v269 = vld [vmem:[%s1 + $0x520] sm:$0xff]
  %v270 = vld [vmem:[%s1 + $0x528] sm:$0xff]
  %v271 = vld [vmem:[%s1 + $0x530] sm:$0xff]
  %v272 = vld [vmem:[%s1 + $0x538] sm:$0xff]
  %v273 = vld [vmem:[%s1 + $0x540] sm:$0xff]
  %v274 = vld [vmem:[%s1 + $0x548] sm:$0xff]
  %v275 = vld [vmem:[%s1 + $0x550] sm:$0xff]
  %v276 = vld [vmem:[%s1 + $0x558] sm:$0xff]
  %v277 = vld [vmem:[%s1 + $0x560] sm:$0xff]
  %v278 = vld [vmem:[%s1 + $0x568] sm:$0xff]
  %v279 = vld [vmem:[%s1 + $0x570] sm:$0xff]
  %v280 = vld [vmem:[%s1 + $0x578] sm:$0xff]
  %v281 = vld [vmem:[%s1 + $0x580] sm:$0xff]
  %v282 = vld [vmem:[%s1 + $0x588] sm:$0xff]
  %v283 = vld [vmem:[%s1 + $0x590] sm:$0xff]
  %v284 = vld [vmem:[%s1 + $0x598] sm:$0xff]
  %v285 = vld [vmem:[%s1 + $0x5a0] sm:$0xff]
  %v286 = vld [vmem:[%s1 + $0x5a8] sm:$0xff]
  %v287 = vld [vmem:[%s1 + $0x5b0] sm:$0xff]
  %v288 = vld [vmem:[%s1 + $0x5b8] sm:$0xff]
  %v289 = vld [vmem:[%s1 + $0x5c0] sm:$0xff]
  %v290 = vld [vmem:[%s1 + $0x5c8] sm:$0xff]
  %v291 = vld [vmem:[%s1 + $0x5d0] sm:$0xff]
  %v292 = vld [vmem:[%s1 + $0x5d8] sm:$0xff]
  %v293 = vld [vmem:[%s1 + $0x5e0] sm:$0xff]
  %v294 = vld [vmem:[%s1 + $0x5e8] sm:$0xff]
  %v295 = vld [vmem:[%s1 + $0x5f0] sm:$0xff]
  %v296 = vld [vmem:[%s1 + $0x5f8] sm:$0xff]
  %v297 = vld [vmem:[%s1 + $0x600] sm:$0xff]
  %v298 = vld [vmem:[%s1 + $0x608] sm:$0xff]
  %v299 = vld [vmem:[%s1 + $0x610] sm:$0xff]
  %v300 = vld [vmem:[%s1 + $0x618] sm:$0xff]
  %v301 = vld [vmem:[%s1 + $0x620] sm:$0xff]
  %v302 = vld [vmem:[%s1 + $0x628] sm:$0xff]
  %v303 = vld [vmem:[%s1 + $0x630] sm:$0xff]
  %v304 = vld [vmem:[%s1 + $0x638] sm:$0xff]
  %v305 = vld [vmem:[%s1 + $0x640] sm:$0xff]
  %v306 = vld [vmem:[%s1 + $0x648] sm:$0xff]
  %v307 = vld [vmem:[%s1 + $0x650] sm:$0xff]
  %v308 = vld [vmem:[%s1 + $0x658] sm:$0xff]
  %v309 = vld [vmem:[%s1 + $0x660] sm:$0xff]
  %v310 = vld [vmem:[%s1 + $0x668] sm:$0xff]
  %v311 = vld [vmem:[%s1 + $0x670] sm:$0xff]
  %v312 = vld [vmem:[%s1 + $0x678] sm:$0xff]
  %v313 = vld [vmem:[%s1 + $0x680] sm:$0xff]
  %v314 = vld [vmem:[%s1 + $0x688] sm:$0xff]
  %v315 = vld [vmem:[%s1 + $0x690] sm:$0xff]
  %v316 = vld [vmem:[%s1 + $0x698] sm:$0xff]
  %v317 = vld [vmem:[%s1 + $0x6a0] sm:$0xff]
  %v318 = vld [vmem:[%s1 + $0x6a8] sm:$0xff]
  %v319 = vld [vmem:[%s1 + $0x6b0] sm:$0xff]
  %v320 = vld [vmem:[%s1 + $0x6b8] sm:$0xff]
  %v321 = vld [vmem:[%s1 + $0x6c0] sm:$0xff]
  %v322 = vld [vmem:[%s1 + $0x6c8] sm:$0xff]
  %v323 = vld [vmem:[%s1 + $0x6d0] sm:$0xff]
  %v324 = vld [vmem:[%s1 + $0x6d8] sm:$0xff]
  %v325 = vld [vmem:[%s1 + $0x6e0] sm:$0xff]
  %v326 = vld [vmem:[%s1 + $0x6e8] sm:$0xff]
  %v327 = vld [vmem:[%s1 + $0x6f0] sm:$0xff]
  %v328 = vld [vmem:[%s1 + $0x6f8] sm:$0xff]
  %v329 = vld [vmem:[%s1 + $0x700] sm:$0xff]
  %v330 = vld [vmem:[%s1 + $0x708] sm:$0xff]
  %v331 = vld [vmem:[%s1 + $0x710] sm:$0xff]
  %v332 = vld [vmem:[%s1 + $0x718] sm:$0xff]
  %v333 = vld [vmem:[%s1 + $0x720] sm:$0xff]
  %v334 = vld [vmem:[%s1 + $0x728] sm:$0xff]
  %v335 = vld [vmem:[%s1 + $0x730] sm:$0xff]
  %v336 = vld [vmem:[%s1 + $0x738] sm:$0xff]
  %v337 = vld [vmem:[%s1 + $0x740] sm:$0xff]
  %v338 = vld [vmem:[%s1 + $0x748] sm:$0xff]
  %v339 = vld [vmem:[%s1 + $0x750] sm:$0xff]
  %v340 = vld [vmem:[%s1 + $0x758] sm:$0xff]
  %v341 = vld [vmem:[%s1 + $0x760] sm:$0xff]
  %v342 = vld [vmem:[%s1 + $0x768] sm:$0xff]
  %v343 = vld [vmem:[%s1 + $0x770] sm:$0xff]
  %v344 = vld [vmem:[%s1 + $0x778] sm:$0xff]
  %v345 = vld [vmem:[%s1 + $0x780] sm:$0xff]
  %v346 = vld [vmem:[%s1 + $0x788] sm:$0xff]
  %v347 = vld [vmem:[%s1 + $0x790] sm:$0xff]
  %v348 = vld [vmem:[%s1 + $0x798] sm:$0xff]
  %v349 = vld [vmem:[%s1 + $0x7a0] sm:$0xff]
  %v350 = vld [vmem:[%s1 + $0x7a8] sm:$0xff]
  %v351 = vld [vmem:[%s1 + $0x7b0] sm:$0xff]
  %v352 = vld [vmem:[%s1 + $0x7b8] sm:$0xff]
  %v353 = vld [vmem:[%s1 + $0x7c0] sm:$0xff]
  %v354 = vld [vmem:[%s1 + $0x7c8] sm:$0xff]
  %v355 = vld [vmem:[%s1 + $0x7d0] sm:$0xff]
  %v356 = vld [vmem:[%s1 + $0x7d8] sm:$0xff]
  %v357 = vld [vmem:[%s1 + $0x7e0] sm:$0xff]
  %v358 = vld [vmem:[%s1 + $0x7e8] sm:$0xff]
  %v359 = vld [vmem:[%s1 + $0x7f0] sm:$0xff]
  %v360 = vld [vmem:[%s1 + $0x7f8] sm:$0xff]
  %v361 = vld [vmem:[%s1 + $0x800] sm:$0xff]
  %v362 = vld [vmem:[%s1 + $0x808] sm:$0xff]
  %v363 = vld [vmem:[%s1 + $0x810] sm:$0xff]
  %v364 = vld [vmem:[%s1 + $0x818] sm:$0xff]
  %v365 = vld [vmem:[%s1 + $0x820] sm:$0xff]
  %v366 = vld [vmem:[%s1 + $0x828] sm:$0xff]
  %v367 = vld [vmem:[%s1 + $0x830] sm:$0xff]
  %v368 = vld [vmem:[%s1 + $0x838] sm:$0xff]
  %v369 = vld [vmem:[%s1 + $0x840] sm:$0xff]
  %v370 = vld [vmem:[%s1 + $0x848] sm:$0xff]
  %v371 = vld [vmem:[%s1 + $0x850] sm:$0xff]
  %v372 = vld [vmem:[%s1 + $0x858] sm:$0xff]
  %v373 = vld [vmem:[%s1 + $0x860] sm:$0xff]
  %v374 = vld [vmem:[%s1 + $0x868] sm:$0xff]
  %v375 = vld [vmem:[%s1 + $0x870] sm:$0xff]
  %v376 = vld [vmem:[%s1 + $0x878] sm:$0xff]
  %v377 = vld [vmem:[%s1 + $0x880] sm:$0xff]
  %v378 = vld [vmem:[%s1 + $0x888] sm:$0xff]
  %v379 = vld [vmem:[%s1 + $0x890] sm:$0xff]
  %v380 = vld [vmem:[%s1 + $0x898] sm:$0xff]
  %v381 = vld [vmem:[%s1 + $0x8a0] sm:$0xff]
  %v382 = vld [vmem:[%s1 + $0x8a8] sm:$0xff]
  %v383 = vld [vmem:[%s1 + $0x8b0] sm:$0xff]
  %v384 = vld [vmem:[%s1 + $0x8b8] sm:$0xff]
  %v385 = vld [vmem:[%s1 + $0x8c0] sm:$0xff]
  %v386 = vld [vmem:[%s1 + $0x8c8] sm:$0xff]
  %v387 = vld [vmem:[%s1 + $0x8d0] sm:$0xff]
  %v388 = vld [vmem:[%s1 + $0x8d8] sm:$0xff]
  %v389 = vld [vmem:[%s1 + $0x8e0] sm:$0xff]
  %v390 = vld [vmem:[%s1 + $0x8e8] sm:$0xff]
  %v391 = vld [vmem:[%s1 + $0x8f0] sm:$0xff]
  %v392 = vld [vmem:[%s1 + $0x8f8] sm:$0xff]
  %v393 = vld [vmem:[%s1 + $0x900] sm:$0xff]
  %v394 = vld [vmem:[%s1 + $0x908] sm:$0xff]
  %v395 = vld [vmem:[%s1 + $0x910] sm:$0xff]
  %v396 = vld [vmem:[%s1 + $0x918] sm:$0xff]
  %v397 = vld [vmem:[%s1 + $0x920] sm:$0xff]
  %v398 = vld [vmem:[%s1 + $0x928] sm:$0xff]
  %v399 = vld [vmem:[%s1 + $0x930] sm:$0xff]
  %v400 = vld [vmem:[%s1 + $0x938] sm:$0xff]
  %v401 = vld [vmem:[%s1 + $0x940] sm:$0xff]
  %v402 = vld [vmem:[%s1 + $0x948] sm:$0xff]
  %v403 = vld [vmem:[%s1 + $0x950] sm:$0xff]
  %v404 = vld [vmem:[%s1 + $0x958] sm:$0xff]
  %v405 = vld [vmem:[%s1 + $0x960] sm:$0xff]
  %v406 = vld [vmem:[%s1 + $0x968] sm:$0xff]
  %v407 = vld [vmem:[%s1 + $0x970] sm:$0xff]
  %v408 = vld [vmem:[%s1 + $0x978] sm:$0xff]
  %v409 = vld [vmem:[%s1 + $0x980] sm:$0xff]
  %v410 = vld [vmem:[%s1 + $0x988] sm:$0xff]
  %v411 = vld [vmem:[%s1 + $0x990] sm:$0xff]
  %v412 = vld [vmem:[%s1 + $0x998] sm:$0xff]
  %v413 = vld [vmem:[%s1 + $0x9a0] sm:$0xff]
  %v414 = vld [vmem:[%s1 + $0x9a8] sm:$0xff]
  %v415 = vld [vmem:[%s1 + $0x9b0] sm:$0xff]
  %v416 = vld [vmem:[%s1 + $0x9b8] sm:$0xff]
  %v417 = vld [vmem:[%s1 + $0x9c0] sm:$0xff]
  %v418 = vld [vmem:[%s1 + $0x9c8] sm:$0xff]
  %v419 = vld [vmem:[%s1 + $0x9d0] sm:$0xff]
  %v420 = vld [vmem:[%s1 + $0x9d8] sm:$0xff]
  %v421 = vld [vmem:[%s1 + $0x9e0] sm:$0xff]
  %v422 = vld [vmem:[%s1 + $0x9e8] sm:$0xff]
  %v423 = vld [vmem:[%s1 + $0x9f0] sm:$0xff]
  %v424 = vld [vmem:[%s1 + $0x9f8] sm:$0xff]
  %v425 = vld [vmem:[%s1 + $0xa00] sm:$0xff]
  %v426 = vld [vmem:[%s1 + $0xa08] sm:$0xff]
  %v427 = vld [vmem:[%s1 + $0xa10] sm:$0xff]
  %v428 = vld [vmem:[%s1 + $0xa18] sm:$0xff]
  %v429 = vld [vmem:[%s1 + $0xa20] sm:$0xff]
  %v430 = vld [vmem:[%s1 + $0xa28] sm:$0xff]
  %v431 = vld [vmem:[%s1 + $0xa30] sm:$0xff]
  %v432 = vld [vmem:[%s1 + $0xa38] sm:$0xff]
  %v433 = vld [vmem:[%s1 + $0xa40] sm:$0xff]
  %v434 = vld [vmem:[%s1 + $0xa48] sm:$0xff]
  %v435 = vld [vmem:[%s1 + $0xa50] sm:$0xff]
  %v436 = vld [vmem:[%s1 + $0xa58] sm:$0xff]
  %v437 = vld [vmem:[%s1 + $0xa60] sm:$0xff]
  %v438 = vld [vmem:[%s1 + $0xa68] sm:$0xff]
  %v439 = vld [vmem:[%s1 + $0xa70] sm:$0xff]
  %v440 = vld [vmem:[%s1 + $0xa78] sm:$0xff]
  %v441 = vld [vmem:[%s1 + $0xa80] sm:$0xff]
  %v442 = vld [vmem:[%s1 + $0xa88] sm:$0xff]
  %v443 = vld [vmem:[%s1 + $0xa90] sm:$0xff]
  %v444 = vld [vmem:[%s1 + $0xa98] sm:$0xff]
  %v445 = vld [vmem:[%s1 + $0xaa0] sm:$0xff]
  %v446 = vld [vmem:[%s1 + $0xaa8] sm:$0xff]
  %v447 = vld [vmem:[%s1 + $0xab0] sm:$0xff]
  %v448 = vld [vmem:[%s1 + $0xab8] sm:$0xff]
  %v449 = vld [vmem:[%s1 + $0xac0] sm:$0xff]
  %v450 = vld [vmem:[%s1 + $0xac8] sm:$0xff]
  %v451 = vld [vmem:[%s1 + $0xad0] sm:$0xff]
  %v452 = vld [vmem:[%s1 + $0xad8] sm:$0xff]
  %v453 = vld [vmem:[%s1 + $0xae0] sm:$0xff]
  %v454 = vld [vmem:[%s1 + $0xae8] sm:$0xff]
  %v455 = vld [vmem:[%s1 + $0xaf0] sm:$0xff]
  %v456 = vld [vmem:[%s1 + $0xaf8] sm:$0xff]
  %v457 = vld [vmem:[%s1 + $0xb00] sm:$0xff]
  %v458 = vld [vmem:[%s1 + $0xb08] sm:$0xff]
  %v459 = vld [vmem:[%s1 + $0xb10] sm:$0xff]
  %v460 = vld [vmem:[%s1 + $0xb18] sm:$0xff]
  %v461 = vld [vmem:[%s1 + $0xb20] sm:$0xff]
  %v462 = vld [vmem:[%s1 + $0xb28] sm:$0xff]
  %v463 = vld [vmem:[%s1 + $0xb30] sm:$0xff]
  %v464 = vld [vmem:[%s1 + $0xb38] sm:$0xff]
  %v465 = vld [vmem:[%s1 + $0xb40] sm:$0xff]
  %v466 = vld [vmem:[%s1 + $0xb48] sm:$0xff]
  %v467 = vld [vmem:[%s1 + $0xb50] sm:$0xff]
  %v468 = vld [vmem:[%s1 + $0xb58] sm:$0xff]
  %v469 = vld [vmem:[%s1 + $0xb60] sm:$0xff]
  %v470 = vld [vmem:[%s1 + $0xb68] sm:$0xff]
  %v471 = vld [vmem:[%s1 + $0xb70] sm:$0xff]
  %v472 = vld [vmem:[%s1 + $0xb78] sm:$0xff]
  %v473 = vld [vmem:[%s1 + $0xb80] sm:$0xff]
  %v474 = vld [vmem:[%s1 + $0xb88] sm:$0xff]
  %v475 = vld [vmem:[%s1 + $0xb90] sm:$0xff]
  %v476 = vld [vmem:[%s1 + $0xb98] sm:$0xff]
  %v477 = vld [vmem:[%s1 + $0xba0] sm:$0xff]
  %v478 = vld [vmem:[%s1 + $0xba8] sm:$0xff]
  %v479 = vld [vmem:[%s1 + $0xbb0] sm:$0xff]
  %v480 = vld [vmem:[%s1 + $0xbb8] sm:$0xff]
  %v481 = vld [vmem:[%s1 + $0xbc0] sm:$0xff]
  %v482 = vld [vmem:[%s1 + $0xbc8] sm:$0xff]
  %v483 = vld [vmem:[%s1 + $0xbd0] sm:$0xff]
  %v484 = vld [vmem:[%s1 + $0xbd8] sm:$0xff]
  %v485 = vld [vmem:[%s1 + $0xbe0] sm:$0xff]
  %v486 = vld [vmem:[%s1 + $0xbe8] sm:$0xff]
  %v487 = vld [vmem:[%s1 + $0xbf0] sm:$0xff]
  %v488 = vld [vmem:[%s1 + $0xbf8] sm:$0xff]
  %v489 = vld [vmem:[%s1 + $0xc00] sm:$0xff]
  %v490 = vld [vmem:[%s1 + $0xc08] sm:$0xff]
  %v491 = vld [vmem:[%s1 + $0xc10] sm:$0xff]
  %v492 = vld [vmem:[%s1 + $0xc18] sm:$0xff]
  %v493 = vld [vmem:[%s1 + $0xc20] sm:$0xff]
  %v494 = vld [vmem:[%s1 + $0xc28] sm:$0xff]
  %v495 = vld [vmem:[%s1 + $0xc30] sm:$0xff]
  %v496 = vld [vmem:[%s1 + $0xc38] sm:$0xff]
  %v497 = vld [vmem:[%s1 + $0xc40] sm:$0xff]
  %v498 = vld [vmem:[%s1 + $0xc48] sm:$0xff]
  %v499 = vld [vmem:[%s1 + $0xc50] sm:$0xff]
  %v500 = vld [vmem:[%s1 + $0xc58] sm:$0xff]
  %v501 = vld [vmem:[%s1 + $0xc60] sm:$0xff]
  %v502 = vld [vmem:[%s1 + $0xc68] sm:$0xff]
  %v503 = vld [vmem:[%s1 + $0xc70] sm:$0xff]
  %v504 = vld [vmem:[%s1 + $0xc78] sm:$0xff]
  %v505 = vld [vmem:[%s1 + $0xc80] sm:$0xff]
  %v506 = vld [vmem:[%s1 + $0xc88] sm:$0xff]
  %v507 = vld [vmem:[%s1 + $0xc90] sm:$0xff]
  %v508 = vld [vmem:[%s1 + $0xc98] sm:$0xff]
  %v509 = vld [vmem:[%s1 + $0xca0] sm:$0xff]
  %v510 = vld [vmem:[%s1 + $0xca8] sm:$0xff]
  %v511 = vld [vmem:[%s1 + $0xcb0] sm:$0xff]
  %v512 = vld [vmem:[%s1 + $0xcb8] sm:$0xff]
  %v513 = vld [vmem:[%s1 + $0xcc0] sm:$0xff]
  %v514 = vld [vmem:[%s1 + $0xcc8] sm:$0xff]
  %v515 = vld [vmem:[%s1 + $0xcd0] sm:$0xff]
  %v516 = vld [vmem:[%s1 + $0xcd8] sm:$0xff]
  %v517 = vld [vmem:[%s1 + $0xce0] sm:$0xff]
  %v518 = vld [vmem:[%s1 + $0xce8] sm:$0xff]
  %v519 = vld [vmem:[%s1 + $0xcf0] sm:$0xff]
  %v520 = vld [vmem:[%s1 + $0xcf8] sm:$0xff]
  %v521 = vld [vmem:[%s1 + $0xd00] sm:$0xff]
  %v522 = vld [vmem:[%s1 + $0xd08] sm:$0xff]
  %v523 = vld [vmem:[%s1 + $0xd10] sm:$0xff]
  %v524 = vld [vmem:[%s1 + $0xd18] sm:$0xff]
  %v525 = vld [vmem:[%s1 + $0xd20] sm:$0xff]
  %v526 = vld [vmem:[%s1 + $0xd28] sm:$0xff]
  %v527 = vld [vmem:[%s1 + $0xd30] sm:$0xff]
  %v528 = vld [vmem:[%s1 + $0xd38] sm:$0xff]
  %v529 = vld [vmem:[%s1 + $0xd40] sm:$0xff]
  %v530 = vld [vmem:[%s1 + $0xd48] sm:$0xff]
  %v531 = vld [vmem:[%s1 + $0xd50] sm:$0xff]
  %v532 = vld [vmem:[%s1 + $0xd58] sm:$0xff]
  %v533 = vld [vmem:[%s1 + $0xd60] sm:$0xff]
  %v534 = vld [vmem:[%s1 + $0xd68] sm:$0xff]
  %v535 = vld [vmem:[%s1 + $0xd70] sm:$0xff]
  %v536 = vld [vmem:[%s1 + $0xd78] sm:$0xff]
  %v537 = vld [vmem:[%s1 + $0xd80] sm:$0xff]
  %v538 = vld [vmem:[%s1 + $0xd88] sm:$0xff]
  %v539 = vld [vmem:[%s1 + $0xd90] sm:$0xff]
  %v540 = vld [vmem:[%s1 + $0xd98] sm:$0xff]
  %v541 = vld [vmem:[%s1 + $0xda0] sm:$0xff]
  %v542 = vld [vmem:[%s1 + $0xda8] sm:$0xff]
  %v543 = vld [vmem:[%s1 + $0xdb0] sm:$0xff]
  %v544 = vld [vmem:[%s1 + $0xdb8] sm:$0xff]
  %v545 = vld [vmem:[%s1 + $0xdc0] sm:$0xff]
  %v546 = vld [vmem:[%s1 + $0xdc8] sm:$0xff]
  %v547 = vld [vmem:[%s1 + $0xdd0] sm:$0xff]
  %v548 = vld [vmem:[%s1 + $0xdd8] sm:$0xff]
  %v549 = vld [vmem:[%s1 + $0xde0] sm:$0xff]
  %v550 = vld [vmem:[%s1 + $0xde8] sm:$0xff]
  %v551 = vld [vmem:[%s1 + $0xdf0] sm:$0xff]
  %v552 = vld [vmem:[%s1 + $0xdf8] sm:$0xff]
  %v553 = vld [vmem:[%s1 + $0xe00] sm:$0xff]
  %v554 = vld [vmem:[%s1 + $0xe08] sm:$0xff]
  %v555 = vld [vmem:[%s1 + $0xe10] sm:$0xff]
  %v556 = vld [vmem:[%s1 + $0xe18] sm:$0xff]
  %v557 = vld [vmem:[%s1 + $0xe20] sm:$0xff]
  %v558 = vld [vmem:[%s1 + $0xe28] sm:$0xff]
  %v559 = vld [vmem:[%s1 + $0xe30] sm:$0xff]
  %v560 = vld [vmem:[%s1 + $0xe38] sm:$0xff]
  %v561 = vld [vmem:[%s1 + $0xe40] sm:$0xff]
  %v562 = vld [vmem:[%s1 + $0xe48] sm:$0xff]
  %v563 = vld [vmem:[%s1 + $0xe50] sm:$0xff]
  %v564 = vld [vmem:[%s1 + $0xe58] sm:$0xff]
  %v565 = vld [vmem:[%s1 + $0xe60] sm:$0xff]
  %v566 = vld [vmem:[%s1 + $0xe68] sm:$0xff]
  %v567 = vld [vmem:[%s1 + $0xe70] sm:$0xff]
  %v568 = vld [vmem:[%s1 + $0xe78] sm:$0xff]
  %v569 = vld [vmem:[%s1 + $0xe80] sm:$0xff]
  %v570 = vld [vmem:[%s1 + $0xe88] sm:$0xff]
  %v571 = vld [vmem:[%s1 + $0xe90] sm:$0xff]
  %v572 = vld [vmem:[%s1 + $0xe98] sm:$0xff]
  %v573 = vld [vmem:[%s1 + $0xea0] sm:$0xff]
  %v574 = vld [vmem:[%s1 + $0xea8] sm:$0xff]
  %v575 = vld [vmem:[%s1 + $0xeb0] sm:$0xff]
  %v576 = vld [vmem:[%s1 + $0xeb8] sm:$0xff]
  %v577 = vld [vmem:[%s1 + $0xec0] sm:$0xff]
  %v578 = vld [vmem:[%s1 + $0xec8] sm:$0xff]
  %v579 = vld [vmem:[%s1 + $0xed0] sm:$0xff]
  %v580 = vld [vmem:[%s1 + $0xed8] sm:$0xff]
  %v581 = vld [vmem:[%s1 + $0xee0] sm:$0xff]
  %v582 = vld [vmem:[%s1 + $0xee8] sm:$0xff]
  %v583 = vld [vmem:[%s1 + $0xef0] sm:$0xff]
  %v584 = vld [vmem:[%s1 + $0xef8] sm:$0xff]
  %v585 = vld [vmem:[%s1 + $0xf00] sm:$0xff]
  %v586 = vld [vmem:[%s1 + $0xf08] sm:$0xff]
  %v587 = vld [vmem:[%s1 + $0xf10] sm:$0xff]
  %v588 = vld [vmem:[%s1 + $0xf18] sm:$0xff]
  %v589 = vld [vmem:[%s1 + $0xf20] sm:$0xff]
  %v590 = vld [vmem:[%s1 + $0xf28] sm:$0xff]
  %v591 = vld [vmem:[%s1 + $0xf30] sm:$0xff]
  %v592 = vld [vmem:[%s1 + $0xf38] sm:$0xff]
  %v593 = vld [vmem:[%s1 + $0xf40] sm:$0xff]
  %v594 = vld [vmem:[%s1 + $0xf48] sm:$0xff]
  %v595 = vld [vmem:[%s1 + $0xf50] sm:$0xff]
  %v596 = vld [vmem:[%s1 + $0xf58] sm:$0xff]
  %v597 = vld [vmem:[%s1 + $0xf60] sm:$0xff]
  %v598 = vld [vmem:[%s1 + $0xf68] sm:$0xff]
  %v599 = vld [vmem:[%s1 + $0xf70] sm:$0xff]
  %v600 = vld [vmem:[%s1 + $0xf78] sm:$0xff]
  %v601 = vld [vmem:[%s1 + $0xf80] sm:$0xff]
  %v602 = vld [vmem:[%s1 + $0xf88] sm:$0xff]
  %v603 = vld [vmem:[%s1 + $0xf90] sm:$0xff]
  %v604 = vld [vmem:[%s1 + $0xf98] sm:$0xff]
  %v605 = vld [vmem:[%s1 + $0xfa0] sm:$0xff]
  %v606 = vld [vmem:[%s1 + $0xfa8] sm:$0xff]
  %v607 = vld [vmem:[%s1 + $0xfb0] sm:$0xff]
  %v608 = vld [vmem:[%s1 + $0xfb8] sm:$0xff]
  %v609 = vld [vmem:[%s1 + $0xfc0] sm:$0xff]
  %v610 = vld [vmem:[%s1 + $0xfc8] sm:$0xff]
  %v611 = vld [vmem:[%s1 + $0xfd0] sm:$0xff]
  %v612 = vld [vmem:[%s1 + $0xfd8] sm:$0xff]
  %v613 = vld [vmem:[%s1 + $0xfe0] sm:$0xff]
  %v614 = vld [vmem:[%s1 + $0xfe8] sm:$0xff]
  %v615 = vld [vmem:[%s1 + $0xff0] sm:$0xff]
  %v616 = vld [vmem:[%s1 + $0xff8] sm:$0xff]
  %v617 = vld [vmem:[%s1 + $0x1000] sm:$0xff]
  %v618 = vld [vmem:[%s1 + $0x1008] sm:$0xff]
  %v619 = vld [vmem:[%s1 + $0x1010] sm:$0xff]
  %v620 = vld [vmem:[%s1 + $0x1018] sm:$0xff]
  %v621 = vld [vmem:[%s1 + $0x1020] sm:$0xff]
  %v622 = vld [vmem:[%s1 + $0x1028] sm:$0xff]
  %v623 = vld [vmem:[%s1 + $0x1030] sm:$0xff]
  %v624 = vld [vmem:[%s1 + $0x1038] sm:$0xff]
  %v625 = vld [vmem:[%s1 + $0x1040] sm:$0xff]
  %v626 = vld [vmem:[%s1 + $0x1048] sm:$0xff]
  %v627 = vld [vmem:[%s1 + $0x1050] sm:$0xff]
  %v628 = vld [vmem:[%s1 + $0x1058] sm:$0xff]
  %v629 = vld [vmem:[%s1 + $0x1060] sm:$0xff]
  %v630 = vld [vmem:[%s1 + $0x1068] sm:$0xff]
  %v631 = vld [vmem:[%s1 + $0x1070] sm:$0xff]
  %v632 = vld [vmem:[%s1 + $0x1078] sm:$0xff]
  %v633 = vld [vmem:[%s1 + $0x1080] sm:$0xff]
  %v634 = vld [vmem:[%s1 + $0x1088] sm:$0xff]
  %v635 = vld [vmem:[%s1 + $0x1090] sm:$0xff]
  %v636 = vld [vmem:[%s1 + $0x1098] sm:$0xff]
  %v637 = vld [vmem:[%s1 + $0x10a0] sm:$0xff]
  %v638 = vld [vmem:[%s1 + $0x10a8] sm:$0xff]
  %v639 = vld [vmem:[%s1 + $0x10b0] sm:$0xff]
  %v640 = vld [vmem:[%s1 + $0x10b8] sm:$0xff]
  %v641 = vld [vmem:[%s1 + $0x10c0] sm:$0xff]
  %v642 = vld [vmem:[%s1 + $0x10c8] sm:$0xff]
  %v643 = vld [vmem:[%s1 + $0x10d0] sm:$0xff]
  %v644 = vld [vmem:[%s1 + $0x10d8] sm:$0xff]
  %v645 = vld [vmem:[%s1 + $0x10e0] sm:$0xff]
  %v646 = vld [vmem:[%s1 + $0x10e8] sm:$0xff]
  %v647 = vld [vmem:[%s1 + $0x10f0] sm:$0xff]
  %v648 = vld [vmem:[%s1 + $0x10f8] sm:$0xff]
  %v649 = vld [vmem:[%s1 + $0x1100] sm:$0xff]
  %v650 = vld [vmem:[%s1 + $0x1108] sm:$0xff]
  %v651 = vld [vmem:[%s1 + $0x1110] sm:$0xff]
  %v652 = vld [vmem:[%s1 + $0x1118] sm:$0xff]
  %v653 = vld [vmem:[%s1 + $0x1120] sm:$0xff]
  %v654 = vld [vmem:[%s1 + $0x1128] sm:$0xff]
  %v655 = vld [vmem:[%s1 + $0x1130] sm:$0xff]
  %v656 = vld [vmem:[%s1 + $0x1138] sm:$0xff]
  %v657 = vld [vmem:[%s1 + $0x1140] sm:$0xff]
  %v658 = vld [vmem:[%s1 + $0x1148] sm:$0xff]
  %v659 = vld [vmem:[%s1 + $0x1150] sm:$0xff]
  %v660 = vld [vmem:[%s1 + $0x1158] sm:$0xff]
  %v661 = vld [vmem:[%s1 + $0x1160] sm:$0xff]
  %v662 = vld [vmem:[%s1 + $0x1168] sm:$0xff]
  %v663 = vld [vmem:[%s1 + $0x1170] sm:$0xff]
  %v664 = vld [vmem:[%s1 + $0x1178] sm:$0xff]
  %v665 = vld [vmem:[%s1 + $0x1180] sm:$0xff]
  %v666 = vld [vmem:[%s1 + $0x1188] sm:$0xff]
  %v667 = vld [vmem:[%s1 + $0x1190] sm:$0xff]
  %v668 = vld [vmem:[%s1 + $0x1198] sm:$0xff]
  %v669 = vld [vmem:[%s1 + $0x11a0] sm:$0xff]
  %v670 = vld [vmem:[%s1 + $0x11a8] sm:$0xff]
  %v671 = vld [vmem:[%s1 + $0x11b0] sm:$0xff]
  %v672 = vld [vmem:[%s1 + $0x11b8] sm:$0xff]
  %v673 = vld [vmem:[%s1 + $0x11c0] sm:$0xff]
  %v674 = vld [vmem:[%s1 + $0x11c8] sm:$0xff]
  %v675 = vld [vmem:[%s1 + $0x11d0] sm:$0xff]
  %v676 = vld [vmem:[%s1 + $0x11d8] sm:$0xff]
  %v677 = vld [vmem:[%s1 + $0x11e0] sm:$0xff]
  %v678 = vld [vmem:[%s1 + $0x11e8] sm:$0xff]
  %v679 = vld [vmem:[%s1 + $0x11f0] sm:$0xff]
  %v680 = vld [vmem:[%s1 + $0x11f8] sm:$0xff]
  %v681 = vld [vmem:[%s1 + $0x1200] sm:$0xff]
  %v682 = vld [vmem:[%s1 + $0x1208] sm:$0xff]
  %v683 = vld [vmem:[%s1 + $0x1210] sm:$0xff]
  %v684 = vld [vmem:[%s1 + $0x1218] sm:$0xff]
  %v685 = vld [vmem:[%s1 + $0x1220] sm:$0xff]
  %v686 = vld [vmem:[%s1 + $0x1228] sm:$0xff]
  %v687 = vld [vmem:[%s1 + $0x1230] sm:$0xff]
  %v688 = vld [vmem:[%s1 + $0x1238] sm:$0xff]
  %v689 = vld [vmem:[%s1 + $0x1240] sm:$0xff]
  %v690 = vld [vmem:[%s1 + $0x1248] sm:$0xff]
  %v691 = vld [vmem:[%s1 + $0x1250] sm:$0xff]
  %v692 = vld [vmem:[%s1 + $0x1258] sm:$0xff]
  %v693 = vld [vmem:[%s1 + $0x1260] sm:$0xff]
  %v694 = vld [vmem:[%s1 + $0x1268] sm:$0xff]
  %v695 = vld [vmem:[%s1 + $0x1270] sm:$0xff]
  %v696 = vld [vmem:[%s1 + $0x1278] sm:$0xff]
  %v697 = vld [vmem:[%s1 + $0x1280] sm:$0xff]
  %v698 = vld [vmem:[%s1 + $0x1288] sm:$0xff]
  %v699 = vld [vmem:[%s1 + $0x1290] sm:$0xff]
  %v700 = vld [vmem:[%s1 + $0x1298] sm:$0xff]
  %v701 = vld [vmem:[%s1 + $0x12a0] sm:$0xff]
  %v702 = vld [vmem:[%s1 + $0x12a8] sm:$0xff]
  %v703 = vld [vmem:[%s1 + $0x12b0] sm:$0xff]
  %v704 = vld [vmem:[%s1 + $0x12b8] sm:$0xff]
  %v705 = vld [vmem:[%s1 + $0x12c0] sm:$0xff]
  %v706 = vld [vmem:[%s1 + $0x12c8] sm:$0xff]
  %v707 = vld [vmem:[%s1 + $0x12d0] sm:$0xff]
  %v708 = vld [vmem:[%s1 + $0x12d8] sm:$0xff]
  %v709 = vld [vmem:[%s1 + $0x12e0] sm:$0xff]
  %v710 = vld [vmem:[%s1 + $0x12e8] sm:$0xff]
  %v711 = vld [vmem:[%s1 + $0x12f0] sm:$0xff]
  %v712 = vld [vmem:[%s1 + $0x12f8] sm:$0xff]
  %v713 = vld [vmem:[%s1 + $0x1300] sm:$0xff]
  %v714 = vld [vmem:[%s1 + $0x1308] sm:$0xff]
  %v715 = vld [vmem:[%s1 + $0x1310] sm:$0xff]
  %v716 = vld [vmem:[%s1 + $0x1318] sm:$0xff]
  %v717 = vld [vmem:[%s1 + $0x1320] sm:$0xff]
  %v718 = vld [vmem:[%s1 + $0x1328] sm:$0xff]
  %v719 = vld [vmem:[%s1 + $0x1330] sm:$0xff]
  %v720 = vld [vmem:[%s1 + $0x1338] sm:$0xff]
  %v721 = vld [vmem:[%s1 + $0x1340] sm:$0xff]
  %v722 = vld [vmem:[%s1 + $0x1348] sm:$0xff]
  %v723 = vld [vmem:[%s1 + $0x1350] sm:$0xff]
  %v724 = vld [vmem:[%s1 + $0x1358] sm:$0xff]
  %v725 = vld [vmem:[%s1 + $0x1360] sm:$0xff]
  %v726 = vld [vmem:[%s1 + $0x1368] sm:$0xff]
  %v727 = vld [vmem:[%s1 + $0x1370] sm:$0xff]
  %v728 = vld [vmem:[%s1 + $0x1378] sm:$0xff]
  %v729 = vld [vmem:[%s1 + $0x1380] sm:$0xff]
  %v730 = vld [vmem:[%s1 + $0x1388] sm:$0xff]
  %v731 = vld [vmem:[%s1 + $0x1390] sm:$0xff]
  %v732 = vld [vmem:[%s1 + $0x1398] sm:$0xff]
  %v733 = vld [vmem:[%s1 + $0x13a0] sm:$0xff]
  %v734 = vld [vmem:[%s1 + $0x13a8] sm:$0xff]
  %v735 = vld [vmem:[%s1 + $0x13b0] sm:$0xff]
  %v736 = vld [vmem:[%s1 + $0x13b8] sm:$0xff]
  %v737 = vld [vmem:[%s1 + $0x13c0] sm:$0xff]
  %v738 = vld [vmem:[%s1 + $0x13c8] sm:$0xff]
  %v739 = vld [vmem:[%s1 + $0x13d0] sm:$0xff]
  %v740 = vld [vmem:[%s1 + $0x13d8] sm:$0xff]
  %v741 = vld [vmem:[%s1 + $0x13e0] sm:$0xff]
  %v742 = vld [vmem:[%s1 + $0x13e8] sm:$0xff]
  %v743 = vld [vmem:[%s1 + $0x13f0] sm:$0xff]
  %v744 = vld [vmem:[%s1 + $0x13f8] sm:$0xff]
  %v745 = vld [vmem:[%s1 + $0x1400] sm:$0xff]
  %v746 = vld [vmem:[%s1 + $0x1408] sm:$0xff]
  %v747 = vld [vmem:[%s1 + $0x1410] sm:$0xff]
  %v748 = vld [vmem:[%s1 + $0x1418] sm:$0xff]
  %v749 = vld [vmem:[%s1 + $0x1420] sm:$0xff]
  %v750 = vld [vmem:[%s1 + $0x1428] sm:$0xff]
  %v751 = vld [vmem:[%s1 + $0x1430] sm:$0xff]
  %v752 = vld [vmem:[%s1 + $0x1438] sm:$0xff]
  %v753 = vld [vmem:[%s1 + $0x1440] sm:$0xff]
  %v754 = vld [vmem:[%s1 + $0x1448] sm:$0xff]
  %v755 = vld [vmem:[%s1 + $0x1450] sm:$0xff]
  %v756 = vld [vmem:[%s1 + $0x1458] sm:$0xff]
  %v757 = vld [vmem:[%s1 + $0x1460] sm:$0xff]
  %v758 = vld [vmem:[%s1 + $0x1468] sm:$0xff]
  %v759 = vld [vmem:[%s1 + $0x1470] sm:$0xff]
  %v760 = vld [vmem:[%s1 + $0x1478] sm:$0xff]
  %v761 = vld [vmem:[%s1 + $0x1480] sm:$0xff]
  %v762 = vld [vmem:[%s1 + $0x1488] sm:$0xff]
  %v763 = vld [vmem:[%s1 + $0x1490] sm:$0xff]
  %v764 = vld [vmem:[%s1 + $0x1498] sm:$0xff]
  %v765 = vld [vmem:[%s1 + $0x14a0] sm:$0xff]
  %v766 = vld [vmem:[%s1 + $0x14a8] sm:$0xff]
  %v767 = vld [vmem:[%s1 + $0x14b0] sm:$0xff]
  %v768 = vld [vmem:[%s1 + $0x14b8] sm:$0xff]
  %v769 = vld [vmem:[%s1 + $0x14c0] sm:$0xff]
  %v770 = vld [vmem:[%s1 + $0x14c8] sm:$0xff]
  %v771 = vld [vmem:[%s1 + $0x14d0] sm:$0xff]
  %v772 = vld [vmem:[%s1 + $0x14d8] sm:$0xff]
  %v773 = vld [vmem:[%s1 + $0x14e0] sm:$0xff]
  %v774 = vld [vmem:[%s1 + $0x14e8] sm:$0xff]
  %v775 = vld [vmem:[%s1 + $0x14f0] sm:$0xff]
  %v776 = vld [vmem:[%s1 + $0x14f8] sm:$0xff]
  %v777 = vld [vmem:[%s1 + $0x1500] sm:$0xff]
  %v778 = vld [vmem:[%s1 + $0x1508] sm:$0xff]
  %v779 = vld [vmem:[%s1 + $0x1510] sm:$0xff]
  %v780 = vld [vmem:[%s1 + $0x1518] sm:$0xff]
  %v781 = vld [vmem:[%s1 + $0x1520] sm:$0xff]
  %v782 = vld [vmem:[%s1 + $0x1528] sm:$0xff]
  %v783 = vld [vmem:[%s1 + $0x1530] sm:$0xff]
  %v784 = vld [vmem:[%s1 + $0x1538] sm:$0xff]
  %v785 = vld [vmem:[%s1 + $0x1540] sm:$0xff]
  %v786 = vld [vmem:[%s1 + $0x1548] sm:$0xff]
  %v787 = vld [vmem:[%s1 + $0x1550] sm:$0xff]
  %v788 = vld [vmem:[%s1 + $0x1558] sm:$0xff]
  %v789 = vld [vmem:[%s1 + $0x1560] sm:$0xff]
  %v790 = vld [vmem:[%s1 + $0x1568] sm:$0xff]
  %v791 = vld [vmem:[%s1 + $0x1570] sm:$0xff]
  %v792 = vld [vmem:[%s1 + $0x1578] sm:$0xff]
  %v793 = vld [vmem:[%s1 + $0x1580] sm:$0xff]
  %v794 = vld [vmem:[%s1 + $0x1588] sm:$0xff]
  %v795 = vld [vmem:[%s1 + $0x1590] sm:$0xff]
  %v796 = vld [vmem:[%s1 + $0x1598] sm:$0xff]
  %v797 = vld [vmem:[%s1 + $0x15a0] sm:$0xff]
  %v798 = vld [vmem:[%s1 + $0x15a8] sm:$0xff]
  %v799 = vld [vmem:[%s1 + $0x15b0] sm:$0xff]
  %v800 = vld [vmem:[%s1 + $0x15b8] sm:$0xff]
  %v801 = vld [vmem:[%s1 + $0x15c0] sm:$0xff]
  %v802 = vld [vmem:[%s1 + $0x15c8] sm:$0xff]
  %v803 = vld [vmem:[%s1 + $0x15d0] sm:$0xff]
  %v804 = vld [vmem:[%s1 + $0x15d8] sm:$0xff]
  %v805 = vld [vmem:[%s1 + $0x15e0] sm:$0xff]
  %v806 = vld [vmem:[%s1 + $0x15e8] sm:$0xff]
  %v807 = vld [vmem:[%s1 + $0x15f0] sm:$0xff]
  %v808 = vld [vmem:[%s1 + $0x15f8] sm:$0xff]
  %v809 = vld [vmem:[%s1 + $0x1600] sm:$0xff]
  %v810 = vld [vmem:[%s1 + $0x1608] sm:$0xff]
  %v811 = vld [vmem:[%s1 + $0x1610] sm:$0xff]
  %v812 = vld [vmem:[%s1 + $0x1618] sm:$0xff]
  %v813 = vld [vmem:[%s1 + $0x1620] sm:$0xff]
  %v814 = vld [vmem:[%s1 + $0x1628] sm:$0xff]
  %v815 = vld [vmem:[%s1 + $0x1630] sm:$0xff]
  %v816 = vld [vmem:[%s1 + $0x1638] sm:$0xff]
  %v817 = vld [vmem:[%s1 + $0x1640] sm:$0xff]
  %v818 = vld [vmem:[%s1 + $0x1648] sm:$0xff]
  %v819 = vld [vmem:[%s1 + $0x1650] sm:$0xff]
  %v820 = vld [vmem:[%s1 + $0x1658] sm:$0xff]
  %v821 = vld [vmem:[%s1 + $0x1660] sm:$0xff]
  %v822 = vld [vmem:[%s1 + $0x1668] sm:$0xff]
  %v823 = vld [vmem:[%s1 + $0x1670] sm:$0xff]
  %v824 = vld [vmem:[%s1 + $0x1678] sm:$0xff]
  %v825 = vld [vmem:[%s1 + $0x1680] sm:$0xff]
  %v826 = vld [vmem:[%s1 + $0x1688] sm:$0xff]
  %v827 = vld [vmem:[%s1 + $0x1690] sm:$0xff]
  %v828 = vld [vmem:[%s1 + $0x1698] sm:$0xff]
  %v829 = vld [vmem:[%s1 + $0x16a0] sm:$0xff]
  %v830 = vld [vmem:[%s1 + $0x16a8] sm:$0xff]
  %v831 = vld [vmem:[%s1 + $0x16b0] sm:$0xff]
  %v832 = vld [vmem:[%s1 + $0x16b8] sm:$0xff]
  %v833 = vld [vmem:[%s1 + $0x16c0] sm:$0xff]
  %v834 = vld [vmem:[%s1 + $0x16c8] sm:$0xff]
  %v835 = vld [vmem:[%s1 + $0x16d0] sm:$0xff]
  %v836 = vld [vmem:[%s1 + $0x16d8] sm:$0xff]
  %v837 = vld [vmem:[%s1 + $0x16e0] sm:$0xff]
  %v838 = vld [vmem:[%s1 + $0x16e8] sm:$0xff]
  %v839 = vld [vmem:[%s1 + $0x16f0] sm:$0xff]
  %v840 = vld [vmem:[%s1 + $0x16f8] sm:$0xff]
  %v841 = vld [vmem:[%s1 + $0x1700] sm:$0xff]
  %v842 = vld [vmem:[%s1 + $0x1708] sm:$0xff]
  %v843 = vld [vmem:[%s1 + $0x1710] sm:$0xff]
  %v844 = vld [vmem:[%s1 + $0x1718] sm:$0xff]
  %v845 = vld [vmem:[%s1 + $0x1720] sm:$0xff]
  %v846 = vld [vmem:[%s1 + $0x1728] sm:$0xff]
  %v847 = vld [vmem:[%s1 + $0x1730] sm:$0xff]
  %v848 = vld [vmem:[%s1 + $0x1738] sm:$0xff]
  %v849 = vld [vmem:[%s1 + $0x1740] sm:$0xff]
  %v850 = vld [vmem:[%s1 + $0x1748] sm:$0xff]
  %v851 = vld [vmem:[%s1 + $0x1750] sm:$0xff]
  %v852 = vld [vmem:[%s1 + $0x1758] sm:$0xff]
  %v853 = vld [vmem:[%s1 + $0x1760] sm:$0xff]
  %v854 = vld [vmem:[%s1 + $0x1768] sm:$0xff]
  %v855 = vld [vmem:[%s1 + $0x1770] sm:$0xff]
  %v856 = vld [vmem:[%s1 + $0x1778] sm:$0xff]
  %v857 = vld [vmem:[%s1 + $0x1780] sm:$0xff]
  %v858 = vld [vmem:[%s1 + $0x1788] sm:$0xff]
  %v859 = vld [vmem:[%s1 + $0x1790] sm:$0xff]
  %v860 = vld [vmem:[%s1 + $0x1798] sm:$0xff]
  %v861 = vld [vmem:[%s1 + $0x17a0] sm:$0xff]
  %v862 = vld [vmem:[%s1 + $0x17a8] sm:$0xff]
  %v863 = vld [vmem:[%s1 + $0x17b0] sm:$0xff]
  %v864 = vld [vmem:[%s1 + $0x17b8] sm:$0xff]
  %v865 = vld [vmem:[%s1 + $0x17c0] sm:$0xff]
  %v866 = vld [vmem:[%s1 + $0x17c8] sm:$0xff]
  %v867 = vld [vmem:[%s1 + $0x17d0] sm:$0xff]
  %v868 = vld [vmem:[%s1 + $0x17d8] sm:$0xff]
  %v869 = vld [vmem:[%s1 + $0x17e0] sm:$0xff]
  %v870 = vld [vmem:[%s1 + $0x17e8] sm:$0xff]
  %v871 = vld [vmem:[%s1 + $0x17f0] sm:$0xff]
  %v872 = vld [vmem:[%s1 + $0x17f8] sm:$0xff]
  %v873 = vld [vmem:[%s1 + $0x1800] sm:$0xff]
  %v874 = vld [vmem:[%s1 + $0x1808] sm:$0xff]
  %v875 = vld [vmem:[%s1 + $0x1810] sm:$0xff]
  %v876 = vld [vmem:[%s1 + $0x1818] sm:$0xff]
  %v877 = vld [vmem:[%s1 + $0x1820] sm:$0xff]
  %v878 = vld [vmem:[%s1 + $0x1828] sm:$0xff]
  %v879 = vld [vmem:[%s1 + $0x1830] sm:$0xff]
  %v880 = vld [vmem:[%s1 + $0x1838] sm:$0xff]
  %v881 = vld [vmem:[%s1 + $0x1840] sm:$0xff]
  %v882 = vld [vmem:[%s1 + $0x1848] sm:$0xff]
  %v883 = vld [vmem:[%s1 + $0x1850] sm:$0xff]
  %v884 = vld [vmem:[%s1 + $0x1858] sm:$0xff]
  %v885 = vld [vmem:[%s1 + $0x1860] sm:$0xff]
  %v886 = vld [vmem:[%s1 + $0x1868] sm:$0xff]
  %v887 = vld [vmem:[%s1 + $0x1870] sm:$0xff]
  %v888 = vld [vmem:[%s1 + $0x1878] sm:$0xff]
  %v889 = vld [vmem:[%s1 + $0x1880] sm:$0xff]
  %v890 = vld [vmem:[%s1 + $0x1888] sm:$0xff]
  %v891 = vld [vmem:[%s1 + $0x1890] sm:$0xff]
  %v892 = vld [vmem:[%s1 + $0x1898] sm:$0xff]
  %v893 = vld [vmem:[%s1 + $0x18a0] sm:$0xff]
  %v894 = vld [vmem:[%s1 + $0x18a8] sm:$0xff]
  %v895 = vld [vmem:[%s1 + $0x18b0] sm:$0xff]
  %v896 = vld [vmem:[%s1 + $0x18b8] sm:$0xff]
  %v897 = vld [vmem:[%s1 + $0x18c0] sm:$0xff]
  %v898 = vld [vmem:[%s1 + $0x18c8] sm:$0xff]
  %v899 = vld [vmem:[%s1 + $0x18d0] sm:$0xff]
  %v900 = vld [vmem:[%s1 + $0x18d8] sm:$0xff]
  %v901 = vld [vmem:[%s1 + $0x18e0] sm:$0xff]
  %v902 = vld [vmem:[%s1 + $0x18e8] sm:$0xff]
  %v903 = vld [vmem:[%s1 + $0x18f0] sm:$0xff]
  %v904 = vld [vmem:[%s1 + $0x18f8] sm:$0xff]
  %v905 = vld [vmem:[%s1 + $0x1900] sm:$0xff]
  %v906 = vld [vmem:[%s1 + $0x1908] sm:$0xff]
  %v907 = vld [vmem:[%s1 + $0x1910] sm:$0xff]
  %v908 = vld [vmem:[%s1 + $0x1918] sm:$0xff]
  %v909 = vld [vmem:[%s1 + $0x1920] sm:$0xff]
  %v910 = vld [vmem:[%s1 + $0x1928] sm:$0xff]
  %v911 = vld [vmem:[%s1 + $0x1930] sm:$0xff]
  %v912 = vld [vmem:[%s1 + $0x1938] sm:$0xff]
  %v913 = vld [vmem:[%s1 + $0x1940] sm:$0xff]
  %v914 = vld [vmem:[%s1 + $0x1948] sm:$0xff]
  %v915 = vld [vmem:[%s1 + $0x1950] sm:$0xff]
  %v916 = vld [vmem:[%s1 + $0x1958] sm:$0xff]
  %v917 = vld [vmem:[%s1 + $0x1960] sm:$0xff]
  %v918 = vld [vmem:[%s1 + $0x1968] sm:$0xff]
  %v919 = vld [vmem:[%s1 + $0x1970] sm:$0xff]
  %v920 = vld [vmem:[%s1 + $0x1978] sm:$0xff]
  %v921 = vld [vmem:[%s1 + $0x1980] sm:$0xff]
  %v922 = vld [vmem:[%s1 + $0x1988] sm:$0xff]
  %v923 = vld [vmem:[%s1 + $0x1990] sm:$0xff]
  %v924 = vld [vmem:[%s1 + $0x1998] sm:$0xff]
  %v925 = vld [vmem:[%s1 + $0x19a0] sm:$0xff]
  %v926 = vld [vmem:[%s1 + $0x19a8] sm:$0xff]
  %v927 = vld [vmem:[%s1 + $0x19b0] sm:$0xff]
  %v928 = vld [vmem:[%s1 + $0x19b8] sm:$0xff]
  %v929 = vld [vmem:[%s1 + $0x19c0] sm:$0xff]
  %v930 = vld [vmem:[%s1 + $0x19c8] sm:$0xff]
  %v931 = vld [vmem:[%s1 + $0x19d0] sm:$0xff]
  %v932 = vld [vmem:[%s1 + $0x19d8] sm:$0xff]
  %v933 = vld [vmem:[%s1 + $0x19e0] sm:$0xff]
  %v934 = vld [vmem:[%s1 + $0x19e8] sm:$0xff]
  %v935 = vld [vmem:[%s1 + $0x19f0] sm:$0xff]
  %v936 = vld [vmem:[%s1 + $0x19f8] sm:$0xff]
  %v937 = vld [vmem:[%s1 + $0x1a00] sm:$0xff]
  %v938 = vld [vmem:[%s1 + $0x1a08] sm:$0xff]
  %v939 = vld [vmem:[%s1 + $0x1a10] sm:$0xff]
  %v940 = vld [vmem:[%s1 + $0x1a18] sm:$0xff]
  %v941 = vld [vmem:[%s1 + $0x1a20] sm:$0xff]
  %v942 = vld [vmem:[%s1 + $0x1a28] sm:$0xff]
  %v943 = vld [vmem:[%s1 + $0x1a30] sm:$0xff]
  %v944 = vld [vmem:[%s1 + $0x1a38] sm:$0xff]
  %v945 = vld [vmem:[%s1 + $0x1a40] sm:$0xff]
  %v946 = vld [vmem:[%s1 + $0x1a48] sm:$0xff]
  %v947 = vld [vmem:[%s1 + $0x1a50] sm:$0xff]
  %v948 = vld [vmem:[%s1 + $0x1a58] sm:$0xff]
  %v949 = vld [vmem:[%s1 + $0x1a60] sm:$0xff]
  %v950 = vld [vmem:[%s1 + $0x1a68] sm:$0xff]
  %v951 = vld [vmem:[%s1 + $0x1a70] sm:$0xff]
  %v952 = vld [vmem:[%s1 + $0x1a78] sm:$0xff]
  %v953 = vld [vmem:[%s1 + $0x1a80] sm:$0xff]
  %v954 = vld [vmem:[%s1 + $0x1a88] sm:$0xff]
  %v955 = vld [vmem:[%s1 + $0x1a90] sm:$0xff]
  %v956 = vld [vmem:[%s1 + $0x1a98] sm:$0xff]
  %v957 = vld [vmem:[%s1 + $0x1aa0] sm:$0xff]
  %v958 = vld [vmem:[%s1 + $0x1aa8] sm:$0xff]
  %v959 = vld [vmem:[%s1 + $0x1ab0] sm:$0xff]
  %v960 = vld [vmem:[%s1 + $0x1ab8] sm:$0xff]
  %v961 = vld [vmem:[%s1 + $0x1ac0] sm:$0xff]
  %v962 = vld [vmem:[%s1 + $0x1ac8] sm:$0xff]
  %v963 = vld [vmem:[%s1 + $0x1ad0] sm:$0xff]
  %v964 = vld [vmem:[%s1 + $0x1ad8] sm:$0xff]
  %v965 = vld [vmem:[%s1 + $0x1ae0] sm:$0xff]
  %v966 = vld [vmem:[%s1 + $0x1ae8] sm:$0xff]
  %v967 = vld [vmem:[%s1 + $0x1af0] sm:$0xff]
  %v968 = vld [vmem:[%s1 + $0x1af8] sm:$0xff]
  %v969 = vld [vmem:[%s1 + $0x1b00] sm:$0xff]
  %v970 = vld [vmem:[%s1 + $0x1b08] sm:$0xff]
  %v971 = vld [vmem:[%s1 + $0x1b10] sm:$0xff]
  %v972 = vld [vmem:[%s1 + $0x1b18] sm:$0xff]
  %v973 = vld [vmem:[%s1 + $0x1b20] sm:$0xff]
  %v974 = vld [vmem:[%s1 + $0x1b28] sm:$0xff]
  %v975 = vld [vmem:[%s1 + $0x1b30] sm:$0xff]
  %v976 = vld [vmem:[%s1 + $0x1b38] sm:$0xff]
  %v977 = vld [vmem:[%s1 + $0x1b40] sm:$0xff]
  %v978 = vld [vmem:[%s1 + $0x1b48] sm:$0xff]
  %v979 = vld [vmem:[%s1 + $0x1b50] sm:$0xff]
  %v980 = vld [vmem:[%s1 + $0x1b58] sm:$0xff]
  %v981 = vld [vmem:[%s1 + $0x1b60] sm:$0xff]
  %v982 = vld [vmem:[%s1 + $0x1b68] sm:$0xff]
  %v983 = vld [vmem:[%s1 + $0x1b70] sm:$0xff]
  %v984 = vld [vmem:[%s1 + $0x1b78] sm:$0xff]
  %v985 = vld [vmem:[%s1 + $0x1b80] sm:$0xff]
  %v986 = vld [vmem:[%s1 + $0x1b88] sm:$0xff]
  %v987 = vld [vmem:[%s1 + $0x1b90] sm:$0xff]
  %v988 = vld [vmem:[%s1 + $0x1b98] sm:$0xff]
  %v989 = vld [vmem:[%s1 + $0x1ba0] sm:$0xff]
  %v990 = vld [vmem:[%s1 + $0x1ba8] sm:$0xff]
  %v991 = vld [vmem:[%s1 + $0x1bb0] sm:$0xff]
  %v992 = vld [vmem:[%s1 + $0x1bb8] sm:$0xff]
  %v993 = vld [vmem:[%s1 + $0x1bc0] sm:$0xff]
  %v994 = vld [vmem:[%s1 + $0x1bc8] sm:$0xff]
  %v995 = vld [vmem:[%s1 + $0x1bd0] sm:$0xff]
  %v996 = vld [vmem:[%s1 + $0x1bd8] sm:$0xff]
  %v997 = vld [vmem:[%s1 + $0x1be0] sm:$0xff]
  %v998 = vld [vmem:[%s1 + $0x1be8] sm:$0xff]
  %v999 = vld [vmem:[%s1 + $0x1bf0] sm:$0xff]
  %v1000 = vld [vmem:[%s1 + $0x1bf8] sm:$0xff]
  %v1001 = vld [vmem:[%s1 + $0x1c00] sm:$0xff]
  %v1002 = vld [vmem:[%s1 + $0x1c08] sm:$0xff]
  %v1003 = vld [vmem:[%s1 + $0x1c10] sm:$0xff]
  %v1004 = vld [vmem:[%s1 + $0x1c18] sm:$0xff]
  %v1005 = vld [vmem:[%s1 + $0x1c20] sm:$0xff]
  %v1006 = vld [vmem:[%s1 + $0x1c28] sm:$0xff]
  %v1007 = vld [vmem:[%s1 + $0x1c30] sm:$0xff]
  %v1008 = vld [vmem:[%s1 + $0x1c38] sm:$0xff]
  %v1009 = vld [vmem:[%s1 + $0x1c40] sm:$0xff]
  %v1010 = vld [vmem:[%s1 + $0x1c48] sm:$0xff]
  %v1011 = vld [vmem:[%s1 + $0x1c50] sm:$0xff]
  %v1012 = vld [vmem:[%s1 + $0x1c58] sm:$0xff]
  %v1013 = vld [vmem:[%s1 + $0x1c60] sm:$0xff]
  %v1014 = vld [vmem:[%s1 + $0x1c68] sm:$0xff]
  %v1015 = vld [vmem:[%s1 + $0x1c70] sm:$0xff]
  %v1016 = vld [vmem:[%s1 + $0x1c78] sm:$0xff]
  %v1017 = vld [vmem:[%s1 + $0x1c80] sm:$0xff]
  %v1018 = vld [vmem:[%s1 + $0x1c88] sm:$0xff]
  %v1019 = vld [vmem:[%s1 + $0x1c90] sm:$0xff]
  %v1020 = vld [vmem:[%s1 + $0x1c98] sm:$0xff]
  %v1021 = vld [vmem:[%s1 + $0x1ca0] sm:$0xff]
  %v1022 = vld [vmem:[%s1 + $0x1ca8] sm:$0xff]
  %v1023 = vld [vmem:[%s1 + $0x1cb0] sm:$0xff]
  %v1024 = vld [vmem:[%s1 + $0x1cb8] sm:$0xff]
  %v1025 = vld [vmem:[%s1 + $0x1cc0] sm:$0xff]
  %v1026 = vld [vmem:[%s1 + $0x1cc8] sm:$0xff]
  %v1027 = vld [vmem:[%s1 + $0x1cd0] sm:$0xff]
  %v1028 = vld [vmem:[%s1 + $0x1cd8] sm:$0xff]
  %v1029 = vld [vmem:[%s1 + $0x1ce0] sm:$0xff]
  %v1030 = vld [vmem:[%s1 + $0x1ce8] sm:$0xff]
  %v1031 = vld [vmem:[%s1 + $0x1cf0] sm:$0xff]
  %v1032 = vld [vmem:[%s1 + $0x1cf8] sm:$0xff]
  %v1033 = vld [vmem:[%s1 + $0x1d00] sm:$0xff]
  %v1034 = vld [vmem:[%s1 + $0x1d08] sm:$0xff]
  %v1035 = vld [vmem:[%s1 + $0x1d10] sm:$0xff]
  %v1036 = vld [vmem:[%s1 + $0x1d18] sm:$0xff]
  %v1037 = vld [vmem:[%s1 + $0x1d20] sm:$0xff]
  %v1038 = vld [vmem:[%s1 + $0x1d28] sm:$0xff]
  %v1039 = vld [vmem:[%s1 + $0x1d30] sm:$0xff]
  %v1040 = vld [vmem:[%s1 + $0x1d38] sm:$0xff]
  %v1041 = vld [vmem:[%s1 + $0x1d40] sm:$0xff]
  %v1042 = vld [vmem:[%s1 + $0x1d48] sm:$0xff]
  %v1043 = vld [vmem:[%s1 + $0x1d50] sm:$0xff]
  %v1044 = vld [vmem:[%s1 + $0x1d58] sm:$0xff]
  %v1045 = vld [vmem:[%s1 + $0x1d60] sm:$0xff]
  %v1046 = vld [vmem:[%s1 + $0x1d68] sm:$0xff]
  %v1047 = vld [vmem:[%s1 + $0x1d70] sm:$0xff]
  %v1048 = vld [vmem:[%s1 + $0x1d78] sm:$0xff]
  %v1049 = vld [vmem:[%s1 + $0x1d80] sm:$0xff]
  %v1050 = vld [vmem:[%s1 + $0x1d88] sm:$0xff]
  %v1051 = vld [vmem:[%s1 + $0x1d90] sm:$0xff]
  %v1052 = vld [vmem:[%s1 + $0x1d98] sm:$0xff]
  %v1053 = vld [vmem:[%s1 + $0x1da0] sm:$0xff]
  %v1054 = vld [vmem:[%s1 + $0x1da8] sm:$0xff]
  %v1055 = vld [vmem:[%s1 + $0x1db0] sm:$0xff]
  %v1056 = vld [vmem:[%s1 + $0x1db8] sm:$0xff]
  %v1057 = vld [vmem:[%s1 + $0x1dc0] sm:$0xff]
  %v1058 = vld [vmem:[%s1 + $0x1dc8] sm:$0xff]
  %v1059 = vld [vmem:[%s1 + $0x1dd0] sm:$0xff]
  %v1060 = vld [vmem:[%s1 + $0x1dd8] sm:$0xff]
  %v1061 = vld [vmem:[%s1 + $0x1de0] sm:$0xff]
  %v1062 = vld [vmem:[%s1 + $0x1de8] sm:$0xff]
  %v1063 = vld [vmem:[%s1 + $0x1df0] sm:$0xff]
  %v1064 = vld [vmem:[%s1 + $0x1df8] sm:$0xff]
  %v1065 = vld [vmem:[%s1 + $0x1e00] sm:$0xff]
  %v1066 = vld [vmem:[%s1 + $0x1e08] sm:$0xff]
  %v1067 = vld [vmem:[%s1 + $0x1e10] sm:$0xff]
  %v1068 = vld [vmem:[%s1 + $0x1e18] sm:$0xff]
  %v1069 = vld [vmem:[%s1 + $0x1e20] sm:$0xff]
  %v1070 = vld [vmem:[%s1 + $0x1e28] sm:$0xff]
  %v1071 = vld [vmem:[%s1 + $0x1e30] sm:$0xff]
  %v1072 = vld [vmem:[%s1 + $0x1e38] sm:$0xff]
  %v1073 = vld [vmem:[%s1 + $0x1e40] sm:$0xff]
  %v1074 = vld [vmem:[%s1 + $0x1e48] sm:$0xff]
  %v1075 = vld [vmem:[%s1 + $0x1e50] sm:$0xff]
  %v1076 = vld [vmem:[%s1 + $0x1e58] sm:$0xff]
  %v1077 = vld [vmem:[%s1 + $0x1e60] sm:$0xff]
  %v1078 = vld [vmem:[%s1 + $0x1e68] sm:$0xff]
  %v1079 = vld [vmem:[%s1 + $0x1e70] sm:$0xff]
  %v1080 = vld [vmem:[%s1 + $0x1e78] sm:$0xff]
  %v1081 = vld [vmem:[%s1 + $0x1e80] sm:$0xff]
  %v1082 = vld [vmem:[%s1 + $0x1e88] sm:$0xff]
  %v1083 = vld [vmem:[%s1 + $0x1e90] sm:$0xff]
  %v1084 = vld [vmem:[%s1 + $0x1e98] sm:$0xff]
  %v1085 = vld [vmem:[%s1 + $0x1ea0] sm:$0xff]
  %v1086 = vld [vmem:[%s1 + $0x1ea8] sm:$0xff]
  %v1087 = vld [vmem:[%s1 + $0x1eb0] sm:$0xff]
  %v1088 = vld [vmem:[%s1 + $0x1eb8] sm:$0xff]
  %v1089 = vld [vmem:[%s1 + $0x1ec0] sm:$0xff]
  %v1090 = vld [vmem:[%s1 + $0x1ec8] sm:$0xff]
  %v1091 = vld [vmem:[%s1 + $0x1ed0] sm:$0xff]
  %v1092 = vld [vmem:[%s1 + $0x1ed8] sm:$0xff]
  %v1093 = vld [vmem:[%s1 + $0x1ee0] sm:$0xff]
  %v1094 = vld [vmem:[%s1 + $0x1ee8] sm:$0xff]
  %v1095 = vld [vmem:[%s1 + $0x1ef0] sm:$0xff]
  %v1096 = vld [vmem:[%s1 + $0x1ef8] sm:$0xff]
  %v1097 = vld [vmem:[%s1 + $0x1f00] sm:$0xff]
  %v1098 = vld [vmem:[%s1 + $0x1f08] sm:$0xff]
  %v1099 = vld [vmem:[%s1 + $0x1f10] sm:$0xff]
  %v1100 = vld [vmem:[%s1 + $0x1f18] sm:$0xff]
  %v1101 = vld [vmem:[%s1 + $0x1f20] sm:$0xff]
  %v1102 = vld [vmem:[%s1 + $0x1f28] sm:$0xff]
  %v1103 = vld [vmem:[%s1 + $0x1f30] sm:$0xff]
  %v1104 = vld [vmem:[%s1 + $0x1f38] sm:$0xff]
  %v1105 = vld [vmem:[%s1 + $0x1f40] sm:$0xff]
  %v1106 = vld [vmem:[%s1 + $0x1f48] sm:$0xff]
  %v1107 = vld [vmem:[%s1 + $0x1f50] sm:$0xff]
  %v1108 = vld [vmem:[%s1 + $0x1f58] sm:$0xff]
  %v1109 = vld [vmem:[%s1 + $0x1f60] sm:$0xff]
  %v1110 = vld [vmem:[%s1 + $0x1f68] sm:$0xff]
  %v1111 = vld [vmem:[%s1 + $0x1f70] sm:$0xff]
  %v1112 = vld [vmem:[%s1 + $0x1f78] sm:$0xff]
  %v1113 = vld [vmem:[%s1 + $0x1f80] sm:$0xff]
  %v1114 = vld [vmem:[%s1 + $0x1f88] sm:$0xff]
  %v1115 = vld [vmem:[%s1 + $0x1f90] sm:$0xff]
  %v1116 = vld [vmem:[%s1 + $0x1f98] sm:$0xff]
  %v1117 = vld [vmem:[%s1 + $0x1fa0] sm:$0xff]
  %v1118 = vld [vmem:[%s1 + $0x1fa8] sm:$0xff]
  %v1119 = vld [vmem:[%s1 + $0x1fb0] sm:$0xff]
  %v1120 = vld [vmem:[%s1 + $0x1fb8] sm:$0xff]
  %v1121 = vld [vmem:[%s1 + $0x1fc0] sm:$0xff]
  %v1122 = vld [vmem:[%s1 + $0x1fc8] sm:$0xff]
  %v1123 = vld [vmem:[%s1 + $0x1fd0] sm:$0xff]
  %v1124 = vld [vmem:[%s1 + $0x1fd8] sm:$0xff]
  %v1125 = vld [vmem:[%s1 + $0x1fe0] sm:$0xff]
  %v1126 = vld [vmem:[%s1 + $0x1fe8] sm:$0xff]
  %v1127 = vld [vmem:[%s1 + $0x1ff0] sm:$0xff]
  %v1128 = vld [vmem:[%s1 + $0x1ff8] sm:$0xff]
  %v1129 = vld [vmem:[%s1 + $0x2000] sm:$0xff]
  %v1130 = vld [vmem:[%s1 + $0x2008] sm:$0xff]
  %v1131 = vld [vmem:[%s1 + $0x2010] sm:$0xff]
  %v1132 = vld [vmem:[%s1 + $0x2018] sm:$0xff]
  %v1133 = vld [vmem:[%s1 + $0x2020] sm:$0xff]
  %v1134 = vld [vmem:[%s1 + $0x2028] sm:$0xff]
  %v1135 = vld [vmem:[%s1 + $0x2030] sm:$0xff]
  %v1136 = vld [vmem:[%s1 + $0x2038] sm:$0xff]
  %v1137 = vld [vmem:[%s1 + $0x2040] sm:$0xff]
  %v1138 = vld [vmem:[%s1 + $0x2048] sm:$0xff]
  %v1139 = vld [vmem:[%s1 + $0x2050] sm:$0xff]
  %v1140 = vld [vmem:[%s1 + $0x2058] sm:$0xff]
  %v1141 = vld [vmem:[%s1 + $0x2060] sm:$0xff]
  %v1142 = vld [vmem:[%s1 + $0x2068] sm:$0xff]
  %v1143 = vld [vmem:[%s1 + $0x2070] sm:$0xff]
  %v1144 = vld [vmem:[%s1 + $0x2078] sm:$0xff]
  %v1145 = vld [vmem:[%s1 + $0x2080] sm:$0xff]
  %v1146 = vld [vmem:[%s1 + $0x2088] sm:$0xff]
  %v1147 = vld [vmem:[%s1 + $0x2090] sm:$0xff]
  %v1148 = vld [vmem:[%s1 + $0x2098] sm:$0xff]
  %v1149 = vld [vmem:[%s1 + $0x20a0] sm:$0xff]
  %v1150 = vld [vmem:[%s1 + $0x20a8] sm:$0xff]
  %v1151 = vld [vmem:[%s1 + $0x20b0] sm:$0xff]
  %v1152 = vld [vmem:[%s1 + $0x20b8] sm:$0xff]
  %v1153 = vld [vmem:[%s1 + $0x20c0] sm:$0xff]
  %v1154 = vld [vmem:[%s1 + $0x20c8] sm:$0xff]
  %v1155 = vld [vmem:[%s1 + $0x20d0] sm:$0xff]
  %v1156 = vld [vmem:[%s1 + $0x20d8] sm:$0xff]
  %v1157 = vld [vmem:[%s1 + $0x20e0] sm:$0xff]
  %v1158 = vld [vmem:[%s1 + $0x20e8] sm:$0xff]
  %v1159 = vld [vmem:[%s1 + $0x20f0] sm:$0xff]
  %v1160 = vld [vmem:[%s1 + $0x20f8] sm:$0xff]
  %v1161 = vld [vmem:[%s1 + $0x2100] sm:$0xff]
  %v1162 = vld [vmem:[%s1 + $0x2108] sm:$0xff]
  %v1163 = vld [vmem:[%s1 + $0x2110] sm:$0xff]
  %v1164 = vld [vmem:[%s1 + $0x2118] sm:$0xff]
  %v1165 = vld [vmem:[%s1 + $0x2120] sm:$0xff]
  %v1166 = vld [vmem:[%s1 + $0x2128] sm:$0xff]
  %v1167 = vld [vmem:[%s1 + $0x2130] sm:$0xff]
  %v1168 = vld [vmem:[%s1 + $0x2138] sm:$0xff]
  %v1169 = vld [vmem:[%s1 + $0x2140] sm:$0xff]
  %v1170 = vld [vmem:[%s1 + $0x2148] sm:$0xff]
  %v1171 = vld [vmem:[%s1 + $0x2150] sm:$0xff]
  %v1172 = vld [vmem:[%s1 + $0x2158] sm:$0xff]
  %v1173 = vld [vmem:[%s1 + $0x2160] sm:$0xff]
  %v1174 = vld [vmem:[%s1 + $0x2168] sm:$0xff]
  %v1175 = vld [vmem:[%s1 + $0x2170] sm:$0xff]
  %v1176 = vld [vmem:[%s1 + $0x2178] sm:$0xff]
  %v1177 = vld [vmem:[%s1 + $0x2180] sm:$0xff]
  %v1178 = vld [vmem:[%s1 + $0x2188] sm:$0xff]
  %v1179 = vld [vmem:[%s1 + $0x2190] sm:$0xff]
  %v1180 = vld [vmem:[%s1 + $0x2198] sm:$0xff]
  %v1181 = vld [vmem:[%s1 + $0x21a0] sm:$0xff]
  %v1182 = vld [vmem:[%s1 + $0x21a8] sm:$0xff]
  %v1183 = vld [vmem:[%s1 + $0x21b0] sm:$0xff]
  %v1184 = vld [vmem:[%s1 + $0x21b8] sm:$0xff]
  %v1185 = vld [vmem:[%s1 + $0x21c0] sm:$0xff]
  %v1186 = vld [vmem:[%s1 + $0x21c8] sm:$0xff]
  %v1187 = vld [vmem:[%s1 + $0x21d0] sm:$0xff]
  %v1188 = vld [vmem:[%s1 + $0x21d8] sm:$0xff]
  %v1189 = vld [vmem:[%s1 + $0x21e0] sm:$0xff]
  %v1190 = vld [vmem:[%s1 + $0x21e8] sm:$0xff]
  %v1191 = vld [vmem:[%s1 + $0x21f0] sm:$0xff]
  %v1192 = vld [vmem:[%s1 + $0x21f8] sm:$0xff]
  %v1193 = vld [vmem:[%s1 + $0x2200] sm:$0xff]
  %v1194 = vld [vmem:[%s1 + $0x2208] sm:$0xff]
  %v1195 = vld [vmem:[%s1 + $0x2210] sm:$0xff]
  %v1196 = vld [vmem:[%s1 + $0x2218] sm:$0xff]
  %v1197 = vld [vmem:[%s1 + $0x2220] sm:$0xff]
  %v1198 = vld [vmem:[%s1 + $0x2228] sm:$0xff]
  %v1199 = vld [vmem:[%s1 + $0x2230] sm:$0xff]
  %v1200 = vld [vmem:[%s1 + $0x2238] sm:$0xff]
  %v1201 = vld [vmem:[%s1 + $0x2240] sm:$0xff]
  %v1202 = vld [vmem:[%s1 + $0x2248] sm:$0xff]
  %v1203 = vld [vmem:[%s1 + $0x2250] sm:$0xff]
  %v1204 = vld [vmem:[%s1 + $0x2258] sm:$0xff]
  %v1205 = vld [vmem:[%s1 + $0x2260] sm:$0xff]
  %v1206 = vld [vmem:[%s1 + $0x2268] sm:$0xff]
  %v1207 = vld [vmem:[%s1 + $0x2270] sm:$0xff]
  %v1208 = vld [vmem:[%s1 + $0x2278] sm:$0xff]
  %v1209 = vld [vmem:[%s1 + $0x2280] sm:$0xff]
  %v1210 = vld [vmem:[%s1 + $0x2288] sm:$0xff]
  %v1211 = vld [vmem:[%s1 + $0x2290] sm:$0xff]
  %v1212 = vld [vmem:[%s1 + $0x2298] sm:$0xff]
  %v1213 = vld [vmem:[%s1 + $0x22a0] sm:$0xff]
  %v1214 = vld [vmem:[%s1 + $0x22a8] sm:$0xff]
  %v1215 = vld [vmem:[%s1 + $0x22b0] sm:$0xff]
  %v1216 = vld [vmem:[%s1 + $0x22b8] sm:$0xff]
  %v1217 = vld [vmem:[%s1 + $0x22c0] sm:$0xff]
  %v1218 = vld [vmem:[%s1 + $0x22c8] sm:$0xff]
  %v1219 = vld [vmem:[%s1 + $0x22d0] sm:$0xff]
  %v1220 = vld [vmem:[%s1 + $0x22d8] sm:$0xff]
  %v1221 = vld [vmem:[%s1 + $0x22e0] sm:$0xff]
  %v1222 = vld [vmem:[%s1 + $0x22e8] sm:$0xff]
  %v1223 = vld [vmem:[%s1 + $0x22f0] sm:$0xff]
  %v1224 = vld [vmem:[%s1 + $0x22f8] sm:$0xff]
  %v1225 = vld [vmem:[%s1 + $0x2300] sm:$0xff]
  %v1226 = vld [vmem:[%s1 + $0x2308] sm:$0xff]
  %v1227 = vld [vmem:[%s1 + $0x2310] sm:$0xff]
  %v1228 = vld [vmem:[%s1 + $0x2318] sm:$0xff]
  %v1229 = vld [vmem:[%s1 + $0x2320] sm:$0xff]
  %v1230 = vld [vmem:[%s1 + $0x2328] sm:$0xff]
  %v1231 = vld [vmem:[%s1 + $0x2330] sm:$0xff]
  %v1232 = vld [vmem:[%s1 + $0x2338] sm:$0xff]
  %v1233 = vld [vmem:[%s1 + $0x2340] sm:$0xff]
  %v1234 = vld [vmem:[%s1 + $0x2348] sm:$0xff]
  %v1235 = vld [vmem:[%s1 + $0x2350] sm:$0xff]
  %v1236 = vld [vmem:[%s1 + $0x2358] sm:$0xff]
  %v1237 = vld [vmem:[%s1 + $0x2360] sm:$0xff]
  %v1238 = vld [vmem:[%s1 + $0x2368] sm:$0xff]
  %v1239 = vld [vmem:[%s1 + $0x2370] sm:$0xff]
  %v1240 = vld [vmem:[%s1 + $0x2378] sm:$0xff]
  %v1241 = vld [vmem:[%s1 + $0x2380] sm:$0xff]
  %v1242 = vld [vmem:[%s1 + $0x2388] sm:$0xff]
  %v1243 = vld [vmem:[%s1 + $0x2390] sm:$0xff]
  %v1244 = vld [vmem:[%s1 + $0x2398] sm:$0xff]
  %v1245 = vld [vmem:[%s1 + $0x23a0] sm:$0xff]
  %v1246 = vld [vmem:[%s1 + $0x23a8] sm:$0xff]
  %v1247 = vld [vmem:[%s1 + $0x23b0] sm:$0xff]
  %v1248 = vld [vmem:[%s1 + $0x23b8] sm:$0xff]
  %v1249 = vld [vmem:[%s1 + $0x23c0] sm:$0xff]
  %v1250 = vld [vmem:[%s1 + $0x23c8] sm:$0xff]
  %v1251 = vld [vmem:[%s1 + $0x23d0] sm:$0xff]
  %v1252 = vld [vmem:[%s1 + $0x23d8] sm:$0xff]
  %v1253 = vld [vmem:[%s1 + $0x23e0] sm:$0xff]
  %v1254 = vld [vmem:[%s1 + $0x23e8] sm:$0xff]
  %v1255 = vld [vmem:[%s1 + $0x23f0] sm:$0xff]
  %v1256 = vld [vmem:[%s1 + $0x23f8] sm:$0xff]
  %v1257 = vld [vmem:[%s1 + $0x2400] sm:$0xff]
  %v1258 = vld [vmem:[%s1 + $0x2408] sm:$0xff]
  %v1259 = vld [vmem:[%s1 + $0x2410] sm:$0xff]
  %v1260 = vld [vmem:[%s1 + $0x2418] sm:$0xff]
  %v1261 = vld [vmem:[%s1 + $0x2420] sm:$0xff]
  %v1262 = vld [vmem:[%s1 + $0x2428] sm:$0xff]
  %v1263 = vld [vmem:[%s1 + $0x2430] sm:$0xff]
  %v1264 = vld [vmem:[%s1 + $0x2438] sm:$0xff]
  %v1265 = vld [vmem:[%s1 + $0x2440] sm:$0xff]
  %v1266 = vld [vmem:[%s1 + $0x2448] sm:$0xff]
  %v1267 = vld [vmem:[%s1 + $0x2450] sm:$0xff]
  %v1268 = vld [vmem:[%s1 + $0x2458] sm:$0xff]
  %v1269 = vld [vmem:[%s1 + $0x2460] sm:$0xff]
  %v1270 = vld [vmem:[%s1 + $0x2468] sm:$0xff]
  %v1271 = vld [vmem:[%s1 + $0x2470] sm:$0xff]
  %v1272 = vld [vmem:[%s1 + $0x2478] sm:$0xff]
  %v1273 = vld [vmem:[%s1 + $0x2480] sm:$0xff]
  %v1274 = vld [vmem:[%s1 + $0x2488] sm:$0xff]
  %v1275 = vld [vmem:[%s1 + $0x2490] sm:$0xff]
  %v1276 = vld [vmem:[%s1 + $0x2498] sm:$0xff]
  %v1277 = vld [vmem:[%s1 + $0x24a0] sm:$0xff]
  %v1278 = vld [vmem:[%s1 + $0x24a8] sm:$0xff]
  %v1279 = vld [vmem:[%s1 + $0x24b0] sm:$0xff]
  %v1280 = vld [vmem:[%s1 + $0x24b8] sm:$0xff]
  %v1281 = vld [vmem:[%s1 + $0x24c0] sm:$0xff]
  %v1282 = vld [vmem:[%s1 + $0x24c8] sm:$0xff]
  %v1283 = vld [vmem:[%s1 + $0x24d0] sm:$0xff]
  %v1284 = vld [vmem:[%s1 + $0x24d8] sm:$0xff]
  %v1285 = vld [vmem:[%s1 + $0x24e0] sm:$0xff]
  %v1286 = vld [vmem:[%s1 + $0x24e8] sm:$0xff]
  %v1287 = vld [vmem:[%s1 + $0x24f0] sm:$0xff]
  %v1288 = vld [vmem:[%s1 + $0x24f8] sm:$0xff]
  %v1289 = vld [vmem:[%s1 + $0x2500] sm:$0xff]
  %v1290 = vld [vmem:[%s1 + $0x2508] sm:$0xff]
  %v1291 = vld [vmem:[%s1 + $0x2510] sm:$0xff]
  %v1292 = vld [vmem:[%s1 + $0x2518] sm:$0xff]
  %v1293 = vld [vmem:[%s1 + $0x2520] sm:$0xff]
  %v1294 = vld [vmem:[%s1 + $0x2528] sm:$0xff]
  %v1295 = vld [vmem:[%s1 + $0x2530] sm:$0xff]
  %v1296 = vld [vmem:[%s1 + $0x2538] sm:$0xff]
  %v1297 = vld [vmem:[%s1 + $0x2540] sm:$0xff]
  %v1298 = vld [vmem:[%s1 + $0x2548] sm:$0xff]
  %v1299 = vld [vmem:[%s1 + $0x2550] sm:$0xff]
  %v1300 = vld [vmem:[%s1 + $0x2558] sm:$0xff]
  %v1301 = vld [vmem:[%s1 + $0x2560] sm:$0xff]
  %v1302 = vld [vmem:[%s1 + $0x2568] sm:$0xff]
  %v1303 = vld [vmem:[%s1 + $0x2570] sm:$0xff]
  %v1304 = vld [vmem:[%s1 + $0x2578] sm:$0xff]
  %v1305 = vld [vmem:[%s1 + $0x2580] sm:$0xff]
  %v1306 = vld [vmem:[%s1 + $0x2588] sm:$0xff]
  %v1307 = vld [vmem:[%s1 + $0x2590] sm:$0xff]
  %v1308 = vld [vmem:[%s1 + $0x2598] sm:$0xff]
  %v1309 = vld [vmem:[%s1 + $0x25a0] sm:$0xff]
  %v1310 = vld [vmem:[%s1 + $0x25a8] sm:$0xff]
  %v1311 = vld [vmem:[%s1 + $0x25b0] sm:$0xff]
  %v1312 = vld [vmem:[%s1 + $0x25b8] sm:$0xff]
  %v1313 = vld [vmem:[%s1 + $0x25c0] sm:$0xff]
  %v1314 = vld [vmem:[%s1 + $0x25c8] sm:$0xff]
  %v1315 = vld [vmem:[%s1 + $0x25d0] sm:$0xff]
  %v1316 = vld [vmem:[%s1 + $0x25d8] sm:$0xff]
  %v1317 = vld [vmem:[%s1 + $0x25e0] sm:$0xff]
  %v1318 = vld [vmem:[%s1 + $0x25e8] sm:$0xff]
  %v1319 = vld [vmem:[%s1 + $0x25f0] sm:$0xff]
  %v1320 = vld [vmem:[%s1 + $0x25f8] sm:$0xff]
  %v1321 = vld [vmem:[%s1 + $0x2600] sm:$0xff]
  %v1322 = vld [vmem:[%s1 + $0x2608] sm:$0xff]
  %v1323 = vld [vmem:[%s1 + $0x2610] sm:$0xff]
  %v1324 = vld [vmem:[%s1 + $0x2618] sm:$0xff]
  %v1325 = vld [vmem:[%s1 + $0x2620] sm:$0xff]
  %v1326 = vld [vmem:[%s1 + $0x2628] sm:$0xff]
  %v1327 = vld [vmem:[%s1 + $0x2630] sm:$0xff]
  %v1328 = vld [vmem:[%s1 + $0x2638] sm:$0xff]
  %v1329 = vld [vmem:[%s1 + $0x2640] sm:$0xff]
  %v1330 = vld [vmem:[%s1 + $0x2648] sm:$0xff]
  %v1331 = vld [vmem:[%s1 + $0x2650] sm:$0xff]
  %v1332 = vld [vmem:[%s1 + $0x2658] sm:$0xff]
  %v1333 = vld [vmem:[%s1 + $0x2660] sm:$0xff]
  %v1334 = vld [vmem:[%s1 + $0x2668] sm:$0xff]
  %v1335 = vld [vmem:[%s1 + $0x2670] sm:$0xff]
  %v1336 = vld [vmem:[%s1 + $0x2678] sm:$0xff]
  %v1337 = vld [vmem:[%s1 + $0x2680] sm:$0xff]
  %v1338 = vld [vmem:[%s1 + $0x2688] sm:$0xff]
  %v1339 = vld [vmem:[%s1 + $0x2690] sm:$0xff]
  %v1340 = vld [vmem:[%s1 + $0x2698] sm:$0xff]
  %v1341 = vld [vmem:[%s1 + $0x26a0] sm:$0xff]
  %v1342 = vld [vmem:[%s1 + $0x26a8] sm:$0xff]
  %v1343 = vld [vmem:[%s1 + $0x26b0] sm:$0xff]
  %v1344 = vld [vmem:[%s1 + $0x26b8] sm:$0xff]
  %v1345 = vld [vmem:[%s1 + $0x26c0] sm:$0xff]
  %v1346 = vld [vmem:[%s1 + $0x26c8] sm:$0xff]
  %v1347 = vld [vmem:[%s1 + $0x26d0] sm:$0xff]
  %v1348 = vld [vmem:[%s1 + $0x26d8] sm:$0xff]
  %v1349 = vld [vmem:[%s1 + $0x26e0] sm:$0xff]
  %v1350 = vld [vmem:[%s1 + $0x26e8] sm:$0xff]
  %v1351 = vld [vmem:[%s1 + $0x26f0] sm:$0xff]
  %v1352 = vld [vmem:[%s1 + $0x26f8] sm:$0xff]
  %v1353 = vld [vmem:[%s1 + $0x2700] sm:$0xff]
  %v1354 = vld [vmem:[%s1 + $0x2708] sm:$0xff]
  %v1355 = vld [vmem:[%s1 + $0x2710] sm:$0xff]
  %v1356 = vld [vmem:[%s1 + $0x2718] sm:$0xff]
  %v1357 = vld [vmem:[%s1 + $0x2720] sm:$0xff]
  %v1358 = vld [vmem:[%s1 + $0x2728] sm:$0xff]
  %v1359 = vld [vmem:[%s1 + $0x2730] sm:$0xff]
  %v1360 = vld [vmem:[%s1 + $0x2738] sm:$0xff]
  %v1361 = vld [vmem:[%s1 + $0x2740] sm:$0xff]
  %v1362 = vld [vmem:[%s1 + $0x2748] sm:$0xff]
  %v1363 = vld [vmem:[%s1 + $0x2750] sm:$0xff]
  %v1364 = vld [vmem:[%s1 + $0x2758] sm:$0xff]
  %v1365 = vld [vmem:[%s1 + $0x2760] sm:$0xff]
  %v1366 = vld [vmem:[%s1 + $0x2768] sm:$0xff]
  %v1367 = vld [vmem:[%s1 + $0x2770] sm:$0xff]
  %v1368 = vld [vmem:[%s1 + $0x2778] sm:$0xff]
  %v1369 = vld [vmem:[%s1 + $0x2780] sm:$0xff]
  %v1370 = vld [vmem:[%s1 + $0x2788] sm:$0xff]
  %v1371 = vld [vmem:[%s1 + $0x2790] sm:$0xff]
  %v1372 = vld [vmem:[%s1 + $0x2798] sm:$0xff]
  %v1373 = vld [vmem:[%s1 + $0x27a0] sm:$0xff]
  %v1374 = vld [vmem:[%s1 + $0x27a8] sm:$0xff]
  %v1375 = vld [vmem:[%s1 + $0x27b0] sm:$0xff]
  %v1376 = vld [vmem:[%s1 + $0x27b8] sm:$0xff]
  %v1377 = vld [vmem:[%s1 + $0x27c0] sm:$0xff]
  %v1378 = vld [vmem:[%s1 + $0x27c8] sm:$0xff]
  %v1379 = vld [vmem:[%s1 + $0x27d0] sm:$0xff]
  %v1380 = vld [vmem:[%s1 + $0x27d8] sm:$0xff]
  %v1381 = vld [vmem:[%s1 + $0x27e0] sm:$0xff]
  %v1382 = vld [vmem:[%s1 + $0x27e8] sm:$0xff]
  %v1383 = vld [vmem:[%s1 + $0x27f0] sm:$0xff]
  %v1384 = vld [vmem:[%s1 + $0x27f8] sm:$0xff]
  %v1385 = vld [vmem:[%s1 + $0x2800] sm:$0xff]
  %v1386 = vld [vmem:[%s1 + $0x2808] sm:$0xff]
  %v1387 = vld [vmem:[%s1 + $0x2810] sm:$0xff]
  %v1388 = vld [vmem:[%s1 + $0x2818] sm:$0xff]
  %v1389 = vld [vmem:[%s1 + $0x2820] sm:$0xff]
  %v1390 = vld [vmem:[%s1 + $0x2828] sm:$0xff]
  %v1391 = vld [vmem:[%s1 + $0x2830] sm:$0xff]
  %v1392 = vld [vmem:[%s1 + $0x2838] sm:$0xff]
  %v1393 = vld [vmem:[%s1 + $0x2840] sm:$0xff]
  %v1394 = vld [vmem:[%s1 + $0x2848] sm:$0xff]
  %v1395 = vld [vmem:[%s1 + $0x2850] sm:$0xff]
  %v1396 = vld [vmem:[%s1 + $0x2858] sm:$0xff]
  %v1397 = vld [vmem:[%s1 + $0x2860] sm:$0xff]
  %v1398 = vld [vmem:[%s1 + $0x2868] sm:$0xff]
  %v1399 = vld [vmem:[%s1 + $0x2870] sm:$0xff]
  %v1400 = vld [vmem:[%s1 + $0x2878] sm:$0xff]
  %v1401 = vld [vmem:[%s1 + $0x2880] sm:$0xff]
  %v1402 = vld [vmem:[%s1 + $0x2888] sm:$0xff]
  %v1403 = vld [vmem:[%s1 + $0x2890] sm:$0xff]
  %v1404 = vld [vmem:[%s1 + $0x2898] sm:$0xff]
  %v1405 = vld [vmem:[%s1 + $0x28a0] sm:$0xff]
  %v1406 = vld [vmem:[%s1 + $0x28a8] sm:$0xff]
  %v1407 = vld [vmem:[%s1 + $0x28b0] sm:$0xff]
  %v1408 = vld [vmem:[%s1 + $0x28b8] sm:$0xff]
  %v1409 = vld [vmem:[%s1 + $0x28c0] sm:$0xff]
  %v1410 = vld [vmem:[%s1 + $0x28c8] sm:$0xff]
  %v1411 = vld [vmem:[%s1 + $0x28d0] sm:$0xff]
  %v1412 = vld [vmem:[%s1 + $0x28d8] sm:$0xff]
  %v1413 = vld [vmem:[%s1 + $0x28e0] sm:$0xff]
  %v1414 = vld [vmem:[%s1 + $0x28e8] sm:$0xff]
  %v1415 = vld [vmem:[%s1 + $0x28f0] sm:$0xff]
  %v1416 = vld [vmem:[%s1 + $0x28f8] sm:$0xff]
  %v1417 = vld [vmem:[%s1 + $0x2900] sm:$0xff]
  %v1418 = vld [vmem:[%s1 + $0x2908] sm:$0xff]
  %v1419 = vld [vmem:[%s1 + $0x2910] sm:$0xff]
  %v1420 = vld [vmem:[%s1 + $0x2918] sm:$0xff]
  %v1421 = vld [vmem:[%s1 + $0x2920] sm:$0xff]
  %v1422 = vld [vmem:[%s1 + $0x2928] sm:$0xff]
  %v1423 = vld [vmem:[%s1 + $0x2930] sm:$0xff]
  %v1424 = vld [vmem:[%s1 + $0x2938] sm:$0xff]
  %v1425 = vld [vmem:[%s1 + $0x2940] sm:$0xff]
  %v1426 = vld [vmem:[%s1 + $0x2948] sm:$0xff]
  %v1427 = vld [vmem:[%s1 + $0x2950] sm:$0xff]
  %v1428 = vld [vmem:[%s1 + $0x2958] sm:$0xff]
  %v1429 = vld [vmem:[%s1 + $0x2960] sm:$0xff]
  %v1430 = vld [vmem:[%s1 + $0x2968] sm:$0xff]
  %v1431 = vld [vmem:[%s1 + $0x2970] sm:$0xff]
  %v1432 = vld [vmem:[%s1 + $0x2978] sm:$0xff]
  %v1433 = vld [vmem:[%s1 + $0x2980] sm:$0xff]
  %v1434 = vld [vmem:[%s1 + $0x2988] sm:$0xff]
  %v1435 = vld [vmem:[%s1 + $0x2990] sm:$0xff]
  %v1436 = vld [vmem:[%s1 + $0x2998] sm:$0xff]
  %v1437 = vld [vmem:[%s1 + $0x29a0] sm:$0xff]
  %v1438 = vld [vmem:[%s1 + $0x29a8] sm:$0xff]
  %v1439 = vld [vmem:[%s1 + $0x29b0] sm:$0xff]
  %v1440 = vld [vmem:[%s1 + $0x29b8] sm:$0xff]
  %v1441 = vld [vmem:[%s1 + $0x29c0] sm:$0xff]
  %v1442 = vld [vmem:[%s1 + $0x29c8] sm:$0xff]
  %v1443 = vld [vmem:[%s1 + $0x29d0] sm:$0xff]
  %v1444 = vld [vmem:[%s1 + $0x29d8] sm:$0xff]
  %v1445 = vld [vmem:[%s1 + $0x29e0] sm:$0xff]
  %v1446 = vld [vmem:[%s1 + $0x29e8] sm:$0xff]
  %v1447 = vld [vmem:[%s1 + $0x29f0] sm:$0xff]
  %v1448 = vld [vmem:[%s1 + $0x29f8] sm:$0xff]
  %v1449 = vld [vmem:[%s1 + $0x2a00] sm:$0xff]
  %v1450 = vld [vmem:[%s1 + $0x2a08] sm:$0xff]
  %v1451 = vld [vmem:[%s1 + $0x2a10] sm:$0xff]
  %v1452 = vld [vmem:[%s1 + $0x2a18] sm:$0xff]
  %v1453 = vld [vmem:[%s1 + $0x2a20] sm:$0xff]
  %v1454 = vld [vmem:[%s1 + $0x2a28] sm:$0xff]
  %v1455 = vld [vmem:[%s1 + $0x2a30] sm:$0xff]
  %v1456 = vld [vmem:[%s1 + $0x2a38] sm:$0xff]
  %v1457 = vld [vmem:[%s1 + $0x2a40] sm:$0xff]
  %v1458 = vld [vmem:[%s1 + $0x2a48] sm:$0xff]
  %v1459 = vld [vmem:[%s1 + $0x2a50] sm:$0xff]
  %v1460 = vld [vmem:[%s1 + $0x2a58] sm:$0xff]
  %v1461 = vld [vmem:[%s1 + $0x2a60] sm:$0xff]
  %v1462 = vld [vmem:[%s1 + $0x2a68] sm:$0xff]
  %v1463 = vld [vmem:[%s1 + $0x2a70] sm:$0xff]
  %v1464 = vld [vmem:[%s1 + $0x2a78] sm:$0xff]
  %v1465 = vld [vmem:[%s1 + $0x2a80] sm:$0xff]
  %v1466 = vld [vmem:[%s1 + $0x2a88] sm:$0xff]
  %v1467 = vld [vmem:[%s1 + $0x2a90] sm:$0xff]
  %v1468 = vld [vmem:[%s1 + $0x2a98] sm:$0xff]
  %v1469 = vld [vmem:[%s1 + $0x2aa0] sm:$0xff]
  %v1470 = vld [vmem:[%s1 + $0x2aa8] sm:$0xff]
  %v1471 = vld [vmem:[%s1 + $0x2ab0] sm:$0xff]
  %v1472 = vld [vmem:[%s1 + $0x2ab8] sm:$0xff]
  %v1473 = vld [vmem:[%s1 + $0x2ac0] sm:$0xff]
  %v1474 = vld [vmem:[%s1 + $0x2ac8] sm:$0xff]
  %v1475 = vld [vmem:[%s1 + $0x2ad0] sm:$0xff]
  %v1476 = vld [vmem:[%s1 + $0x2ad8] sm:$0xff]
  %v1477 = vld [vmem:[%s1 + $0x2ae0] sm:$0xff]
  %v1478 = vld [vmem:[%s1 + $0x2ae8] sm:$0xff]
  %v1479 = vld [vmem:[%s1 + $0x2af0] sm:$0xff]
  %v1480 = vld [vmem:[%s1 + $0x2af8] sm:$0xff]
  %v1481 = vld [vmem:[%s1 + $0x2b00] sm:$0xff]
  %v1482 = vld [vmem:[%s1 + $0x2b08] sm:$0xff]
  %v1483 = vld [vmem:[%s1 + $0x2b10] sm:$0xff]
  %v1484 = vld [vmem:[%s1 + $0x2b18] sm:$0xff]
  %v1485 = vld [vmem:[%s1 + $0x2b20] sm:$0xff]
  %v1486 = vld [vmem:[%s1 + $0x2b28] sm:$0xff]
  %v1487 = vld [vmem:[%s1 + $0x2b30] sm:$0xff]
  %v1488 = vld [vmem:[%s1 + $0x2b38] sm:$0xff]
  %v1489 = vld [vmem:[%s1 + $0x2b40] sm:$0xff]
  %v1490 = vld [vmem:[%s1 + $0x2b48] sm:$0xff]
  %v1491 = vld [vmem:[%s1 + $0x2b50] sm:$0xff]
  %v1492 = vld [vmem:[%s1 + $0x2b58] sm:$0xff]
  %v1493 = vld [vmem:[%s1 + $0x2b60] sm:$0xff]
  %v1494 = vld [vmem:[%s1 + $0x2b68] sm:$0xff]
  %v1495 = vld [vmem:[%s1 + $0x2b70] sm:$0xff]
  %v1496 = vld [vmem:[%s1 + $0x2b78] sm:$0xff]
  %v1497 = vld [vmem:[%s1 + $0x2b80] sm:$0xff]
  %v1498 = vld [vmem:[%s1 + $0x2b88] sm:$0xff]
  %v1499 = vld [vmem:[%s1 + $0x2b90] sm:$0xff]
  %v1500 = vld [vmem:[%s1 + $0x2b98] sm:$0xff]
  %v1501 = vld [vmem:[%s1 + $0x2ba0] sm:$0xff]
  %v1502 = vld [vmem:[%s1 + $0x2ba8] sm:$0xff]
  %v1503 = vld [vmem:[%s1 + $0x2bb0] sm:$0xff]
  %v1504 = vld [vmem:[%s1 + $0x2bb8] sm:$0xff]
  %v1505 = vld [vmem:[%s1 + $0x2bc0] sm:$0xff]
  %v1506 = vld [vmem:[%s1 + $0x2bc8] sm:$0xff]
  %v1507 = vld [vmem:[%s1 + $0x2bd0] sm:$0xff]
  %v1508 = vld [vmem:[%s1 + $0x2bd8] sm:$0xff]
  %v1509 = vld [vmem:[%s1 + $0x2be0] sm:$0xff]
  %v1510 = vld [vmem:[%s1 + $0x2be8] sm:$0xff]
  %v1511 = vld [vmem:[%s1 + $0x2bf0] sm:$0xff]
  %v1512 = vld [vmem:[%s1 + $0x2bf8] sm:$0xff]
  %v1513 = vld [vmem:[%s1 + $0x2c00] sm:$0xff]
  %v1514 = vld [vmem:[%s1 + $0x2c08] sm:$0xff]
  %v1515 = vld [vmem:[%s1 + $0x2c10] sm:$0xff]
  %v1516 = vld [vmem:[%s1 + $0x2c18] sm:$0xff]
  %v1517 = vld [vmem:[%s1 + $0x2c20] sm:$0xff]
  %v1518 = vld [vmem:[%s1 + $0x2c28] sm:$0xff]
  %v1519 = vld [vmem:[%s1 + $0x2c30] sm:$0xff]
  %v1520 = vld [vmem:[%s1 + $0x2c38] sm:$0xff]
  %v1521 = vld [vmem:[%s1 + $0x2c40] sm:$0xff]
  %v1522 = vld [vmem:[%s1 + $0x2c48] sm:$0xff]
  %v1523 = vld [vmem:[%s1 + $0x2c50] sm:$0xff]
  %v1524 = vld [vmem:[%s1 + $0x2c58] sm:$0xff]
  %v1525 = vld [vmem:[%s1 + $0x2c60] sm:$0xff]
  %v1526 = vld [vmem:[%s1 + $0x2c68] sm:$0xff]
  %v1527 = vld [vmem:[%s1 + $0x2c70] sm:$0xff]
  %v1528 = vld [vmem:[%s1 + $0x2c78] sm:$0xff]
  %v1529 = vld [vmem:[%s1 + $0x2c80] sm:$0xff]
  %v1530 = vld [vmem:[%s1 + $0x2c88] sm:$0xff]
  %v1531 = vld [vmem:[%s1 + $0x2c90] sm:$0xff]
  %v1532 = vld [vmem:[%s1 + $0x2c98] sm:$0xff]
  %v1533 = vld [vmem:[%s1 + $0x2ca0] sm:$0xff]
  %v1534 = vld [vmem:[%s1 + $0x2ca8] sm:$0xff]
  %v1535 = vld [vmem:[%s1 + $0x2cb0] sm:$0xff]
  %v1536 = vld [vmem:[%s1 + $0x2cb8] sm:$0xff]
  %v1537 = vld [vmem:[%s1 + $0x2cc0] sm:$0xff]
  %v1538 = vld [vmem:[%s1 + $0x2cc8] sm:$0xff]
  %v1539 = vld [vmem:[%s1 + $0x2cd0] sm:$0xff]
  %v1540 = vld [vmem:[%s1 + $0x2cd8] sm:$0xff]
  %v1541 = vld [vmem:[%s1 + $0x2ce0] sm:$0xff]
  %v1542 = vld [vmem:[%s1 + $0x2ce8] sm:$0xff]
  %v1543 = vld [vmem:[%s1 + $0x2cf0] sm:$0xff]
  %v1544 = vld [vmem:[%s1 + $0x2cf8] sm:$0xff]
  %v2985 = vunpack.c.l.b16 %v105
  %v2986 = vunpack.c.h.b16 %v105
  %v2987 = vunpack.c.l.b16 %v106
  %v2988 = vunpack.c.h.b16 %v106
  %v2989 = vunpack.c.l.b16 %v107
  %v2990 = vunpack.c.h.b16 %v107
  %v2991 = vunpack.c.l.b16 %v108
  %v2992 = vunpack.c.h.b16 %v108
  %v2993 = vunpack.c.l.b16 %v109
  %v2994 = vunpack.c.h.b16 %v109
  %v2995 = vunpack.c.l.b16 %v110
  %v2996 = vunpack.c.h.b16 %v110
  %v2997 = vunpack.c.l.b16 %v111
  %v2998 = vunpack.c.h.b16 %v111
  %v2999 = vunpack.c.l.b16 %v112
  %v3000 = vunpack.c.h.b16 %v112
  %v3001 = vunpack.c.l.b16 %v113
  %v3002 = vunpack.c.h.b16 %v113
  %v3003 = vunpack.c.l.b16 %v114
  %v3004 = vunpack.c.h.b16 %v114
  %v3005 = vunpack.c.l.b16 %v115
  %v3006 = vunpack.c.h.b16 %v115
  %v3007 = vunpack.c.l.b16 %v116
  %v3008 = vunpack.c.h.b16 %v116
  %v3009 = vunpack.c.l.b16 %v117
  %v3010 = vunpack.c.h.b16 %v117
  %v3011 = vunpack.c.l.b16 %v118
  %v3012 = vunpack.c.h.b16 %v118
  %v3013 = vunpack.c.l.b16 %v119
  %v3014 = vunpack.c.h.b16 %v119
  %v3015 = vunpack.c.l.b16 %v120
  %v3016 = vunpack.c.h.b16 %v120
  %v3017 = vunpack.c.l.b16 %v121
  %v3018 = vunpack.c.h.b16 %v121
  %v3019 = vunpack.c.l.b16 %v122
  %v3020 = vunpack.c.h.b16 %v122
  %v3021 = vunpack.c.l.b16 %v123
  %v3022 = vunpack.c.h.b16 %v123
  %v3023 = vunpack.c.l.b16 %v124
  %v3024 = vunpack.c.h.b16 %v124
  %v3025 = vunpack.c.l.b16 %v125
  %v3026 = vunpack.c.h.b16 %v125
  %v3027 = vunpack.c.l.b16 %v126
  %v3028 = vunpack.c.h.b16 %v126
  %v3029 = vunpack.c.l.b16 %v127
  %v3030 = vunpack.c.h.b16 %v127
  %v3031 = vunpack.c.l.b16 %v128
  %v3032 = vunpack.c.h.b16 %v128
  %v3033 = vunpack.c.l.b16 %v129
  %v3034 = vunpack.c.h.b16 %v129
  %v3035 = vunpack.c.l.b16 %v130
  %v3036 = vunpack.c.h.b16 %v130
  %v3037 = vunpack.c.l.b16 %v131
  %v3038 = vunpack.c.h.b16 %v131
  %v3039 = vunpack.c.l.b16 %v132
  %v3040 = vunpack.c.h.b16 %v132
  %v3041 = vunpack.c.l.b16 %v133
  %v3042 = vunpack.c.h.b16 %v133
  %v3043 = vunpack.c.l.b16 %v134
  %v3044 = vunpack.c.h.b16 %v134
  %v3045 = vunpack.c.l.b16 %v135
  %v3046 = vunpack.c.h.b16 %v135
  %v3047 = vunpack.c.l.b16 %v136
  %v3048 = vunpack.c.h.b16 %v136
  %v3049 = vunpack.c.l.b16 %v137
  %v3050 = vunpack.c.h.b16 %v137
  %v3051 = vunpack.c.l.b16 %v138
  %v3052 = vunpack.c.h.b16 %v138
  %v3053 = vunpack.c.l.b16 %v139
  %v3054 = vunpack.c.h.b16 %v139
  %v3055 = vunpack.c.l.b16 %v140
  %v3056 = vunpack.c.h.b16 %v140
  %v3057 = vunpack.c.l.b16 %v141
  %v3058 = vunpack.c.h.b16 %v141
  %v3059 = vunpack.c.l.b16 %v142
  %v3060 = vunpack.c.h.b16 %v142
  %v3061 = vunpack.c.l.b16 %v143
  %v3062 = vunpack.c.h.b16 %v143
  %v3063 = vunpack.c.l.b16 %v144
  %v3064 = vunpack.c.h.b16 %v144
  %v3065 = vunpack.c.l.b16 %v145
  %v3066 = vunpack.c.h.b16 %v145
  %v3067 = vunpack.c.l.b16 %v146
  %v3068 = vunpack.c.h.b16 %v146
  %v3069 = vunpack.c.l.b16 %v147
  %v3070 = vunpack.c.h.b16 %v147
  %v3071 = vunpack.c.l.b16 %v148
  %v3072 = vunpack.c.h.b16 %v148
  %v3073 = vunpack.c.l.b16 %v149
  %v3074 = vunpack.c.h.b16 %v149
  %v3075 = vunpack.c.l.b16 %v150
  %v3076 = vunpack.c.h.b16 %v150
  %v3077 = vunpack.c.l.b16 %v151
  %v3078 = vunpack.c.h.b16 %v151
  %v3079 = vunpack.c.l.b16 %v152
  %v3080 = vunpack.c.h.b16 %v152
  %v3081 = vunpack.c.l.b16 %v153
  %v3082 = vunpack.c.h.b16 %v153
  %v3083 = vunpack.c.l.b16 %v154
  %v3084 = vunpack.c.h.b16 %v154
  %v3085 = vunpack.c.l.b16 %v155
  %v3086 = vunpack.c.h.b16 %v155
  %v3087 = vunpack.c.l.b16 %v156
  %v3088 = vunpack.c.h.b16 %v156
  %v3089 = vunpack.c.l.b16 %v157
  %v3090 = vunpack.c.h.b16 %v157
  %v3091 = vunpack.c.l.b16 %v158
  %v3092 = vunpack.c.h.b16 %v158
  %v3093 = vunpack.c.l.b16 %v159
  %v3094 = vunpack.c.h.b16 %v159
  %v3095 = vunpack.c.l.b16 %v160
  %v3096 = vunpack.c.h.b16 %v160
  %v3097 = vunpack.c.l.b16 %v161
  %v3098 = vunpack.c.h.b16 %v161
  %v3099 = vunpack.c.l.b16 %v162
  %v3100 = vunpack.c.h.b16 %v162
  %v3101 = vunpack.c.l.b16 %v163
  %v3102 = vunpack.c.h.b16 %v163
  %v3103 = vunpack.c.l.b16 %v164
  %v3104 = vunpack.c.h.b16 %v164
  %v3105 = vunpack.c.l.b16 %v165
  %v3106 = vunpack.c.h.b16 %v165
  %v3107 = vunpack.c.l.b16 %v166
  %v3108 = vunpack.c.h.b16 %v166
  %v3109 = vunpack.c.l.b16 %v167
  %v3110 = vunpack.c.h.b16 %v167
  %v3111 = vunpack.c.l.b16 %v168
  %v3112 = vunpack.c.h.b16 %v168
  %v3113 = vunpack.c.l.b16 %v169
  %v3114 = vunpack.c.h.b16 %v169
  %v3115 = vunpack.c.l.b16 %v170
  %v3116 = vunpack.c.h.b16 %v170
  %v3117 = vunpack.c.l.b16 %v171
  %v3118 = vunpack.c.h.b16 %v171
  %v3119 = vunpack.c.l.b16 %v172
  %v3120 = vunpack.c.h.b16 %v172
  %v3121 = vunpack.c.l.b16 %v173
  %v3122 = vunpack.c.h.b16 %v173
  %v3123 = vunpack.c.l.b16 %v174
  %v3124 = vunpack.c.h.b16 %v174
  %v3125 = vunpack.c.l.b16 %v175
  %v3126 = vunpack.c.h.b16 %v175
  %v3127 = vunpack.c.l.b16 %v176
  %v3128 = vunpack.c.h.b16 %v176
  %v3129 = vunpack.c.l.b16 %v177
  %v3130 = vunpack.c.h.b16 %v177
  %v3131 = vunpack.c.l.b16 %v178
  %v3132 = vunpack.c.h.b16 %v178
  %v3133 = vunpack.c.l.b16 %v179
  %v3134 = vunpack.c.h.b16 %v179
  %v3135 = vunpack.c.l.b16 %v180
  %v3136 = vunpack.c.h.b16 %v180
  %v3137 = vunpack.c.l.b16 %v181
  %v3138 = vunpack.c.h.b16 %v181
  %v3139 = vunpack.c.l.b16 %v182
  %v3140 = vunpack.c.h.b16 %v182
  %v3141 = vunpack.c.l.b16 %v183
  %v3142 = vunpack.c.h.b16 %v183
  %v3143 = vunpack.c.l.b16 %v184
  %v3144 = vunpack.c.h.b16 %v184
  %v3145 = vunpack.c.l.b16 %v185
  %v3146 = vunpack.c.h.b16 %v185
  %v3147 = vunpack.c.l.b16 %v186
  %v3148 = vunpack.c.h.b16 %v186
  %v3149 = vunpack.c.l.b16 %v187
  %v3150 = vunpack.c.h.b16 %v187
  %v3151 = vunpack.c.l.b16 %v188
  %v3152 = vunpack.c.h.b16 %v188
  %v3153 = vunpack.c.l.b16 %v189
  %v3154 = vunpack.c.h.b16 %v189
  %v3155 = vunpack.c.l.b16 %v190
  %v3156 = vunpack.c.h.b16 %v190
  %v3157 = vunpack.c.l.b16 %v191
  %v3158 = vunpack.c.h.b16 %v191
  %v3159 = vunpack.c.l.b16 %v192
  %v3160 = vunpack.c.h.b16 %v192
  %v3161 = vunpack.c.l.b16 %v193
  %v3162 = vunpack.c.h.b16 %v193
  %v3163 = vunpack.c.l.b16 %v194
  %v3164 = vunpack.c.h.b16 %v194
  %v3165 = vunpack.c.l.b16 %v195
  %v3166 = vunpack.c.h.b16 %v195
  %v3167 = vunpack.c.l.b16 %v196
  %v3168 = vunpack.c.h.b16 %v196
  %v3169 = vunpack.c.l.b16 %v197
  %v3170 = vunpack.c.h.b16 %v197
  %v3171 = vunpack.c.l.b16 %v198
  %v3172 = vunpack.c.h.b16 %v198
  %v3173 = vunpack.c.l.b16 %v199
  %v3174 = vunpack.c.h.b16 %v199
  %v3175 = vunpack.c.l.b16 %v200
  %v3176 = vunpack.c.h.b16 %v200
  %v3177 = vunpack.c.l.b16 %v201
  %v3178 = vunpack.c.h.b16 %v201
  %v3179 = vunpack.c.l.b16 %v202
  %v3180 = vunpack.c.h.b16 %v202
  %v3181 = vunpack.c.l.b16 %v203
  %v3182 = vunpack.c.h.b16 %v203
  %v3183 = vunpack.c.l.b16 %v204
  %v3184 = vunpack.c.h.b16 %v204
  %v3185 = vunpack.c.l.b16 %v205
  %v3186 = vunpack.c.h.b16 %v205
  %v3187 = vunpack.c.l.b16 %v206
  %v3188 = vunpack.c.h.b16 %v206
  %v3189 = vunpack.c.l.b16 %v207
  %v3190 = vunpack.c.h.b16 %v207
  %v3191 = vunpack.c.l.b16 %v208
  %v3192 = vunpack.c.h.b16 %v208
  %v3193 = vunpack.c.l.b16 %v209
  %v3194 = vunpack.c.h.b16 %v209
  %v3195 = vunpack.c.l.b16 %v210
  %v3196 = vunpack.c.h.b16 %v210
  %v3197 = vunpack.c.l.b16 %v211
  %v3198 = vunpack.c.h.b16 %v211
  %v3199 = vunpack.c.l.b16 %v212
  %v3200 = vunpack.c.h.b16 %v212
  %v3201 = vunpack.c.l.b16 %v213
  %v3202 = vunpack.c.h.b16 %v213
  %v3203 = vunpack.c.l.b16 %v214
  %v3204 = vunpack.c.h.b16 %v214
  %v3205 = vunpack.c.l.b16 %v215
  %v3206 = vunpack.c.h.b16 %v215
  %v3207 = vunpack.c.l.b16 %v216
  %v3208 = vunpack.c.h.b16 %v216
  %v3209 = vunpack.c.l.b16 %v217
  %v3210 = vunpack.c.h.b16 %v217
  %v3211 = vunpack.c.l.b16 %v218
  %v3212 = vunpack.c.h.b16 %v218
  %v3213 = vunpack.c.l.b16 %v219
  %v3214 = vunpack.c.h.b16 %v219
  %v3215 = vunpack.c.l.b16 %v220
  %v3216 = vunpack.c.h.b16 %v220
  %v3217 = vunpack.c.l.b16 %v221
  %v3218 = vunpack.c.h.b16 %v221
  %v3219 = vunpack.c.l.b16 %v222
  %v3220 = vunpack.c.h.b16 %v222
  %v3221 = vunpack.c.l.b16 %v223
  %v3222 = vunpack.c.h.b16 %v223
  %v3223 = vunpack.c.l.b16 %v224
  %v3224 = vunpack.c.h.b16 %v224
  %v3225 = vunpack.c.l.b16 %v225
  %v3226 = vunpack.c.h.b16 %v225
  %v3227 = vunpack.c.l.b16 %v226
  %v3228 = vunpack.c.h.b16 %v226
  %v3229 = vunpack.c.l.b16 %v227
  %v3230 = vunpack.c.h.b16 %v227
  %v3231 = vunpack.c.l.b16 %v228
  %v3232 = vunpack.c.h.b16 %v228
  %v3233 = vunpack.c.l.b16 %v229
  %v3234 = vunpack.c.h.b16 %v229
  %v3235 = vunpack.c.l.b16 %v230
  %v3236 = vunpack.c.h.b16 %v230
  %v3237 = vunpack.c.l.b16 %v231
  %v3238 = vunpack.c.h.b16 %v231
  %v3239 = vunpack.c.l.b16 %v232
  %v3240 = vunpack.c.h.b16 %v232
  %v3241 = vunpack.c.l.b16 %v233
  %v3242 = vunpack.c.h.b16 %v233
  %v3243 = vunpack.c.l.b16 %v234
  %v3244 = vunpack.c.h.b16 %v234
  %v3245 = vunpack.c.l.b16 %v235
  %v3246 = vunpack.c.h.b16 %v235
  %v3247 = vunpack.c.l.b16 %v236
  %v3248 = vunpack.c.h.b16 %v236
  %v3249 = vunpack.c.l.b16 %v237
  %v3250 = vunpack.c.h.b16 %v237
  %v3251 = vunpack.c.l.b16 %v238
  %v3252 = vunpack.c.h.b16 %v238
  %v3253 = vunpack.c.l.b16 %v239
  %v3254 = vunpack.c.h.b16 %v239
  %v3255 = vunpack.c.l.b16 %v240
  %v3256 = vunpack.c.h.b16 %v240
  %v3257 = vunpack.c.l.b16 %v241
  %v3258 = vunpack.c.h.b16 %v241
  %v3259 = vunpack.c.l.b16 %v242
  %v3260 = vunpack.c.h.b16 %v242
  %v3261 = vunpack.c.l.b16 %v243
  %v3262 = vunpack.c.h.b16 %v243
  %v3263 = vunpack.c.l.b16 %v244
  %v3264 = vunpack.c.h.b16 %v244
  %v3265 = vunpack.c.l.b16 %v245
  %v3266 = vunpack.c.h.b16 %v245
  %v3267 = vunpack.c.l.b16 %v246
  %v3268 = vunpack.c.h.b16 %v246
  %v3269 = vunpack.c.l.b16 %v247
  %v3270 = vunpack.c.h.b16 %v247
  %v3271 = vunpack.c.l.b16 %v248
  %v3272 = vunpack.c.h.b16 %v248
  %v3273 = vunpack.c.l.b16 %v249
  %v3274 = vunpack.c.h.b16 %v249
  %v3275 = vunpack.c.l.b16 %v250
  %v3276 = vunpack.c.h.b16 %v250
  %v3277 = vunpack.c.l.b16 %v251
  %v3278 = vunpack.c.h.b16 %v251
  %v3279 = vunpack.c.l.b16 %v252
  %v3280 = vunpack.c.h.b16 %v252
  %v3281 = vunpack.c.l.b16 %v253
  %v3282 = vunpack.c.h.b16 %v253
  %v3283 = vunpack.c.l.b16 %v254
  %v3284 = vunpack.c.h.b16 %v254
  %v3285 = vunpack.c.l.b16 %v255
  %v3286 = vunpack.c.h.b16 %v255
  %v3287 = vunpack.c.l.b16 %v256
  %v3288 = vunpack.c.h.b16 %v256
  %v3289 = vunpack.c.l.b16 %v257
  %v3290 = vunpack.c.h.b16 %v257
  %v3291 = vunpack.c.l.b16 %v258
  %v3292 = vunpack.c.h.b16 %v258
  %v3293 = vunpack.c.l.b16 %v259
  %v3294 = vunpack.c.h.b16 %v259
  %v3295 = vunpack.c.l.b16 %v260
  %v3296 = vunpack.c.h.b16 %v260
  %v3297 = vunpack.c.l.b16 %v261
  %v3298 = vunpack.c.h.b16 %v261
  %v3299 = vunpack.c.l.b16 %v262
  %v3300 = vunpack.c.h.b16 %v262
  %v3301 = vunpack.c.l.b16 %v263
  %v3302 = vunpack.c.h.b16 %v263
  %v3303 = vunpack.c.l.b16 %v264
  %v3304 = vunpack.c.h.b16 %v264
  %v3305 = vunpack.c.l.b16 %v265
  %v3306 = vunpack.c.h.b16 %v265
  %v3307 = vunpack.c.l.b16 %v266
  %v3308 = vunpack.c.h.b16 %v266
  %v3309 = vunpack.c.l.b16 %v267
  %v3310 = vunpack.c.h.b16 %v267
  %v3311 = vunpack.c.l.b16 %v268
  %v3312 = vunpack.c.h.b16 %v268
  %v3313 = vunpack.c.l.b16 %v269
  %v3314 = vunpack.c.h.b16 %v269
  %v3315 = vunpack.c.l.b16 %v270
  %v3316 = vunpack.c.h.b16 %v270
  %v3317 = vunpack.c.l.b16 %v271
  %v3318 = vunpack.c.h.b16 %v271
  %v3319 = vunpack.c.l.b16 %v272
  %v3320 = vunpack.c.h.b16 %v272
  %v3321 = vunpack.c.l.b16 %v273
  %v3322 = vunpack.c.h.b16 %v273
  %v3323 = vunpack.c.l.b16 %v274
  %v3324 = vunpack.c.h.b16 %v274
  %v3325 = vunpack.c.l.b16 %v275
  %v3326 = vunpack.c.h.b16 %v275
  %v3327 = vunpack.c.l.b16 %v276
  %v3328 = vunpack.c.h.b16 %v276
  %v3329 = vunpack.c.l.b16 %v277
  %v3330 = vunpack.c.h.b16 %v277
  %v3331 = vunpack.c.l.b16 %v278
  %v3332 = vunpack.c.h.b16 %v278
  %v3333 = vunpack.c.l.b16 %v279
  %v3334 = vunpack.c.h.b16 %v279
  %v3335 = vunpack.c.l.b16 %v280
  %v3336 = vunpack.c.h.b16 %v280
  %v3337 = vunpack.c.l.b16 %v281
  %v3338 = vunpack.c.h.b16 %v281
  %v3339 = vunpack.c.l.b16 %v282
  %v3340 = vunpack.c.h.b16 %v282
  %v3341 = vunpack.c.l.b16 %v283
  %v3342 = vunpack.c.h.b16 %v283
  %v3343 = vunpack.c.l.b16 %v284
  %v3344 = vunpack.c.h.b16 %v284
  %v3345 = vunpack.c.l.b16 %v285
  %v3346 = vunpack.c.h.b16 %v285
  %v3347 = vunpack.c.l.b16 %v286
  %v3348 = vunpack.c.h.b16 %v286
  %v3349 = vunpack.c.l.b16 %v287
  %v3350 = vunpack.c.h.b16 %v287
  %v3351 = vunpack.c.l.b16 %v288
  %v3352 = vunpack.c.h.b16 %v288
  %v3353 = vunpack.c.l.b16 %v289
  %v3354 = vunpack.c.h.b16 %v289
  %v3355 = vunpack.c.l.b16 %v290
  %v3356 = vunpack.c.h.b16 %v290
  %v3357 = vunpack.c.l.b16 %v291
  %v3358 = vunpack.c.h.b16 %v291
  %v3359 = vunpack.c.l.b16 %v292
  %v3360 = vunpack.c.h.b16 %v292
  %v3361 = vunpack.c.l.b16 %v293
  %v3362 = vunpack.c.h.b16 %v293
  %v3363 = vunpack.c.l.b16 %v294
  %v3364 = vunpack.c.h.b16 %v294
  %v3365 = vunpack.c.l.b16 %v295
  %v3366 = vunpack.c.h.b16 %v295
  %v3367 = vunpack.c.l.b16 %v296
  %v3368 = vunpack.c.h.b16 %v296
  %v3369 = vunpack.c.l.b16 %v297
  %v3370 = vunpack.c.h.b16 %v297
  %v3371 = vunpack.c.l.b16 %v298
  %v3372 = vunpack.c.h.b16 %v298
  %v3373 = vunpack.c.l.b16 %v299
  %v3374 = vunpack.c.h.b16 %v299
  %v3375 = vunpack.c.l.b16 %v300
  %v3376 = vunpack.c.h.b16 %v300
  %v3377 = vunpack.c.l.b16 %v301
  %v3378 = vunpack.c.h.b16 %v301
  %v3379 = vunpack.c.l.b16 %v302
  %v3380 = vunpack.c.h.b16 %v302
  %v3381 = vunpack.c.l.b16 %v303
  %v3382 = vunpack.c.h.b16 %v303
  %v3383 = vunpack.c.l.b16 %v304
  %v3384 = vunpack.c.h.b16 %v304
  %v3385 = vunpack.c.l.b16 %v305
  %v3386 = vunpack.c.h.b16 %v305
  %v3387 = vunpack.c.l.b16 %v306
  %v3388 = vunpack.c.h.b16 %v306
  %v3389 = vunpack.c.l.b16 %v307
  %v3390 = vunpack.c.h.b16 %v307
  %v3391 = vunpack.c.l.b16 %v308
  %v3392 = vunpack.c.h.b16 %v308
  %v3393 = vunpack.c.l.b16 %v309
  %v3394 = vunpack.c.h.b16 %v309
  %v3395 = vunpack.c.l.b16 %v310
  %v3396 = vunpack.c.h.b16 %v310
  %v3397 = vunpack.c.l.b16 %v311
  %v3398 = vunpack.c.h.b16 %v311
  %v3399 = vunpack.c.l.b16 %v312
  %v3400 = vunpack.c.h.b16 %v312
  %v3401 = vunpack.c.l.b16 %v313
  %v3402 = vunpack.c.h.b16 %v313
  %v3403 = vunpack.c.l.b16 %v314
  %v3404 = vunpack.c.h.b16 %v314
  %v3405 = vunpack.c.l.b16 %v315
  %v3406 = vunpack.c.h.b16 %v315
  %v3407 = vunpack.c.l.b16 %v316
  %v3408 = vunpack.c.h.b16 %v316
  %v3409 = vunpack.c.l.b16 %v317
  %v3410 = vunpack.c.h.b16 %v317
  %v3411 = vunpack.c.l.b16 %v318
  %v3412 = vunpack.c.h.b16 %v318
  %v3413 = vunpack.c.l.b16 %v319
  %v3414 = vunpack.c.h.b16 %v319
  %v3415 = vunpack.c.l.b16 %v320
  %v3416 = vunpack.c.h.b16 %v320
  %v3417 = vunpack.c.l.b16 %v321
  %v3418 = vunpack.c.h.b16 %v321
  %v3419 = vunpack.c.l.b16 %v322
  %v3420 = vunpack.c.h.b16 %v322
  %v3421 = vunpack.c.l.b16 %v323
  %v3422 = vunpack.c.h.b16 %v323
  %v3423 = vunpack.c.l.b16 %v324
  %v3424 = vunpack.c.h.b16 %v324
  %v3425 = vunpack.c.l.b16 %v325
  %v3426 = vunpack.c.h.b16 %v325
  %v3427 = vunpack.c.l.b16 %v326
  %v3428 = vunpack.c.h.b16 %v326
  %v3429 = vunpack.c.l.b16 %v327
  %v3430 = vunpack.c.h.b16 %v327
  %v3431 = vunpack.c.l.b16 %v328
  %v3432 = vunpack.c.h.b16 %v328
  %v3433 = vunpack.c.l.b16 %v329
  %v3434 = vunpack.c.h.b16 %v329
  %v3435 = vunpack.c.l.b16 %v330
  %v3436 = vunpack.c.h.b16 %v330
  %v3437 = vunpack.c.l.b16 %v331
  %v3438 = vunpack.c.h.b16 %v331
  %v3439 = vunpack.c.l.b16 %v332
  %v3440 = vunpack.c.h.b16 %v332
  %v3441 = vunpack.c.l.b16 %v333
  %v3442 = vunpack.c.h.b16 %v333
  %v3443 = vunpack.c.l.b16 %v334
  %v3444 = vunpack.c.h.b16 %v334
  %v3445 = vunpack.c.l.b16 %v335
  %v3446 = vunpack.c.h.b16 %v335
  %v3447 = vunpack.c.l.b16 %v336
  %v3448 = vunpack.c.h.b16 %v336
  %v3449 = vunpack.c.l.b16 %v337
  %v3450 = vunpack.c.h.b16 %v337
  %v3451 = vunpack.c.l.b16 %v338
  %v3452 = vunpack.c.h.b16 %v338
  %v3453 = vunpack.c.l.b16 %v339
  %v3454 = vunpack.c.h.b16 %v339
  %v3455 = vunpack.c.l.b16 %v340
  %v3456 = vunpack.c.h.b16 %v340
  %v3457 = vunpack.c.l.b16 %v341
  %v3458 = vunpack.c.h.b16 %v341
  %v3459 = vunpack.c.l.b16 %v342
  %v3460 = vunpack.c.h.b16 %v342
  %v3461 = vunpack.c.l.b16 %v343
  %v3462 = vunpack.c.h.b16 %v343
  %v3463 = vunpack.c.l.b16 %v344
  %v3464 = vunpack.c.h.b16 %v344
  %v3465 = vunpack.c.l.b16 %v345
  %v3466 = vunpack.c.h.b16 %v345
  %v3467 = vunpack.c.l.b16 %v346
  %v3468 = vunpack.c.h.b16 %v346
  %v3469 = vunpack.c.l.b16 %v347
  %v3470 = vunpack.c.h.b16 %v347
  %v3471 = vunpack.c.l.b16 %v348
  %v3472 = vunpack.c.h.b16 %v348
  %v3473 = vunpack.c.l.b16 %v349
  %v3474 = vunpack.c.h.b16 %v349
  %v3475 = vunpack.c.l.b16 %v350
  %v3476 = vunpack.c.h.b16 %v350
  %v3477 = vunpack.c.l.b16 %v351
  %v3478 = vunpack.c.h.b16 %v351
  %v3479 = vunpack.c.l.b16 %v352
  %v3480 = vunpack.c.h.b16 %v352
  %v3481 = vunpack.c.l.b16 %v353
  %v3482 = vunpack.c.h.b16 %v353
  %v3483 = vunpack.c.l.b16 %v354
  %v3484 = vunpack.c.h.b16 %v354
  %v3485 = vunpack.c.l.b16 %v355
  %v3486 = vunpack.c.h.b16 %v355
  %v3487 = vunpack.c.l.b16 %v356
  %v3488 = vunpack.c.h.b16 %v356
  %v3489 = vunpack.c.l.b16 %v357
  %v3490 = vunpack.c.h.b16 %v357
  %v3491 = vunpack.c.l.b16 %v358
  %v3492 = vunpack.c.h.b16 %v358
  %v3493 = vunpack.c.l.b16 %v359
  %v3494 = vunpack.c.h.b16 %v359
  %v3495 = vunpack.c.l.b16 %v360
  %v3496 = vunpack.c.h.b16 %v360
  %v3497 = vunpack.c.l.b16 %v361
  %v3498 = vunpack.c.h.b16 %v361
  %v3499 = vunpack.c.l.b16 %v362
  %v3500 = vunpack.c.h.b16 %v362
  %v3501 = vunpack.c.l.b16 %v363
  %v3502 = vunpack.c.h.b16 %v363
  %v3503 = vunpack.c.l.b16 %v364
  %v3504 = vunpack.c.h.b16 %v364
  %v3505 = vunpack.c.l.b16 %v365
  %v3506 = vunpack.c.h.b16 %v365
  %v3507 = vunpack.c.l.b16 %v366
  %v3508 = vunpack.c.h.b16 %v366
  %v3509 = vunpack.c.l.b16 %v367
  %v3510 = vunpack.c.h.b16 %v367
  %v3511 = vunpack.c.l.b16 %v368
  %v3512 = vunpack.c.h.b16 %v368
  %v3513 = vunpack.c.l.b16 %v369
  %v3514 = vunpack.c.h.b16 %v369
  %v3515 = vunpack.c.l.b16 %v370
  %v3516 = vunpack.c.h.b16 %v370
  %v3517 = vunpack.c.l.b16 %v371
  %v3518 = vunpack.c.h.b16 %v371
  %v3519 = vunpack.c.l.b16 %v372
  %v3520 = vunpack.c.h.b16 %v372
  %v3521 = vunpack.c.l.b16 %v373
  %v3522 = vunpack.c.h.b16 %v373
  %v3523 = vunpack.c.l.b16 %v374
  %v3524 = vunpack.c.h.b16 %v374
  %v3525 = vunpack.c.l.b16 %v375
  %v3526 = vunpack.c.h.b16 %v375
  %v3527 = vunpack.c.l.b16 %v376
  %v3528 = vunpack.c.h.b16 %v376
  %v3529 = vunpack.c.l.b16 %v377
  %v3530 = vunpack.c.h.b16 %v377
  %v3531 = vunpack.c.l.b16 %v378
  %v3532 = vunpack.c.h.b16 %v378
  %v3533 = vunpack.c.l.b16 %v379
  %v3534 = vunpack.c.h.b16 %v379
  %v3535 = vunpack.c.l.b16 %v380
  %v3536 = vunpack.c.h.b16 %v380
  %v3537 = vunpack.c.l.b16 %v381
  %v3538 = vunpack.c.h.b16 %v381
  %v3539 = vunpack.c.l.b16 %v382
  %v3540 = vunpack.c.h.b16 %v382
  %v3541 = vunpack.c.l.b16 %v383
  %v3542 = vunpack.c.h.b16 %v383
  %v3543 = vunpack.c.l.b16 %v384
  %v3544 = vunpack.c.h.b16 %v384
  %v3545 = vunpack.c.l.b16 %v385
  %v3546 = vunpack.c.h.b16 %v385
  %v3547 = vunpack.c.l.b16 %v386
  %v3548 = vunpack.c.h.b16 %v386
  %v3549 = vunpack.c.l.b16 %v387
  %v3550 = vunpack.c.h.b16 %v387
  %v3551 = vunpack.c.l.b16 %v388
  %v3552 = vunpack.c.h.b16 %v388
  %v3553 = vunpack.c.l.b16 %v389
  %v3554 = vunpack.c.h.b16 %v389
  %v3555 = vunpack.c.l.b16 %v390
  %v3556 = vunpack.c.h.b16 %v390
  %v3557 = vunpack.c.l.b16 %v391
  %v3558 = vunpack.c.h.b16 %v391
  %v3559 = vunpack.c.l.b16 %v392
  %v3560 = vunpack.c.h.b16 %v392
  %v3561 = vunpack.c.l.b16 %v393
  %v3562 = vunpack.c.h.b16 %v393
  %v3563 = vunpack.c.l.b16 %v394
  %v3564 = vunpack.c.h.b16 %v394
  %v3565 = vunpack.c.l.b16 %v395
  %v3566 = vunpack.c.h.b16 %v395
  %v3567 = vunpack.c.l.b16 %v396
  %v3568 = vunpack.c.h.b16 %v396
  %v3569 = vunpack.c.l.b16 %v397
  %v3570 = vunpack.c.h.b16 %v397
  %v3571 = vunpack.c.l.b16 %v398
  %v3572 = vunpack.c.h.b16 %v398
  %v3573 = vunpack.c.l.b16 %v399
  %v3574 = vunpack.c.h.b16 %v399
  %v3575 = vunpack.c.l.b16 %v400
  %v3576 = vunpack.c.h.b16 %v400
  %v3577 = vunpack.c.l.b16 %v401
  %v3578 = vunpack.c.h.b16 %v401
  %v3579 = vunpack.c.l.b16 %v402
  %v3580 = vunpack.c.h.b16 %v402
  %v3581 = vunpack.c.l.b16 %v403
  %v3582 = vunpack.c.h.b16 %v403
  %v3583 = vunpack.c.l.b16 %v404
  %v3584 = vunpack.c.h.b16 %v404
  %v3585 = vunpack.c.l.b16 %v405
  %v3586 = vunpack.c.h.b16 %v405
  %v3587 = vunpack.c.l.b16 %v406
  %v3588 = vunpack.c.h.b16 %v406
  %v3589 = vunpack.c.l.b16 %v407
  %v3590 = vunpack.c.h.b16 %v407
  %v3591 = vunpack.c.l.b16 %v408
  %v3592 = vunpack.c.h.b16 %v408
  %v3593 = vunpack.c.l.b16 %v409
  %v3594 = vunpack.c.h.b16 %v409
  %v3595 = vunpack.c.l.b16 %v410
  %v3596 = vunpack.c.h.b16 %v410
  %v3597 = vunpack.c.l.b16 %v411
  %v3598 = vunpack.c.h.b16 %v411
  %v3599 = vunpack.c.l.b16 %v412
  %v3600 = vunpack.c.h.b16 %v412
  %v3601 = vunpack.c.l.b16 %v413
  %v3602 = vunpack.c.h.b16 %v413
  %v3603 = vunpack.c.l.b16 %v414
  %v3604 = vunpack.c.h.b16 %v414
  %v3605 = vunpack.c.l.b16 %v415
  %v3606 = vunpack.c.h.b16 %v415
  %v3607 = vunpack.c.l.b16 %v416
  %v3608 = vunpack.c.h.b16 %v416
  %v3609 = vunpack.c.l.b16 %v417
  %v3610 = vunpack.c.h.b16 %v417
  %v3611 = vunpack.c.l.b16 %v418
  %v3612 = vunpack.c.h.b16 %v418
  %v3613 = vunpack.c.l.b16 %v419
  %v3614 = vunpack.c.h.b16 %v419
  %v3615 = vunpack.c.l.b16 %v420
  %v3616 = vunpack.c.h.b16 %v420
  %v3617 = vunpack.c.l.b16 %v421
  %v3618 = vunpack.c.h.b16 %v421
  %v3619 = vunpack.c.l.b16 %v422
  %v3620 = vunpack.c.h.b16 %v422
  %v3621 = vunpack.c.l.b16 %v423
  %v3622 = vunpack.c.h.b16 %v423
  %v3623 = vunpack.c.l.b16 %v424
  %v3624 = vunpack.c.h.b16 %v424
  %v3625 = vunpack.c.l.b16 %v425
  %v3626 = vunpack.c.h.b16 %v425
  %v3627 = vunpack.c.l.b16 %v426
  %v3628 = vunpack.c.h.b16 %v426
  %v3629 = vunpack.c.l.b16 %v427
  %v3630 = vunpack.c.h.b16 %v427
  %v3631 = vunpack.c.l.b16 %v428
  %v3632 = vunpack.c.h.b16 %v428
  %v3633 = vunpack.c.l.b16 %v429
  %v3634 = vunpack.c.h.b16 %v429
  %v3635 = vunpack.c.l.b16 %v430
  %v3636 = vunpack.c.h.b16 %v430
  %v3637 = vunpack.c.l.b16 %v431
  %v3638 = vunpack.c.h.b16 %v431
  %v3639 = vunpack.c.l.b16 %v432
  %v3640 = vunpack.c.h.b16 %v432
  %v3641 = vunpack.c.l.b16 %v433
  %v3642 = vunpack.c.h.b16 %v433
  %v3643 = vunpack.c.l.b16 %v434
  %v3644 = vunpack.c.h.b16 %v434
  %v3645 = vunpack.c.l.b16 %v435
  %v3646 = vunpack.c.h.b16 %v435
  %v3647 = vunpack.c.l.b16 %v436
  %v3648 = vunpack.c.h.b16 %v436
  %v3649 = vunpack.c.l.b16 %v437
  %v3650 = vunpack.c.h.b16 %v437
  %v3651 = vunpack.c.l.b16 %v438
  %v3652 = vunpack.c.h.b16 %v438
  %v3653 = vunpack.c.l.b16 %v439
  %v3654 = vunpack.c.h.b16 %v439
  %v3655 = vunpack.c.l.b16 %v440
  %v3656 = vunpack.c.h.b16 %v440
  %v3657 = vunpack.c.l.b16 %v441
  %v3658 = vunpack.c.h.b16 %v441
  %v3659 = vunpack.c.l.b16 %v442
  %v3660 = vunpack.c.h.b16 %v442
  %v3661 = vunpack.c.l.b16 %v443
  %v3662 = vunpack.c.h.b16 %v443
  %v3663 = vunpack.c.l.b16 %v444
  %v3664 = vunpack.c.h.b16 %v444
  %v3665 = vunpack.c.l.b16 %v445
  %v3666 = vunpack.c.h.b16 %v445
  %v3667 = vunpack.c.l.b16 %v446
  %v3668 = vunpack.c.h.b16 %v446
  %v3669 = vunpack.c.l.b16 %v447
  %v3670 = vunpack.c.h.b16 %v447
  %v3671 = vunpack.c.l.b16 %v448
  %v3672 = vunpack.c.h.b16 %v448
  %v3673 = vunpack.c.l.b16 %v449
  %v3674 = vunpack.c.h.b16 %v449
  %v3675 = vunpack.c.l.b16 %v450
  %v3676 = vunpack.c.h.b16 %v450
  %v3677 = vunpack.c.l.b16 %v451
  %v3678 = vunpack.c.h.b16 %v451
  %v3679 = vunpack.c.l.b16 %v452
  %v3680 = vunpack.c.h.b16 %v452
  %v3681 = vunpack.c.l.b16 %v453
  %v3682 = vunpack.c.h.b16 %v453
  %v3683 = vunpack.c.l.b16 %v454
  %v3684 = vunpack.c.h.b16 %v454
  %v3685 = vunpack.c.l.b16 %v455
  %v3686 = vunpack.c.h.b16 %v455
  %v3687 = vunpack.c.l.b16 %v456
  %v3688 = vunpack.c.h.b16 %v456
  %v3689 = vunpack.c.l.b16 %v457
  %v3690 = vunpack.c.h.b16 %v457
  %v3691 = vunpack.c.l.b16 %v458
  %v3692 = vunpack.c.h.b16 %v458
  %v3693 = vunpack.c.l.b16 %v459
  %v3694 = vunpack.c.h.b16 %v459
  %v3695 = vunpack.c.l.b16 %v460
  %v3696 = vunpack.c.h.b16 %v460
  %v3697 = vunpack.c.l.b16 %v461
  %v3698 = vunpack.c.h.b16 %v461
  %v3699 = vunpack.c.l.b16 %v462
  %v3700 = vunpack.c.h.b16 %v462
  %v3701 = vunpack.c.l.b16 %v463
  %v3702 = vunpack.c.h.b16 %v463
  %v3703 = vunpack.c.l.b16 %v464
  %v3704 = vunpack.c.h.b16 %v464
  %v3705 = vunpack.c.l.b16 %v465
  %v3706 = vunpack.c.h.b16 %v465
  %v3707 = vunpack.c.l.b16 %v466
  %v3708 = vunpack.c.h.b16 %v466
  %v3709 = vunpack.c.l.b16 %v467
  %v3710 = vunpack.c.h.b16 %v467
  %v3711 = vunpack.c.l.b16 %v468
  %v3712 = vunpack.c.h.b16 %v468
  %v3713 = vunpack.c.l.b16 %v469
  %v3714 = vunpack.c.h.b16 %v469
  %v3715 = vunpack.c.l.b16 %v470
  %v3716 = vunpack.c.h.b16 %v470
  %v3717 = vunpack.c.l.b16 %v471
  %v3718 = vunpack.c.h.b16 %v471
  %v3719 = vunpack.c.l.b16 %v472
  %v3720 = vunpack.c.h.b16 %v472
  %v3721 = vunpack.c.l.b16 %v473
  %v3722 = vunpack.c.h.b16 %v473
  %v3723 = vunpack.c.l.b16 %v474
  %v3724 = vunpack.c.h.b16 %v474
  %v3725 = vunpack.c.l.b16 %v475
  %v3726 = vunpack.c.h.b16 %v475
  %v3727 = vunpack.c.l.b16 %v476
  %v3728 = vunpack.c.h.b16 %v476
  %v3729 = vunpack.c.l.b16 %v477
  %v3730 = vunpack.c.h.b16 %v477
  %v3731 = vunpack.c.l.b16 %v478
  %v3732 = vunpack.c.h.b16 %v478
  %v3733 = vunpack.c.l.b16 %v479
  %v3734 = vunpack.c.h.b16 %v479
  %v3735 = vunpack.c.l.b16 %v480
  %v3736 = vunpack.c.h.b16 %v480
  %v3737 = vunpack.c.l.b16 %v481
  %v3738 = vunpack.c.h.b16 %v481
  %v3739 = vunpack.c.l.b16 %v482
  %v3740 = vunpack.c.h.b16 %v482
  %v3741 = vunpack.c.l.b16 %v483
  %v3742 = vunpack.c.h.b16 %v483
  %v3743 = vunpack.c.l.b16 %v484
  %v3744 = vunpack.c.h.b16 %v484
  %v3745 = vunpack.c.l.b16 %v485
  %v3746 = vunpack.c.h.b16 %v485
  %v3747 = vunpack.c.l.b16 %v486
  %v3748 = vunpack.c.h.b16 %v486
  %v3749 = vunpack.c.l.b16 %v487
  %v3750 = vunpack.c.h.b16 %v487
  %v3751 = vunpack.c.l.b16 %v488
  %v3752 = vunpack.c.h.b16 %v488
  %v3753 = vunpack.c.l.b16 %v489
  %v3754 = vunpack.c.h.b16 %v489
  %v3755 = vunpack.c.l.b16 %v490
  %v3756 = vunpack.c.h.b16 %v490
  %v3757 = vunpack.c.l.b16 %v491
  %v3758 = vunpack.c.h.b16 %v491
  %v3759 = vunpack.c.l.b16 %v492
  %v3760 = vunpack.c.h.b16 %v492
  %v3761 = vunpack.c.l.b16 %v493
  %v3762 = vunpack.c.h.b16 %v493
  %v3763 = vunpack.c.l.b16 %v494
  %v3764 = vunpack.c.h.b16 %v494
  %v3765 = vunpack.c.l.b16 %v495
  %v3766 = vunpack.c.h.b16 %v495
  %v3767 = vunpack.c.l.b16 %v496
  %v3768 = vunpack.c.h.b16 %v496
  %v3769 = vunpack.c.l.b16 %v497
  %v3770 = vunpack.c.h.b16 %v497
  %v3771 = vunpack.c.l.b16 %v498
  %v3772 = vunpack.c.h.b16 %v498
  %v3773 = vunpack.c.l.b16 %v499
  %v3774 = vunpack.c.h.b16 %v499
  %v3775 = vunpack.c.l.b16 %v500
  %v3776 = vunpack.c.h.b16 %v500
  %v3777 = vunpack.c.l.b16 %v501
  %v3778 = vunpack.c.h.b16 %v501
  %v3779 = vunpack.c.l.b16 %v502
  %v3780 = vunpack.c.h.b16 %v502
  %v3781 = vunpack.c.l.b16 %v503
  %v3782 = vunpack.c.h.b16 %v503
  %v3783 = vunpack.c.l.b16 %v504
  %v3784 = vunpack.c.h.b16 %v504
  %v3785 = vunpack.c.l.b16 %v505
  %v3786 = vunpack.c.h.b16 %v505
  %v3787 = vunpack.c.l.b16 %v506
  %v3788 = vunpack.c.h.b16 %v506
  %v3789 = vunpack.c.l.b16 %v507
  %v3790 = vunpack.c.h.b16 %v507
  %v3791 = vunpack.c.l.b16 %v508
  %v3792 = vunpack.c.h.b16 %v508
  %v3793 = vunpack.c.l.b16 %v509
  %v3794 = vunpack.c.h.b16 %v509
  %v3795 = vunpack.c.l.b16 %v510
  %v3796 = vunpack.c.h.b16 %v510
  %v3797 = vunpack.c.l.b16 %v511
  %v3798 = vunpack.c.h.b16 %v511
  %v3799 = vunpack.c.l.b16 %v512
  %v3800 = vunpack.c.h.b16 %v512
  %v3801 = vunpack.c.l.b16 %v513
  %v3802 = vunpack.c.h.b16 %v513
  %v3803 = vunpack.c.l.b16 %v514
  %v3804 = vunpack.c.h.b16 %v514
  %v3805 = vunpack.c.l.b16 %v515
  %v3806 = vunpack.c.h.b16 %v515
  %v3807 = vunpack.c.l.b16 %v516
  %v3808 = vunpack.c.h.b16 %v516
  %v3809 = vunpack.c.l.b16 %v517
  %v3810 = vunpack.c.h.b16 %v517
  %v3811 = vunpack.c.l.b16 %v518
  %v3812 = vunpack.c.h.b16 %v518
  %v3813 = vunpack.c.l.b16 %v519
  %v3814 = vunpack.c.h.b16 %v519
  %v3815 = vunpack.c.l.b16 %v520
  %v3816 = vunpack.c.h.b16 %v520
  %v3817 = vunpack.c.l.b16 %v521
  %v3818 = vunpack.c.h.b16 %v521
  %v3819 = vunpack.c.l.b16 %v522
  %v3820 = vunpack.c.h.b16 %v522
  %v3821 = vunpack.c.l.b16 %v523
  %v3822 = vunpack.c.h.b16 %v523
  %v3823 = vunpack.c.l.b16 %v524
  %v3824 = vunpack.c.h.b16 %v524
  %v3825 = vunpack.c.l.b16 %v525
  %v3826 = vunpack.c.h.b16 %v525
  %v3827 = vunpack.c.l.b16 %v526
  %v3828 = vunpack.c.h.b16 %v526
  %v3829 = vunpack.c.l.b16 %v527
  %v3830 = vunpack.c.h.b16 %v527
  %v3831 = vunpack.c.l.b16 %v528
  %v3832 = vunpack.c.h.b16 %v528
  %v3833 = vunpack.c.l.b16 %v529
  %v3834 = vunpack.c.h.b16 %v529
  %v3835 = vunpack.c.l.b16 %v530
  %v3836 = vunpack.c.h.b16 %v530
  %v3837 = vunpack.c.l.b16 %v531
  %v3838 = vunpack.c.h.b16 %v531
  %v3839 = vunpack.c.l.b16 %v532
  %v3840 = vunpack.c.h.b16 %v532
  %v3841 = vunpack.c.l.b16 %v533
  %v3842 = vunpack.c.h.b16 %v533
  %v3843 = vunpack.c.l.b16 %v534
  %v3844 = vunpack.c.h.b16 %v534
  %v3845 = vunpack.c.l.b16 %v535
  %v3846 = vunpack.c.h.b16 %v535
  %v3847 = vunpack.c.l.b16 %v536
  %v3848 = vunpack.c.h.b16 %v536
  %v3849 = vunpack.c.l.b16 %v537
  %v3850 = vunpack.c.h.b16 %v537
  %v3851 = vunpack.c.l.b16 %v538
  %v3852 = vunpack.c.h.b16 %v538
  %v3853 = vunpack.c.l.b16 %v539
  %v3854 = vunpack.c.h.b16 %v539
  %v3855 = vunpack.c.l.b16 %v540
  %v3856 = vunpack.c.h.b16 %v540
  %v3857 = vunpack.c.l.b16 %v541
  %v3858 = vunpack.c.h.b16 %v541
  %v3859 = vunpack.c.l.b16 %v542
  %v3860 = vunpack.c.h.b16 %v542
  %v3861 = vunpack.c.l.b16 %v543
  %v3862 = vunpack.c.h.b16 %v543
  %v3863 = vunpack.c.l.b16 %v544
  %v3864 = vunpack.c.h.b16 %v544
  %v3865 = vunpack.c.l.b16 %v545
  %v3866 = vunpack.c.h.b16 %v545
  %v3867 = vunpack.c.l.b16 %v546
  %v3868 = vunpack.c.h.b16 %v546
  %v3869 = vunpack.c.l.b16 %v547
  %v3870 = vunpack.c.h.b16 %v547
  %v3871 = vunpack.c.l.b16 %v548
  %v3872 = vunpack.c.h.b16 %v548
  %v3873 = vunpack.c.l.b16 %v549
  %v3874 = vunpack.c.h.b16 %v549
  %v3875 = vunpack.c.l.b16 %v550
  %v3876 = vunpack.c.h.b16 %v550
  %v3877 = vunpack.c.l.b16 %v551
  %v3878 = vunpack.c.h.b16 %v551
  %v3879 = vunpack.c.l.b16 %v552
  %v3880 = vunpack.c.h.b16 %v552
  %v3881 = vunpack.c.l.b16 %v553
  %v3882 = vunpack.c.h.b16 %v553
  %v3883 = vunpack.c.l.b16 %v554
  %v3884 = vunpack.c.h.b16 %v554
  %v3885 = vunpack.c.l.b16 %v555
  %v3886 = vunpack.c.h.b16 %v555
  %v3887 = vunpack.c.l.b16 %v556
  %v3888 = vunpack.c.h.b16 %v556
  %v3889 = vunpack.c.l.b16 %v557
  %v3890 = vunpack.c.h.b16 %v557
  %v3891 = vunpack.c.l.b16 %v558
  %v3892 = vunpack.c.h.b16 %v558
  %v3893 = vunpack.c.l.b16 %v559
  %v3894 = vunpack.c.h.b16 %v559
  %v3895 = vunpack.c.l.b16 %v560
  %v3896 = vunpack.c.h.b16 %v560
  %v3897 = vunpack.c.l.b16 %v561
  %v3898 = vunpack.c.h.b16 %v561
  %v3899 = vunpack.c.l.b16 %v562
  %v3900 = vunpack.c.h.b16 %v562
  %v3901 = vunpack.c.l.b16 %v563
  %v3902 = vunpack.c.h.b16 %v563
  %v3903 = vunpack.c.l.b16 %v564
  %v3904 = vunpack.c.h.b16 %v564
  %v3905 = vunpack.c.l.b16 %v565
  %v3906 = vunpack.c.h.b16 %v565
  %v3907 = vunpack.c.l.b16 %v566
  %v3908 = vunpack.c.h.b16 %v566
  %v3909 = vunpack.c.l.b16 %v567
  %v3910 = vunpack.c.h.b16 %v567
  %v3911 = vunpack.c.l.b16 %v568
  %v3912 = vunpack.c.h.b16 %v568
  %v3913 = vunpack.c.l.b16 %v569
  %v3914 = vunpack.c.h.b16 %v569
  %v3915 = vunpack.c.l.b16 %v570
  %v3916 = vunpack.c.h.b16 %v570
  %v3917 = vunpack.c.l.b16 %v571
  %v3918 = vunpack.c.h.b16 %v571
  %v3919 = vunpack.c.l.b16 %v572
  %v3920 = vunpack.c.h.b16 %v572
  %v3921 = vunpack.c.l.b16 %v573
  %v3922 = vunpack.c.h.b16 %v573
  %v3923 = vunpack.c.l.b16 %v574
  %v3924 = vunpack.c.h.b16 %v574
  %v3925 = vunpack.c.l.b16 %v575
  %v3926 = vunpack.c.h.b16 %v575
  %v3927 = vunpack.c.l.b16 %v576
  %v3928 = vunpack.c.h.b16 %v576
  %v3929 = vunpack.c.l.b16 %v577
  %v3930 = vunpack.c.h.b16 %v577
  %v3931 = vunpack.c.l.b16 %v578
  %v3932 = vunpack.c.h.b16 %v578
  %v3933 = vunpack.c.l.b16 %v579
  %v3934 = vunpack.c.h.b16 %v579
  %v3935 = vunpack.c.l.b16 %v580
  %v3936 = vunpack.c.h.b16 %v580
  %v3937 = vunpack.c.l.b16 %v581
  %v3938 = vunpack.c.h.b16 %v581
  %v3939 = vunpack.c.l.b16 %v582
  %v3940 = vunpack.c.h.b16 %v582
  %v3941 = vunpack.c.l.b16 %v583
  %v3942 = vunpack.c.h.b16 %v583
  %v3943 = vunpack.c.l.b16 %v584
  %v3944 = vunpack.c.h.b16 %v584
  %v3945 = vunpack.c.l.b16 %v585
  %v3946 = vunpack.c.h.b16 %v585
  %v3947 = vunpack.c.l.b16 %v586
  %v3948 = vunpack.c.h.b16 %v586
  %v3949 = vunpack.c.l.b16 %v587
  %v3950 = vunpack.c.h.b16 %v587
  %v3951 = vunpack.c.l.b16 %v588
  %v3952 = vunpack.c.h.b16 %v588
  %v3953 = vunpack.c.l.b16 %v589
  %v3954 = vunpack.c.h.b16 %v589
  %v3955 = vunpack.c.l.b16 %v590
  %v3956 = vunpack.c.h.b16 %v590
  %v3957 = vunpack.c.l.b16 %v591
  %v3958 = vunpack.c.h.b16 %v591
  %v3959 = vunpack.c.l.b16 %v592
  %v3960 = vunpack.c.h.b16 %v592
  %v3961 = vunpack.c.l.b16 %v593
  %v3962 = vunpack.c.h.b16 %v593
  %v3963 = vunpack.c.l.b16 %v594
  %v3964 = vunpack.c.h.b16 %v594
  %v3965 = vunpack.c.l.b16 %v595
  %v3966 = vunpack.c.h.b16 %v595
  %v3967 = vunpack.c.l.b16 %v596
  %v3968 = vunpack.c.h.b16 %v596
  %v3969 = vunpack.c.l.b16 %v597
  %v3970 = vunpack.c.h.b16 %v597
  %v3971 = vunpack.c.l.b16 %v598
  %v3972 = vunpack.c.h.b16 %v598
  %v3973 = vunpack.c.l.b16 %v599
  %v3974 = vunpack.c.h.b16 %v599
  %v3975 = vunpack.c.l.b16 %v600
  %v3976 = vunpack.c.h.b16 %v600
  %v3977 = vunpack.c.l.b16 %v601
  %v3978 = vunpack.c.h.b16 %v601
  %v3979 = vunpack.c.l.b16 %v602
  %v3980 = vunpack.c.h.b16 %v602
  %v3981 = vunpack.c.l.b16 %v603
  %v3982 = vunpack.c.h.b16 %v603
  %v3983 = vunpack.c.l.b16 %v604
  %v3984 = vunpack.c.h.b16 %v604
  %v3985 = vunpack.c.l.b16 %v605
  %v3986 = vunpack.c.h.b16 %v605
  %v3987 = vunpack.c.l.b16 %v606
  %v3988 = vunpack.c.h.b16 %v606
  %v3989 = vunpack.c.l.b16 %v607
  %v3990 = vunpack.c.h.b16 %v607
  %v3991 = vunpack.c.l.b16 %v608
  %v3992 = vunpack.c.h.b16 %v608
  %v3993 = vunpack.c.l.b16 %v609
  %v3994 = vunpack.c.h.b16 %v609
  %v3995 = vunpack.c.l.b16 %v610
  %v3996 = vunpack.c.h.b16 %v610
  %v3997 = vunpack.c.l.b16 %v611
  %v3998 = vunpack.c.h.b16 %v611
  %v3999 = vunpack.c.l.b16 %v612
  %v4000 = vunpack.c.h.b16 %v612
  %v4001 = vunpack.c.l.b16 %v613
  %v4002 = vunpack.c.h.b16 %v613
  %v4003 = vunpack.c.l.b16 %v614
  %v4004 = vunpack.c.h.b16 %v614
  %v4005 = vunpack.c.l.b16 %v615
  %v4006 = vunpack.c.h.b16 %v615
  %v4007 = vunpack.c.l.b16 %v616
  %v4008 = vunpack.c.h.b16 %v616
  %v4009 = vunpack.c.l.b16 %v617
  %v4010 = vunpack.c.h.b16 %v617
  %v4011 = vunpack.c.l.b16 %v618
  %v4012 = vunpack.c.h.b16 %v618
  %v4013 = vunpack.c.l.b16 %v619
  %v4014 = vunpack.c.h.b16 %v619
  %v4015 = vunpack.c.l.b16 %v620
  %v4016 = vunpack.c.h.b16 %v620
  %v4017 = vunpack.c.l.b16 %v621
  %v4018 = vunpack.c.h.b16 %v621
  %v4019 = vunpack.c.l.b16 %v622
  %v4020 = vunpack.c.h.b16 %v622
  %v4021 = vunpack.c.l.b16 %v623
  %v4022 = vunpack.c.h.b16 %v623
  %v4023 = vunpack.c.l.b16 %v624
  %v4024 = vunpack.c.h.b16 %v624
  %v4025 = vunpack.c.l.b16 %v625
  %v4026 = vunpack.c.h.b16 %v625
  %v4027 = vunpack.c.l.b16 %v626
  %v4028 = vunpack.c.h.b16 %v626
  %v4029 = vunpack.c.l.b16 %v627
  %v4030 = vunpack.c.h.b16 %v627
  %v4031 = vunpack.c.l.b16 %v628
  %v4032 = vunpack.c.h.b16 %v628
  %v4033 = vunpack.c.l.b16 %v629
  %v4034 = vunpack.c.h.b16 %v629
  %v4035 = vunpack.c.l.b16 %v630
  %v4036 = vunpack.c.h.b16 %v630
  %v4037 = vunpack.c.l.b16 %v631
  %v4038 = vunpack.c.h.b16 %v631
  %v4039 = vunpack.c.l.b16 %v632
  %v4040 = vunpack.c.h.b16 %v632
  %v4041 = vunpack.c.l.b16 %v633
  %v4042 = vunpack.c.h.b16 %v633
  %v4043 = vunpack.c.l.b16 %v634
  %v4044 = vunpack.c.h.b16 %v634
  %v4045 = vunpack.c.l.b16 %v635
  %v4046 = vunpack.c.h.b16 %v635
  %v4047 = vunpack.c.l.b16 %v636
  %v4048 = vunpack.c.h.b16 %v636
  %v4049 = vunpack.c.l.b16 %v637
  %v4050 = vunpack.c.h.b16 %v637
  %v4051 = vunpack.c.l.b16 %v638
  %v4052 = vunpack.c.h.b16 %v638
  %v4053 = vunpack.c.l.b16 %v639
  %v4054 = vunpack.c.h.b16 %v639
  %v4055 = vunpack.c.l.b16 %v640
  %v4056 = vunpack.c.h.b16 %v640
  %v4057 = vunpack.c.l.b16 %v641
  %v4058 = vunpack.c.h.b16 %v641
  %v4059 = vunpack.c.l.b16 %v642
  %v4060 = vunpack.c.h.b16 %v642
  %v4061 = vunpack.c.l.b16 %v643
  %v4062 = vunpack.c.h.b16 %v643
  %v4063 = vunpack.c.l.b16 %v644
  %v4064 = vunpack.c.h.b16 %v644
  %v4065 = vunpack.c.l.b16 %v645
  %v4066 = vunpack.c.h.b16 %v645
  %v4067 = vunpack.c.l.b16 %v646
  %v4068 = vunpack.c.h.b16 %v646
  %v4069 = vunpack.c.l.b16 %v647
  %v4070 = vunpack.c.h.b16 %v647
  %v4071 = vunpack.c.l.b16 %v648
  %v4072 = vunpack.c.h.b16 %v648
  %v4073 = vunpack.c.l.b16 %v649
  %v4074 = vunpack.c.h.b16 %v649
  %v4075 = vunpack.c.l.b16 %v650
  %v4076 = vunpack.c.h.b16 %v650
  %v4077 = vunpack.c.l.b16 %v651
  %v4078 = vunpack.c.h.b16 %v651
  %v4079 = vunpack.c.l.b16 %v652
  %v4080 = vunpack.c.h.b16 %v652
  %v4081 = vunpack.c.l.b16 %v653
  %v4082 = vunpack.c.h.b16 %v653
  %v4083 = vunpack.c.l.b16 %v654
  %v4084 = vunpack.c.h.b16 %v654
  %v4085 = vunpack.c.l.b16 %v655
  %v4086 = vunpack.c.h.b16 %v655
  %v4087 = vunpack.c.l.b16 %v656
  %v4088 = vunpack.c.h.b16 %v656
  %v4089 = vunpack.c.l.b16 %v657
  %v4090 = vunpack.c.h.b16 %v657
  %v4091 = vunpack.c.l.b16 %v658
  %v4092 = vunpack.c.h.b16 %v658
  %v4093 = vunpack.c.l.b16 %v659
  %v4094 = vunpack.c.h.b16 %v659
  %v4095 = vunpack.c.l.b16 %v660
  %v4096 = vunpack.c.h.b16 %v660
  %v4097 = vunpack.c.l.b16 %v661
  %v4098 = vunpack.c.h.b16 %v661
  %v4099 = vunpack.c.l.b16 %v662
  %v4100 = vunpack.c.h.b16 %v662
  %v4101 = vunpack.c.l.b16 %v663
  %v4102 = vunpack.c.h.b16 %v663
  %v4103 = vunpack.c.l.b16 %v664
  %v4104 = vunpack.c.h.b16 %v664
  %v4105 = vunpack.c.l.b16 %v665
  %v4106 = vunpack.c.h.b16 %v665
  %v4107 = vunpack.c.l.b16 %v666
  %v4108 = vunpack.c.h.b16 %v666
  %v4109 = vunpack.c.l.b16 %v667
  %v4110 = vunpack.c.h.b16 %v667
  %v4111 = vunpack.c.l.b16 %v668
  %v4112 = vunpack.c.h.b16 %v668
  %v4113 = vunpack.c.l.b16 %v669
  %v4114 = vunpack.c.h.b16 %v669
  %v4115 = vunpack.c.l.b16 %v670
  %v4116 = vunpack.c.h.b16 %v670
  %v4117 = vunpack.c.l.b16 %v671
  %v4118 = vunpack.c.h.b16 %v671
  %v4119 = vunpack.c.l.b16 %v672
  %v4120 = vunpack.c.h.b16 %v672
  %v4121 = vunpack.c.l.b16 %v673
  %v4122 = vunpack.c.h.b16 %v673
  %v4123 = vunpack.c.l.b16 %v674
  %v4124 = vunpack.c.h.b16 %v674
  %v4125 = vunpack.c.l.b16 %v675
  %v4126 = vunpack.c.h.b16 %v675
  %v4127 = vunpack.c.l.b16 %v676
  %v4128 = vunpack.c.h.b16 %v676
  %v4129 = vunpack.c.l.b16 %v677
  %v4130 = vunpack.c.h.b16 %v677
  %v4131 = vunpack.c.l.b16 %v678
  %v4132 = vunpack.c.h.b16 %v678
  %v4133 = vunpack.c.l.b16 %v679
  %v4134 = vunpack.c.h.b16 %v679
  %v4135 = vunpack.c.l.b16 %v680
  %v4136 = vunpack.c.h.b16 %v680
  %v4137 = vunpack.c.l.b16 %v681
  %v4138 = vunpack.c.h.b16 %v681
  %v4139 = vunpack.c.l.b16 %v682
  %v4140 = vunpack.c.h.b16 %v682
  %v4141 = vunpack.c.l.b16 %v683
  %v4142 = vunpack.c.h.b16 %v683
  %v4143 = vunpack.c.l.b16 %v684
  %v4144 = vunpack.c.h.b16 %v684
  %v4145 = vunpack.c.l.b16 %v685
  %v4146 = vunpack.c.h.b16 %v685
  %v4147 = vunpack.c.l.b16 %v686
  %v4148 = vunpack.c.h.b16 %v686
  %v4149 = vunpack.c.l.b16 %v687
  %v4150 = vunpack.c.h.b16 %v687
  %v4151 = vunpack.c.l.b16 %v688
  %v4152 = vunpack.c.h.b16 %v688
  %v4153 = vunpack.c.l.b16 %v689
  %v4154 = vunpack.c.h.b16 %v689
  %v4155 = vunpack.c.l.b16 %v690
  %v4156 = vunpack.c.h.b16 %v690
  %v4157 = vunpack.c.l.b16 %v691
  %v4158 = vunpack.c.h.b16 %v691
  %v4159 = vunpack.c.l.b16 %v692
  %v4160 = vunpack.c.h.b16 %v692
  %v4161 = vunpack.c.l.b16 %v693
  %v4162 = vunpack.c.h.b16 %v693
  %v4163 = vunpack.c.l.b16 %v694
  %v4164 = vunpack.c.h.b16 %v694
  %v4165 = vunpack.c.l.b16 %v695
  %v4166 = vunpack.c.h.b16 %v695
  %v4167 = vunpack.c.l.b16 %v696
  %v4168 = vunpack.c.h.b16 %v696
  %v4169 = vunpack.c.l.b16 %v697
  %v4170 = vunpack.c.h.b16 %v697
  %v4171 = vunpack.c.l.b16 %v698
  %v4172 = vunpack.c.h.b16 %v698
  %v4173 = vunpack.c.l.b16 %v699
  %v4174 = vunpack.c.h.b16 %v699
  %v4175 = vunpack.c.l.b16 %v700
  %v4176 = vunpack.c.h.b16 %v700
  %v4177 = vunpack.c.l.b16 %v701
  %v4178 = vunpack.c.h.b16 %v701
  %v4179 = vunpack.c.l.b16 %v702
  %v4180 = vunpack.c.h.b16 %v702
  %v4181 = vunpack.c.l.b16 %v703
  %v4182 = vunpack.c.h.b16 %v703
  %v4183 = vunpack.c.l.b16 %v704
  %v4184 = vunpack.c.h.b16 %v704
  %v4185 = vunpack.c.l.b16 %v705
  %v4186 = vunpack.c.h.b16 %v705
  %v4187 = vunpack.c.l.b16 %v706
  %v4188 = vunpack.c.h.b16 %v706
  %v4189 = vunpack.c.l.b16 %v707
  %v4190 = vunpack.c.h.b16 %v707
  %v4191 = vunpack.c.l.b16 %v708
  %v4192 = vunpack.c.h.b16 %v708
  %v4193 = vunpack.c.l.b16 %v709
  %v4194 = vunpack.c.h.b16 %v709
  %v4195 = vunpack.c.l.b16 %v710
  %v4196 = vunpack.c.h.b16 %v710
  %v4197 = vunpack.c.l.b16 %v711
  %v4198 = vunpack.c.h.b16 %v711
  %v4199 = vunpack.c.l.b16 %v712
  %v4200 = vunpack.c.h.b16 %v712
  %v4201 = vunpack.c.l.b16 %v713
  %v4202 = vunpack.c.h.b16 %v713
  %v4203 = vunpack.c.l.b16 %v714
  %v4204 = vunpack.c.h.b16 %v714
  %v4205 = vunpack.c.l.b16 %v715
  %v4206 = vunpack.c.h.b16 %v715
  %v4207 = vunpack.c.l.b16 %v716
  %v4208 = vunpack.c.h.b16 %v716
  %v4209 = vunpack.c.l.b16 %v717
  %v4210 = vunpack.c.h.b16 %v717
  %v4211 = vunpack.c.l.b16 %v718
  %v4212 = vunpack.c.h.b16 %v718
  %v4213 = vunpack.c.l.b16 %v719
  %v4214 = vunpack.c.h.b16 %v719
  %v4215 = vunpack.c.l.b16 %v720
  %v4216 = vunpack.c.h.b16 %v720
  %v4217 = vunpack.c.l.b16 %v721
  %v4218 = vunpack.c.h.b16 %v721
  %v4219 = vunpack.c.l.b16 %v722
  %v4220 = vunpack.c.h.b16 %v722
  %v4221 = vunpack.c.l.b16 %v723
  %v4222 = vunpack.c.h.b16 %v723
  %v4223 = vunpack.c.l.b16 %v724
  %v4224 = vunpack.c.h.b16 %v724
  %v4225 = vunpack.c.l.b16 %v725
  %v4226 = vunpack.c.h.b16 %v725
  %v4227 = vunpack.c.l.b16 %v726
  %v4228 = vunpack.c.h.b16 %v726
  %v4229 = vunpack.c.l.b16 %v727
  %v4230 = vunpack.c.h.b16 %v727
  %v4231 = vunpack.c.l.b16 %v728
  %v4232 = vunpack.c.h.b16 %v728
  %v4233 = vunpack.c.l.b16 %v729
  %v4234 = vunpack.c.h.b16 %v729
  %v4235 = vunpack.c.l.b16 %v730
  %v4236 = vunpack.c.h.b16 %v730
  %v4237 = vunpack.c.l.b16 %v731
  %v4238 = vunpack.c.h.b16 %v731
  %v4239 = vunpack.c.l.b16 %v732
  %v4240 = vunpack.c.h.b16 %v732
  %v4241 = vunpack.c.l.b16 %v733
  %v4242 = vunpack.c.h.b16 %v733
  %v4243 = vunpack.c.l.b16 %v734
  %v4244 = vunpack.c.h.b16 %v734
  %v4245 = vunpack.c.l.b16 %v735
  %v4246 = vunpack.c.h.b16 %v735
  %v4247 = vunpack.c.l.b16 %v736
  %v4248 = vunpack.c.h.b16 %v736
  %v4249 = vunpack.c.l.b16 %v737
  %v4250 = vunpack.c.h.b16 %v737
  %v4251 = vunpack.c.l.b16 %v738
  %v4252 = vunpack.c.h.b16 %v738
  %v4253 = vunpack.c.l.b16 %v739
  %v4254 = vunpack.c.h.b16 %v739
  %v4255 = vunpack.c.l.b16 %v740
  %v4256 = vunpack.c.h.b16 %v740
  %v4257 = vunpack.c.l.b16 %v741
  %v4258 = vunpack.c.h.b16 %v741
  %v4259 = vunpack.c.l.b16 %v742
  %v4260 = vunpack.c.h.b16 %v742
  %v4261 = vunpack.c.l.b16 %v743
  %v4262 = vunpack.c.h.b16 %v743
  %v4263 = vunpack.c.l.b16 %v744
  %v4264 = vunpack.c.h.b16 %v744
  %v4265 = vunpack.c.l.b16 %v745
  %v4266 = vunpack.c.h.b16 %v745
  %v4267 = vunpack.c.l.b16 %v746
  %v4268 = vunpack.c.h.b16 %v746
  %v4269 = vunpack.c.l.b16 %v747
  %v4270 = vunpack.c.h.b16 %v747
  %v4271 = vunpack.c.l.b16 %v748
  %v4272 = vunpack.c.h.b16 %v748
  %v4273 = vunpack.c.l.b16 %v749
  %v4274 = vunpack.c.h.b16 %v749
  %v4275 = vunpack.c.l.b16 %v750
  %v4276 = vunpack.c.h.b16 %v750
  %v4277 = vunpack.c.l.b16 %v751
  %v4278 = vunpack.c.h.b16 %v751
  %v4279 = vunpack.c.l.b16 %v752
  %v4280 = vunpack.c.h.b16 %v752
  %v4281 = vunpack.c.l.b16 %v753
  %v4282 = vunpack.c.h.b16 %v753
  %v4283 = vunpack.c.l.b16 %v754
  %v4284 = vunpack.c.h.b16 %v754
  %v4285 = vunpack.c.l.b16 %v755
  %v4286 = vunpack.c.h.b16 %v755
  %v4287 = vunpack.c.l.b16 %v756
  %v4288 = vunpack.c.h.b16 %v756
  %v4289 = vunpack.c.l.b16 %v757
  %v4290 = vunpack.c.h.b16 %v757
  %v4291 = vunpack.c.l.b16 %v758
  %v4292 = vunpack.c.h.b16 %v758
  %v4293 = vunpack.c.l.b16 %v759
  %v4294 = vunpack.c.h.b16 %v759
  %v4295 = vunpack.c.l.b16 %v760
  %v4296 = vunpack.c.h.b16 %v760
  %v4297 = vunpack.c.l.b16 %v761
  %v4298 = vunpack.c.h.b16 %v761
  %v4299 = vunpack.c.l.b16 %v762
  %v4300 = vunpack.c.h.b16 %v762
  %v4301 = vunpack.c.l.b16 %v763
  %v4302 = vunpack.c.h.b16 %v763
  %v4303 = vunpack.c.l.b16 %v764
  %v4304 = vunpack.c.h.b16 %v764
  %v4305 = vunpack.c.l.b16 %v765
  %v4306 = vunpack.c.h.b16 %v765
  %v4307 = vunpack.c.l.b16 %v766
  %v4308 = vunpack.c.h.b16 %v766
  %v4309 = vunpack.c.l.b16 %v767
  %v4310 = vunpack.c.h.b16 %v767
  %v4311 = vunpack.c.l.b16 %v768
  %v4312 = vunpack.c.h.b16 %v768
  %v4313 = vunpack.c.l.b16 %v769
  %v4314 = vunpack.c.h.b16 %v769
  %v4315 = vunpack.c.l.b16 %v770
  %v4316 = vunpack.c.h.b16 %v770
  %v4317 = vunpack.c.l.b16 %v771
  %v4318 = vunpack.c.h.b16 %v771
  %v4319 = vunpack.c.l.b16 %v772
  %v4320 = vunpack.c.h.b16 %v772
  %v4321 = vunpack.c.l.b16 %v773
  %v4322 = vunpack.c.h.b16 %v773
  %v4323 = vunpack.c.l.b16 %v774
  %v4324 = vunpack.c.h.b16 %v774
  %v4325 = vunpack.c.l.b16 %v775
  %v4326 = vunpack.c.h.b16 %v775
  %v4327 = vunpack.c.l.b16 %v776
  %v4328 = vunpack.c.h.b16 %v776
  %v4329 = vunpack.c.l.b16 %v777
  %v4330 = vunpack.c.h.b16 %v777
  %v4331 = vunpack.c.l.b16 %v778
  %v4332 = vunpack.c.h.b16 %v778
  %v4333 = vunpack.c.l.b16 %v779
  %v4334 = vunpack.c.h.b16 %v779
  %v4335 = vunpack.c.l.b16 %v780
  %v4336 = vunpack.c.h.b16 %v780
  %v4337 = vunpack.c.l.b16 %v781
  %v4338 = vunpack.c.h.b16 %v781
  %v4339 = vunpack.c.l.b16 %v782
  %v4340 = vunpack.c.h.b16 %v782
  %v4341 = vunpack.c.l.b16 %v783
  %v4342 = vunpack.c.h.b16 %v783
  %v4343 = vunpack.c.l.b16 %v784
  %v4344 = vunpack.c.h.b16 %v784
  %v4345 = vunpack.c.l.b16 %v785
  %v4346 = vunpack.c.h.b16 %v785
  %v4347 = vunpack.c.l.b16 %v786
  %v4348 = vunpack.c.h.b16 %v786
  %v4349 = vunpack.c.l.b16 %v787
  %v4350 = vunpack.c.h.b16 %v787
  %v4351 = vunpack.c.l.b16 %v788
  %v4352 = vunpack.c.h.b16 %v788
  %v4353 = vunpack.c.l.b16 %v789
  %v4354 = vunpack.c.h.b16 %v789
  %v4355 = vunpack.c.l.b16 %v790
  %v4356 = vunpack.c.h.b16 %v790
  %v4357 = vunpack.c.l.b16 %v791
  %v4358 = vunpack.c.h.b16 %v791
  %v4359 = vunpack.c.l.b16 %v792
  %v4360 = vunpack.c.h.b16 %v792
  %v4361 = vunpack.c.l.b16 %v793
  %v4362 = vunpack.c.h.b16 %v793
  %v4363 = vunpack.c.l.b16 %v794
  %v4364 = vunpack.c.h.b16 %v794
  %v4365 = vunpack.c.l.b16 %v795
  %v4366 = vunpack.c.h.b16 %v795
  %v4367 = vunpack.c.l.b16 %v796
  %v4368 = vunpack.c.h.b16 %v796
  %v4369 = vunpack.c.l.b16 %v797
  %v4370 = vunpack.c.h.b16 %v797
  %v4371 = vunpack.c.l.b16 %v798
  %v4372 = vunpack.c.h.b16 %v798
  %v4373 = vunpack.c.l.b16 %v799
  %v4374 = vunpack.c.h.b16 %v799
  %v4375 = vunpack.c.l.b16 %v800
  %v4376 = vunpack.c.h.b16 %v800
  %v4377 = vunpack.c.l.b16 %v801
  %v4378 = vunpack.c.h.b16 %v801
  %v4379 = vunpack.c.l.b16 %v802
  %v4380 = vunpack.c.h.b16 %v802
  %v4381 = vunpack.c.l.b16 %v803
  %v4382 = vunpack.c.h.b16 %v803
  %v4383 = vunpack.c.l.b16 %v804
  %v4384 = vunpack.c.h.b16 %v804
  %v4385 = vunpack.c.l.b16 %v805
  %v4386 = vunpack.c.h.b16 %v805
  %v4387 = vunpack.c.l.b16 %v806
  %v4388 = vunpack.c.h.b16 %v806
  %v4389 = vunpack.c.l.b16 %v807
  %v4390 = vunpack.c.h.b16 %v807
  %v4391 = vunpack.c.l.b16 %v808
  %v4392 = vunpack.c.h.b16 %v808
  %v4393 = vunpack.c.l.b16 %v809
  %v4394 = vunpack.c.h.b16 %v809
  %v4395 = vunpack.c.l.b16 %v810
  %v4396 = vunpack.c.h.b16 %v810
  %v4397 = vunpack.c.l.b16 %v811
  %v4398 = vunpack.c.h.b16 %v811
  %v4399 = vunpack.c.l.b16 %v812
  %v4400 = vunpack.c.h.b16 %v812
  %v4401 = vunpack.c.l.b16 %v813
  %v4402 = vunpack.c.h.b16 %v813
  %v4403 = vunpack.c.l.b16 %v814
  %v4404 = vunpack.c.h.b16 %v814
  %v4405 = vunpack.c.l.b16 %v815
  %v4406 = vunpack.c.h.b16 %v815
  %v4407 = vunpack.c.l.b16 %v816
  %v4408 = vunpack.c.h.b16 %v816
  %v4409 = vunpack.c.l.b16 %v817
  %v4410 = vunpack.c.h.b16 %v817
  %v4411 = vunpack.c.l.b16 %v818
  %v4412 = vunpack.c.h.b16 %v818
  %v4413 = vunpack.c.l.b16 %v819
  %v4414 = vunpack.c.h.b16 %v819
  %v4415 = vunpack.c.l.b16 %v820
  %v4416 = vunpack.c.h.b16 %v820
  %v4417 = vunpack.c.l.b16 %v821
  %v4418 = vunpack.c.h.b16 %v821
  %v4419 = vunpack.c.l.b16 %v822
  %v4420 = vunpack.c.h.b16 %v822
  %v4421 = vunpack.c.l.b16 %v823
  %v4422 = vunpack.c.h.b16 %v823
  %v4423 = vunpack.c.l.b16 %v824
  %v4424 = vunpack.c.h.b16 %v824
  %v4425 = vunpack.c.l.b16 %v825
  %v4426 = vunpack.c.h.b16 %v825
  %v4427 = vunpack.c.l.b16 %v826
  %v4428 = vunpack.c.h.b16 %v826
  %v4429 = vunpack.c.l.b16 %v827
  %v4430 = vunpack.c.h.b16 %v827
  %v4431 = vunpack.c.l.b16 %v828
  %v4432 = vunpack.c.h.b16 %v828
  %v4433 = vunpack.c.l.b16 %v829
  %v4434 = vunpack.c.h.b16 %v829
  %v4435 = vunpack.c.l.b16 %v830
  %v4436 = vunpack.c.h.b16 %v830
  %v4437 = vunpack.c.l.b16 %v831
  %v4438 = vunpack.c.h.b16 %v831
  %v4439 = vunpack.c.l.b16 %v832
  %v4440 = vunpack.c.h.b16 %v832
  %v4441 = vunpack.c.l.b16 %v833
  %v4442 = vunpack.c.h.b16 %v833
  %v4443 = vunpack.c.l.b16 %v834
  %v4444 = vunpack.c.h.b16 %v834
  %v4445 = vunpack.c.l.b16 %v835
  %v4446 = vunpack.c.h.b16 %v835
  %v4447 = vunpack.c.l.b16 %v836
  %v4448 = vunpack.c.h.b16 %v836
  %v4449 = vunpack.c.l.b16 %v837
  %v4450 = vunpack.c.h.b16 %v837
  %v4451 = vunpack.c.l.b16 %v838
  %v4452 = vunpack.c.h.b16 %v838
  %v4453 = vunpack.c.l.b16 %v839
  %v4454 = vunpack.c.h.b16 %v839
  %v4455 = vunpack.c.l.b16 %v840
  %v4456 = vunpack.c.h.b16 %v840
  %v4457 = vunpack.c.l.b16 %v841
  %v4458 = vunpack.c.h.b16 %v841
  %v4459 = vunpack.c.l.b16 %v842
  %v4460 = vunpack.c.h.b16 %v842
  %v4461 = vunpack.c.l.b16 %v843
  %v4462 = vunpack.c.h.b16 %v843
  %v4463 = vunpack.c.l.b16 %v844
  %v4464 = vunpack.c.h.b16 %v844
  %v4465 = vunpack.c.l.b16 %v845
  %v4466 = vunpack.c.h.b16 %v845
  %v4467 = vunpack.c.l.b16 %v846
  %v4468 = vunpack.c.h.b16 %v846
  %v4469 = vunpack.c.l.b16 %v847
  %v4470 = vunpack.c.h.b16 %v847
  %v4471 = vunpack.c.l.b16 %v848
  %v4472 = vunpack.c.h.b16 %v848
  %v4473 = vunpack.c.l.b16 %v849
  %v4474 = vunpack.c.h.b16 %v849
  %v4475 = vunpack.c.l.b16 %v850
  %v4476 = vunpack.c.h.b16 %v850
  %v4477 = vunpack.c.l.b16 %v851
  %v4478 = vunpack.c.h.b16 %v851
  %v4479 = vunpack.c.l.b16 %v852
  %v4480 = vunpack.c.h.b16 %v852
  %v4481 = vunpack.c.l.b16 %v853
  %v4482 = vunpack.c.h.b16 %v853
  %v4483 = vunpack.c.l.b16 %v854
  %v4484 = vunpack.c.h.b16 %v854
  %v4485 = vunpack.c.l.b16 %v855
  %v4486 = vunpack.c.h.b16 %v855
  %v4487 = vunpack.c.l.b16 %v856
  %v4488 = vunpack.c.h.b16 %v856
  %v4489 = vunpack.c.l.b16 %v857
  %v4490 = vunpack.c.h.b16 %v857
  %v4491 = vunpack.c.l.b16 %v858
  %v4492 = vunpack.c.h.b16 %v858
  %v4493 = vunpack.c.l.b16 %v859
  %v4494 = vunpack.c.h.b16 %v859
  %v4495 = vunpack.c.l.b16 %v860
  %v4496 = vunpack.c.h.b16 %v860
  %v4497 = vunpack.c.l.b16 %v861
  %v4498 = vunpack.c.h.b16 %v861
  %v4499 = vunpack.c.l.b16 %v862
  %v4500 = vunpack.c.h.b16 %v862
  %v4501 = vunpack.c.l.b16 %v863
  %v4502 = vunpack.c.h.b16 %v863
  %v4503 = vunpack.c.l.b16 %v864
  %v4504 = vunpack.c.h.b16 %v864
  %v4505 = vunpack.c.l.b16 %v865
  %v4506 = vunpack.c.h.b16 %v865
  %v4507 = vunpack.c.l.b16 %v866
  %v4508 = vunpack.c.h.b16 %v866
  %v4509 = vunpack.c.l.b16 %v867
  %v4510 = vunpack.c.h.b16 %v867
  %v4511 = vunpack.c.l.b16 %v868
  %v4512 = vunpack.c.h.b16 %v868
  %v4513 = vunpack.c.l.b16 %v869
  %v4514 = vunpack.c.h.b16 %v869
  %v4515 = vunpack.c.l.b16 %v870
  %v4516 = vunpack.c.h.b16 %v870
  %v4517 = vunpack.c.l.b16 %v871
  %v4518 = vunpack.c.h.b16 %v871
  %v4519 = vunpack.c.l.b16 %v872
  %v4520 = vunpack.c.h.b16 %v872
  %v4521 = vunpack.c.l.b16 %v873
  %v4522 = vunpack.c.h.b16 %v873
  %v4523 = vunpack.c.l.b16 %v874
  %v4524 = vunpack.c.h.b16 %v874
  %v4525 = vunpack.c.l.b16 %v875
  %v4526 = vunpack.c.h.b16 %v875
  %v4527 = vunpack.c.l.b16 %v876
  %v4528 = vunpack.c.h.b16 %v876
  %v4529 = vunpack.c.l.b16 %v877
  %v4530 = vunpack.c.h.b16 %v877
  %v4531 = vunpack.c.l.b16 %v878
  %v4532 = vunpack.c.h.b16 %v878
  %v4533 = vunpack.c.l.b16 %v879
  %v4534 = vunpack.c.h.b16 %v879
  %v4535 = vunpack.c.l.b16 %v880
  %v4536 = vunpack.c.h.b16 %v880
  %v4537 = vunpack.c.l.b16 %v881
  %v4538 = vunpack.c.h.b16 %v881
  %v4539 = vunpack.c.l.b16 %v882
  %v4540 = vunpack.c.h.b16 %v882
  %v4541 = vunpack.c.l.b16 %v883
  %v4542 = vunpack.c.h.b16 %v883
  %v4543 = vunpack.c.l.b16 %v884
  %v4544 = vunpack.c.h.b16 %v884
  %v4545 = vunpack.c.l.b16 %v885
  %v4546 = vunpack.c.h.b16 %v885
  %v4547 = vunpack.c.l.b16 %v886
  %v4548 = vunpack.c.h.b16 %v886
  %v4549 = vunpack.c.l.b16 %v887
  %v4550 = vunpack.c.h.b16 %v887
  %v4551 = vunpack.c.l.b16 %v888
  %v4552 = vunpack.c.h.b16 %v888
  %v4553 = vunpack.c.l.b16 %v889
  %v4554 = vunpack.c.h.b16 %v889
  %v4555 = vunpack.c.l.b16 %v890
  %v4556 = vunpack.c.h.b16 %v890
  %v4557 = vunpack.c.l.b16 %v891
  %v4558 = vunpack.c.h.b16 %v891
  %v4559 = vunpack.c.l.b16 %v892
  %v4560 = vunpack.c.h.b16 %v892
  %v4561 = vunpack.c.l.b16 %v893
  %v4562 = vunpack.c.h.b16 %v893
  %v4563 = vunpack.c.l.b16 %v894
  %v4564 = vunpack.c.h.b16 %v894
  %v4565 = vunpack.c.l.b16 %v895
  %v4566 = vunpack.c.h.b16 %v895
  %v4567 = vunpack.c.l.b16 %v896
  %v4568 = vunpack.c.h.b16 %v896
  %v4569 = vunpack.c.l.b16 %v897
  %v4570 = vunpack.c.h.b16 %v897
  %v4571 = vunpack.c.l.b16 %v898
  %v4572 = vunpack.c.h.b16 %v898
  %v4573 = vunpack.c.l.b16 %v899
  %v4574 = vunpack.c.h.b16 %v899
  %v4575 = vunpack.c.l.b16 %v900
  %v4576 = vunpack.c.h.b16 %v900
  %v4577 = vunpack.c.l.b16 %v901
  %v4578 = vunpack.c.h.b16 %v901
  %v4579 = vunpack.c.l.b16 %v902
  %v4580 = vunpack.c.h.b16 %v902
  %v4581 = vunpack.c.l.b16 %v903
  %v4582 = vunpack.c.h.b16 %v903
  %v4583 = vunpack.c.l.b16 %v904
  %v4584 = vunpack.c.h.b16 %v904
  %v4585 = vunpack.c.l.b16 %v905
  %v4586 = vunpack.c.h.b16 %v905
  %v4587 = vunpack.c.l.b16 %v906
  %v4588 = vunpack.c.h.b16 %v906
  %v4589 = vunpack.c.l.b16 %v907
  %v4590 = vunpack.c.h.b16 %v907
  %v4591 = vunpack.c.l.b16 %v908
  %v4592 = vunpack.c.h.b16 %v908
  %v4593 = vunpack.c.l.b16 %v909
  %v4594 = vunpack.c.h.b16 %v909
  %v4595 = vunpack.c.l.b16 %v910
  %v4596 = vunpack.c.h.b16 %v910
  %v4597 = vunpack.c.l.b16 %v911
  %v4598 = vunpack.c.h.b16 %v911
  %v4599 = vunpack.c.l.b16 %v912
  %v4600 = vunpack.c.h.b16 %v912
  %v4601 = vunpack.c.l.b16 %v913
  %v4602 = vunpack.c.h.b16 %v913
  %v4603 = vunpack.c.l.b16 %v914
  %v4604 = vunpack.c.h.b16 %v914
  %v4605 = vunpack.c.l.b16 %v915
  %v4606 = vunpack.c.h.b16 %v915
  %v4607 = vunpack.c.l.b16 %v916
  %v4608 = vunpack.c.h.b16 %v916
  %v4609 = vunpack.c.l.b16 %v917
  %v4610 = vunpack.c.h.b16 %v917
  %v4611 = vunpack.c.l.b16 %v918
  %v4612 = vunpack.c.h.b16 %v918
  %v4613 = vunpack.c.l.b16 %v919
  %v4614 = vunpack.c.h.b16 %v919
  %v4615 = vunpack.c.l.b16 %v920
  %v4616 = vunpack.c.h.b16 %v920
  %v4617 = vunpack.c.l.b16 %v921
  %v4618 = vunpack.c.h.b16 %v921
  %v4619 = vunpack.c.l.b16 %v922
  %v4620 = vunpack.c.h.b16 %v922
  %v4621 = vunpack.c.l.b16 %v923
  %v4622 = vunpack.c.h.b16 %v923
  %v4623 = vunpack.c.l.b16 %v924
  %v4624 = vunpack.c.h.b16 %v924
  %v4625 = vunpack.c.l.b16 %v925
  %v4626 = vunpack.c.h.b16 %v925
  %v4627 = vunpack.c.l.b16 %v926
  %v4628 = vunpack.c.h.b16 %v926
  %v4629 = vunpack.c.l.b16 %v927
  %v4630 = vunpack.c.h.b16 %v927
  %v4631 = vunpack.c.l.b16 %v928
  %v4632 = vunpack.c.h.b16 %v928
  %v4633 = vunpack.c.l.b16 %v929
  %v4634 = vunpack.c.h.b16 %v929
  %v4635 = vunpack.c.l.b16 %v930
  %v4636 = vunpack.c.h.b16 %v930
  %v4637 = vunpack.c.l.b16 %v931
  %v4638 = vunpack.c.h.b16 %v931
  %v4639 = vunpack.c.l.b16 %v932
  %v4640 = vunpack.c.h.b16 %v932
  %v4641 = vunpack.c.l.b16 %v933
  %v4642 = vunpack.c.h.b16 %v933
  %v4643 = vunpack.c.l.b16 %v934
  %v4644 = vunpack.c.h.b16 %v934
  %v4645 = vunpack.c.l.b16 %v935
  %v4646 = vunpack.c.h.b16 %v935
  %v4647 = vunpack.c.l.b16 %v936
  %v4648 = vunpack.c.h.b16 %v936
  %v4649 = vunpack.c.l.b16 %v937
  %v4650 = vunpack.c.h.b16 %v937
  %v4651 = vunpack.c.l.b16 %v938
  %v4652 = vunpack.c.h.b16 %v938
  %v4653 = vunpack.c.l.b16 %v939
  %v4654 = vunpack.c.h.b16 %v939
  %v4655 = vunpack.c.l.b16 %v940
  %v4656 = vunpack.c.h.b16 %v940
  %v4657 = vunpack.c.l.b16 %v941
  %v4658 = vunpack.c.h.b16 %v941
  %v4659 = vunpack.c.l.b16 %v942
  %v4660 = vunpack.c.h.b16 %v942
  %v4661 = vunpack.c.l.b16 %v943
  %v4662 = vunpack.c.h.b16 %v943
  %v4663 = vunpack.c.l.b16 %v944
  %v4664 = vunpack.c.h.b16 %v944
  %v4665 = vunpack.c.l.b16 %v945
  %v4666 = vunpack.c.h.b16 %v945
  %v4667 = vunpack.c.l.b16 %v946
  %v4668 = vunpack.c.h.b16 %v946
  %v4669 = vunpack.c.l.b16 %v947
  %v4670 = vunpack.c.h.b16 %v947
  %v4671 = vunpack.c.l.b16 %v948
  %v4672 = vunpack.c.h.b16 %v948
  %v4673 = vunpack.c.l.b16 %v949
  %v4674 = vunpack.c.h.b16 %v949
  %v4675 = vunpack.c.l.b16 %v950
  %v4676 = vunpack.c.h.b16 %v950
  %v4677 = vunpack.c.l.b16 %v951
  %v4678 = vunpack.c.h.b16 %v951
  %v4679 = vunpack.c.l.b16 %v952
  %v4680 = vunpack.c.h.b16 %v952
  %v4681 = vunpack.c.l.b16 %v953
  %v4682 = vunpack.c.h.b16 %v953
  %v4683 = vunpack.c.l.b16 %v954
  %v4684 = vunpack.c.h.b16 %v954
  %v4685 = vunpack.c.l.b16 %v955
  %v4686 = vunpack.c.h.b16 %v955
  %v4687 = vunpack.c.l.b16 %v956
  %v4688 = vunpack.c.h.b16 %v956
  %v4689 = vunpack.c.l.b16 %v957
  %v4690 = vunpack.c.h.b16 %v957
  %v4691 = vunpack.c.l.b16 %v958
  %v4692 = vunpack.c.h.b16 %v958
  %v4693 = vunpack.c.l.b16 %v959
  %v4694 = vunpack.c.h.b16 %v959
  %v4695 = vunpack.c.l.b16 %v960
  %v4696 = vunpack.c.h.b16 %v960
  %v4697 = vunpack.c.l.b16 %v961
  %v4698 = vunpack.c.h.b16 %v961
  %v4699 = vunpack.c.l.b16 %v962
  %v4700 = vunpack.c.h.b16 %v962
  %v4701 = vunpack.c.l.b16 %v963
  %v4702 = vunpack.c.h.b16 %v963
  %v4703 = vunpack.c.l.b16 %v964
  %v4704 = vunpack.c.h.b16 %v964
  %v4705 = vunpack.c.l.b16 %v965
  %v4706 = vunpack.c.h.b16 %v965
  %v4707 = vunpack.c.l.b16 %v966
  %v4708 = vunpack.c.h.b16 %v966
  %v4709 = vunpack.c.l.b16 %v967
  %v4710 = vunpack.c.h.b16 %v967
  %v4711 = vunpack.c.l.b16 %v968
  %v4712 = vunpack.c.h.b16 %v968
  %v4713 = vunpack.c.l.b16 %v969
  %v4714 = vunpack.c.h.b16 %v969
  %v4715 = vunpack.c.l.b16 %v970
  %v4716 = vunpack.c.h.b16 %v970
  %v4717 = vunpack.c.l.b16 %v971
  %v4718 = vunpack.c.h.b16 %v971
  %v4719 = vunpack.c.l.b16 %v972
  %v4720 = vunpack.c.h.b16 %v972
  %v4721 = vunpack.c.l.b16 %v973
  %v4722 = vunpack.c.h.b16 %v973
  %v4723 = vunpack.c.l.b16 %v974
  %v4724 = vunpack.c.h.b16 %v974
  %v4725 = vunpack.c.l.b16 %v975
  %v4726 = vunpack.c.h.b16 %v975
  %v4727 = vunpack.c.l.b16 %v976
  %v4728 = vunpack.c.h.b16 %v976
  %v4729 = vunpack.c.l.b16 %v977
  %v4730 = vunpack.c.h.b16 %v977
  %v4731 = vunpack.c.l.b16 %v978
  %v4732 = vunpack.c.h.b16 %v978
  %v4733 = vunpack.c.l.b16 %v979
  %v4734 = vunpack.c.h.b16 %v979
  %v4735 = vunpack.c.l.b16 %v980
  %v4736 = vunpack.c.h.b16 %v980
  %v4737 = vunpack.c.l.b16 %v981
  %v4738 = vunpack.c.h.b16 %v981
  %v4739 = vunpack.c.l.b16 %v982
  %v4740 = vunpack.c.h.b16 %v982
  %v4741 = vunpack.c.l.b16 %v983
  %v4742 = vunpack.c.h.b16 %v983
  %v4743 = vunpack.c.l.b16 %v984
  %v4744 = vunpack.c.h.b16 %v984
  %v4745 = vunpack.c.l.b16 %v985
  %v4746 = vunpack.c.h.b16 %v985
  %v4747 = vunpack.c.l.b16 %v986
  %v4748 = vunpack.c.h.b16 %v986
  %v4749 = vunpack.c.l.b16 %v987
  %v4750 = vunpack.c.h.b16 %v987
  %v4751 = vunpack.c.l.b16 %v988
  %v4752 = vunpack.c.h.b16 %v988
  %v4753 = vunpack.c.l.b16 %v989
  %v4754 = vunpack.c.h.b16 %v989
  %v4755 = vunpack.c.l.b16 %v990
  %v4756 = vunpack.c.h.b16 %v990
  %v4757 = vunpack.c.l.b16 %v991
  %v4758 = vunpack.c.h.b16 %v991
  %v4759 = vunpack.c.l.b16 %v992
  %v4760 = vunpack.c.h.b16 %v992
  %v4761 = vunpack.c.l.b16 %v993
  %v4762 = vunpack.c.h.b16 %v993
  %v4763 = vunpack.c.l.b16 %v994
  %v4764 = vunpack.c.h.b16 %v994
  %v4765 = vunpack.c.l.b16 %v995
  %v4766 = vunpack.c.h.b16 %v995
  %v4767 = vunpack.c.l.b16 %v996
  %v4768 = vunpack.c.h.b16 %v996
  %v4769 = vunpack.c.l.b16 %v997
  %v4770 = vunpack.c.h.b16 %v997
  %v4771 = vunpack.c.l.b16 %v998
  %v4772 = vunpack.c.h.b16 %v998
  %v4773 = vunpack.c.l.b16 %v999
  %v4774 = vunpack.c.h.b16 %v999
  %v4775 = vunpack.c.l.b16 %v1000
  %v4776 = vunpack.c.h.b16 %v1000
  %v4777 = vunpack.c.l.b16 %v1001
  %v4778 = vunpack.c.h.b16 %v1001
  %v4779 = vunpack.c.l.b16 %v1002
  %v4780 = vunpack.c.h.b16 %v1002
  %v4781 = vunpack.c.l.b16 %v1003
  %v4782 = vunpack.c.h.b16 %v1003
  %v4783 = vunpack.c.l.b16 %v1004
  %v4784 = vunpack.c.h.b16 %v1004
  %v4785 = vunpack.c.l.b16 %v1005
  %v4786 = vunpack.c.h.b16 %v1005
  %v4787 = vunpack.c.l.b16 %v1006
  %v4788 = vunpack.c.h.b16 %v1006
  %v4789 = vunpack.c.l.b16 %v1007
  %v4790 = vunpack.c.h.b16 %v1007
  %v4791 = vunpack.c.l.b16 %v1008
  %v4792 = vunpack.c.h.b16 %v1008
  %v4793 = vunpack.c.l.b16 %v1009
  %v4794 = vunpack.c.h.b16 %v1009
  %v4795 = vunpack.c.l.b16 %v1010
  %v4796 = vunpack.c.h.b16 %v1010
  %v4797 = vunpack.c.l.b16 %v1011
  %v4798 = vunpack.c.h.b16 %v1011
  %v4799 = vunpack.c.l.b16 %v1012
  %v4800 = vunpack.c.h.b16 %v1012
  %v4801 = vunpack.c.l.b16 %v1013
  %v4802 = vunpack.c.h.b16 %v1013
  %v4803 = vunpack.c.l.b16 %v1014
  %v4804 = vunpack.c.h.b16 %v1014
  %v4805 = vunpack.c.l.b16 %v1015
  %v4806 = vunpack.c.h.b16 %v1015
  %v4807 = vunpack.c.l.b16 %v1016
  %v4808 = vunpack.c.h.b16 %v1016
  %v4809 = vunpack.c.l.b16 %v1017
  %v4810 = vunpack.c.h.b16 %v1017
  %v4811 = vunpack.c.l.b16 %v1018
  %v4812 = vunpack.c.h.b16 %v1018
  %v4813 = vunpack.c.l.b16 %v1019
  %v4814 = vunpack.c.h.b16 %v1019
  %v4815 = vunpack.c.l.b16 %v1020
  %v4816 = vunpack.c.h.b16 %v1020
  %v4817 = vunpack.c.l.b16 %v1021
  %v4818 = vunpack.c.h.b16 %v1021
  %v4819 = vunpack.c.l.b16 %v1022
  %v4820 = vunpack.c.h.b16 %v1022
  %v4821 = vunpack.c.l.b16 %v1023
  %v4822 = vunpack.c.h.b16 %v1023
  %v4823 = vunpack.c.l.b16 %v1024
  %v4824 = vunpack.c.h.b16 %v1024
  %v4825 = vunpack.c.l.b16 %v1025
  %v4826 = vunpack.c.h.b16 %v1025
  %v4827 = vunpack.c.l.b16 %v1026
  %v4828 = vunpack.c.h.b16 %v1026
  %v4829 = vunpack.c.l.b16 %v1027
  %v4830 = vunpack.c.h.b16 %v1027
  %v4831 = vunpack.c.l.b16 %v1028
  %v4832 = vunpack.c.h.b16 %v1028
  %v4833 = vunpack.c.l.b16 %v1029
  %v4834 = vunpack.c.h.b16 %v1029
  %v4835 = vunpack.c.l.b16 %v1030
  %v4836 = vunpack.c.h.b16 %v1030
  %v4837 = vunpack.c.l.b16 %v1031
  %v4838 = vunpack.c.h.b16 %v1031
  %v4839 = vunpack.c.l.b16 %v1032
  %v4840 = vunpack.c.h.b16 %v1032
  %v4841 = vunpack.c.l.b16 %v1033
  %v4842 = vunpack.c.h.b16 %v1033
  %v4843 = vunpack.c.l.b16 %v1034
  %v4844 = vunpack.c.h.b16 %v1034
  %v4845 = vunpack.c.l.b16 %v1035
  %v4846 = vunpack.c.h.b16 %v1035
  %v4847 = vunpack.c.l.b16 %v1036
  %v4848 = vunpack.c.h.b16 %v1036
  %v4849 = vunpack.c.l.b16 %v1037
  %v4850 = vunpack.c.h.b16 %v1037
  %v4851 = vunpack.c.l.b16 %v1038
  %v4852 = vunpack.c.h.b16 %v1038
  %v4853 = vunpack.c.l.b16 %v1039
  %v4854 = vunpack.c.h.b16 %v1039
  %v4855 = vunpack.c.l.b16 %v1040
  %v4856 = vunpack.c.h.b16 %v1040
  %v4857 = vunpack.c.l.b16 %v1041
  %v4858 = vunpack.c.h.b16 %v1041
  %v4859 = vunpack.c.l.b16 %v1042
  %v4860 = vunpack.c.h.b16 %v1042
  %v4861 = vunpack.c.l.b16 %v1043
  %v4862 = vunpack.c.h.b16 %v1043
  %v4863 = vunpack.c.l.b16 %v1044
  %v4864 = vunpack.c.h.b16 %v1044
  %v4865 = vunpack.c.l.b16 %v1045
  %v4866 = vunpack.c.h.b16 %v1045
  %v4867 = vunpack.c.l.b16 %v1046
  %v4868 = vunpack.c.h.b16 %v1046
  %v4869 = vunpack.c.l.b16 %v1047
  %v4870 = vunpack.c.h.b16 %v1047
  %v4871 = vunpack.c.l.b16 %v1048
  %v4872 = vunpack.c.h.b16 %v1048
  %v4873 = vunpack.c.l.b16 %v1049
  %v4874 = vunpack.c.h.b16 %v1049
  %v4875 = vunpack.c.l.b16 %v1050
  %v4876 = vunpack.c.h.b16 %v1050
  %v4877 = vunpack.c.l.b16 %v1051
  %v4878 = vunpack.c.h.b16 %v1051
  %v4879 = vunpack.c.l.b16 %v1052
  %v4880 = vunpack.c.h.b16 %v1052
  %v4881 = vunpack.c.l.b16 %v1053
  %v4882 = vunpack.c.h.b16 %v1053
  %v4883 = vunpack.c.l.b16 %v1054
  %v4884 = vunpack.c.h.b16 %v1054
  %v4885 = vunpack.c.l.b16 %v1055
  %v4886 = vunpack.c.h.b16 %v1055
  %v4887 = vunpack.c.l.b16 %v1056
  %v4888 = vunpack.c.h.b16 %v1056
  %v4889 = vunpack.c.l.b16 %v1057
  %v4890 = vunpack.c.h.b16 %v1057
  %v4891 = vunpack.c.l.b16 %v1058
  %v4892 = vunpack.c.h.b16 %v1058
  %v4893 = vunpack.c.l.b16 %v1059
  %v4894 = vunpack.c.h.b16 %v1059
  %v4895 = vunpack.c.l.b16 %v1060
  %v4896 = vunpack.c.h.b16 %v1060
  %v4897 = vunpack.c.l.b16 %v1061
  %v4898 = vunpack.c.h.b16 %v1061
  %v4899 = vunpack.c.l.b16 %v1062
  %v4900 = vunpack.c.h.b16 %v1062
  %v4901 = vunpack.c.l.b16 %v1063
  %v4902 = vunpack.c.h.b16 %v1063
  %v4903 = vunpack.c.l.b16 %v1064
  %v4904 = vunpack.c.h.b16 %v1064
  %v4905 = vunpack.c.l.b16 %v1065
  %v4906 = vunpack.c.h.b16 %v1065
  %v4907 = vunpack.c.l.b16 %v1066
  %v4908 = vunpack.c.h.b16 %v1066
  %v4909 = vunpack.c.l.b16 %v1067
  %v4910 = vunpack.c.h.b16 %v1067
  %v4911 = vunpack.c.l.b16 %v1068
  %v4912 = vunpack.c.h.b16 %v1068
  %v4913 = vunpack.c.l.b16 %v1069
  %v4914 = vunpack.c.h.b16 %v1069
  %v4915 = vunpack.c.l.b16 %v1070
  %v4916 = vunpack.c.h.b16 %v1070
  %v4917 = vunpack.c.l.b16 %v1071
  %v4918 = vunpack.c.h.b16 %v1071
  %v4919 = vunpack.c.l.b16 %v1072
  %v4920 = vunpack.c.h.b16 %v1072
  %v4921 = vunpack.c.l.b16 %v1073
  %v4922 = vunpack.c.h.b16 %v1073
  %v4923 = vunpack.c.l.b16 %v1074
  %v4924 = vunpack.c.h.b16 %v1074
  %v4925 = vunpack.c.l.b16 %v1075
  %v4926 = vunpack.c.h.b16 %v1075
  %v4927 = vunpack.c.l.b16 %v1076
  %v4928 = vunpack.c.h.b16 %v1076
  %v4929 = vunpack.c.l.b16 %v1077
  %v4930 = vunpack.c.h.b16 %v1077
  %v4931 = vunpack.c.l.b16 %v1078
  %v4932 = vunpack.c.h.b16 %v1078
  %v4933 = vunpack.c.l.b16 %v1079
  %v4934 = vunpack.c.h.b16 %v1079
  %v4935 = vunpack.c.l.b16 %v1080
  %v4936 = vunpack.c.h.b16 %v1080
  %v4937 = vunpack.c.l.b16 %v1081
  %v4938 = vunpack.c.h.b16 %v1081
  %v4939 = vunpack.c.l.b16 %v1082
  %v4940 = vunpack.c.h.b16 %v1082
  %v4941 = vunpack.c.l.b16 %v1083
  %v4942 = vunpack.c.h.b16 %v1083
  %v4943 = vunpack.c.l.b16 %v1084
  %v4944 = vunpack.c.h.b16 %v1084
  %v4945 = vunpack.c.l.b16 %v1085
  %v4946 = vunpack.c.h.b16 %v1085
  %v4947 = vunpack.c.l.b16 %v1086
  %v4948 = vunpack.c.h.b16 %v1086
  %v4949 = vunpack.c.l.b16 %v1087
  %v4950 = vunpack.c.h.b16 %v1087
  %v4951 = vunpack.c.l.b16 %v1088
  %v4952 = vunpack.c.h.b16 %v1088
  %v4953 = vunpack.c.l.b16 %v1089
  %v4954 = vunpack.c.h.b16 %v1089
  %v4955 = vunpack.c.l.b16 %v1090
  %v4956 = vunpack.c.h.b16 %v1090
  %v4957 = vunpack.c.l.b16 %v1091
  %v4958 = vunpack.c.h.b16 %v1091
  %v4959 = vunpack.c.l.b16 %v1092
  %v4960 = vunpack.c.h.b16 %v1092
  %v4961 = vunpack.c.l.b16 %v1093
  %v4962 = vunpack.c.h.b16 %v1093
  %v4963 = vunpack.c.l.b16 %v1094
  %v4964 = vunpack.c.h.b16 %v1094
  %v4965 = vunpack.c.l.b16 %v1095
  %v4966 = vunpack.c.h.b16 %v1095
  %v4967 = vunpack.c.l.b16 %v1096
  %v4968 = vunpack.c.h.b16 %v1096
  %v4969 = vunpack.c.l.b16 %v1097
  %v4970 = vunpack.c.h.b16 %v1097
  %v4971 = vunpack.c.l.b16 %v1098
  %v4972 = vunpack.c.h.b16 %v1098
  %v4973 = vunpack.c.l.b16 %v1099
  %v4974 = vunpack.c.h.b16 %v1099
  %v4975 = vunpack.c.l.b16 %v1100
  %v4976 = vunpack.c.h.b16 %v1100
  %v4977 = vunpack.c.l.b16 %v1101
  %v4978 = vunpack.c.h.b16 %v1101
  %v4979 = vunpack.c.l.b16 %v1102
  %v4980 = vunpack.c.h.b16 %v1102
  %v4981 = vunpack.c.l.b16 %v1103
  %v4982 = vunpack.c.h.b16 %v1103
  %v4983 = vunpack.c.l.b16 %v1104
  %v4984 = vunpack.c.h.b16 %v1104
  %v4985 = vunpack.c.l.b16 %v1105
  %v4986 = vunpack.c.h.b16 %v1105
  %v4987 = vunpack.c.l.b16 %v1106
  %v4988 = vunpack.c.h.b16 %v1106
  %v4989 = vunpack.c.l.b16 %v1107
  %v4990 = vunpack.c.h.b16 %v1107
  %v4991 = vunpack.c.l.b16 %v1108
  %v4992 = vunpack.c.h.b16 %v1108
  %v4993 = vunpack.c.l.b16 %v1109
  %v4994 = vunpack.c.h.b16 %v1109
  %v4995 = vunpack.c.l.b16 %v1110
  %v4996 = vunpack.c.h.b16 %v1110
  %v4997 = vunpack.c.l.b16 %v1111
  %v4998 = vunpack.c.h.b16 %v1111
  %v4999 = vunpack.c.l.b16 %v1112
  %v5000 = vunpack.c.h.b16 %v1112
  %v5001 = vunpack.c.l.b16 %v1113
  %v5002 = vunpack.c.h.b16 %v1113
  %v5003 = vunpack.c.l.b16 %v1114
  %v5004 = vunpack.c.h.b16 %v1114
  %v5005 = vunpack.c.l.b16 %v1115
  %v5006 = vunpack.c.h.b16 %v1115
  %v5007 = vunpack.c.l.b16 %v1116
  %v5008 = vunpack.c.h.b16 %v1116
  %v5009 = vunpack.c.l.b16 %v1117
  %v5010 = vunpack.c.h.b16 %v1117
  %v5011 = vunpack.c.l.b16 %v1118
  %v5012 = vunpack.c.h.b16 %v1118
  %v5013 = vunpack.c.l.b16 %v1119
  %v5014 = vunpack.c.h.b16 %v1119
  %v5015 = vunpack.c.l.b16 %v1120
  %v5016 = vunpack.c.h.b16 %v1120
  %v5017 = vunpack.c.l.b16 %v1121
  %v5018 = vunpack.c.h.b16 %v1121
  %v5019 = vunpack.c.l.b16 %v1122
  %v5020 = vunpack.c.h.b16 %v1122
  %v5021 = vunpack.c.l.b16 %v1123
  %v5022 = vunpack.c.h.b16 %v1123
  %v5023 = vunpack.c.l.b16 %v1124
  %v5024 = vunpack.c.h.b16 %v1124
  %v5025 = vunpack.c.l.b16 %v1125
  %v5026 = vunpack.c.h.b16 %v1125
  %v5027 = vunpack.c.l.b16 %v1126
  %v5028 = vunpack.c.h.b16 %v1126
  %v5029 = vunpack.c.l.b16 %v1127
  %v5030 = vunpack.c.h.b16 %v1127
  %v5031 = vunpack.c.l.b16 %v1128
  %v5032 = vunpack.c.h.b16 %v1128
  %v5033 = vunpack.c.l.b16 %v1129
  %v5034 = vunpack.c.h.b16 %v1129
  %v5035 = vunpack.c.l.b16 %v1130
  %v5036 = vunpack.c.h.b16 %v1130
  %v5037 = vunpack.c.l.b16 %v1131
  %v5038 = vunpack.c.h.b16 %v1131
  %v5039 = vunpack.c.l.b16 %v1132
  %v5040 = vunpack.c.h.b16 %v1132
  %v5041 = vunpack.c.l.b16 %v1133
  %v5042 = vunpack.c.h.b16 %v1133
  %v5043 = vunpack.c.l.b16 %v1134
  %v5044 = vunpack.c.h.b16 %v1134
  %v5045 = vunpack.c.l.b16 %v1135
  %v5046 = vunpack.c.h.b16 %v1135
  %v5047 = vunpack.c.l.b16 %v1136
  %v5048 = vunpack.c.h.b16 %v1136
  %v5049 = vunpack.c.l.b16 %v1137
  %v5050 = vunpack.c.h.b16 %v1137
  %v5051 = vunpack.c.l.b16 %v1138
  %v5052 = vunpack.c.h.b16 %v1138
  %v5053 = vunpack.c.l.b16 %v1139
  %v5054 = vunpack.c.h.b16 %v1139
  %v5055 = vunpack.c.l.b16 %v1140
  %v5056 = vunpack.c.h.b16 %v1140
  %v5057 = vunpack.c.l.b16 %v1141
  %v5058 = vunpack.c.h.b16 %v1141
  %v5059 = vunpack.c.l.b16 %v1142
  %v5060 = vunpack.c.h.b16 %v1142
  %v5061 = vunpack.c.l.b16 %v1143
  %v5062 = vunpack.c.h.b16 %v1143
  %v5063 = vunpack.c.l.b16 %v1144
  %v5064 = vunpack.c.h.b16 %v1144
  %v5065 = vunpack.c.l.b16 %v1145
  %v5066 = vunpack.c.h.b16 %v1145
  %v5067 = vunpack.c.l.b16 %v1146
  %v5068 = vunpack.c.h.b16 %v1146
  %v5069 = vunpack.c.l.b16 %v1147
  %v5070 = vunpack.c.h.b16 %v1147
  %v5071 = vunpack.c.l.b16 %v1148
  %v5072 = vunpack.c.h.b16 %v1148
  %v5073 = vunpack.c.l.b16 %v1149
  %v5074 = vunpack.c.h.b16 %v1149
  %v5075 = vunpack.c.l.b16 %v1150
  %v5076 = vunpack.c.h.b16 %v1150
  %v5077 = vunpack.c.l.b16 %v1151
  %v5078 = vunpack.c.h.b16 %v1151
  %v5079 = vunpack.c.l.b16 %v1152
  %v5080 = vunpack.c.h.b16 %v1152
  %v5081 = vunpack.c.l.b16 %v1153
  %v5082 = vunpack.c.h.b16 %v1153
  %v5083 = vunpack.c.l.b16 %v1154
  %v5084 = vunpack.c.h.b16 %v1154
  %v5085 = vunpack.c.l.b16 %v1155
  %v5086 = vunpack.c.h.b16 %v1155
  %v5087 = vunpack.c.l.b16 %v1156
  %v5088 = vunpack.c.h.b16 %v1156
  %v5089 = vunpack.c.l.b16 %v1157
  %v5090 = vunpack.c.h.b16 %v1157
  %v5091 = vunpack.c.l.b16 %v1158
  %v5092 = vunpack.c.h.b16 %v1158
  %v5093 = vunpack.c.l.b16 %v1159
  %v5094 = vunpack.c.h.b16 %v1159
  %v5095 = vunpack.c.l.b16 %v1160
  %v5096 = vunpack.c.h.b16 %v1160
  %v5097 = vunpack.c.l.b16 %v1161
  %v5098 = vunpack.c.h.b16 %v1161
  %v5099 = vunpack.c.l.b16 %v1162
  %v5100 = vunpack.c.h.b16 %v1162
  %v5101 = vunpack.c.l.b16 %v1163
  %v5102 = vunpack.c.h.b16 %v1163
  %v5103 = vunpack.c.l.b16 %v1164
  %v5104 = vunpack.c.h.b16 %v1164
  %v5105 = vunpack.c.l.b16 %v1165
  %v5106 = vunpack.c.h.b16 %v1165
  %v5107 = vunpack.c.l.b16 %v1166
  %v5108 = vunpack.c.h.b16 %v1166
  %v5109 = vunpack.c.l.b16 %v1167
  %v5110 = vunpack.c.h.b16 %v1167
  %v5111 = vunpack.c.l.b16 %v1168
  %v5112 = vunpack.c.h.b16 %v1168
  %v5113 = vunpack.c.l.b16 %v1169
  %v5114 = vunpack.c.h.b16 %v1169
  %v5115 = vunpack.c.l.b16 %v1170
  %v5116 = vunpack.c.h.b16 %v1170
  %v5117 = vunpack.c.l.b16 %v1171
  %v5118 = vunpack.c.h.b16 %v1171
  %v5119 = vunpack.c.l.b16 %v1172
  %v5120 = vunpack.c.h.b16 %v1172
  %v5121 = vunpack.c.l.b16 %v1173
  %v5122 = vunpack.c.h.b16 %v1173
  %v5123 = vunpack.c.l.b16 %v1174
  %v5124 = vunpack.c.h.b16 %v1174
  %v5125 = vunpack.c.l.b16 %v1175
  %v5126 = vunpack.c.h.b16 %v1175
  %v5127 = vunpack.c.l.b16 %v1176
  %v5128 = vunpack.c.h.b16 %v1176
  %v5129 = vunpack.c.l.b16 %v1177
  %v5130 = vunpack.c.h.b16 %v1177
  %v5131 = vunpack.c.l.b16 %v1178
  %v5132 = vunpack.c.h.b16 %v1178
  %v5133 = vunpack.c.l.b16 %v1179
  %v5134 = vunpack.c.h.b16 %v1179
  %v5135 = vunpack.c.l.b16 %v1180
  %v5136 = vunpack.c.h.b16 %v1180
  %v5137 = vunpack.c.l.b16 %v1181
  %v5138 = vunpack.c.h.b16 %v1181
  %v5139 = vunpack.c.l.b16 %v1182
  %v5140 = vunpack.c.h.b16 %v1182
  %v5141 = vunpack.c.l.b16 %v1183
  %v5142 = vunpack.c.h.b16 %v1183
  %v5143 = vunpack.c.l.b16 %v1184
  %v5144 = vunpack.c.h.b16 %v1184
  %v5145 = vunpack.c.l.b16 %v1185
  %v5146 = vunpack.c.h.b16 %v1185
  %v5147 = vunpack.c.l.b16 %v1186
  %v5148 = vunpack.c.h.b16 %v1186
  %v5149 = vunpack.c.l.b16 %v1187
  %v5150 = vunpack.c.h.b16 %v1187
  %v5151 = vunpack.c.l.b16 %v1188
  %v5152 = vunpack.c.h.b16 %v1188
  %v5153 = vunpack.c.l.b16 %v1189
  %v5154 = vunpack.c.h.b16 %v1189
  %v5155 = vunpack.c.l.b16 %v1190
  %v5156 = vunpack.c.h.b16 %v1190
  %v5157 = vunpack.c.l.b16 %v1191
  %v5158 = vunpack.c.h.b16 %v1191
  %v5159 = vunpack.c.l.b16 %v1192
  %v5160 = vunpack.c.h.b16 %v1192
  %v5161 = vunpack.c.l.b16 %v1193
  %v5162 = vunpack.c.h.b16 %v1193
  %v5163 = vunpack.c.l.b16 %v1194
  %v5164 = vunpack.c.h.b16 %v1194
  %v5165 = vunpack.c.l.b16 %v1195
  %v5166 = vunpack.c.h.b16 %v1195
  %v5167 = vunpack.c.l.b16 %v1196
  %v5168 = vunpack.c.h.b16 %v1196
  %v5169 = vunpack.c.l.b16 %v1197
  %v5170 = vunpack.c.h.b16 %v1197
  %v5171 = vunpack.c.l.b16 %v1198
  %v5172 = vunpack.c.h.b16 %v1198
  %v5173 = vunpack.c.l.b16 %v1199
  %v5174 = vunpack.c.h.b16 %v1199
  %v5175 = vunpack.c.l.b16 %v1200
  %v5176 = vunpack.c.h.b16 %v1200
  %v5177 = vunpack.c.l.b16 %v1201
  %v5178 = vunpack.c.h.b16 %v1201
  %v5179 = vunpack.c.l.b16 %v1202
  %v5180 = vunpack.c.h.b16 %v1202
  %v5181 = vunpack.c.l.b16 %v1203
  %v5182 = vunpack.c.h.b16 %v1203
  %v5183 = vunpack.c.l.b16 %v1204
  %v5184 = vunpack.c.h.b16 %v1204
  %v5185 = vunpack.c.l.b16 %v1205
  %v5186 = vunpack.c.h.b16 %v1205
  %v5187 = vunpack.c.l.b16 %v1206
  %v5188 = vunpack.c.h.b16 %v1206
  %v5189 = vunpack.c.l.b16 %v1207
  %v5190 = vunpack.c.h.b16 %v1207
  %v5191 = vunpack.c.l.b16 %v1208
  %v5192 = vunpack.c.h.b16 %v1208
  %v5193 = vunpack.c.l.b16 %v1209
  %v5194 = vunpack.c.h.b16 %v1209
  %v5195 = vunpack.c.l.b16 %v1210
  %v5196 = vunpack.c.h.b16 %v1210
  %v5197 = vunpack.c.l.b16 %v1211
  %v5198 = vunpack.c.h.b16 %v1211
  %v5199 = vunpack.c.l.b16 %v1212
  %v5200 = vunpack.c.h.b16 %v1212
  %v5201 = vunpack.c.l.b16 %v1213
  %v5202 = vunpack.c.h.b16 %v1213
  %v5203 = vunpack.c.l.b16 %v1214
  %v5204 = vunpack.c.h.b16 %v1214
  %v5205 = vunpack.c.l.b16 %v1215
  %v5206 = vunpack.c.h.b16 %v1215
  %v5207 = vunpack.c.l.b16 %v1216
  %v5208 = vunpack.c.h.b16 %v1216
  %v5209 = vunpack.c.l.b16 %v1217
  %v5210 = vunpack.c.h.b16 %v1217
  %v5211 = vunpack.c.l.b16 %v1218
  %v5212 = vunpack.c.h.b16 %v1218
  %v5213 = vunpack.c.l.b16 %v1219
  %v5214 = vunpack.c.h.b16 %v1219
  %v5215 = vunpack.c.l.b16 %v1220
  %v5216 = vunpack.c.h.b16 %v1220
  %v5217 = vunpack.c.l.b16 %v1221
  %v5218 = vunpack.c.h.b16 %v1221
  %v5219 = vunpack.c.l.b16 %v1222
  %v5220 = vunpack.c.h.b16 %v1222
  %v5221 = vunpack.c.l.b16 %v1223
  %v5222 = vunpack.c.h.b16 %v1223
  %v5223 = vunpack.c.l.b16 %v1224
  %v5224 = vunpack.c.h.b16 %v1224
  %v5225 = vunpack.c.l.b16 %v1225
  %v5226 = vunpack.c.h.b16 %v1225
  %v5227 = vunpack.c.l.b16 %v1226
  %v5228 = vunpack.c.h.b16 %v1226
  %v5229 = vunpack.c.l.b16 %v1227
  %v5230 = vunpack.c.h.b16 %v1227
  %v5231 = vunpack.c.l.b16 %v1228
  %v5232 = vunpack.c.h.b16 %v1228
  %v5233 = vunpack.c.l.b16 %v1229
  %v5234 = vunpack.c.h.b16 %v1229
  %v5235 = vunpack.c.l.b16 %v1230
  %v5236 = vunpack.c.h.b16 %v1230
  %v5237 = vunpack.c.l.b16 %v1231
  %v5238 = vunpack.c.h.b16 %v1231
  %v5239 = vunpack.c.l.b16 %v1232
  %v5240 = vunpack.c.h.b16 %v1232
  %v5241 = vunpack.c.l.b16 %v1233
  %v5242 = vunpack.c.h.b16 %v1233
  %v5243 = vunpack.c.l.b16 %v1234
  %v5244 = vunpack.c.h.b16 %v1234
  %v5245 = vunpack.c.l.b16 %v1235
  %v5246 = vunpack.c.h.b16 %v1235
  %v5247 = vunpack.c.l.b16 %v1236
  %v5248 = vunpack.c.h.b16 %v1236
  %v5249 = vunpack.c.l.b16 %v1237
  %v5250 = vunpack.c.h.b16 %v1237
  %v5251 = vunpack.c.l.b16 %v1238
  %v5252 = vunpack.c.h.b16 %v1238
  %v5253 = vunpack.c.l.b16 %v1239
  %v5254 = vunpack.c.h.b16 %v1239
  %v5255 = vunpack.c.l.b16 %v1240
  %v5256 = vunpack.c.h.b16 %v1240
  %v5257 = vunpack.c.l.b16 %v1241
  %v5258 = vunpack.c.h.b16 %v1241
  %v5259 = vunpack.c.l.b16 %v1242
  %v5260 = vunpack.c.h.b16 %v1242
  %v5261 = vunpack.c.l.b16 %v1243
  %v5262 = vunpack.c.h.b16 %v1243
  %v5263 = vunpack.c.l.b16 %v1244
  %v5264 = vunpack.c.h.b16 %v1244
  %v5265 = vunpack.c.l.b16 %v1245
  %v5266 = vunpack.c.h.b16 %v1245
  %v5267 = vunpack.c.l.b16 %v1246
  %v5268 = vunpack.c.h.b16 %v1246
  %v5269 = vunpack.c.l.b16 %v1247
  %v5270 = vunpack.c.h.b16 %v1247
  %v5271 = vunpack.c.l.b16 %v1248
  %v5272 = vunpack.c.h.b16 %v1248
  %v5273 = vunpack.c.l.b16 %v1249
  %v5274 = vunpack.c.h.b16 %v1249
  %v5275 = vunpack.c.l.b16 %v1250
  %v5276 = vunpack.c.h.b16 %v1250
  %v5277 = vunpack.c.l.b16 %v1251
  %v5278 = vunpack.c.h.b16 %v1251
  %v5279 = vunpack.c.l.b16 %v1252
  %v5280 = vunpack.c.h.b16 %v1252
  %v5281 = vunpack.c.l.b16 %v1253
  %v5282 = vunpack.c.h.b16 %v1253
  %v5283 = vunpack.c.l.b16 %v1254
  %v5284 = vunpack.c.h.b16 %v1254
  %v5285 = vunpack.c.l.b16 %v1255
  %v5286 = vunpack.c.h.b16 %v1255
  %v5287 = vunpack.c.l.b16 %v1256
  %v5288 = vunpack.c.h.b16 %v1256
  %v5289 = vunpack.c.l.b16 %v1257
  %v5290 = vunpack.c.h.b16 %v1257
  %v5291 = vunpack.c.l.b16 %v1258
  %v5292 = vunpack.c.h.b16 %v1258
  %v5293 = vunpack.c.l.b16 %v1259
  %v5294 = vunpack.c.h.b16 %v1259
  %v5295 = vunpack.c.l.b16 %v1260
  %v5296 = vunpack.c.h.b16 %v1260
  %v5297 = vunpack.c.l.b16 %v1261
  %v5298 = vunpack.c.h.b16 %v1261
  %v5299 = vunpack.c.l.b16 %v1262
  %v5300 = vunpack.c.h.b16 %v1262
  %v5301 = vunpack.c.l.b16 %v1263
  %v5302 = vunpack.c.h.b16 %v1263
  %v5303 = vunpack.c.l.b16 %v1264
  %v5304 = vunpack.c.h.b16 %v1264
  %v5305 = vunpack.c.l.b16 %v1265
  %v5306 = vunpack.c.h.b16 %v1265
  %v5307 = vunpack.c.l.b16 %v1266
  %v5308 = vunpack.c.h.b16 %v1266
  %v5309 = vunpack.c.l.b16 %v1267
  %v5310 = vunpack.c.h.b16 %v1267
  %v5311 = vunpack.c.l.b16 %v1268
  %v5312 = vunpack.c.h.b16 %v1268
  %v5313 = vunpack.c.l.b16 %v1269
  %v5314 = vunpack.c.h.b16 %v1269
  %v5315 = vunpack.c.l.b16 %v1270
  %v5316 = vunpack.c.h.b16 %v1270
  %v5317 = vunpack.c.l.b16 %v1271
  %v5318 = vunpack.c.h.b16 %v1271
  %v5319 = vunpack.c.l.b16 %v1272
  %v5320 = vunpack.c.h.b16 %v1272
  %v5321 = vunpack.c.l.b16 %v1273
  %v5322 = vunpack.c.h.b16 %v1273
  %v5323 = vunpack.c.l.b16 %v1274
  %v5324 = vunpack.c.h.b16 %v1274
  %v5325 = vunpack.c.l.b16 %v1275
  %v5326 = vunpack.c.h.b16 %v1275
  %v5327 = vunpack.c.l.b16 %v1276
  %v5328 = vunpack.c.h.b16 %v1276
  %v5329 = vunpack.c.l.b16 %v1277
  %v5330 = vunpack.c.h.b16 %v1277
  %v5331 = vunpack.c.l.b16 %v1278
  %v5332 = vunpack.c.h.b16 %v1278
  %v5333 = vunpack.c.l.b16 %v1279
  %v5334 = vunpack.c.h.b16 %v1279
  %v5335 = vunpack.c.l.b16 %v1280
  %v5336 = vunpack.c.h.b16 %v1280
  %v5337 = vunpack.c.l.b16 %v1281
  %v5338 = vunpack.c.h.b16 %v1281
  %v5339 = vunpack.c.l.b16 %v1282
  %v5340 = vunpack.c.h.b16 %v1282
  %v5341 = vunpack.c.l.b16 %v1283
  %v5342 = vunpack.c.h.b16 %v1283
  %v5343 = vunpack.c.l.b16 %v1284
  %v5344 = vunpack.c.h.b16 %v1284
  %v5345 = vunpack.c.l.b16 %v1285
  %v5346 = vunpack.c.h.b16 %v1285
  %v5347 = vunpack.c.l.b16 %v1286
  %v5348 = vunpack.c.h.b16 %v1286
  %v5349 = vunpack.c.l.b16 %v1287
  %v5350 = vunpack.c.h.b16 %v1287
  %v5351 = vunpack.c.l.b16 %v1288
  %v5352 = vunpack.c.h.b16 %v1288
  %v5353 = vunpack.c.l.b16 %v1289
  %v5354 = vunpack.c.h.b16 %v1289
  %v5355 = vunpack.c.l.b16 %v1290
  %v5356 = vunpack.c.h.b16 %v1290
  %v5357 = vunpack.c.l.b16 %v1291
  %v5358 = vunpack.c.h.b16 %v1291
  %v5359 = vunpack.c.l.b16 %v1292
  %v5360 = vunpack.c.h.b16 %v1292
  %v5361 = vunpack.c.l.b16 %v1293
  %v5362 = vunpack.c.h.b16 %v1293
  %v5363 = vunpack.c.l.b16 %v1294
  %v5364 = vunpack.c.h.b16 %v1294
  %v5365 = vunpack.c.l.b16 %v1295
  %v5366 = vunpack.c.h.b16 %v1295
  %v5367 = vunpack.c.l.b16 %v1296
  %v5368 = vunpack.c.h.b16 %v1296
  %v5369 = vunpack.c.l.b16 %v1297
  %v5370 = vunpack.c.h.b16 %v1297
  %v5371 = vunpack.c.l.b16 %v1298
  %v5372 = vunpack.c.h.b16 %v1298
  %v5373 = vunpack.c.l.b16 %v1299
  %v5374 = vunpack.c.h.b16 %v1299
  %v5375 = vunpack.c.l.b16 %v1300
  %v5376 = vunpack.c.h.b16 %v1300
  %v5377 = vunpack.c.l.b16 %v1301
  %v5378 = vunpack.c.h.b16 %v1301
  %v5379 = vunpack.c.l.b16 %v1302
  %v5380 = vunpack.c.h.b16 %v1302
  %v5381 = vunpack.c.l.b16 %v1303
  %v5382 = vunpack.c.h.b16 %v1303
  %v5383 = vunpack.c.l.b16 %v1304
  %v5384 = vunpack.c.h.b16 %v1304
  %v5385 = vunpack.c.l.b16 %v1305
  %v5386 = vunpack.c.h.b16 %v1305
  %v5387 = vunpack.c.l.b16 %v1306
  %v5388 = vunpack.c.h.b16 %v1306
  %v5389 = vunpack.c.l.b16 %v1307
  %v5390 = vunpack.c.h.b16 %v1307
  %v5391 = vunpack.c.l.b16 %v1308
  %v5392 = vunpack.c.h.b16 %v1308
  %v5393 = vunpack.c.l.b16 %v1309
  %v5394 = vunpack.c.h.b16 %v1309
  %v5395 = vunpack.c.l.b16 %v1310
  %v5396 = vunpack.c.h.b16 %v1310
  %v5397 = vunpack.c.l.b16 %v1311
  %v5398 = vunpack.c.h.b16 %v1311
  %v5399 = vunpack.c.l.b16 %v1312
  %v5400 = vunpack.c.h.b16 %v1312
  %v5401 = vunpack.c.l.b16 %v1313
  %v5402 = vunpack.c.h.b16 %v1313
  %v5403 = vunpack.c.l.b16 %v1314
  %v5404 = vunpack.c.h.b16 %v1314
  %v5405 = vunpack.c.l.b16 %v1315
  %v5406 = vunpack.c.h.b16 %v1315
  %v5407 = vunpack.c.l.b16 %v1316
  %v5408 = vunpack.c.h.b16 %v1316
  %v5409 = vunpack.c.l.b16 %v1317
  %v5410 = vunpack.c.h.b16 %v1317
  %v5411 = vunpack.c.l.b16 %v1318
  %v5412 = vunpack.c.h.b16 %v1318
  %v5413 = vunpack.c.l.b16 %v1319
  %v5414 = vunpack.c.h.b16 %v1319
  %v5415 = vunpack.c.l.b16 %v1320
  %v5416 = vunpack.c.h.b16 %v1320
  %v5417 = vunpack.c.l.b16 %v1321
  %v5418 = vunpack.c.h.b16 %v1321
  %v5419 = vunpack.c.l.b16 %v1322
  %v5420 = vunpack.c.h.b16 %v1322
  %v5421 = vunpack.c.l.b16 %v1323
  %v5422 = vunpack.c.h.b16 %v1323
  %v5423 = vunpack.c.l.b16 %v1324
  %v5424 = vunpack.c.h.b16 %v1324
  %v5425 = vunpack.c.l.b16 %v1325
  %v5426 = vunpack.c.h.b16 %v1325
  %v5427 = vunpack.c.l.b16 %v1326
  %v5428 = vunpack.c.h.b16 %v1326
  %v5429 = vunpack.c.l.b16 %v1327
  %v5430 = vunpack.c.h.b16 %v1327
  %v5431 = vunpack.c.l.b16 %v1328
  %v5432 = vunpack.c.h.b16 %v1328
  %v5433 = vunpack.c.l.b16 %v1329
  %v5434 = vunpack.c.h.b16 %v1329
  %v5435 = vunpack.c.l.b16 %v1330
  %v5436 = vunpack.c.h.b16 %v1330
  %v5437 = vunpack.c.l.b16 %v1331
  %v5438 = vunpack.c.h.b16 %v1331
  %v5439 = vunpack.c.l.b16 %v1332
  %v5440 = vunpack.c.h.b16 %v1332
  %v5441 = vunpack.c.l.b16 %v1333
  %v5442 = vunpack.c.h.b16 %v1333
  %v5443 = vunpack.c.l.b16 %v1334
  %v5444 = vunpack.c.h.b16 %v1334
  %v5445 = vunpack.c.l.b16 %v1335
  %v5446 = vunpack.c.h.b16 %v1335
  %v5447 = vunpack.c.l.b16 %v1336
  %v5448 = vunpack.c.h.b16 %v1336
  %v5449 = vunpack.c.l.b16 %v1337
  %v5450 = vunpack.c.h.b16 %v1337
  %v5451 = vunpack.c.l.b16 %v1338
  %v5452 = vunpack.c.h.b16 %v1338
  %v5453 = vunpack.c.l.b16 %v1339
  %v5454 = vunpack.c.h.b16 %v1339
  %v5455 = vunpack.c.l.b16 %v1340
  %v5456 = vunpack.c.h.b16 %v1340
  %v5457 = vunpack.c.l.b16 %v1341
  %v5458 = vunpack.c.h.b16 %v1341
  %v5459 = vunpack.c.l.b16 %v1342
  %v5460 = vunpack.c.h.b16 %v1342
  %v5461 = vunpack.c.l.b16 %v1343
  %v5462 = vunpack.c.h.b16 %v1343
  %v5463 = vunpack.c.l.b16 %v1344
  %v5464 = vunpack.c.h.b16 %v1344
  %v5465 = vunpack.c.l.b16 %v1345
  %v5466 = vunpack.c.h.b16 %v1345
  %v5467 = vunpack.c.l.b16 %v1346
  %v5468 = vunpack.c.h.b16 %v1346
  %v5469 = vunpack.c.l.b16 %v1347
  %v5470 = vunpack.c.h.b16 %v1347
  %v5471 = vunpack.c.l.b16 %v1348
  %v5472 = vunpack.c.h.b16 %v1348
  %v5473 = vunpack.c.l.b16 %v1349
  %v5474 = vunpack.c.h.b16 %v1349
  %v5475 = vunpack.c.l.b16 %v1350
  %v5476 = vunpack.c.h.b16 %v1350
  %v5477 = vunpack.c.l.b16 %v1351
  %v5478 = vunpack.c.h.b16 %v1351
  %v5479 = vunpack.c.l.b16 %v1352
  %v5480 = vunpack.c.h.b16 %v1352
  %v5481 = vunpack.c.l.b16 %v1353
  %v5482 = vunpack.c.h.b16 %v1353
  %v5483 = vunpack.c.l.b16 %v1354
  %v5484 = vunpack.c.h.b16 %v1354
  %v5485 = vunpack.c.l.b16 %v1355
  %v5486 = vunpack.c.h.b16 %v1355
  %v5487 = vunpack.c.l.b16 %v1356
  %v5488 = vunpack.c.h.b16 %v1356
  %v5489 = vunpack.c.l.b16 %v1357
  %v5490 = vunpack.c.h.b16 %v1357
  %v5491 = vunpack.c.l.b16 %v1358
  %v5492 = vunpack.c.h.b16 %v1358
  %v5493 = vunpack.c.l.b16 %v1359
  %v5494 = vunpack.c.h.b16 %v1359
  %v5495 = vunpack.c.l.b16 %v1360
  %v5496 = vunpack.c.h.b16 %v1360
  %v5497 = vunpack.c.l.b16 %v1361
  %v5498 = vunpack.c.h.b16 %v1361
  %v5499 = vunpack.c.l.b16 %v1362
  %v5500 = vunpack.c.h.b16 %v1362
  %v5501 = vunpack.c.l.b16 %v1363
  %v5502 = vunpack.c.h.b16 %v1363
  %v5503 = vunpack.c.l.b16 %v1364
  %v5504 = vunpack.c.h.b16 %v1364
  %v5505 = vunpack.c.l.b16 %v1365
  %v5506 = vunpack.c.h.b16 %v1365
  %v5507 = vunpack.c.l.b16 %v1366
  %v5508 = vunpack.c.h.b16 %v1366
  %v5509 = vunpack.c.l.b16 %v1367
  %v5510 = vunpack.c.h.b16 %v1367
  %v5511 = vunpack.c.l.b16 %v1368
  %v5512 = vunpack.c.h.b16 %v1368
  %v5513 = vunpack.c.l.b16 %v1369
  %v5514 = vunpack.c.h.b16 %v1369
  %v5515 = vunpack.c.l.b16 %v1370
  %v5516 = vunpack.c.h.b16 %v1370
  %v5517 = vunpack.c.l.b16 %v1371
  %v5518 = vunpack.c.h.b16 %v1371
  %v5519 = vunpack.c.l.b16 %v1372
  %v5520 = vunpack.c.h.b16 %v1372
  %v5521 = vunpack.c.l.b16 %v1373
  %v5522 = vunpack.c.h.b16 %v1373
  %v5523 = vunpack.c.l.b16 %v1374
  %v5524 = vunpack.c.h.b16 %v1374
  %v5525 = vunpack.c.l.b16 %v1375
  %v5526 = vunpack.c.h.b16 %v1375
  %v5527 = vunpack.c.l.b16 %v1376
  %v5528 = vunpack.c.h.b16 %v1376
  %v5529 = vunpack.c.l.b16 %v1377
  %v5530 = vunpack.c.h.b16 %v1377
  %v5531 = vunpack.c.l.b16 %v1378
  %v5532 = vunpack.c.h.b16 %v1378
  %v5533 = vunpack.c.l.b16 %v1379
  %v5534 = vunpack.c.h.b16 %v1379
  %v5535 = vunpack.c.l.b16 %v1380
  %v5536 = vunpack.c.h.b16 %v1380
  %v5537 = vunpack.c.l.b16 %v1381
  %v5538 = vunpack.c.h.b16 %v1381
  %v5539 = vunpack.c.l.b16 %v1382
  %v5540 = vunpack.c.h.b16 %v1382
  %v5541 = vunpack.c.l.b16 %v1383
  %v5542 = vunpack.c.h.b16 %v1383
  %v5543 = vunpack.c.l.b16 %v1384
  %v5544 = vunpack.c.h.b16 %v1384
  %v5545 = vunpack.c.l.b16 %v1385
  %v5546 = vunpack.c.h.b16 %v1385
  %v5547 = vunpack.c.l.b16 %v1386
  %v5548 = vunpack.c.h.b16 %v1386
  %v5549 = vunpack.c.l.b16 %v1387
  %v5550 = vunpack.c.h.b16 %v1387
  %v5551 = vunpack.c.l.b16 %v1388
  %v5552 = vunpack.c.h.b16 %v1388
  %v5553 = vunpack.c.l.b16 %v1389
  %v5554 = vunpack.c.h.b16 %v1389
  %v5555 = vunpack.c.l.b16 %v1390
  %v5556 = vunpack.c.h.b16 %v1390
  %v5557 = vunpack.c.l.b16 %v1391
  %v5558 = vunpack.c.h.b16 %v1391
  %v5559 = vunpack.c.l.b16 %v1392
  %v5560 = vunpack.c.h.b16 %v1392
  %v5561 = vunpack.c.l.b16 %v1393
  %v5562 = vunpack.c.h.b16 %v1393
  %v5563 = vunpack.c.l.b16 %v1394
  %v5564 = vunpack.c.h.b16 %v1394
  %v5565 = vunpack.c.l.b16 %v1395
  %v5566 = vunpack.c.h.b16 %v1395
  %v5567 = vunpack.c.l.b16 %v1396
  %v5568 = vunpack.c.h.b16 %v1396
  %v5569 = vunpack.c.l.b16 %v1397
  %v5570 = vunpack.c.h.b16 %v1397
  %v5571 = vunpack.c.l.b16 %v1398
  %v5572 = vunpack.c.h.b16 %v1398
  %v5573 = vunpack.c.l.b16 %v1399
  %v5574 = vunpack.c.h.b16 %v1399
  %v5575 = vunpack.c.l.b16 %v1400
  %v5576 = vunpack.c.h.b16 %v1400
  %v5577 = vunpack.c.l.b16 %v1401
  %v5578 = vunpack.c.h.b16 %v1401
  %v5579 = vunpack.c.l.b16 %v1402
  %v5580 = vunpack.c.h.b16 %v1402
  %v5581 = vunpack.c.l.b16 %v1403
  %v5582 = vunpack.c.h.b16 %v1403
  %v5583 = vunpack.c.l.b16 %v1404
  %v5584 = vunpack.c.h.b16 %v1404
  %v5585 = vunpack.c.l.b16 %v1405
  %v5586 = vunpack.c.h.b16 %v1405
  %v5587 = vunpack.c.l.b16 %v1406
  %v5588 = vunpack.c.h.b16 %v1406
  %v5589 = vunpack.c.l.b16 %v1407
  %v5590 = vunpack.c.h.b16 %v1407
  %v5591 = vunpack.c.l.b16 %v1408
  %v5592 = vunpack.c.h.b16 %v1408
  %v5593 = vunpack.c.l.b16 %v1409
  %v5594 = vunpack.c.h.b16 %v1409
  %v5595 = vunpack.c.l.b16 %v1410
  %v5596 = vunpack.c.h.b16 %v1410
  %v5597 = vunpack.c.l.b16 %v1411
  %v5598 = vunpack.c.h.b16 %v1411
  %v5599 = vunpack.c.l.b16 %v1412
  %v5600 = vunpack.c.h.b16 %v1412
  %v5601 = vunpack.c.l.b16 %v1413
  %v5602 = vunpack.c.h.b16 %v1413
  %v5603 = vunpack.c.l.b16 %v1414
  %v5604 = vunpack.c.h.b16 %v1414
  %v5605 = vunpack.c.l.b16 %v1415
  %v5606 = vunpack.c.h.b16 %v1415
  %v5607 = vunpack.c.l.b16 %v1416
  %v5608 = vunpack.c.h.b16 %v1416
  %v5609 = vunpack.c.l.b16 %v1417
  %v5610 = vunpack.c.h.b16 %v1417
  %v5611 = vunpack.c.l.b16 %v1418
  %v5612 = vunpack.c.h.b16 %v1418
  %v5613 = vunpack.c.l.b16 %v1419
  %v5614 = vunpack.c.h.b16 %v1419
  %v5615 = vunpack.c.l.b16 %v1420
  %v5616 = vunpack.c.h.b16 %v1420
  %v5617 = vunpack.c.l.b16 %v1421
  %v5618 = vunpack.c.h.b16 %v1421
  %v5619 = vunpack.c.l.b16 %v1422
  %v5620 = vunpack.c.h.b16 %v1422
  %v5621 = vunpack.c.l.b16 %v1423
  %v5622 = vunpack.c.h.b16 %v1423
  %v5623 = vunpack.c.l.b16 %v1424
  %v5624 = vunpack.c.h.b16 %v1424
  %v5625 = vunpack.c.l.b16 %v1425
  %v5626 = vunpack.c.h.b16 %v1425
  %v5627 = vunpack.c.l.b16 %v1426
  %v5628 = vunpack.c.h.b16 %v1426
  %v5629 = vunpack.c.l.b16 %v1427
  %v5630 = vunpack.c.h.b16 %v1427
  %v5631 = vunpack.c.l.b16 %v1428
  %v5632 = vunpack.c.h.b16 %v1428
  %v5633 = vunpack.c.l.b16 %v1429
  %v5634 = vunpack.c.h.b16 %v1429
  %v5635 = vunpack.c.l.b16 %v1430
  %v5636 = vunpack.c.h.b16 %v1430
  %v5637 = vunpack.c.l.b16 %v1431
  %v5638 = vunpack.c.h.b16 %v1431
  %v5639 = vunpack.c.l.b16 %v1432
  %v5640 = vunpack.c.h.b16 %v1432
  %v5641 = vunpack.c.l.b16 %v1433
  %v5642 = vunpack.c.h.b16 %v1433
  %v5643 = vunpack.c.l.b16 %v1434
  %v5644 = vunpack.c.h.b16 %v1434
  %v5645 = vunpack.c.l.b16 %v1435
  %v5646 = vunpack.c.h.b16 %v1435
  %v5647 = vunpack.c.l.b16 %v1436
  %v5648 = vunpack.c.h.b16 %v1436
  %v5649 = vunpack.c.l.b16 %v1437
  %v5650 = vunpack.c.h.b16 %v1437
  %v5651 = vunpack.c.l.b16 %v1438
  %v5652 = vunpack.c.h.b16 %v1438
  %v5653 = vunpack.c.l.b16 %v1439
  %v5654 = vunpack.c.h.b16 %v1439
  %v5655 = vunpack.c.l.b16 %v1440
  %v5656 = vunpack.c.h.b16 %v1440
  %v5657 = vunpack.c.l.b16 %v1441
  %v5658 = vunpack.c.h.b16 %v1441
  %v5659 = vunpack.c.l.b16 %v1442
  %v5660 = vunpack.c.h.b16 %v1442
  %v5661 = vunpack.c.l.b16 %v1443
  %v5662 = vunpack.c.h.b16 %v1443
  %v5663 = vunpack.c.l.b16 %v1444
  %v5664 = vunpack.c.h.b16 %v1444
  %v5665 = vunpack.c.l.b16 %v1445
  %v5666 = vunpack.c.h.b16 %v1445
  %v5667 = vunpack.c.l.b16 %v1446
  %v5668 = vunpack.c.h.b16 %v1446
  %v5669 = vunpack.c.l.b16 %v1447
  %v5670 = vunpack.c.h.b16 %v1447
  %v5671 = vunpack.c.l.b16 %v1448
  %v5672 = vunpack.c.h.b16 %v1448
  %v5673 = vunpack.c.l.b16 %v1449
  %v5674 = vunpack.c.h.b16 %v1449
  %v5675 = vunpack.c.l.b16 %v1450
  %v5676 = vunpack.c.h.b16 %v1450
  %v5677 = vunpack.c.l.b16 %v1451
  %v5678 = vunpack.c.h.b16 %v1451
  %v5679 = vunpack.c.l.b16 %v1452
  %v5680 = vunpack.c.h.b16 %v1452
  %v5681 = vunpack.c.l.b16 %v1453
  %v5682 = vunpack.c.h.b16 %v1453
  %v5683 = vunpack.c.l.b16 %v1454
  %v5684 = vunpack.c.h.b16 %v1454
  %v5685 = vunpack.c.l.b16 %v1455
  %v5686 = vunpack.c.h.b16 %v1455
  %v5687 = vunpack.c.l.b16 %v1456
  %v5688 = vunpack.c.h.b16 %v1456
  %v5689 = vunpack.c.l.b16 %v1457
  %v5690 = vunpack.c.h.b16 %v1457
  %v5691 = vunpack.c.l.b16 %v1458
  %v5692 = vunpack.c.h.b16 %v1458
  %v5693 = vunpack.c.l.b16 %v1459
  %v5694 = vunpack.c.h.b16 %v1459
  %v5695 = vunpack.c.l.b16 %v1460
  %v5696 = vunpack.c.h.b16 %v1460
  %v5697 = vunpack.c.l.b16 %v1461
  %v5698 = vunpack.c.h.b16 %v1461
  %v5699 = vunpack.c.l.b16 %v1462
  %v5700 = vunpack.c.h.b16 %v1462
  %v5701 = vunpack.c.l.b16 %v1463
  %v5702 = vunpack.c.h.b16 %v1463
  %v5703 = vunpack.c.l.b16 %v1464
  %v5704 = vunpack.c.h.b16 %v1464
  %v5705 = vunpack.c.l.b16 %v1465
  %v5706 = vunpack.c.h.b16 %v1465
  %v5707 = vunpack.c.l.b16 %v1466
  %v5708 = vunpack.c.h.b16 %v1466
  %v5709 = vunpack.c.l.b16 %v1467
  %v5710 = vunpack.c.h.b16 %v1467
  %v5711 = vunpack.c.l.b16 %v1468
  %v5712 = vunpack.c.h.b16 %v1468
  %v5713 = vunpack.c.l.b16 %v1469
  %v5714 = vunpack.c.h.b16 %v1469
  %v5715 = vunpack.c.l.b16 %v1470
  %v5716 = vunpack.c.h.b16 %v1470
  %v5717 = vunpack.c.l.b16 %v1471
  %v5718 = vunpack.c.h.b16 %v1471
  %v5719 = vunpack.c.l.b16 %v1472
  %v5720 = vunpack.c.h.b16 %v1472
  %v5721 = vunpack.c.l.b16 %v1473
  %v5722 = vunpack.c.h.b16 %v1473
  %v5723 = vunpack.c.l.b16 %v1474
  %v5724 = vunpack.c.h.b16 %v1474
  %v5725 = vunpack.c.l.b16 %v1475
  %v5726 = vunpack.c.h.b16 %v1475
  %v5727 = vunpack.c.l.b16 %v1476
  %v5728 = vunpack.c.h.b16 %v1476
  %v5729 = vunpack.c.l.b16 %v1477
  %v5730 = vunpack.c.h.b16 %v1477
  %v5731 = vunpack.c.l.b16 %v1478
  %v5732 = vunpack.c.h.b16 %v1478
  %v5733 = vunpack.c.l.b16 %v1479
  %v5734 = vunpack.c.h.b16 %v1479
  %v5735 = vunpack.c.l.b16 %v1480
  %v5736 = vunpack.c.h.b16 %v1480
  %v5737 = vunpack.c.l.b16 %v1481
  %v5738 = vunpack.c.h.b16 %v1481
  %v5739 = vunpack.c.l.b16 %v1482
  %v5740 = vunpack.c.h.b16 %v1482
  %v5741 = vunpack.c.l.b16 %v1483
  %v5742 = vunpack.c.h.b16 %v1483
  %v5743 = vunpack.c.l.b16 %v1484
  %v5744 = vunpack.c.h.b16 %v1484
  %v5745 = vunpack.c.l.b16 %v1485
  %v5746 = vunpack.c.h.b16 %v1485
  %v5747 = vunpack.c.l.b16 %v1486
  %v5748 = vunpack.c.h.b16 %v1486
  %v5749 = vunpack.c.l.b16 %v1487
  %v5750 = vunpack.c.h.b16 %v1487
  %v5751 = vunpack.c.l.b16 %v1488
  %v5752 = vunpack.c.h.b16 %v1488
  %v5753 = vunpack.c.l.b16 %v1489
  %v5754 = vunpack.c.h.b16 %v1489
  %v5755 = vunpack.c.l.b16 %v1490
  %v5756 = vunpack.c.h.b16 %v1490
  %v5757 = vunpack.c.l.b16 %v1491
  %v5758 = vunpack.c.h.b16 %v1491
  %v5759 = vunpack.c.l.b16 %v1492
  %v5760 = vunpack.c.h.b16 %v1492
  %v5761 = vunpack.c.l.b16 %v1493
  %v5762 = vunpack.c.h.b16 %v1493
  %v5763 = vunpack.c.l.b16 %v1494
  %v5764 = vunpack.c.h.b16 %v1494
  %v5765 = vunpack.c.l.b16 %v1495
  %v5766 = vunpack.c.h.b16 %v1495
  %v5767 = vunpack.c.l.b16 %v1496
  %v5768 = vunpack.c.h.b16 %v1496
  %v5769 = vunpack.c.l.b16 %v1497
  %v5770 = vunpack.c.h.b16 %v1497
  %v5771 = vunpack.c.l.b16 %v1498
  %v5772 = vunpack.c.h.b16 %v1498
  %v5773 = vunpack.c.l.b16 %v1499
  %v5774 = vunpack.c.h.b16 %v1499
  %v5775 = vunpack.c.l.b16 %v1500
  %v5776 = vunpack.c.h.b16 %v1500
  %v5777 = vunpack.c.l.b16 %v1501
  %v5778 = vunpack.c.h.b16 %v1501
  %v5779 = vunpack.c.l.b16 %v1502
  %v5780 = vunpack.c.h.b16 %v1502
  %v5781 = vunpack.c.l.b16 %v1503
  %v5782 = vunpack.c.h.b16 %v1503
  %v5783 = vunpack.c.l.b16 %v1504
  %v5784 = vunpack.c.h.b16 %v1504
  %v5785 = vunpack.c.l.b16 %v1505
  %v5786 = vunpack.c.h.b16 %v1505
  %v5787 = vunpack.c.l.b16 %v1506
  %v5788 = vunpack.c.h.b16 %v1506
  %v5789 = vunpack.c.l.b16 %v1507
  %v5790 = vunpack.c.h.b16 %v1507
  %v5791 = vunpack.c.l.b16 %v1508
  %v5792 = vunpack.c.h.b16 %v1508
  %v5793 = vunpack.c.l.b16 %v1509
  %v5794 = vunpack.c.h.b16 %v1509
  %v5795 = vunpack.c.l.b16 %v1510
  %v5796 = vunpack.c.h.b16 %v1510
  %v5797 = vunpack.c.l.b16 %v1511
  %v5798 = vunpack.c.h.b16 %v1511
  %v5799 = vunpack.c.l.b16 %v1512
  %v5800 = vunpack.c.h.b16 %v1512
  %v5801 = vunpack.c.l.b16 %v1513
  %v5802 = vunpack.c.h.b16 %v1513
  %v5803 = vunpack.c.l.b16 %v1514
  %v5804 = vunpack.c.h.b16 %v1514
  %v5805 = vunpack.c.l.b16 %v1515
  %v5806 = vunpack.c.h.b16 %v1515
  %v5807 = vunpack.c.l.b16 %v1516
  %v5808 = vunpack.c.h.b16 %v1516
  %v5809 = vunpack.c.l.b16 %v1517
  %v5810 = vunpack.c.h.b16 %v1517
  %v5811 = vunpack.c.l.b16 %v1518
  %v5812 = vunpack.c.h.b16 %v1518
  %v5813 = vunpack.c.l.b16 %v1519
  %v5814 = vunpack.c.h.b16 %v1519
  %v5815 = vunpack.c.l.b16 %v1520
  %v5816 = vunpack.c.h.b16 %v1520
  %v5817 = vunpack.c.l.b16 %v1521
  %v5818 = vunpack.c.h.b16 %v1521
  %v5819 = vunpack.c.l.b16 %v1522
  %v5820 = vunpack.c.h.b16 %v1522
  %v5821 = vunpack.c.l.b16 %v1523
  %v5822 = vunpack.c.h.b16 %v1523
  %v5823 = vunpack.c.l.b16 %v1524
  %v5824 = vunpack.c.h.b16 %v1524
  %v5825 = vunpack.c.l.b16 %v1525
  %v5826 = vunpack.c.h.b16 %v1525
  %v5827 = vunpack.c.l.b16 %v1526
  %v5828 = vunpack.c.h.b16 %v1526
  %v5829 = vunpack.c.l.b16 %v1527
  %v5830 = vunpack.c.h.b16 %v1527
  %v5831 = vunpack.c.l.b16 %v1528
  %v5832 = vunpack.c.h.b16 %v1528
  %v5833 = vunpack.c.l.b16 %v1529
  %v5834 = vunpack.c.h.b16 %v1529
  %v5835 = vunpack.c.l.b16 %v1530
  %v5836 = vunpack.c.h.b16 %v1530
  %v5837 = vunpack.c.l.b16 %v1531
  %v5838 = vunpack.c.h.b16 %v1531
  %v5839 = vunpack.c.l.b16 %v1532
  %v5840 = vunpack.c.h.b16 %v1532
  %v5841 = vunpack.c.l.b16 %v1533
  %v5842 = vunpack.c.h.b16 %v1533
  %v5843 = vunpack.c.l.b16 %v1534
  %v5844 = vunpack.c.h.b16 %v1534
  %v5845 = vunpack.c.l.b16 %v1535
  %v5846 = vunpack.c.h.b16 %v1535
  %v5847 = vunpack.c.l.b16 %v1536
  %v5848 = vunpack.c.h.b16 %v1536
  %v5849 = vunpack.c.l.b16 %v1537
  %v5850 = vunpack.c.h.b16 %v1537
  %v5851 = vunpack.c.l.b16 %v1538
  %v5852 = vunpack.c.h.b16 %v1538
  %v5853 = vunpack.c.l.b16 %v1539
  %v5854 = vunpack.c.h.b16 %v1539
  %v5855 = vunpack.c.l.b16 %v1540
  %v5856 = vunpack.c.h.b16 %v1540
  %v5857 = vunpack.c.l.b16 %v1541
  %v5858 = vunpack.c.h.b16 %v1541
  %v5859 = vunpack.c.l.b16 %v1542
  %v5860 = vunpack.c.h.b16 %v1542
  %v5861 = vunpack.c.l.b16 %v1543
  %v5862 = vunpack.c.h.b16 %v1543
  %v5863 = vunpack.c.l.b16 %v1544
  %v5864 = vunpack.c.h.b16 %v1544
  %v5865 = vpack.c.b16 %v2989, %v2985
  %v5866 = vpack.c.b16 %v2990, %v2986
  %v5867 = vpack.c.b16 %v2991, %v2987
  %v5868 = vpack.c.b16 %v2992, %v2988
  %v5869 = vpack.c.b16 %v2997, %v2993
  %v5870 = vpack.c.b16 %v2998, %v2994
  %v5871 = vpack.c.b16 %v2999, %v2995
  %v5872 = vpack.c.b16 %v3000, %v2996
  %v5873 = vpack.c.b16 %v3005, %v3001
  %v5874 = vpack.c.b16 %v3006, %v3002
  %v5875 = vpack.c.b16 %v3007, %v3003
  %v5876 = vpack.c.b16 %v3008, %v3004
  %v5877 = vpack.c.b16 %v3013, %v3009
  %v5878 = vpack.c.b16 %v3014, %v3010
  %v5879 = vpack.c.b16 %v3015, %v3011
  %v5880 = vpack.c.b16 %v3016, %v3012
  %v5881 = vpack.c.b16 %v3021, %v3017
  %v5882 = vpack.c.b16 %v3022, %v3018
  %v5883 = vpack.c.b16 %v3023, %v3019
  %v5884 = vpack.c.b16 %v3024, %v3020
  %v5885 = vpack.c.b16 %v3029, %v3025
  %v5886 = vpack.c.b16 %v3030, %v3026
  %v5887 = vpack.c.b16 %v3031, %v3027
  %v5888 = vpack.c.b16 %v3032, %v3028
  %v5889 = vpack.c.b16 %v3037, %v3033
  %v5890 = vpack.c.b16 %v3038, %v3034
  %v5891 = vpack.c.b16 %v3039, %v3035
  %v5892 = vpack.c.b16 %v3040, %v3036
  %v5893 = vpack.c.b16 %v3045, %v3041
  %v5894 = vpack.c.b16 %v3046, %v3042
  %v5895 = vpack.c.b16 %v3047, %v3043
  %v5896 = vpack.c.b16 %v3048, %v3044
  %v5897 = vpack.c.b16 %v3053, %v3049
  %v5898 = vpack.c.b16 %v3054, %v3050
  %v5899 = vpack.c.b16 %v3055, %v3051
  %v5900 = vpack.c.b16 %v3056, %v3052
  %v5901 = vpack.c.b16 %v3061, %v3057
  %v5902 = vpack.c.b16 %v3062, %v3058
  %v5903 = vpack.c.b16 %v3063, %v3059
  %v5904 = vpack.c.b16 %v3064, %v3060
  %v5905 = vpack.c.b16 %v3069, %v3065
  %v5906 = vpack.c.b16 %v3070, %v3066
  %v5907 = vpack.c.b16 %v3071, %v3067
  %v5908 = vpack.c.b16 %v3072, %v3068
  %v5909 = vpack.c.b16 %v3077, %v3073
  %v5910 = vpack.c.b16 %v3078, %v3074
  %v5911 = vpack.c.b16 %v3079, %v3075
  %v5912 = vpack.c.b16 %v3080, %v3076
  %v5913 = vpack.c.b16 %v3085, %v3081
  %v5914 = vpack.c.b16 %v3086, %v3082
  %v5915 = vpack.c.b16 %v3087, %v3083
  %v5916 = vpack.c.b16 %v3088, %v3084
  %v5917 = vpack.c.b16 %v3093, %v3089
  %v5918 = vpack.c.b16 %v3094, %v3090
  %v5919 = vpack.c.b16 %v3095, %v3091
  %v5920 = vpack.c.b16 %v3096, %v3092
  %v5921 = vpack.c.b16 %v3101, %v3097
  %v5922 = vpack.c.b16 %v3102, %v3098
  %v5923 = vpack.c.b16 %v3103, %v3099
  %v5924 = vpack.c.b16 %v3104, %v3100
  %v5925 = vpack.c.b16 %v3109, %v3105
  %v5926 = vpack.c.b16 %v3110, %v3106
  %v5927 = vpack.c.b16 %v3111, %v3107
  %v5928 = vpack.c.b16 %v3112, %v3108
  %v5929 = vpack.c.b16 %v3117, %v3113
  %v5930 = vpack.c.b16 %v3118, %v3114
  %v5931 = vpack.c.b16 %v3119, %v3115
  %v5932 = vpack.c.b16 %v3120, %v3116
  %v5933 = vpack.c.b16 %v3125, %v3121
  %v5934 = vpack.c.b16 %v3126, %v3122
  %v5935 = vpack.c.b16 %v3127, %v3123
  %v5936 = vpack.c.b16 %v3128, %v3124
  %v5937 = vpack.c.b16 %v3133, %v3129
  %v5938 = vpack.c.b16 %v3134, %v3130
  %v5939 = vpack.c.b16 %v3135, %v3131
  %v5940 = vpack.c.b16 %v3136, %v3132
  %v5941 = vpack.c.b16 %v3141, %v3137
  %v5942 = vpack.c.b16 %v3142, %v3138
  %v5943 = vpack.c.b16 %v3143, %v3139
  %v5944 = vpack.c.b16 %v3144, %v3140
  %v5945 = vpack.c.b16 %v3149, %v3145
  %v5946 = vpack.c.b16 %v3150, %v3146
  %v5947 = vpack.c.b16 %v3151, %v3147
  %v5948 = vpack.c.b16 %v3152, %v3148
  %v5949 = vpack.c.b16 %v3157, %v3153
  %v5950 = vpack.c.b16 %v3158, %v3154
  %v5951 = vpack.c.b16 %v3159, %v3155
  %v5952 = vpack.c.b16 %v3160, %v3156
  %v5953 = vpack.c.b16 %v3165, %v3161
  %v5954 = vpack.c.b16 %v3166, %v3162
  %v5955 = vpack.c.b16 %v3167, %v3163
  %v5956 = vpack.c.b16 %v3168, %v3164
  %v5957 = vpack.c.b16 %v3173, %v3169
  %v5958 = vpack.c.b16 %v3174, %v3170
  %v5959 = vpack.c.b16 %v3175, %v3171
  %v5960 = vpack.c.b16 %v3176, %v3172
  %v5961 = vpack.c.b16 %v3181, %v3177
  %v5962 = vpack.c.b16 %v3182, %v3178
  %v5963 = vpack.c.b16 %v3183, %v3179
  %v5964 = vpack.c.b16 %v3184, %v3180
  %v5965 = vpack.c.b16 %v3189, %v3185
  %v5966 = vpack.c.b16 %v3190, %v3186
  %v5967 = vpack.c.b16 %v3191, %v3187
  %v5968 = vpack.c.b16 %v3192, %v3188
  %v5969 = vpack.c.b16 %v3197, %v3193
  %v5970 = vpack.c.b16 %v3198, %v3194
  %v5971 = vpack.c.b16 %v3199, %v3195
  %v5972 = vpack.c.b16 %v3200, %v3196
  %v5973 = vpack.c.b16 %v3205, %v3201
  %v5974 = vpack.c.b16 %v3206, %v3202
  %v5975 = vpack.c.b16 %v3207, %v3203
  %v5976 = vpack.c.b16 %v3208, %v3204
  %v5977 = vpack.c.b16 %v3213, %v3209
  %v5978 = vpack.c.b16 %v3214, %v3210
  %v5979 = vpack.c.b16 %v3215, %v3211
  %v5980 = vpack.c.b16 %v3216, %v3212
  %v5981 = vpack.c.b16 %v3221, %v3217
  %v5982 = vpack.c.b16 %v3222, %v3218
  %v5983 = vpack.c.b16 %v3223, %v3219
  %v5984 = vpack.c.b16 %v3224, %v3220
  %v5985 = vpack.c.b16 %v3229, %v3225
  %v5986 = vpack.c.b16 %v3230, %v3226
  %v5987 = vpack.c.b16 %v3231, %v3227
  %v5988 = vpack.c.b16 %v3232, %v3228
  %v5989 = vpack.c.b16 %v3237, %v3233
  %v5990 = vpack.c.b16 %v3238, %v3234
  %v5991 = vpack.c.b16 %v3239, %v3235
  %v5992 = vpack.c.b16 %v3240, %v3236
  %v5993 = vpack.c.b16 %v3245, %v3241
  %v5994 = vpack.c.b16 %v3246, %v3242
  %v5995 = vpack.c.b16 %v3247, %v3243
  %v5996 = vpack.c.b16 %v3248, %v3244
  %v5997 = vpack.c.b16 %v3253, %v3249
  %v5998 = vpack.c.b16 %v3254, %v3250
  %v5999 = vpack.c.b16 %v3255, %v3251
  %v6000 = vpack.c.b16 %v3256, %v3252
  %v6001 = vpack.c.b16 %v3261, %v3257
  %v6002 = vpack.c.b16 %v3262, %v3258
  %v6003 = vpack.c.b16 %v3263, %v3259
  %v6004 = vpack.c.b16 %v3264, %v3260
  %v6005 = vpack.c.b16 %v3269, %v3265
  %v6006 = vpack.c.b16 %v3270, %v3266
  %v6007 = vpack.c.b16 %v3271, %v3267
  %v6008 = vpack.c.b16 %v3272, %v3268
  %v6009 = vpack.c.b16 %v3277, %v3273
  %v6010 = vpack.c.b16 %v3278, %v3274
  %v6011 = vpack.c.b16 %v3279, %v3275
  %v6012 = vpack.c.b16 %v3280, %v3276
  %v6013 = vpack.c.b16 %v3285, %v3281
  %v6014 = vpack.c.b16 %v3286, %v3282
  %v6015 = vpack.c.b16 %v3287, %v3283
  %v6016 = vpack.c.b16 %v3288, %v3284
  %v6017 = vpack.c.b16 %v3293, %v3289
  %v6018 = vpack.c.b16 %v3294, %v3290
  %v6019 = vpack.c.b16 %v3295, %v3291
  %v6020 = vpack.c.b16 %v3296, %v3292
  %v6021 = vpack.c.b16 %v3301, %v3297
  %v6022 = vpack.c.b16 %v3302, %v3298
  %v6023 = vpack.c.b16 %v3303, %v3299
  %v6024 = vpack.c.b16 %v3304, %v3300
  %v6025 = vpack.c.b16 %v3309, %v3305
  %v6026 = vpack.c.b16 %v3310, %v3306
  %v6027 = vpack.c.b16 %v3311, %v3307
  %v6028 = vpack.c.b16 %v3312, %v3308
  %v6029 = vpack.c.b16 %v3317, %v3313
  %v6030 = vpack.c.b16 %v3318, %v3314
  %v6031 = vpack.c.b16 %v3319, %v3315
  %v6032 = vpack.c.b16 %v3320, %v3316
  %v6033 = vpack.c.b16 %v3325, %v3321
  %v6034 = vpack.c.b16 %v3326, %v3322
  %v6035 = vpack.c.b16 %v3327, %v3323
  %v6036 = vpack.c.b16 %v3328, %v3324
  %v6037 = vpack.c.b16 %v3333, %v3329
  %v6038 = vpack.c.b16 %v3334, %v3330
  %v6039 = vpack.c.b16 %v3335, %v3331
  %v6040 = vpack.c.b16 %v3336, %v3332
  %v6041 = vpack.c.b16 %v3341, %v3337
  %v6042 = vpack.c.b16 %v3342, %v3338
  %v6043 = vpack.c.b16 %v3343, %v3339
  %v6044 = vpack.c.b16 %v3344, %v3340
  %v6045 = vpack.c.b16 %v3349, %v3345
  %v6046 = vpack.c.b16 %v3350, %v3346
  %v6047 = vpack.c.b16 %v3351, %v3347
  %v6048 = vpack.c.b16 %v3352, %v3348
  %v6049 = vpack.c.b16 %v3357, %v3353
  %v6050 = vpack.c.b16 %v3358, %v3354
  %v6051 = vpack.c.b16 %v3359, %v3355
  %v6052 = vpack.c.b16 %v3360, %v3356
  %v6053 = vpack.c.b16 %v3365, %v3361
  %v6054 = vpack.c.b16 %v3366, %v3362
  %v6055 = vpack.c.b16 %v3367, %v3363
  %v6056 = vpack.c.b16 %v3368, %v3364
  %v6057 = vpack.c.b16 %v3373, %v3369
  %v6058 = vpack.c.b16 %v3374, %v3370
  %v6059 = vpack.c.b16 %v3375, %v3371
  %v6060 = vpack.c.b16 %v3376, %v3372
  %v6061 = vpack.c.b16 %v3381, %v3377
  %v6062 = vpack.c.b16 %v3382, %v3378
  %v6063 = vpack.c.b16 %v3383, %v3379
  %v6064 = vpack.c.b16 %v3384, %v3380
  %v6065 = vpack.c.b16 %v3389, %v3385
  %v6066 = vpack.c.b16 %v3390, %v3386
  %v6067 = vpack.c.b16 %v3391, %v3387
  %v6068 = vpack.c.b16 %v3392, %v3388
  %v6069 = vpack.c.b16 %v3397, %v3393
  %v6070 = vpack.c.b16 %v3398, %v3394
  %v6071 = vpack.c.b16 %v3399, %v3395
  %v6072 = vpack.c.b16 %v3400, %v3396
  %v6073 = vpack.c.b16 %v3405, %v3401
  %v6074 = vpack.c.b16 %v3406, %v3402
  %v6075 = vpack.c.b16 %v3407, %v3403
  %v6076 = vpack.c.b16 %v3408, %v3404
  %v6077 = vpack.c.b16 %v3413, %v3409
  %v6078 = vpack.c.b16 %v3414, %v3410
  %v6079 = vpack.c.b16 %v3415, %v3411
  %v6080 = vpack.c.b16 %v3416, %v3412
  %v6081 = vpack.c.b16 %v3421, %v3417
  %v6082 = vpack.c.b16 %v3422, %v3418
  %v6083 = vpack.c.b16 %v3423, %v3419
  %v6084 = vpack.c.b16 %v3424, %v3420
  %v6085 = vpack.c.b16 %v3429, %v3425
  %v6086 = vpack.c.b16 %v3430, %v3426
  %v6087 = vpack.c.b16 %v3431, %v3427
  %v6088 = vpack.c.b16 %v3432, %v3428
  %v6089 = vpack.c.b16 %v3437, %v3433
  %v6090 = vpack.c.b16 %v3438, %v3434
  %v6091 = vpack.c.b16 %v3439, %v3435
  %v6092 = vpack.c.b16 %v3440, %v3436
  %v6093 = vpack.c.b16 %v3445, %v3441
  %v6094 = vpack.c.b16 %v3446, %v3442
  %v6095 = vpack.c.b16 %v3447, %v3443
  %v6096 = vpack.c.b16 %v3448, %v3444
  %v6097 = vpack.c.b16 %v3453, %v3449
  %v6098 = vpack.c.b16 %v3454, %v3450
  %v6099 = vpack.c.b16 %v3455, %v3451
  %v6100 = vpack.c.b16 %v3456, %v3452
  %v6101 = vpack.c.b16 %v3461, %v3457
  %v6102 = vpack.c.b16 %v3462, %v3458
  %v6103 = vpack.c.b16 %v3463, %v3459
  %v6104 = vpack.c.b16 %v3464, %v3460
  %v6105 = vpack.c.b16 %v3469, %v3465
  %v6106 = vpack.c.b16 %v3470, %v3466
  %v6107 = vpack.c.b16 %v3471, %v3467
  %v6108 = vpack.c.b16 %v3472, %v3468
  %v6109 = vpack.c.b16 %v3477, %v3473
  %v6110 = vpack.c.b16 %v3478, %v3474
  %v6111 = vpack.c.b16 %v3479, %v3475
  %v6112 = vpack.c.b16 %v3480, %v3476
  %v6113 = vpack.c.b16 %v3485, %v3481
  %v6114 = vpack.c.b16 %v3486, %v3482
  %v6115 = vpack.c.b16 %v3487, %v3483
  %v6116 = vpack.c.b16 %v3488, %v3484
  %v6117 = vpack.c.b16 %v3493, %v3489
  %v6118 = vpack.c.b16 %v3494, %v3490
  %v6119 = vpack.c.b16 %v3495, %v3491
  %v6120 = vpack.c.b16 %v3496, %v3492
  %v6121 = vpack.c.b16 %v3501, %v3497
  %v6122 = vpack.c.b16 %v3502, %v3498
  %v6123 = vpack.c.b16 %v3503, %v3499
  %v6124 = vpack.c.b16 %v3504, %v3500
  %v6125 = vpack.c.b16 %v3509, %v3505
  %v6126 = vpack.c.b16 %v3510, %v3506
  %v6127 = vpack.c.b16 %v3511, %v3507
  %v6128 = vpack.c.b16 %v3512, %v3508
  %v6129 = vpack.c.b16 %v3517, %v3513
  %v6130 = vpack.c.b16 %v3518, %v3514
  %v6131 = vpack.c.b16 %v3519, %v3515
  %v6132 = vpack.c.b16 %v3520, %v3516
  %v6133 = vpack.c.b16 %v3525, %v3521
  %v6134 = vpack.c.b16 %v3526, %v3522
  %v6135 = vpack.c.b16 %v3527, %v3523
  %v6136 = vpack.c.b16 %v3528, %v3524
  %v6137 = vpack.c.b16 %v3533, %v3529
  %v6138 = vpack.c.b16 %v3534, %v3530
  %v6139 = vpack.c.b16 %v3535, %v3531
  %v6140 = vpack.c.b16 %v3536, %v3532
  %v6141 = vpack.c.b16 %v3541, %v3537
  %v6142 = vpack.c.b16 %v3542, %v3538
  %v6143 = vpack.c.b16 %v3543, %v3539
  %v6144 = vpack.c.b16 %v3544, %v3540
  %v6145 = vpack.c.b16 %v3549, %v3545
  %v6146 = vpack.c.b16 %v3550, %v3546
  %v6147 = vpack.c.b16 %v3551, %v3547
  %v6148 = vpack.c.b16 %v3552, %v3548
  %v6149 = vpack.c.b16 %v3557, %v3553
  %v6150 = vpack.c.b16 %v3558, %v3554
  %v6151 = vpack.c.b16 %v3559, %v3555
  %v6152 = vpack.c.b16 %v3560, %v3556
  %v6153 = vpack.c.b16 %v3565, %v3561
  %v6154 = vpack.c.b16 %v3566, %v3562
  %v6155 = vpack.c.b16 %v3567, %v3563
  %v6156 = vpack.c.b16 %v3568, %v3564
  %v6157 = vpack.c.b16 %v3573, %v3569
  %v6158 = vpack.c.b16 %v3574, %v3570
  %v6159 = vpack.c.b16 %v3575, %v3571
  %v6160 = vpack.c.b16 %v3576, %v3572
  %v6161 = vpack.c.b16 %v3581, %v3577
  %v6162 = vpack.c.b16 %v3582, %v3578
  %v6163 = vpack.c.b16 %v3583, %v3579
  %v6164 = vpack.c.b16 %v3584, %v3580
  %v6165 = vpack.c.b16 %v3589, %v3585
  %v6166 = vpack.c.b16 %v3590, %v3586
  %v6167 = vpack.c.b16 %v3591, %v3587
  %v6168 = vpack.c.b16 %v3592, %v3588
  %v6169 = vpack.c.b16 %v3597, %v3593
  %v6170 = vpack.c.b16 %v3598, %v3594
  %v6171 = vpack.c.b16 %v3599, %v3595
  %v6172 = vpack.c.b16 %v3600, %v3596
  %v6173 = vpack.c.b16 %v3605, %v3601
  %v6174 = vpack.c.b16 %v3606, %v3602
  %v6175 = vpack.c.b16 %v3607, %v3603
  %v6176 = vpack.c.b16 %v3608, %v3604
  %v6177 = vpack.c.b16 %v3613, %v3609
  %v6178 = vpack.c.b16 %v3614, %v3610
  %v6179 = vpack.c.b16 %v3615, %v3611
  %v6180 = vpack.c.b16 %v3616, %v3612
  %v6181 = vpack.c.b16 %v3621, %v3617
  %v6182 = vpack.c.b16 %v3622, %v3618
  %v6183 = vpack.c.b16 %v3623, %v3619
  %v6184 = vpack.c.b16 %v3624, %v3620
  %v6185 = vpack.c.b16 %v3629, %v3625
  %v6186 = vpack.c.b16 %v3630, %v3626
  %v6187 = vpack.c.b16 %v3631, %v3627
  %v6188 = vpack.c.b16 %v3632, %v3628
  %v6189 = vpack.c.b16 %v3637, %v3633
  %v6190 = vpack.c.b16 %v3638, %v3634
  %v6191 = vpack.c.b16 %v3639, %v3635
  %v6192 = vpack.c.b16 %v3640, %v3636
  %v6193 = vpack.c.b16 %v3645, %v3641
  %v6194 = vpack.c.b16 %v3646, %v3642
  %v6195 = vpack.c.b16 %v3647, %v3643
  %v6196 = vpack.c.b16 %v3648, %v3644
  %v6197 = vpack.c.b16 %v3653, %v3649
  %v6198 = vpack.c.b16 %v3654, %v3650
  %v6199 = vpack.c.b16 %v3655, %v3651
  %v6200 = vpack.c.b16 %v3656, %v3652
  %v6201 = vpack.c.b16 %v3661, %v3657
  %v6202 = vpack.c.b16 %v3662, %v3658
  %v6203 = vpack.c.b16 %v3663, %v3659
  %v6204 = vpack.c.b16 %v3664, %v3660
  %v6205 = vpack.c.b16 %v3669, %v3665
  %v6206 = vpack.c.b16 %v3670, %v3666
  %v6207 = vpack.c.b16 %v3671, %v3667
  %v6208 = vpack.c.b16 %v3672, %v3668
  %v6209 = vpack.c.b16 %v3677, %v3673
  %v6210 = vpack.c.b16 %v3678, %v3674
  %v6211 = vpack.c.b16 %v3679, %v3675
  %v6212 = vpack.c.b16 %v3680, %v3676
  %v6213 = vpack.c.b16 %v3685, %v3681
  %v6214 = vpack.c.b16 %v3686, %v3682
  %v6215 = vpack.c.b16 %v3687, %v3683
  %v6216 = vpack.c.b16 %v3688, %v3684
  %v6217 = vpack.c.b16 %v3693, %v3689
  %v6218 = vpack.c.b16 %v3694, %v3690
  %v6219 = vpack.c.b16 %v3695, %v3691
  %v6220 = vpack.c.b16 %v3696, %v3692
  %v6221 = vpack.c.b16 %v3701, %v3697
  %v6222 = vpack.c.b16 %v3702, %v3698
  %v6223 = vpack.c.b16 %v3703, %v3699
  %v6224 = vpack.c.b16 %v3704, %v3700
  %v6225 = vpack.c.b16 %v3709, %v3705
  %v6226 = vpack.c.b16 %v3710, %v3706
  %v6227 = vpack.c.b16 %v3711, %v3707
  %v6228 = vpack.c.b16 %v3712, %v3708
  %v6229 = vpack.c.b16 %v3717, %v3713
  %v6230 = vpack.c.b16 %v3718, %v3714
  %v6231 = vpack.c.b16 %v3719, %v3715
  %v6232 = vpack.c.b16 %v3720, %v3716
  %v6233 = vpack.c.b16 %v3725, %v3721
  %v6234 = vpack.c.b16 %v3726, %v3722
  %v6235 = vpack.c.b16 %v3727, %v3723
  %v6236 = vpack.c.b16 %v3728, %v3724
  %v6237 = vpack.c.b16 %v3733, %v3729
  %v6238 = vpack.c.b16 %v3734, %v3730
  %v6239 = vpack.c.b16 %v3735, %v3731
  %v6240 = vpack.c.b16 %v3736, %v3732
  %v6241 = vpack.c.b16 %v3741, %v3737
  %v6242 = vpack.c.b16 %v3742, %v3738
  %v6243 = vpack.c.b16 %v3743, %v3739
  %v6244 = vpack.c.b16 %v3744, %v3740
  %v6245 = vpack.c.b16 %v3749, %v3745
  %v6246 = vpack.c.b16 %v3750, %v3746
  %v6247 = vpack.c.b16 %v3751, %v3747
  %v6248 = vpack.c.b16 %v3752, %v3748
  %v6249 = vpack.c.b16 %v3757, %v3753
  %v6250 = vpack.c.b16 %v3758, %v3754
  %v6251 = vpack.c.b16 %v3759, %v3755
  %v6252 = vpack.c.b16 %v3760, %v3756
  %v6253 = vpack.c.b16 %v3765, %v3761
  %v6254 = vpack.c.b16 %v3766, %v3762
  %v6255 = vpack.c.b16 %v3767, %v3763
  %v6256 = vpack.c.b16 %v3768, %v3764
  %v6257 = vpack.c.b16 %v3773, %v3769
  %v6258 = vpack.c.b16 %v3774, %v3770
  %v6259 = vpack.c.b16 %v3775, %v3771
  %v6260 = vpack.c.b16 %v3776, %v3772
  %v6261 = vpack.c.b16 %v3781, %v3777
  %v6262 = vpack.c.b16 %v3782, %v3778
  %v6263 = vpack.c.b16 %v3783, %v3779
  %v6264 = vpack.c.b16 %v3784, %v3780
  %v6265 = vpack.c.b16 %v3789, %v3785
  %v6266 = vpack.c.b16 %v3790, %v3786
  %v6267 = vpack.c.b16 %v3791, %v3787
  %v6268 = vpack.c.b16 %v3792, %v3788
  %v6269 = vpack.c.b16 %v3797, %v3793
  %v6270 = vpack.c.b16 %v3798, %v3794
  %v6271 = vpack.c.b16 %v3799, %v3795
  %v6272 = vpack.c.b16 %v3800, %v3796
  %v6273 = vpack.c.b16 %v3805, %v3801
  %v6274 = vpack.c.b16 %v3806, %v3802
  %v6275 = vpack.c.b16 %v3807, %v3803
  %v6276 = vpack.c.b16 %v3808, %v3804
  %v6277 = vpack.c.b16 %v3813, %v3809
  %v6278 = vpack.c.b16 %v3814, %v3810
  %v6279 = vpack.c.b16 %v3815, %v3811
  %v6280 = vpack.c.b16 %v3816, %v3812
  %v6281 = vpack.c.b16 %v3821, %v3817
  %v6282 = vpack.c.b16 %v3822, %v3818
  %v6283 = vpack.c.b16 %v3823, %v3819
  %v6284 = vpack.c.b16 %v3824, %v3820
  %v6285 = vpack.c.b16 %v3829, %v3825
  %v6286 = vpack.c.b16 %v3830, %v3826
  %v6287 = vpack.c.b16 %v3831, %v3827
  %v6288 = vpack.c.b16 %v3832, %v3828
  %v6289 = vpack.c.b16 %v3837, %v3833
  %v6290 = vpack.c.b16 %v3838, %v3834
  %v6291 = vpack.c.b16 %v3839, %v3835
  %v6292 = vpack.c.b16 %v3840, %v3836
  %v6293 = vpack.c.b16 %v3845, %v3841
  %v6294 = vpack.c.b16 %v3846, %v3842
  %v6295 = vpack.c.b16 %v3847, %v3843
  %v6296 = vpack.c.b16 %v3848, %v3844
  %v6297 = vpack.c.b16 %v3853, %v3849
  %v6298 = vpack.c.b16 %v3854, %v3850
  %v6299 = vpack.c.b16 %v3855, %v3851
  %v6300 = vpack.c.b16 %v3856, %v3852
  %v6301 = vpack.c.b16 %v3861, %v3857
  %v6302 = vpack.c.b16 %v3862, %v3858
  %v6303 = vpack.c.b16 %v3863, %v3859
  %v6304 = vpack.c.b16 %v3864, %v3860
  %v6305 = vpack.c.b16 %v3869, %v3865
  %v6306 = vpack.c.b16 %v3870, %v3866
  %v6307 = vpack.c.b16 %v3871, %v3867
  %v6308 = vpack.c.b16 %v3872, %v3868
  %v6309 = vpack.c.b16 %v3877, %v3873
  %v6310 = vpack.c.b16 %v3878, %v3874
  %v6311 = vpack.c.b16 %v3879, %v3875
  %v6312 = vpack.c.b16 %v3880, %v3876
  %v6313 = vpack.c.b16 %v3885, %v3881
  %v6314 = vpack.c.b16 %v3886, %v3882
  %v6315 = vpack.c.b16 %v3887, %v3883
  %v6316 = vpack.c.b16 %v3888, %v3884
  %v6317 = vpack.c.b16 %v3893, %v3889
  %v6318 = vpack.c.b16 %v3894, %v3890
  %v6319 = vpack.c.b16 %v3895, %v3891
  %v6320 = vpack.c.b16 %v3896, %v3892
  %v6321 = vpack.c.b16 %v3901, %v3897
  %v6322 = vpack.c.b16 %v3902, %v3898
  %v6323 = vpack.c.b16 %v3903, %v3899
  %v6324 = vpack.c.b16 %v3904, %v3900
  %v6325 = vpack.c.b16 %v3909, %v3905
  %v6326 = vpack.c.b16 %v3910, %v3906
  %v6327 = vpack.c.b16 %v3911, %v3907
  %v6328 = vpack.c.b16 %v3912, %v3908
  %v6329 = vpack.c.b16 %v3917, %v3913
  %v6330 = vpack.c.b16 %v3918, %v3914
  %v6331 = vpack.c.b16 %v3919, %v3915
  %v6332 = vpack.c.b16 %v3920, %v3916
  %v6333 = vpack.c.b16 %v3925, %v3921
  %v6334 = vpack.c.b16 %v3926, %v3922
  %v6335 = vpack.c.b16 %v3927, %v3923
  %v6336 = vpack.c.b16 %v3928, %v3924
  %v6337 = vpack.c.b16 %v3933, %v3929
  %v6338 = vpack.c.b16 %v3934, %v3930
  %v6339 = vpack.c.b16 %v3935, %v3931
  %v6340 = vpack.c.b16 %v3936, %v3932
  %v6341 = vpack.c.b16 %v3941, %v3937
  %v6342 = vpack.c.b16 %v3942, %v3938
  %v6343 = vpack.c.b16 %v3943, %v3939
  %v6344 = vpack.c.b16 %v3944, %v3940
  %v6345 = vpack.c.b16 %v3949, %v3945
  %v6346 = vpack.c.b16 %v3950, %v3946
  %v6347 = vpack.c.b16 %v3951, %v3947
  %v6348 = vpack.c.b16 %v3952, %v3948
  %v6349 = vpack.c.b16 %v3957, %v3953
  %v6350 = vpack.c.b16 %v3958, %v3954
  %v6351 = vpack.c.b16 %v3959, %v3955
  %v6352 = vpack.c.b16 %v3960, %v3956
  %v6353 = vpack.c.b16 %v3965, %v3961
  %v6354 = vpack.c.b16 %v3966, %v3962
  %v6355 = vpack.c.b16 %v3967, %v3963
  %v6356 = vpack.c.b16 %v3968, %v3964
  %v6357 = vpack.c.b16 %v3973, %v3969
  %v6358 = vpack.c.b16 %v3974, %v3970
  %v6359 = vpack.c.b16 %v3975, %v3971
  %v6360 = vpack.c.b16 %v3976, %v3972
  %v6361 = vpack.c.b16 %v3981, %v3977
  %v6362 = vpack.c.b16 %v3982, %v3978
  %v6363 = vpack.c.b16 %v3983, %v3979
  %v6364 = vpack.c.b16 %v3984, %v3980
  %v6365 = vpack.c.b16 %v3989, %v3985
  %v6366 = vpack.c.b16 %v3990, %v3986
  %v6367 = vpack.c.b16 %v3991, %v3987
  %v6368 = vpack.c.b16 %v3992, %v3988
  %v6369 = vpack.c.b16 %v3997, %v3993
  %v6370 = vpack.c.b16 %v3998, %v3994
  %v6371 = vpack.c.b16 %v3999, %v3995
  %v6372 = vpack.c.b16 %v4000, %v3996
  %v6373 = vpack.c.b16 %v4005, %v4001
  %v6374 = vpack.c.b16 %v4006, %v4002
  %v6375 = vpack.c.b16 %v4007, %v4003
  %v6376 = vpack.c.b16 %v4008, %v4004
  %v6377 = vpack.c.b16 %v4013, %v4009
  %v6378 = vpack.c.b16 %v4014, %v4010
  %v6379 = vpack.c.b16 %v4015, %v4011
  %v6380 = vpack.c.b16 %v4016, %v4012
  %v6381 = vpack.c.b16 %v4021, %v4017
  %v6382 = vpack.c.b16 %v4022, %v4018
  %v6383 = vpack.c.b16 %v4023, %v4019
  %v6384 = vpack.c.b16 %v4024, %v4020
  %v6385 = vpack.c.b16 %v4029, %v4025
  %v6386 = vpack.c.b16 %v4030, %v4026
  %v6387 = vpack.c.b16 %v4031, %v4027
  %v6388 = vpack.c.b16 %v4032, %v4028
  %v6389 = vpack.c.b16 %v4037, %v4033
  %v6390 = vpack.c.b16 %v4038, %v4034
  %v6391 = vpack.c.b16 %v4039, %v4035
  %v6392 = vpack.c.b16 %v4040, %v4036
  %v6393 = vpack.c.b16 %v4045, %v4041
  %v6394 = vpack.c.b16 %v4046, %v4042
  %v6395 = vpack.c.b16 %v4047, %v4043
  %v6396 = vpack.c.b16 %v4048, %v4044
  %v6397 = vpack.c.b16 %v4053, %v4049
  %v6398 = vpack.c.b16 %v4054, %v4050
  %v6399 = vpack.c.b16 %v4055, %v4051
  %v6400 = vpack.c.b16 %v4056, %v4052
  %v6401 = vpack.c.b16 %v4061, %v4057
  %v6402 = vpack.c.b16 %v4062, %v4058
  %v6403 = vpack.c.b16 %v4063, %v4059
  %v6404 = vpack.c.b16 %v4064, %v4060
  %v6405 = vpack.c.b16 %v4069, %v4065
  %v6406 = vpack.c.b16 %v4070, %v4066
  %v6407 = vpack.c.b16 %v4071, %v4067
  %v6408 = vpack.c.b16 %v4072, %v4068
  %v6409 = vpack.c.b16 %v4077, %v4073
  %v6410 = vpack.c.b16 %v4078, %v4074
  %v6411 = vpack.c.b16 %v4079, %v4075
  %v6412 = vpack.c.b16 %v4080, %v4076
  %v6413 = vpack.c.b16 %v4085, %v4081
  %v6414 = vpack.c.b16 %v4086, %v4082
  %v6415 = vpack.c.b16 %v4087, %v4083
  %v6416 = vpack.c.b16 %v4088, %v4084
  %v6417 = vpack.c.b16 %v4093, %v4089
  %v6418 = vpack.c.b16 %v4094, %v4090
  %v6419 = vpack.c.b16 %v4095, %v4091
  %v6420 = vpack.c.b16 %v4096, %v4092
  %v6421 = vpack.c.b16 %v4101, %v4097
  %v6422 = vpack.c.b16 %v4102, %v4098
  %v6423 = vpack.c.b16 %v4103, %v4099
  %v6424 = vpack.c.b16 %v4104, %v4100
  %v6425 = vpack.c.b16 %v4109, %v4105
  %v6426 = vpack.c.b16 %v4110, %v4106
  %v6427 = vpack.c.b16 %v4111, %v4107
  %v6428 = vpack.c.b16 %v4112, %v4108
  %v6429 = vpack.c.b16 %v4117, %v4113
  %v6430 = vpack.c.b16 %v4118, %v4114
  %v6431 = vpack.c.b16 %v4119, %v4115
  %v6432 = vpack.c.b16 %v4120, %v4116
  %v6433 = vpack.c.b16 %v4125, %v4121
  %v6434 = vpack.c.b16 %v4126, %v4122
  %v6435 = vpack.c.b16 %v4127, %v4123
  %v6436 = vpack.c.b16 %v4128, %v4124
  %v6437 = vpack.c.b16 %v4133, %v4129
  %v6438 = vpack.c.b16 %v4134, %v4130
  %v6439 = vpack.c.b16 %v4135, %v4131
  %v6440 = vpack.c.b16 %v4136, %v4132
  %v6441 = vpack.c.b16 %v4141, %v4137
  %v6442 = vpack.c.b16 %v4142, %v4138
  %v6443 = vpack.c.b16 %v4143, %v4139
  %v6444 = vpack.c.b16 %v4144, %v4140
  %v6445 = vpack.c.b16 %v4149, %v4145
  %v6446 = vpack.c.b16 %v4150, %v4146
  %v6447 = vpack.c.b16 %v4151, %v4147
  %v6448 = vpack.c.b16 %v4152, %v4148
  %v6449 = vpack.c.b16 %v4157, %v4153
  %v6450 = vpack.c.b16 %v4158, %v4154
  %v6451 = vpack.c.b16 %v4159, %v4155
  %v6452 = vpack.c.b16 %v4160, %v4156
  %v6453 = vpack.c.b16 %v4165, %v4161
  %v6454 = vpack.c.b16 %v4166, %v4162
  %v6455 = vpack.c.b16 %v4167, %v4163
  %v6456 = vpack.c.b16 %v4168, %v4164
  %v6457 = vpack.c.b16 %v4173, %v4169
  %v6458 = vpack.c.b16 %v4174, %v4170
  %v6459 = vpack.c.b16 %v4175, %v4171
  %v6460 = vpack.c.b16 %v4176, %v4172
  %v6461 = vpack.c.b16 %v4181, %v4177
  %v6462 = vpack.c.b16 %v4182, %v4178
  %v6463 = vpack.c.b16 %v4183, %v4179
  %v6464 = vpack.c.b16 %v4184, %v4180
  %v6465 = vpack.c.b16 %v4189, %v4185
  %v6466 = vpack.c.b16 %v4190, %v4186
  %v6467 = vpack.c.b16 %v4191, %v4187
  %v6468 = vpack.c.b16 %v4192, %v4188
  %v6469 = vpack.c.b16 %v4197, %v4193
  %v6470 = vpack.c.b16 %v4198, %v4194
  %v6471 = vpack.c.b16 %v4199, %v4195
  %v6472 = vpack.c.b16 %v4200, %v4196
  %v6473 = vpack.c.b16 %v4205, %v4201
  %v6474 = vpack.c.b16 %v4206, %v4202
  %v6475 = vpack.c.b16 %v4207, %v4203
  %v6476 = vpack.c.b16 %v4208, %v4204
  %v6477 = vpack.c.b16 %v4213, %v4209
  %v6478 = vpack.c.b16 %v4214, %v4210
  %v6479 = vpack.c.b16 %v4215, %v4211
  %v6480 = vpack.c.b16 %v4216, %v4212
  %v6481 = vpack.c.b16 %v4221, %v4217
  %v6482 = vpack.c.b16 %v4222, %v4218
  %v6483 = vpack.c.b16 %v4223, %v4219
  %v6484 = vpack.c.b16 %v4224, %v4220
  %v6485 = vpack.c.b16 %v4229, %v4225
  %v6486 = vpack.c.b16 %v4230, %v4226
  %v6487 = vpack.c.b16 %v4231, %v4227
  %v6488 = vpack.c.b16 %v4232, %v4228
  %v6489 = vpack.c.b16 %v4237, %v4233
  %v6490 = vpack.c.b16 %v4238, %v4234
  %v6491 = vpack.c.b16 %v4239, %v4235
  %v6492 = vpack.c.b16 %v4240, %v4236
  %v6493 = vpack.c.b16 %v4245, %v4241
  %v6494 = vpack.c.b16 %v4246, %v4242
  %v6495 = vpack.c.b16 %v4247, %v4243
  %v6496 = vpack.c.b16 %v4248, %v4244
  %v6497 = vpack.c.b16 %v4253, %v4249
  %v6498 = vpack.c.b16 %v4254, %v4250
  %v6499 = vpack.c.b16 %v4255, %v4251
  %v6500 = vpack.c.b16 %v4256, %v4252
  %v6501 = vpack.c.b16 %v4261, %v4257
  %v6502 = vpack.c.b16 %v4262, %v4258
  %v6503 = vpack.c.b16 %v4263, %v4259
  %v6504 = vpack.c.b16 %v4264, %v4260
  %v6505 = vpack.c.b16 %v4269, %v4265
  %v6506 = vpack.c.b16 %v4270, %v4266
  %v6507 = vpack.c.b16 %v4271, %v4267
  %v6508 = vpack.c.b16 %v4272, %v4268
  %v6509 = vpack.c.b16 %v4277, %v4273
  %v6510 = vpack.c.b16 %v4278, %v4274
  %v6511 = vpack.c.b16 %v4279, %v4275
  %v6512 = vpack.c.b16 %v4280, %v4276
  %v6513 = vpack.c.b16 %v4285, %v4281
  %v6514 = vpack.c.b16 %v4286, %v4282
  %v6515 = vpack.c.b16 %v4287, %v4283
  %v6516 = vpack.c.b16 %v4288, %v4284
  %v6517 = vpack.c.b16 %v4293, %v4289
  %v6518 = vpack.c.b16 %v4294, %v4290
  %v6519 = vpack.c.b16 %v4295, %v4291
  %v6520 = vpack.c.b16 %v4296, %v4292
  %v6521 = vpack.c.b16 %v4301, %v4297
  %v6522 = vpack.c.b16 %v4302, %v4298
  %v6523 = vpack.c.b16 %v4303, %v4299
  %v6524 = vpack.c.b16 %v4304, %v4300
  %v6525 = vpack.c.b16 %v4309, %v4305
  %v6526 = vpack.c.b16 %v4310, %v4306
  %v6527 = vpack.c.b16 %v4311, %v4307
  %v6528 = vpack.c.b16 %v4312, %v4308
  %v6529 = vpack.c.b16 %v4317, %v4313
  %v6530 = vpack.c.b16 %v4318, %v4314
  %v6531 = vpack.c.b16 %v4319, %v4315
  %v6532 = vpack.c.b16 %v4320, %v4316
  %v6533 = vpack.c.b16 %v4325, %v4321
  %v6534 = vpack.c.b16 %v4326, %v4322
  %v6535 = vpack.c.b16 %v4327, %v4323
  %v6536 = vpack.c.b16 %v4328, %v4324
  %v6537 = vpack.c.b16 %v4333, %v4329
  %v6538 = vpack.c.b16 %v4334, %v4330
  %v6539 = vpack.c.b16 %v4335, %v4331
  %v6540 = vpack.c.b16 %v4336, %v4332
  %v6541 = vpack.c.b16 %v4341, %v4337
  %v6542 = vpack.c.b16 %v4342, %v4338
  %v6543 = vpack.c.b16 %v4343, %v4339
  %v6544 = vpack.c.b16 %v4344, %v4340
  %v6545 = vpack.c.b16 %v4349, %v4345
  %v6546 = vpack.c.b16 %v4350, %v4346
  %v6547 = vpack.c.b16 %v4351, %v4347
  %v6548 = vpack.c.b16 %v4352, %v4348
  %v6549 = vpack.c.b16 %v4357, %v4353
  %v6550 = vpack.c.b16 %v4358, %v4354
  %v6551 = vpack.c.b16 %v4359, %v4355
  %v6552 = vpack.c.b16 %v4360, %v4356
  %v6553 = vpack.c.b16 %v4365, %v4361
  %v6554 = vpack.c.b16 %v4366, %v4362
  %v6555 = vpack.c.b16 %v4367, %v4363
  %v6556 = vpack.c.b16 %v4368, %v4364
  %v6557 = vpack.c.b16 %v4373, %v4369
  %v6558 = vpack.c.b16 %v4374, %v4370
  %v6559 = vpack.c.b16 %v4375, %v4371
  %v6560 = vpack.c.b16 %v4376, %v4372
  %v6561 = vpack.c.b16 %v4381, %v4377
  %v6562 = vpack.c.b16 %v4382, %v4378
  %v6563 = vpack.c.b16 %v4383, %v4379
  %v6564 = vpack.c.b16 %v4384, %v4380
  %v6565 = vpack.c.b16 %v4389, %v4385
  %v6566 = vpack.c.b16 %v4390, %v4386
  %v6567 = vpack.c.b16 %v4391, %v4387
  %v6568 = vpack.c.b16 %v4392, %v4388
  %v6569 = vpack.c.b16 %v4397, %v4393
  %v6570 = vpack.c.b16 %v4398, %v4394
  %v6571 = vpack.c.b16 %v4399, %v4395
  %v6572 = vpack.c.b16 %v4400, %v4396
  %v6573 = vpack.c.b16 %v4405, %v4401
  %v6574 = vpack.c.b16 %v4406, %v4402
  %v6575 = vpack.c.b16 %v4407, %v4403
  %v6576 = vpack.c.b16 %v4408, %v4404
  %v6577 = vpack.c.b16 %v4413, %v4409
  %v6578 = vpack.c.b16 %v4414, %v4410
  %v6579 = vpack.c.b16 %v4415, %v4411
  %v6580 = vpack.c.b16 %v4416, %v4412
  %v6581 = vpack.c.b16 %v4421, %v4417
  %v6582 = vpack.c.b16 %v4422, %v4418
  %v6583 = vpack.c.b16 %v4423, %v4419
  %v6584 = vpack.c.b16 %v4424, %v4420
  %v6585 = vpack.c.b16 %v4429, %v4425
  %v6586 = vpack.c.b16 %v4430, %v4426
  %v6587 = vpack.c.b16 %v4431, %v4427
  %v6588 = vpack.c.b16 %v4432, %v4428
  %v6589 = vpack.c.b16 %v4437, %v4433
  %v6590 = vpack.c.b16 %v4438, %v4434
  %v6591 = vpack.c.b16 %v4439, %v4435
  %v6592 = vpack.c.b16 %v4440, %v4436
  %v6593 = vpack.c.b16 %v4445, %v4441
  %v6594 = vpack.c.b16 %v4446, %v4442
  %v6595 = vpack.c.b16 %v4447, %v4443
  %v6596 = vpack.c.b16 %v4448, %v4444
  %v6597 = vpack.c.b16 %v4453, %v4449
  %v6598 = vpack.c.b16 %v4454, %v4450
  %v6599 = vpack.c.b16 %v4455, %v4451
  %v6600 = vpack.c.b16 %v4456, %v4452
  %v6601 = vpack.c.b16 %v4461, %v4457
  %v6602 = vpack.c.b16 %v4462, %v4458
  %v6603 = vpack.c.b16 %v4463, %v4459
  %v6604 = vpack.c.b16 %v4464, %v4460
  %v6605 = vpack.c.b16 %v4469, %v4465
  %v6606 = vpack.c.b16 %v4470, %v4466
  %v6607 = vpack.c.b16 %v4471, %v4467
  %v6608 = vpack.c.b16 %v4472, %v4468
  %v6609 = vpack.c.b16 %v4477, %v4473
  %v6610 = vpack.c.b16 %v4478, %v4474
  %v6611 = vpack.c.b16 %v4479, %v4475
  %v6612 = vpack.c.b16 %v4480, %v4476
  %v6613 = vpack.c.b16 %v4485, %v4481
  %v6614 = vpack.c.b16 %v4486, %v4482
  %v6615 = vpack.c.b16 %v4487, %v4483
  %v6616 = vpack.c.b16 %v4488, %v4484
  %v6617 = vpack.c.b16 %v4493, %v4489
  %v6618 = vpack.c.b16 %v4494, %v4490
  %v6619 = vpack.c.b16 %v4495, %v4491
  %v6620 = vpack.c.b16 %v4496, %v4492
  %v6621 = vpack.c.b16 %v4501, %v4497
  %v6622 = vpack.c.b16 %v4502, %v4498
  %v6623 = vpack.c.b16 %v4503, %v4499
  %v6624 = vpack.c.b16 %v4504, %v4500
  %v6625 = vpack.c.b16 %v4509, %v4505
  %v6626 = vpack.c.b16 %v4510, %v4506
  %v6627 = vpack.c.b16 %v4511, %v4507
  %v6628 = vpack.c.b16 %v4512, %v4508
  %v6629 = vpack.c.b16 %v4517, %v4513
  %v6630 = vpack.c.b16 %v4518, %v4514
  %v6631 = vpack.c.b16 %v4519, %v4515
  %v6632 = vpack.c.b16 %v4520, %v4516
  %v6633 = vpack.c.b16 %v4525, %v4521
  %v6634 = vpack.c.b16 %v4526, %v4522
  %v6635 = vpack.c.b16 %v4527, %v4523
  %v6636 = vpack.c.b16 %v4528, %v4524
  %v6637 = vpack.c.b16 %v4533, %v4529
  %v6638 = vpack.c.b16 %v4534, %v4530
  %v6639 = vpack.c.b16 %v4535, %v4531
  %v6640 = vpack.c.b16 %v4536, %v4532
  %v6641 = vpack.c.b16 %v4541, %v4537
  %v6642 = vpack.c.b16 %v4542, %v4538
  %v6643 = vpack.c.b16 %v4543, %v4539
  %v6644 = vpack.c.b16 %v4544, %v4540
  %v6645 = vpack.c.b16 %v4549, %v4545
  %v6646 = vpack.c.b16 %v4550, %v4546
  %v6647 = vpack.c.b16 %v4551, %v4547
  %v6648 = vpack.c.b16 %v4552, %v4548
  %v6649 = vpack.c.b16 %v4557, %v4553
  %v6650 = vpack.c.b16 %v4558, %v4554
  %v6651 = vpack.c.b16 %v4559, %v4555
  %v6652 = vpack.c.b16 %v4560, %v4556
  %v6653 = vpack.c.b16 %v4565, %v4561
  %v6654 = vpack.c.b16 %v4566, %v4562
  %v6655 = vpack.c.b16 %v4567, %v4563
  %v6656 = vpack.c.b16 %v4568, %v4564
  %v6657 = vpack.c.b16 %v4573, %v4569
  %v6658 = vpack.c.b16 %v4574, %v4570
  %v6659 = vpack.c.b16 %v4575, %v4571
  %v6660 = vpack.c.b16 %v4576, %v4572
  %v6661 = vpack.c.b16 %v4581, %v4577
  %v6662 = vpack.c.b16 %v4582, %v4578
  %v6663 = vpack.c.b16 %v4583, %v4579
  %v6664 = vpack.c.b16 %v4584, %v4580
  %v6665 = vpack.c.b16 %v4589, %v4585
  %v6666 = vpack.c.b16 %v4590, %v4586
  %v6667 = vpack.c.b16 %v4591, %v4587
  %v6668 = vpack.c.b16 %v4592, %v4588
  %v6669 = vpack.c.b16 %v4597, %v4593
  %v6670 = vpack.c.b16 %v4598, %v4594
  %v6671 = vpack.c.b16 %v4599, %v4595
  %v6672 = vpack.c.b16 %v4600, %v4596
  %v6673 = vpack.c.b16 %v4605, %v4601
  %v6674 = vpack.c.b16 %v4606, %v4602
  %v6675 = vpack.c.b16 %v4607, %v4603
  %v6676 = vpack.c.b16 %v4608, %v4604
  %v6677 = vpack.c.b16 %v4613, %v4609
  %v6678 = vpack.c.b16 %v4614, %v4610
  %v6679 = vpack.c.b16 %v4615, %v4611
  %v6680 = vpack.c.b16 %v4616, %v4612
  %v6681 = vpack.c.b16 %v4621, %v4617
  %v6682 = vpack.c.b16 %v4622, %v4618
  %v6683 = vpack.c.b16 %v4623, %v4619
  %v6684 = vpack.c.b16 %v4624, %v4620
  %v6685 = vpack.c.b16 %v4629, %v4625
  %v6686 = vpack.c.b16 %v4630, %v4626
  %v6687 = vpack.c.b16 %v4631, %v4627
  %v6688 = vpack.c.b16 %v4632, %v4628
  %v6689 = vpack.c.b16 %v4637, %v4633
  %v6690 = vpack.c.b16 %v4638, %v4634
  %v6691 = vpack.c.b16 %v4639, %v4635
  %v6692 = vpack.c.b16 %v4640, %v4636
  %v6693 = vpack.c.b16 %v4645, %v4641
  %v6694 = vpack.c.b16 %v4646, %v4642
  %v6695 = vpack.c.b16 %v4647, %v4643
  %v6696 = vpack.c.b16 %v4648, %v4644
  %v6697 = vpack.c.b16 %v4653, %v4649
  %v6698 = vpack.c.b16 %v4654, %v4650
  %v6699 = vpack.c.b16 %v4655, %v4651
  %v6700 = vpack.c.b16 %v4656, %v4652
  %v6701 = vpack.c.b16 %v4661, %v4657
  %v6702 = vpack.c.b16 %v4662, %v4658
  %v6703 = vpack.c.b16 %v4663, %v4659
  %v6704 = vpack.c.b16 %v4664, %v4660
  %v6705 = vpack.c.b16 %v4669, %v4665
  %v6706 = vpack.c.b16 %v4670, %v4666
  %v6707 = vpack.c.b16 %v4671, %v4667
  %v6708 = vpack.c.b16 %v4672, %v4668
  %v6709 = vpack.c.b16 %v4677, %v4673
  %v6710 = vpack.c.b16 %v4678, %v4674
  %v6711 = vpack.c.b16 %v4679, %v4675
  %v6712 = vpack.c.b16 %v4680, %v4676
  %v6713 = vpack.c.b16 %v4685, %v4681
  %v6714 = vpack.c.b16 %v4686, %v4682
  %v6715 = vpack.c.b16 %v4687, %v4683
  %v6716 = vpack.c.b16 %v4688, %v4684
  %v6717 = vpack.c.b16 %v4693, %v4689
  %v6718 = vpack.c.b16 %v4694, %v4690
  %v6719 = vpack.c.b16 %v4695, %v4691
  %v6720 = vpack.c.b16 %v4696, %v4692
  %v6721 = vpack.c.b16 %v4701, %v4697
  %v6722 = vpack.c.b16 %v4702, %v4698
  %v6723 = vpack.c.b16 %v4703, %v4699
  %v6724 = vpack.c.b16 %v4704, %v4700
  %v6725 = vpack.c.b16 %v4709, %v4705
  %v6726 = vpack.c.b16 %v4710, %v4706
  %v6727 = vpack.c.b16 %v4711, %v4707
  %v6728 = vpack.c.b16 %v4712, %v4708
  %v6729 = vpack.c.b16 %v4717, %v4713
  %v6730 = vpack.c.b16 %v4718, %v4714
  %v6731 = vpack.c.b16 %v4719, %v4715
  %v6732 = vpack.c.b16 %v4720, %v4716
  %v6733 = vpack.c.b16 %v4725, %v4721
  %v6734 = vpack.c.b16 %v4726, %v4722
  %v6735 = vpack.c.b16 %v4727, %v4723
  %v6736 = vpack.c.b16 %v4728, %v4724
  %v6737 = vpack.c.b16 %v4733, %v4729
  %v6738 = vpack.c.b16 %v4734, %v4730
  %v6739 = vpack.c.b16 %v4735, %v4731
  %v6740 = vpack.c.b16 %v4736, %v4732
  %v6741 = vpack.c.b16 %v4741, %v4737
  %v6742 = vpack.c.b16 %v4742, %v4738
  %v6743 = vpack.c.b16 %v4743, %v4739
  %v6744 = vpack.c.b16 %v4744, %v4740
  %v6745 = vpack.c.b16 %v4749, %v4745
  %v6746 = vpack.c.b16 %v4750, %v4746
  %v6747 = vpack.c.b16 %v4751, %v4747
  %v6748 = vpack.c.b16 %v4752, %v4748
  %v6749 = vpack.c.b16 %v4757, %v4753
  %v6750 = vpack.c.b16 %v4758, %v4754
  %v6751 = vpack.c.b16 %v4759, %v4755
  %v6752 = vpack.c.b16 %v4760, %v4756
  %v6753 = vpack.c.b16 %v4765, %v4761
  %v6754 = vpack.c.b16 %v4766, %v4762
  %v6755 = vpack.c.b16 %v4767, %v4763
  %v6756 = vpack.c.b16 %v4768, %v4764
  %v6757 = vpack.c.b16 %v4773, %v4769
  %v6758 = vpack.c.b16 %v4774, %v4770
  %v6759 = vpack.c.b16 %v4775, %v4771
  %v6760 = vpack.c.b16 %v4776, %v4772
  %v6761 = vpack.c.b16 %v4781, %v4777
  %v6762 = vpack.c.b16 %v4782, %v4778
  %v6763 = vpack.c.b16 %v4783, %v4779
  %v6764 = vpack.c.b16 %v4784, %v4780
  %v6765 = vpack.c.b16 %v4789, %v4785
  %v6766 = vpack.c.b16 %v4790, %v4786
  %v6767 = vpack.c.b16 %v4791, %v4787
  %v6768 = vpack.c.b16 %v4792, %v4788
  %v6769 = vpack.c.b16 %v4797, %v4793
  %v6770 = vpack.c.b16 %v4798, %v4794
  %v6771 = vpack.c.b16 %v4799, %v4795
  %v6772 = vpack.c.b16 %v4800, %v4796
  %v6773 = vpack.c.b16 %v4805, %v4801
  %v6774 = vpack.c.b16 %v4806, %v4802
  %v6775 = vpack.c.b16 %v4807, %v4803
  %v6776 = vpack.c.b16 %v4808, %v4804
  %v6777 = vpack.c.b16 %v4813, %v4809
  %v6778 = vpack.c.b16 %v4814, %v4810
  %v6779 = vpack.c.b16 %v4815, %v4811
  %v6780 = vpack.c.b16 %v4816, %v4812
  %v6781 = vpack.c.b16 %v4821, %v4817
  %v6782 = vpack.c.b16 %v4822, %v4818
  %v6783 = vpack.c.b16 %v4823, %v4819
  %v6784 = vpack.c.b16 %v4824, %v4820
  %v6785 = vpack.c.b16 %v4829, %v4825
  %v6786 = vpack.c.b16 %v4830, %v4826
  %v6787 = vpack.c.b16 %v4831, %v4827
  %v6788 = vpack.c.b16 %v4832, %v4828
  %v6789 = vpack.c.b16 %v4837, %v4833
  %v6790 = vpack.c.b16 %v4838, %v4834
  %v6791 = vpack.c.b16 %v4839, %v4835
  %v6792 = vpack.c.b16 %v4840, %v4836
  %v6793 = vpack.c.b16 %v4845, %v4841
  %v6794 = vpack.c.b16 %v4846, %v4842
  %v6795 = vpack.c.b16 %v4847, %v4843
  %v6796 = vpack.c.b16 %v4848, %v4844
  %v6797 = vpack.c.b16 %v4853, %v4849
  %v6798 = vpack.c.b16 %v4854, %v4850
  %v6799 = vpack.c.b16 %v4855, %v4851
  %v6800 = vpack.c.b16 %v4856, %v4852
  %v6801 = vpack.c.b16 %v4861, %v4857
  %v6802 = vpack.c.b16 %v4862, %v4858
  %v6803 = vpack.c.b16 %v4863, %v4859
  %v6804 = vpack.c.b16 %v4864, %v4860
  %v6805 = vpack.c.b16 %v4869, %v4865
  %v6806 = vpack.c.b16 %v4870, %v4866
  %v6807 = vpack.c.b16 %v4871, %v4867
  %v6808 = vpack.c.b16 %v4872, %v4868
  %v6809 = vpack.c.b16 %v4877, %v4873
  %v6810 = vpack.c.b16 %v4878, %v4874
  %v6811 = vpack.c.b16 %v4879, %v4875
  %v6812 = vpack.c.b16 %v4880, %v4876
  %v6813 = vpack.c.b16 %v4885, %v4881
  %v6814 = vpack.c.b16 %v4886, %v4882
  %v6815 = vpack.c.b16 %v4887, %v4883
  %v6816 = vpack.c.b16 %v4888, %v4884
  %v6817 = vpack.c.b16 %v4893, %v4889
  %v6818 = vpack.c.b16 %v4894, %v4890
  %v6819 = vpack.c.b16 %v4895, %v4891
  %v6820 = vpack.c.b16 %v4896, %v4892
  %v6821 = vpack.c.b16 %v4901, %v4897
  %v6822 = vpack.c.b16 %v4902, %v4898
  %v6823 = vpack.c.b16 %v4903, %v4899
  %v6824 = vpack.c.b16 %v4904, %v4900
  %v6825 = vpack.c.b16 %v4909, %v4905
  %v6826 = vpack.c.b16 %v4910, %v4906
  %v6827 = vpack.c.b16 %v4911, %v4907
  %v6828 = vpack.c.b16 %v4912, %v4908
  %v6829 = vpack.c.b16 %v4917, %v4913
  %v6830 = vpack.c.b16 %v4918, %v4914
  %v6831 = vpack.c.b16 %v4919, %v4915
  %v6832 = vpack.c.b16 %v4920, %v4916
  %v6833 = vpack.c.b16 %v4925, %v4921
  %v6834 = vpack.c.b16 %v4926, %v4922
  %v6835 = vpack.c.b16 %v4927, %v4923
  %v6836 = vpack.c.b16 %v4928, %v4924
  %v6837 = vpack.c.b16 %v4933, %v4929
  %v6838 = vpack.c.b16 %v4934, %v4930
  %v6839 = vpack.c.b16 %v4935, %v4931
  %v6840 = vpack.c.b16 %v4936, %v4932
  %v6841 = vpack.c.b16 %v4941, %v4937
  %v6842 = vpack.c.b16 %v4942, %v4938
  %v6843 = vpack.c.b16 %v4943, %v4939
  %v6844 = vpack.c.b16 %v4944, %v4940
  %v6845 = vpack.c.b16 %v4949, %v4945
  %v6846 = vpack.c.b16 %v4950, %v4946
  %v6847 = vpack.c.b16 %v4951, %v4947
  %v6848 = vpack.c.b16 %v4952, %v4948
  %v6849 = vpack.c.b16 %v4957, %v4953
  %v6850 = vpack.c.b16 %v4958, %v4954
  %v6851 = vpack.c.b16 %v4959, %v4955
  %v6852 = vpack.c.b16 %v4960, %v4956
  %v6853 = vpack.c.b16 %v4965, %v4961
  %v6854 = vpack.c.b16 %v4966, %v4962
  %v6855 = vpack.c.b16 %v4967, %v4963
  %v6856 = vpack.c.b16 %v4968, %v4964
  %v6857 = vpack.c.b16 %v4973, %v4969
  %v6858 = vpack.c.b16 %v4974, %v4970
  %v6859 = vpack.c.b16 %v4975, %v4971
  %v6860 = vpack.c.b16 %v4976, %v4972
  %v6861 = vpack.c.b16 %v4981, %v4977
  %v6862 = vpack.c.b16 %v4982, %v4978
  %v6863 = vpack.c.b16 %v4983, %v4979
  %v6864 = vpack.c.b16 %v4984, %v4980
  %v6865 = vpack.c.b16 %v4989, %v4985
  %v6866 = vpack.c.b16 %v4990, %v4986
  %v6867 = vpack.c.b16 %v4991, %v4987
  %v6868 = vpack.c.b16 %v4992, %v4988
  %v6869 = vpack.c.b16 %v4997, %v4993
  %v6870 = vpack.c.b16 %v4998, %v4994
  %v6871 = vpack.c.b16 %v4999, %v4995
  %v6872 = vpack.c.b16 %v5000, %v4996
  %v6873 = vpack.c.b16 %v5005, %v5001
  %v6874 = vpack.c.b16 %v5006, %v5002
  %v6875 = vpack.c.b16 %v5007, %v5003
  %v6876 = vpack.c.b16 %v5008, %v5004
  %v6877 = vpack.c.b16 %v5013, %v5009
  %v6878 = vpack.c.b16 %v5014, %v5010
  %v6879 = vpack.c.b16 %v5015, %v5011
  %v6880 = vpack.c.b16 %v5016, %v5012
  %v6881 = vpack.c.b16 %v5021, %v5017
  %v6882 = vpack.c.b16 %v5022, %v5018
  %v6883 = vpack.c.b16 %v5023, %v5019
  %v6884 = vpack.c.b16 %v5024, %v5020
  %v6885 = vpack.c.b16 %v5029, %v5025
  %v6886 = vpack.c.b16 %v5030, %v5026
  %v6887 = vpack.c.b16 %v5031, %v5027
  %v6888 = vpack.c.b16 %v5032, %v5028
  %v6889 = vpack.c.b16 %v5037, %v5033
  %v6890 = vpack.c.b16 %v5038, %v5034
  %v6891 = vpack.c.b16 %v5039, %v5035
  %v6892 = vpack.c.b16 %v5040, %v5036
  %v6893 = vpack.c.b16 %v5045, %v5041
  %v6894 = vpack.c.b16 %v5046, %v5042
  %v6895 = vpack.c.b16 %v5047, %v5043
  %v6896 = vpack.c.b16 %v5048, %v5044
  %v6897 = vpack.c.b16 %v5053, %v5049
  %v6898 = vpack.c.b16 %v5054, %v5050
  %v6899 = vpack.c.b16 %v5055, %v5051
  %v6900 = vpack.c.b16 %v5056, %v5052
  %v6901 = vpack.c.b16 %v5061, %v5057
  %v6902 = vpack.c.b16 %v5062, %v5058
  %v6903 = vpack.c.b16 %v5063, %v5059
  %v6904 = vpack.c.b16 %v5064, %v5060
  %v6905 = vpack.c.b16 %v5069, %v5065
  %v6906 = vpack.c.b16 %v5070, %v5066
  %v6907 = vpack.c.b16 %v5071, %v5067
  %v6908 = vpack.c.b16 %v5072, %v5068
  %v6909 = vpack.c.b16 %v5077, %v5073
  %v6910 = vpack.c.b16 %v5078, %v5074
  %v6911 = vpack.c.b16 %v5079, %v5075
  %v6912 = vpack.c.b16 %v5080, %v5076
  %v6913 = vpack.c.b16 %v5085, %v5081
  %v6914 = vpack.c.b16 %v5086, %v5082
  %v6915 = vpack.c.b16 %v5087, %v5083
  %v6916 = vpack.c.b16 %v5088, %v5084
  %v6917 = vpack.c.b16 %v5093, %v5089
  %v6918 = vpack.c.b16 %v5094, %v5090
  %v6919 = vpack.c.b16 %v5095, %v5091
  %v6920 = vpack.c.b16 %v5096, %v5092
  %v6921 = vpack.c.b16 %v5101, %v5097
  %v6922 = vpack.c.b16 %v5102, %v5098
  %v6923 = vpack.c.b16 %v5103, %v5099
  %v6924 = vpack.c.b16 %v5104, %v5100
  %v6925 = vpack.c.b16 %v5109, %v5105
  %v6926 = vpack.c.b16 %v5110, %v5106
  %v6927 = vpack.c.b16 %v5111, %v5107
  %v6928 = vpack.c.b16 %v5112, %v5108
  %v6929 = vpack.c.b16 %v5117, %v5113
  %v6930 = vpack.c.b16 %v5118, %v5114
  %v6931 = vpack.c.b16 %v5119, %v5115
  %v6932 = vpack.c.b16 %v5120, %v5116
  %v6933 = vpack.c.b16 %v5125, %v5121
  %v6934 = vpack.c.b16 %v5126, %v5122
  %v6935 = vpack.c.b16 %v5127, %v5123
  %v6936 = vpack.c.b16 %v5128, %v5124
  %v6937 = vpack.c.b16 %v5133, %v5129
  %v6938 = vpack.c.b16 %v5134, %v5130
  %v6939 = vpack.c.b16 %v5135, %v5131
  %v6940 = vpack.c.b16 %v5136, %v5132
  %v6941 = vpack.c.b16 %v5141, %v5137
  %v6942 = vpack.c.b16 %v5142, %v5138
  %v6943 = vpack.c.b16 %v5143, %v5139
  %v6944 = vpack.c.b16 %v5144, %v5140
  %v6945 = vpack.c.b16 %v5149, %v5145
  %v6946 = vpack.c.b16 %v5150, %v5146
  %v6947 = vpack.c.b16 %v5151, %v5147
  %v6948 = vpack.c.b16 %v5152, %v5148
  %v6949 = vpack.c.b16 %v5157, %v5153
  %v6950 = vpack.c.b16 %v5158, %v5154
  %v6951 = vpack.c.b16 %v5159, %v5155
  %v6952 = vpack.c.b16 %v5160, %v5156
  %v6953 = vpack.c.b16 %v5165, %v5161
  %v6954 = vpack.c.b16 %v5166, %v5162
  %v6955 = vpack.c.b16 %v5167, %v5163
  %v6956 = vpack.c.b16 %v5168, %v5164
  %v6957 = vpack.c.b16 %v5173, %v5169
  %v6958 = vpack.c.b16 %v5174, %v5170
  %v6959 = vpack.c.b16 %v5175, %v5171
  %v6960 = vpack.c.b16 %v5176, %v5172
  %v6961 = vpack.c.b16 %v5181, %v5177
  %v6962 = vpack.c.b16 %v5182, %v5178
  %v6963 = vpack.c.b16 %v5183, %v5179
  %v6964 = vpack.c.b16 %v5184, %v5180
  %v6965 = vpack.c.b16 %v5189, %v5185
  %v6966 = vpack.c.b16 %v5190, %v5186
  %v6967 = vpack.c.b16 %v5191, %v5187
  %v6968 = vpack.c.b16 %v5192, %v5188
  %v6969 = vpack.c.b16 %v5197, %v5193
  %v6970 = vpack.c.b16 %v5198, %v5194
  %v6971 = vpack.c.b16 %v5199, %v5195
  %v6972 = vpack.c.b16 %v5200, %v5196
  %v6973 = vpack.c.b16 %v5205, %v5201
  %v6974 = vpack.c.b16 %v5206, %v5202
  %v6975 = vpack.c.b16 %v5207, %v5203
  %v6976 = vpack.c.b16 %v5208, %v5204
  %v6977 = vpack.c.b16 %v5213, %v5209
  %v6978 = vpack.c.b16 %v5214, %v5210
  %v6979 = vpack.c.b16 %v5215, %v5211
  %v6980 = vpack.c.b16 %v5216, %v5212
  %v6981 = vpack.c.b16 %v5221, %v5217
  %v6982 = vpack.c.b16 %v5222, %v5218
  %v6983 = vpack.c.b16 %v5223, %v5219
  %v6984 = vpack.c.b16 %v5224, %v5220
  %v6985 = vpack.c.b16 %v5229, %v5225
  %v6986 = vpack.c.b16 %v5230, %v5226
  %v6987 = vpack.c.b16 %v5231, %v5227
  %v6988 = vpack.c.b16 %v5232, %v5228
  %v6989 = vpack.c.b16 %v5237, %v5233
  %v6990 = vpack.c.b16 %v5238, %v5234
  %v6991 = vpack.c.b16 %v5239, %v5235
  %v6992 = vpack.c.b16 %v5240, %v5236
  %v6993 = vpack.c.b16 %v5245, %v5241
  %v6994 = vpack.c.b16 %v5246, %v5242
  %v6995 = vpack.c.b16 %v5247, %v5243
  %v6996 = vpack.c.b16 %v5248, %v5244
  %v6997 = vpack.c.b16 %v5253, %v5249
  %v6998 = vpack.c.b16 %v5254, %v5250
  %v6999 = vpack.c.b16 %v5255, %v5251
  %v7000 = vpack.c.b16 %v5256, %v5252
  %v7001 = vpack.c.b16 %v5261, %v5257
  %v7002 = vpack.c.b16 %v5262, %v5258
  %v7003 = vpack.c.b16 %v5263, %v5259
  %v7004 = vpack.c.b16 %v5264, %v5260
  %v7005 = vpack.c.b16 %v5269, %v5265
  %v7006 = vpack.c.b16 %v5270, %v5266
  %v7007 = vpack.c.b16 %v5271, %v5267
  %v7008 = vpack.c.b16 %v5272, %v5268
  %v7009 = vpack.c.b16 %v5277, %v5273
  %v7010 = vpack.c.b16 %v5278, %v5274
  %v7011 = vpack.c.b16 %v5279, %v5275
  %v7012 = vpack.c.b16 %v5280, %v5276
  %v7013 = vpack.c.b16 %v5285, %v5281
  %v7014 = vpack.c.b16 %v5286, %v5282
  %v7015 = vpack.c.b16 %v5287, %v5283
  %v7016 = vpack.c.b16 %v5288, %v5284
  %v7017 = vpack.c.b16 %v5293, %v5289
  %v7018 = vpack.c.b16 %v5294, %v5290
  %v7019 = vpack.c.b16 %v5295, %v5291
  %v7020 = vpack.c.b16 %v5296, %v5292
  %v7021 = vpack.c.b16 %v5301, %v5297
  %v7022 = vpack.c.b16 %v5302, %v5298
  %v7023 = vpack.c.b16 %v5303, %v5299
  %v7024 = vpack.c.b16 %v5304, %v5300
  %v7025 = vpack.c.b16 %v5309, %v5305
  %v7026 = vpack.c.b16 %v5310, %v5306
  %v7027 = vpack.c.b16 %v5311, %v5307
  %v7028 = vpack.c.b16 %v5312, %v5308
  %v7029 = vpack.c.b16 %v5317, %v5313
  %v7030 = vpack.c.b16 %v5318, %v5314
  %v7031 = vpack.c.b16 %v5319, %v5315
  %v7032 = vpack.c.b16 %v5320, %v5316
  %v7033 = vpack.c.b16 %v5325, %v5321
  %v7034 = vpack.c.b16 %v5326, %v5322
  %v7035 = vpack.c.b16 %v5327, %v5323
  %v7036 = vpack.c.b16 %v5328, %v5324
  %v7037 = vpack.c.b16 %v5333, %v5329
  %v7038 = vpack.c.b16 %v5334, %v5330
  %v7039 = vpack.c.b16 %v5335, %v5331
  %v7040 = vpack.c.b16 %v5336, %v5332
  %v7041 = vpack.c.b16 %v5341, %v5337
  %v7042 = vpack.c.b16 %v5342, %v5338
  %v7043 = vpack.c.b16 %v5343, %v5339
  %v7044 = vpack.c.b16 %v5344, %v5340
  %v7045 = vpack.c.b16 %v5349, %v5345
  %v7046 = vpack.c.b16 %v5350, %v5346
  %v7047 = vpack.c.b16 %v5351, %v5347
  %v7048 = vpack.c.b16 %v5352, %v5348
  %v7049 = vpack.c.b16 %v5357, %v5353
  %v7050 = vpack.c.b16 %v5358, %v5354
  %v7051 = vpack.c.b16 %v5359, %v5355
  %v7052 = vpack.c.b16 %v5360, %v5356
  %v7053 = vpack.c.b16 %v5365, %v5361
  %v7054 = vpack.c.b16 %v5366, %v5362
  %v7055 = vpack.c.b16 %v5367, %v5363
  %v7056 = vpack.c.b16 %v5368, %v5364
  %v7057 = vpack.c.b16 %v5373, %v5369
  %v7058 = vpack.c.b16 %v5374, %v5370
  %v7059 = vpack.c.b16 %v5375, %v5371
  %v7060 = vpack.c.b16 %v5376, %v5372
  %v7061 = vpack.c.b16 %v5381, %v5377
  %v7062 = vpack.c.b16 %v5382, %v5378
  %v7063 = vpack.c.b16 %v5383, %v5379
  %v7064 = vpack.c.b16 %v5384, %v5380
  %v7065 = vpack.c.b16 %v5389, %v5385
  %v7066 = vpack.c.b16 %v5390, %v5386
  %v7067 = vpack.c.b16 %v5391, %v5387
  %v7068 = vpack.c.b16 %v5392, %v5388
  %v7069 = vpack.c.b16 %v5397, %v5393
  %v7070 = vpack.c.b16 %v5398, %v5394
  %v7071 = vpack.c.b16 %v5399, %v5395
  %v7072 = vpack.c.b16 %v5400, %v5396
  %v7073 = vpack.c.b16 %v5405, %v5401
  %v7074 = vpack.c.b16 %v5406, %v5402
  %v7075 = vpack.c.b16 %v5407, %v5403
  %v7076 = vpack.c.b16 %v5408, %v5404
  %v7077 = vpack.c.b16 %v5413, %v5409
  %v7078 = vpack.c.b16 %v5414, %v5410
  %v7079 = vpack.c.b16 %v5415, %v5411
  %v7080 = vpack.c.b16 %v5416, %v5412
  %v7081 = vpack.c.b16 %v5421, %v5417
  %v7082 = vpack.c.b16 %v5422, %v5418
  %v7083 = vpack.c.b16 %v5423, %v5419
  %v7084 = vpack.c.b16 %v5424, %v5420
  %v7085 = vpack.c.b16 %v5429, %v5425
  %v7086 = vpack.c.b16 %v5430, %v5426
  %v7087 = vpack.c.b16 %v5431, %v5427
  %v7088 = vpack.c.b16 %v5432, %v5428
  %v7089 = vpack.c.b16 %v5437, %v5433
  %v7090 = vpack.c.b16 %v5438, %v5434
  %v7091 = vpack.c.b16 %v5439, %v5435
  %v7092 = vpack.c.b16 %v5440, %v5436
  %v7093 = vpack.c.b16 %v5445, %v5441
  %v7094 = vpack.c.b16 %v5446, %v5442
  %v7095 = vpack.c.b16 %v5447, %v5443
  %v7096 = vpack.c.b16 %v5448, %v5444
  %v7097 = vpack.c.b16 %v5453, %v5449
  %v7098 = vpack.c.b16 %v5454, %v5450
  %v7099 = vpack.c.b16 %v5455, %v5451
  %v7100 = vpack.c.b16 %v5456, %v5452
  %v7101 = vpack.c.b16 %v5461, %v5457
  %v7102 = vpack.c.b16 %v5462, %v5458
  %v7103 = vpack.c.b16 %v5463, %v5459
  %v7104 = vpack.c.b16 %v5464, %v5460
  %v7105 = vpack.c.b16 %v5469, %v5465
  %v7106 = vpack.c.b16 %v5470, %v5466
  %v7107 = vpack.c.b16 %v5471, %v5467
  %v7108 = vpack.c.b16 %v5472, %v5468
  %v7109 = vpack.c.b16 %v5477, %v5473
  %v7110 = vpack.c.b16 %v5478, %v5474
  %v7111 = vpack.c.b16 %v5479, %v5475
  %v7112 = vpack.c.b16 %v5480, %v5476
  %v7113 = vpack.c.b16 %v5485, %v5481
  %v7114 = vpack.c.b16 %v5486, %v5482
  %v7115 = vpack.c.b16 %v5487, %v5483
  %v7116 = vpack.c.b16 %v5488, %v5484
  %v7117 = vpack.c.b16 %v5493, %v5489
  %v7118 = vpack.c.b16 %v5494, %v5490
  %v7119 = vpack.c.b16 %v5495, %v5491
  %v7120 = vpack.c.b16 %v5496, %v5492
  %v7121 = vpack.c.b16 %v5501, %v5497
  %v7122 = vpack.c.b16 %v5502, %v5498
  %v7123 = vpack.c.b16 %v5503, %v5499
  %v7124 = vpack.c.b16 %v5504, %v5500
  %v7125 = vpack.c.b16 %v5509, %v5505
  %v7126 = vpack.c.b16 %v5510, %v5506
  %v7127 = vpack.c.b16 %v5511, %v5507
  %v7128 = vpack.c.b16 %v5512, %v5508
  %v7129 = vpack.c.b16 %v5517, %v5513
  %v7130 = vpack.c.b16 %v5518, %v5514
  %v7131 = vpack.c.b16 %v5519, %v5515
  %v7132 = vpack.c.b16 %v5520, %v5516
  %v7133 = vpack.c.b16 %v5525, %v5521
  %v7134 = vpack.c.b16 %v5526, %v5522
  %v7135 = vpack.c.b16 %v5527, %v5523
  %v7136 = vpack.c.b16 %v5528, %v5524
  %v7137 = vpack.c.b16 %v5533, %v5529
  %v7138 = vpack.c.b16 %v5534, %v5530
  %v7139 = vpack.c.b16 %v5535, %v5531
  %v7140 = vpack.c.b16 %v5536, %v5532
  %v7141 = vpack.c.b16 %v5541, %v5537
  %v7142 = vpack.c.b16 %v5542, %v5538
  %v7143 = vpack.c.b16 %v5543, %v5539
  %v7144 = vpack.c.b16 %v5544, %v5540
  %v7145 = vpack.c.b16 %v5549, %v5545
  %v7146 = vpack.c.b16 %v5550, %v5546
  %v7147 = vpack.c.b16 %v5551, %v5547
  %v7148 = vpack.c.b16 %v5552, %v5548
  %v7149 = vpack.c.b16 %v5557, %v5553
  %v7150 = vpack.c.b16 %v5558, %v5554
  %v7151 = vpack.c.b16 %v5559, %v5555
  %v7152 = vpack.c.b16 %v5560, %v5556
  %v7153 = vpack.c.b16 %v5565, %v5561
  %v7154 = vpack.c.b16 %v5566, %v5562
  %v7155 = vpack.c.b16 %v5567, %v5563
  %v7156 = vpack.c.b16 %v5568, %v5564
  %v7157 = vpack.c.b16 %v5573, %v5569
  %v7158 = vpack.c.b16 %v5574, %v5570
  %v7159 = vpack.c.b16 %v5575, %v5571
  %v7160 = vpack.c.b16 %v5576, %v5572
  %v7161 = vpack.c.b16 %v5581, %v5577
  %v7162 = vpack.c.b16 %v5582, %v5578
  %v7163 = vpack.c.b16 %v5583, %v5579
  %v7164 = vpack.c.b16 %v5584, %v5580
  %v7165 = vpack.c.b16 %v5589, %v5585
  %v7166 = vpack.c.b16 %v5590, %v5586
  %v7167 = vpack.c.b16 %v5591, %v5587
  %v7168 = vpack.c.b16 %v5592, %v5588
  %v7169 = vpack.c.b16 %v5597, %v5593
  %v7170 = vpack.c.b16 %v5598, %v5594
  %v7171 = vpack.c.b16 %v5599, %v5595
  %v7172 = vpack.c.b16 %v5600, %v5596
  %v7173 = vpack.c.b16 %v5605, %v5601
  %v7174 = vpack.c.b16 %v5606, %v5602
  %v7175 = vpack.c.b16 %v5607, %v5603
  %v7176 = vpack.c.b16 %v5608, %v5604
  %v7177 = vpack.c.b16 %v5613, %v5609
  %v7178 = vpack.c.b16 %v5614, %v5610
  %v7179 = vpack.c.b16 %v5615, %v5611
  %v7180 = vpack.c.b16 %v5616, %v5612
  %v7181 = vpack.c.b16 %v5621, %v5617
  %v7182 = vpack.c.b16 %v5622, %v5618
  %v7183 = vpack.c.b16 %v5623, %v5619
  %v7184 = vpack.c.b16 %v5624, %v5620
  %v7185 = vpack.c.b16 %v5629, %v5625
  %v7186 = vpack.c.b16 %v5630, %v5626
  %v7187 = vpack.c.b16 %v5631, %v5627
  %v7188 = vpack.c.b16 %v5632, %v5628
  %v7189 = vpack.c.b16 %v5637, %v5633
  %v7190 = vpack.c.b16 %v5638, %v5634
  %v7191 = vpack.c.b16 %v5639, %v5635
  %v7192 = vpack.c.b16 %v5640, %v5636
  %v7193 = vpack.c.b16 %v5645, %v5641
  %v7194 = vpack.c.b16 %v5646, %v5642
  %v7195 = vpack.c.b16 %v5647, %v5643
  %v7196 = vpack.c.b16 %v5648, %v5644
  %v7197 = vpack.c.b16 %v5653, %v5649
  %v7198 = vpack.c.b16 %v5654, %v5650
  %v7199 = vpack.c.b16 %v5655, %v5651
  %v7200 = vpack.c.b16 %v5656, %v5652
  %v7201 = vpack.c.b16 %v5661, %v5657
  %v7202 = vpack.c.b16 %v5662, %v5658
  %v7203 = vpack.c.b16 %v5663, %v5659
  %v7204 = vpack.c.b16 %v5664, %v5660
  %v7205 = vpack.c.b16 %v5669, %v5665
  %v7206 = vpack.c.b16 %v5670, %v5666
  %v7207 = vpack.c.b16 %v5671, %v5667
  %v7208 = vpack.c.b16 %v5672, %v5668
  %v7209 = vpack.c.b16 %v5677, %v5673
  %v7210 = vpack.c.b16 %v5678, %v5674
  %v7211 = vpack.c.b16 %v5679, %v5675
  %v7212 = vpack.c.b16 %v5680, %v5676
  %v7213 = vpack.c.b16 %v5685, %v5681
  %v7214 = vpack.c.b16 %v5686, %v5682
  %v7215 = vpack.c.b16 %v5687, %v5683
  %v7216 = vpack.c.b16 %v5688, %v5684
  %v7217 = vpack.c.b16 %v5693, %v5689
  %v7218 = vpack.c.b16 %v5694, %v5690
  %v7219 = vpack.c.b16 %v5695, %v5691
  %v7220 = vpack.c.b16 %v5696, %v5692
  %v7221 = vpack.c.b16 %v5701, %v5697
  %v7222 = vpack.c.b16 %v5702, %v5698
  %v7223 = vpack.c.b16 %v5703, %v5699
  %v7224 = vpack.c.b16 %v5704, %v5700
  %v7225 = vpack.c.b16 %v5709, %v5705
  %v7226 = vpack.c.b16 %v5710, %v5706
  %v7227 = vpack.c.b16 %v5711, %v5707
  %v7228 = vpack.c.b16 %v5712, %v5708
  %v7229 = vpack.c.b16 %v5717, %v5713
  %v7230 = vpack.c.b16 %v5718, %v5714
  %v7231 = vpack.c.b16 %v5719, %v5715
  %v7232 = vpack.c.b16 %v5720, %v5716
  %v7233 = vpack.c.b16 %v5725, %v5721
  %v7234 = vpack.c.b16 %v5726, %v5722
  %v7235 = vpack.c.b16 %v5727, %v5723
  %v7236 = vpack.c.b16 %v5728, %v5724
  %v7237 = vpack.c.b16 %v5733, %v5729
  %v7238 = vpack.c.b16 %v5734, %v5730
  %v7239 = vpack.c.b16 %v5735, %v5731
  %v7240 = vpack.c.b16 %v5736, %v5732
  %v7241 = vpack.c.b16 %v5741, %v5737
  %v7242 = vpack.c.b16 %v5742, %v5738
  %v7243 = vpack.c.b16 %v5743, %v5739
  %v7244 = vpack.c.b16 %v5744, %v5740
  %v7245 = vpack.c.b16 %v5749, %v5745
  %v7246 = vpack.c.b16 %v5750, %v5746
  %v7247 = vpack.c.b16 %v5751, %v5747
  %v7248 = vpack.c.b16 %v5752, %v5748
  %v7249 = vpack.c.b16 %v5757, %v5753
  %v7250 = vpack.c.b16 %v5758, %v5754
  %v7251 = vpack.c.b16 %v5759, %v5755
  %v7252 = vpack.c.b16 %v5760, %v5756
  %v7253 = vpack.c.b16 %v5765, %v5761
  %v7254 = vpack.c.b16 %v5766, %v5762
  %v7255 = vpack.c.b16 %v5767, %v5763
  %v7256 = vpack.c.b16 %v5768, %v5764
  %v7257 = vpack.c.b16 %v5773, %v5769
  %v7258 = vpack.c.b16 %v5774, %v5770
  %v7259 = vpack.c.b16 %v5775, %v5771
  %v7260 = vpack.c.b16 %v5776, %v5772
  %v7261 = vpack.c.b16 %v5781, %v5777
  %v7262 = vpack.c.b16 %v5782, %v5778
  %v7263 = vpack.c.b16 %v5783, %v5779
  %v7264 = vpack.c.b16 %v5784, %v5780
  %v7265 = vpack.c.b16 %v5789, %v5785
  %v7266 = vpack.c.b16 %v5790, %v5786
  %v7267 = vpack.c.b16 %v5791, %v5787
  %v7268 = vpack.c.b16 %v5792, %v5788
  %v7269 = vpack.c.b16 %v5797, %v5793
  %v7270 = vpack.c.b16 %v5798, %v5794
  %v7271 = vpack.c.b16 %v5799, %v5795
  %v7272 = vpack.c.b16 %v5800, %v5796
  %v7273 = vpack.c.b16 %v5805, %v5801
  %v7274 = vpack.c.b16 %v5806, %v5802
  %v7275 = vpack.c.b16 %v5807, %v5803
  %v7276 = vpack.c.b16 %v5808, %v5804
  %v7277 = vpack.c.b16 %v5813, %v5809
  %v7278 = vpack.c.b16 %v5814, %v5810
  %v7279 = vpack.c.b16 %v5815, %v5811
  %v7280 = vpack.c.b16 %v5816, %v5812
  %v7281 = vpack.c.b16 %v5821, %v5817
  %v7282 = vpack.c.b16 %v5822, %v5818
  %v7283 = vpack.c.b16 %v5823, %v5819
  %v7284 = vpack.c.b16 %v5824, %v5820
  %v7285 = vpack.c.b16 %v5829, %v5825
  %v7286 = vpack.c.b16 %v5830, %v5826
  %v7287 = vpack.c.b16 %v5831, %v5827
  %v7288 = vpack.c.b16 %v5832, %v5828
  %v7289 = vpack.c.b16 %v5837, %v5833
  %v7290 = vpack.c.b16 %v5838, %v5834
  %v7291 = vpack.c.b16 %v5839, %v5835
  %v7292 = vpack.c.b16 %v5840, %v5836
  %v7293 = vpack.c.b16 %v5845, %v5841
  %v7294 = vpack.c.b16 %v5846, %v5842
  %v7295 = vpack.c.b16 %v5847, %v5843
  %v7296 = vpack.c.b16 %v5848, %v5844
  %v7297 = vpack.c.b16 %v5853, %v5849
  %v7298 = vpack.c.b16 %v5854, %v5850
  %v7299 = vpack.c.b16 %v5855, %v5851
  %v7300 = vpack.c.b16 %v5856, %v5852
  %v7301 = vpack.c.b16 %v5861, %v5857
  %v7302 = vpack.c.b16 %v5862, %v5858
  %v7303 = vpack.c.b16 %v5863, %v5859
  %v7304 = vpack.c.b16 %v5864, %v5860
  %8745 = vmatprep.subr.bf16.mxu0 %v5866
  %8746 = vmatpush1.bf16.msra.mxu0 %v5865
  %8747 = vmatprep.subr.bf16.mxu0 %v5870
  %8748 = vmatpush1.bf16.msra.mxu0 %v5869
  %8749 = vmatprep.subr.bf16.mxu0 %v5874
  %8750 = vmatpush1.bf16.msra.mxu0 %v5873
  %8751 = vmatprep.subr.bf16.mxu0 %v5878
  %8752 = vmatpush1.bf16.msra.mxu0 %v5877
  %8753 = vmatprep.subr.bf16.mxu0 %v5882
  %8754 = vmatpush1.bf16.msra.mxu0 %v5881
  %8755 = vmatprep.subr.bf16.mxu0 %v5886
  %8756 = vmatpush1.bf16.msra.mxu0 %v5885
  %8757 = vmatprep.subr.bf16.mxu0 %v5890
  %8758 = vmatpush1.bf16.msra.mxu0 %v5889
  %8759 = vmatprep.subr.bf16.mxu0 %v5894
  %8760 = vmatpush1.bf16.msra.mxu0 %v5893
  %8761 = vmatprep.subr.bf16.mxu0 %v5898
  %8762 = vmatpush1.bf16.msra.mxu0 %v5897
  %8763 = vmatprep.subr.bf16.mxu0 %v5902
  %8764 = vmatpush1.bf16.msra.mxu0 %v5901
  %8765 = vmatprep.subr.bf16.mxu0 %v5906
  %8766 = vmatpush1.bf16.msra.mxu0 %v5905
  %8767 = vmatprep.subr.bf16.mxu0 %v5910
  %8768 = vmatpush1.bf16.msra.mxu0 %v5909
  %8769 = vmatprep.subr.bf16.mxu0 %v5914
  %8770 = vmatpush1.bf16.msra.mxu0 %v5913
  %8771 = vmatprep.subr.bf16.mxu0 %v5918
  %8772 = vmatpush1.bf16.msra.mxu0 %v5917
  %8773 = vmatprep.subr.bf16.mxu0 %v5922
  %8774 = vmatpush1.bf16.msra.mxu0 %v5921
  %8775 = vmatprep.subr.bf16.mxu0 %v5926
  %8776 = vmatpush1.bf16.msra.mxu0 %v5925
  %8777 = vmatprep.mubr.bf16.mxu0 %v61
  %8778 = vmatmul.mubr.bf16.gmra.mrb[0].mxu0 %v60
  %v8779 = vpop.f32.mrb[0].mxu0
  %v8780 = vadd.f32 0.0, %v8779
  %v8781 = vpop.f32.mrb[0].mxu0
  %v8782 = vadd.f32 0.0, %v8781
  %v8783 = vpop.f32.mrb[0].mxu0
  %v8784 = vpop.f32.mrb[0].mxu0
  %8785 = vdwg.mxu0
  %8786 = vmatprep.subr.bf16.mxu0 %v5930
  %8787 = vmatpush1.bf16.msra.mxu0 %v5929
  %8788 = vmatprep.subr.bf16.mxu0 %v5934
  %8789 = vmatpush1.bf16.msra.mxu0 %v5933
  %8790 = vmatprep.subr.bf16.mxu0 %v5938
  %8791 = vmatpush1.bf16.msra.mxu0 %v5937
  %8792 = vmatprep.subr.bf16.mxu0 %v5942
  %8793 = vmatpush1.bf16.msra.mxu0 %v5941
  %8794 = vmatprep.subr.bf16.mxu0 %v5946
  %8795 = vmatpush1.bf16.msra.mxu0 %v5945
  %8796 = vmatprep.subr.bf16.mxu0 %v5950
  %8797 = vmatpush1.bf16.msra.mxu0 %v5949
  %8798 = vmatprep.subr.bf16.mxu0 %v5954
  %8799 = vmatpush1.bf16.msra.mxu0 %v5953
  %8800 = vmatprep.subr.bf16.mxu0 %v5958
  %8801 = vmatpush1.bf16.msra.mxu0 %v5957
  %8802 = vmatprep.subr.bf16.mxu0 %v5962
  %8803 = vmatpush1.bf16.msra.mxu0 %v5961
  %8804 = vmatprep.subr.bf16.mxu0 %v5966
  %8805 = vmatpush1.bf16.msra.mxu0 %v5965
  %8806 = vmatprep.subr.bf16.mxu0 %v5970
  %8807 = vmatpush1.bf16.msra.mxu0 %v5969
  %8808 = vmatprep.subr.bf16.mxu0 %v5974
  %8809 = vmatpush1.bf16.msra.mxu0 %v5973
  %8810 = vmatprep.subr.bf16.mxu0 %v5978
  %8811 = vmatpush1.bf16.msra.mxu0 %v5977
  %8812 = vmatprep.subr.bf16.mxu0 %v5982
  %8813 = vmatpush1.bf16.msra.mxu0 %v5981
  %8814 = vmatprep.subr.bf16.mxu0 %v5986
  %8815 = vmatpush1.bf16.msra.mxu0 %v5985
  %8816 = vmatprep.subr.bf16.mxu0 %v5990
  %8817 = vmatpush1.bf16.msra.mxu0 %v5989
  %8818 = vmatprep.mubr.bf16.mxu0 %v63
  %8819 = vmatmul.mubr.bf16.gmra.mrb[0].mxu0 %v62
  %v8820 = vpop.f32.mrb[0].mxu0
  %v8821 = vadd.f32 %v8780, %v8820
  %v8822 = vpop.f32.mrb[0].mxu0
  %v8823 = vadd.f32 %v8782, %v8822
  %v8824 = vpop.f32.mrb[0].mxu0
  %v8825 = vpop.f32.mrb[0].mxu0
  %8826 = vdwg.mxu0
  %8827 = vmatprep.subr.bf16.mxu0 %v5994
  %8828 = vmatpush1.bf16.msra.mxu0 %v5993
  %8829 = vmatprep.subr.bf16.mxu0 %v5998
  %8830 = vmatpush1.bf16.msra.mxu0 %v5997
  %8831 = vmatprep.subr.bf16.mxu0 %v6002
  %8832 = vmatpush1.bf16.msra.mxu0 %v6001
  %8833 = vmatprep.subr.bf16.mxu0 %v6006
  %8834 = vmatpush1.bf16.msra.mxu0 %v6005
  %8835 = vmatprep.subr.bf16.mxu0 %v6010
  %8836 = vmatpush1.bf16.msra.mxu0 %v6009
  %8837 = vmatprep.subr.bf16.mxu0 %v6014
  %8838 = vmatpush1.bf16.msra.mxu0 %v6013
  %8839 = vmatprep.subr.bf16.mxu0 %v6018
  %8840 = vmatpush1.bf16.msra.mxu0 %v6017
  %8841 = vmatprep.subr.bf16.mxu0 %v6022
  %8842 = vmatpush1.bf16.msra.mxu0 %v6021
  %8843 = vmatprep.subr.bf16.mxu0 %v6026
  %8844 = vmatpush1.bf16.msra.mxu0 %v6025
  %8845 = vmatprep.subr.bf16.mxu0 %v6030
  %8846 = vmatpush1.bf16.msra.mxu0 %v6029
  %8847 = vmatprep.subr.bf16.mxu0 %v6034
  %8848 = vmatpush1.bf16.msra.mxu0 %v6033
  %8849 = vmatprep.subr.bf16.mxu0 %v6038
  %8850 = vmatpush1.bf16.msra.mxu0 %v6037
  %8851 = vmatprep.subr.bf16.mxu0 %v6042
  %8852 = vmatpush1.bf16.msra.mxu0 %v6041
  %8853 = vmatprep.subr.bf16.mxu0 %v6046
  %8854 = vmatpush1.bf16.msra.mxu0 %v6045
  %8855 = vmatprep.subr.bf16.mxu0 %v6050
  %8856 = vmatpush1.bf16.msra.mxu0 %v6049
  %8857 = vmatprep.subr.bf16.mxu0 %v6054
  %8858 = vmatpush1.bf16.msra.mxu0 %v6053
  %8859 = vmatprep.mubr.bf16.mxu0 %v65
  %8860 = vmatmul.mubr.bf16.gmra.mrb[0].mxu0 %v64
  %v8861 = vpop.f32.mrb[0].mxu0
  %v8862 = vadd.f32 %v8821, %v8861
  %v8863 = vpop.f32.mrb[0].mxu0
  %v8864 = vadd.f32 %v8823, %v8863
  %v8865 = vpop.f32.mrb[0].mxu0
  %v8866 = vpop.f32.mrb[0].mxu0
  %8867 = vdwg.mxu0
  %8868 = vmatprep.subr.bf16.mxu0 %v6058
  %8869 = vmatpush1.bf16.msra.mxu0 %v6057
  %8870 = vmatprep.subr.bf16.mxu0 %v6062
  %8871 = vmatpush1.bf16.msra.mxu0 %v6061
  %8872 = vmatprep.subr.bf16.mxu0 %v6066
  %8873 = vmatpush1.bf16.msra.mxu0 %v6065
  %8874 = vmatprep.subr.bf16.mxu0 %v6070
  %8875 = vmatpush1.bf16.msra.mxu0 %v6069
  %8876 = vmatprep.subr.bf16.mxu0 %v6074
  %8877 = vmatpush1.bf16.msra.mxu0 %v6073
  %8878 = vmatprep.subr.bf16.mxu0 %v6078
  %8879 = vmatpush1.bf16.msra.mxu0 %v6077
  %8880 = vmatprep.subr.bf16.mxu0 %v6082
  %8881 = vmatpush1.bf16.msra.mxu0 %v6081
  %8882 = vmatprep.subr.bf16.mxu0 %v6086
  %8883 = vmatpush1.bf16.msra.mxu0 %v6085
  %8884 = vmatprep.subr.bf16.mxu0 %v6090
  %8885 = vmatpush1.bf16.msra.mxu0 %v6089
  %8886 = vmatprep.subr.bf16.mxu0 %v6094
  %8887 = vmatpush1.bf16.msra.mxu0 %v6093
  %8888 = vmatprep.subr.bf16.mxu0 %v6098
  %8889 = vmatpush1.bf16.msra.mxu0 %v6097
  %8890 = vmatprep.subr.bf16.mxu0 %v6102
  %8891 = vmatpush1.bf16.msra.mxu0 %v6101
  %8892 = vmatprep.subr.bf16.mxu0 %v6106
  %8893 = vmatpush1.bf16.msra.mxu0 %v6105
  %8894 = vmatprep.subr.bf16.mxu0 %v6110
  %8895 = vmatpush1.bf16.msra.mxu0 %v6109
  %8896 = vmatprep.subr.bf16.mxu0 %v6114
  %8897 = vmatpush1.bf16.msra.mxu0 %v6113
  %8898 = vmatprep.subr.bf16.mxu0 %v6118
  %8899 = vmatpush1.bf16.msra.mxu0 %v6117
  %8900 = vmatprep.mubr.bf16.mxu0 %v67
  %8901 = vmatmul.mubr.bf16.gmra.mrb[0].mxu0 %v66
  %v8902 = vpop.f32.mrb[0].mxu0
  %v8903 = vadd.f32 %v8862, %v8902
  %v8904 = vpop.f32.mrb[0].mxu0
  %v8905 = vadd.f32 %v8864, %v8904
  %v8906 = vpop.f32.mrb[0].mxu0
  %v8907 = vpop.f32.mrb[0].mxu0
  %8908 = vdwg.mxu0
  %8909 = vmatprep.subr.bf16.mxu0 %v6122
  %8910 = vmatpush1.bf16.msra.mxu0 %v6121
  %8911 = vmatprep.subr.bf16.mxu0 %v6126
  %8912 = vmatpush1.bf16.msra.mxu0 %v6125
  %8913 = vmatprep.subr.bf16.mxu0 %v6130
  %8914 = vmatpush1.bf16.msra.mxu0 %v6129
  %8915 = vmatprep.subr.bf16.mxu0 %v6134
  %8916 = vmatpush1.bf16.msra.mxu0 %v6133
  %8917 = vmatprep.subr.bf16.mxu0 %v6138
  %8918 = vmatpush1.bf16.msra.mxu0 %v6137
  %8919 = vmatprep.subr.bf16.mxu0 %v6142
  %8920 = vmatpush1.bf16.msra.mxu0 %v6141
  %8921 = vmatprep.subr.bf16.mxu0 %v6146
  %8922 = vmatpush1.bf16.msra.mxu0 %v6145
  %8923 = vmatprep.subr.bf16.mxu0 %v6150
  %8924 = vmatpush1.bf16.msra.mxu0 %v6149
  %8925 = vmatprep.subr.bf16.mxu0 %v6154
  %8926 = vmatpush1.bf16.msra.mxu0 %v6153
  %8927 = vmatprep.subr.bf16.mxu0 %v6158
  %8928 = vmatpush1.bf16.msra.mxu0 %v6157
  %8929 = vmatprep.subr.bf16.mxu0 %v6162
  %8930 = vmatpush1.bf16.msra.mxu0 %v6161
  %8931 = vmatprep.subr.bf16.mxu0 %v6166
  %8932 = vmatpush1.bf16.msra.mxu0 %v6165
  %8933 = vmatprep.subr.bf16.mxu0 %v6170
  %8934 = vmatpush1.bf16.msra.mxu0 %v6169
  %8935 = vmatprep.subr.bf16.mxu0 %v6174
  %8936 = vmatpush1.bf16.msra.mxu0 %v6173
  %8937 = vmatprep.subr.bf16.mxu0 %v6178
  %8938 = vmatpush1.bf16.msra.mxu0 %v6177
  %8939 = vmatprep.subr.bf16.mxu0 %v6182
  %8940 = vmatpush1.bf16.msra.mxu0 %v6181
  %8941 = vmatprep.mubr.bf16.mxu0 %v69
  %8942 = vmatmul.mubr.bf16.gmra.mrb[0].mxu0 %v68
  %v8943 = vpop.f32.mrb[0].mxu0
  %v8944 = vadd.f32 %v8903, %v8943
  %v8945 = vpop.f32.mrb[0].mxu0
  %v8946 = vadd.f32 %v8905, %v8945
  %v8947 = vpop.f32.mrb[0].mxu0
  %v8948 = vpop.f32.mrb[0].mxu0
  %8949 = vdwg.mxu0
  %8950 = vmatprep.subr.bf16.mxu0 %v6186
  %8951 = vmatpush1.bf16.msra.mxu0 %v6185
  %8952 = vmatprep.subr.bf16.mxu0 %v6190
  %8953 = vmatpush1.bf16.msra.mxu0 %v6189
  %8954 = vmatprep.subr.bf16.mxu0 %v6194
  %8955 = vmatpush1.bf16.msra.mxu0 %v6193
  %8956 = vmatprep.subr.bf16.mxu0 %v6198
  %8957 = vmatpush1.bf16.msra.mxu0 %v6197
  %8958 = vmatprep.subr.bf16.mxu0 %v6202
  %8959 = vmatpush1.bf16.msra.mxu0 %v6201
  %8960 = vmatprep.subr.bf16.mxu0 %v6206
  %8961 = vmatpush1.bf16.msra.mxu0 %v6205
  %8962 = vmatprep.subr.bf16.mxu0 %v6210
  %8963 = vmatpush1.bf16.msra.mxu0 %v6209
  %8964 = vmatprep.subr.bf16.mxu0 %v6214
  %8965 = vmatpush1.bf16.msra.mxu0 %v6213
  %8966 = vmatprep.subr.bf16.mxu0 %v6218
  %8967 = vmatpush1.bf16.msra.mxu0 %v6217
  %8968 = vmatprep.subr.bf16.mxu0 %v6222
  %8969 = vmatpush1.bf16.msra.mxu0 %v6221
  %8970 = vmatprep.subr.bf16.mxu0 %v6226
  %8971 = vmatpush1.bf16.msra.mxu0 %v6225
  %8972 = vmatprep.subr.bf16.mxu0 %v6230
  %8973 = vmatpush1.bf16.msra.mxu0 %v6229
  %8974 = vmatprep.subr.bf16.mxu0 %v6234
  %8975 = vmatpush1.bf16.msra.mxu0 %v6233
  %8976 = vmatprep.subr.bf16.mxu0 %v6238
  %8977 = vmatpush1.bf16.msra.mxu0 %v6237
  %8978 = vmatprep.subr.bf16.mxu0 %v6242
  %8979 = vmatpush1.bf16.msra.mxu0 %v6241
  %8980 = vmatprep.subr.bf16.mxu0 %v6246
  %8981 = vmatpush1.bf16.msra.mxu0 %v6245
  %8982 = vmatprep.mubr.bf16.mxu0 %v71
  %8983 = vmatmul.mubr.bf16.gmra.mrb[0].mxu0 %v70
  %v8984 = vpop.f32.mrb[0].mxu0
  %v8985 = vadd.f32 %v8944, %v8984
  %v8986 = vpop.f32.mrb[0].mxu0
  %v8987 = vadd.f32 %v8946, %v8986
  %v8988 = vpop.f32.mrb[0].mxu0
  %v8989 = vpop.f32.mrb[0].mxu0
  %8990 = vdwg.mxu0
  %8991 = vmatprep.subr.bf16.mxu0 %v6250
  %8992 = vmatpush1.bf16.msra.mxu0 %v6249
  %8993 = vmatprep.subr.bf16.mxu0 %v6254
  %8994 = vmatpush1.bf16.msra.mxu0 %v6253
  %8995 = vmatprep.subr.bf16.mxu0 %v6258
  %8996 = vmatpush1.bf16.msra.mxu0 %v6257
  %8997 = vmatprep.subr.bf16.mxu0 %v6262
  %8998 = vmatpush1.bf16.msra.mxu0 %v6261
  %8999 = vmatprep.subr.bf16.mxu0 %v6266
  %9000 = vmatpush1.bf16.msra.mxu0 %v6265
  %9001 = vmatprep.subr.bf16.mxu0 %v6270
  %9002 = vmatpush1.bf16.msra.mxu0 %v6269
  %9003 = vmatprep.subr.bf16.mxu0 %v6274
  %9004 = vmatpush1.bf16.msra.mxu0 %v6273
  %9005 = vmatprep.subr.bf16.mxu0 %v6278
  %9006 = vmatpush1.bf16.msra.mxu0 %v6277
  %9007 = vmatprep.subr.bf16.mxu0 %v6282
  %9008 = vmatpush1.bf16.msra.mxu0 %v6281
  %9009 = vmatprep.subr.bf16.mxu0 %v6286
  %9010 = vmatpush1.bf16.msra.mxu0 %v6285
  %9011 = vmatprep.subr.bf16.mxu0 %v6290
  %9012 = vmatpush1.bf16.msra.mxu0 %v6289
  %9013 = vmatprep.subr.bf16.mxu0 %v6294
  %9014 = vmatpush1.bf16.msra.mxu0 %v6293
  %9015 = vmatprep.subr.bf16.mxu0 %v6298
  %9016 = vmatpush1.bf16.msra.mxu0 %v6297
  %9017 = vmatprep.subr.bf16.mxu0 %v6302
  %9018 = vmatpush1.bf16.msra.mxu0 %v6301
  %9019 = vmatprep.subr.bf16.mxu0 %v6306
  %9020 = vmatpush1.bf16.msra.mxu0 %v6305
  %9021 = vmatprep.subr.bf16.mxu0 %v6310
  %9022 = vmatpush1.bf16.msra.mxu0 %v6309
  %9023 = vmatprep.mubr.bf16.mxu0 %v73
  %9024 = vmatmul.mubr.bf16.gmra.mrb[0].mxu0 %v72
  %v9025 = vpop.f32.mrb[0].mxu0
  %v9026 = vadd.f32 %v8985, %v9025
  %v9027 = vpop.f32.mrb[0].mxu0
  %v9028 = vadd.f32 %v8987, %v9027
  %v9029 = vpop.f32.mrb[0].mxu0
  %v9030 = vpop.f32.mrb[0].mxu0
  %9031 = vdwg.mxu0
  %9032 = vmatprep.subr.bf16.mxu0 %v6314
  %9033 = vmatpush1.bf16.msra.mxu0 %v6313
  %9034 = vmatprep.subr.bf16.mxu0 %v6318
  %9035 = vmatpush1.bf16.msra.mxu0 %v6317
  %9036 = vmatprep.subr.bf16.mxu0 %v6322
  %9037 = vmatpush1.bf16.msra.mxu0 %v6321
  %9038 = vmatprep.subr.bf16.mxu0 %v6326
  %9039 = vmatpush1.bf16.msra.mxu0 %v6325
  %9040 = vmatprep.subr.bf16.mxu0 %v6330
  %9041 = vmatpush1.bf16.msra.mxu0 %v6329
  %9042 = vmatprep.subr.bf16.mxu0 %v6334
  %9043 = vmatpush1.bf16.msra.mxu0 %v6333
  %9044 = vmatprep.subr.bf16.mxu0 %v6338
  %9045 = vmatpush1.bf16.msra.mxu0 %v6337
  %9046 = vmatprep.subr.bf16.mxu0 %v6342
  %9047 = vmatpush1.bf16.msra.mxu0 %v6341
  %9048 = vmatprep.subr.bf16.mxu0 %v6346
  %9049 = vmatpush1.bf16.msra.mxu0 %v6345
  %9050 = vmatprep.subr.bf16.mxu0 %v6350
  %9051 = vmatpush1.bf16.msra.mxu0 %v6349
  %9052 = vmatprep.subr.bf16.mxu0 %v6354
  %9053 = vmatpush1.bf16.msra.mxu0 %v6353
  %9054 = vmatprep.subr.bf16.mxu0 %v6358
  %9055 = vmatpush1.bf16.msra.mxu0 %v6357
  %9056 = vmatprep.subr.bf16.mxu0 %v6362
  %9057 = vmatpush1.bf16.msra.mxu0 %v6361
  %9058 = vmatprep.subr.bf16.mxu0 %v6366
  %9059 = vmatpush1.bf16.msra.mxu0 %v6365
  %9060 = vmatprep.subr.bf16.mxu0 %v6370
  %9061 = vmatpush1.bf16.msra.mxu0 %v6369
  %9062 = vmatprep.subr.bf16.mxu0 %v6374
  %9063 = vmatpush1.bf16.msra.mxu0 %v6373
  %9064 = vmatprep.mubr.bf16.mxu0 %v75
  %9065 = vmatmul.mubr.bf16.gmra.mrb[0].mxu0 %v74
  %v9066 = vpop.f32.mrb[0].mxu0
  %v9067 = vadd.f32 %v9026, %v9066
  %v9068 = vpop.f32.mrb[0].mxu0
  %v9069 = vadd.f32 %v9028, %v9068
  %v9070 = vpop.f32.mrb[0].mxu0
  %v9071 = vpop.f32.mrb[0].mxu0
  %9072 = vdwg.mxu0
  %9073 = vmatprep.subr.bf16.mxu0 %v6378
  %9074 = vmatpush1.bf16.msra.mxu0 %v6377
  %9075 = vmatprep.subr.bf16.mxu0 %v6382
  %9076 = vmatpush1.bf16.msra.mxu0 %v6381
  %9077 = vmatprep.subr.bf16.mxu0 %v6386
  %9078 = vmatpush1.bf16.msra.mxu0 %v6385
  %9079 = vmatprep.subr.bf16.mxu0 %v6390
  %9080 = vmatpush1.bf16.msra.mxu0 %v6389
  %9081 = vmatprep.subr.bf16.mxu0 %v6394
  %9082 = vmatpush1.bf16.msra.mxu0 %v6393
  %9083 = vmatprep.subr.bf16.mxu0 %v6398
  %9084 = vmatpush1.bf16.msra.mxu0 %v6397
  %9085 = vmatprep.subr.bf16.mxu0 %v6402
  %9086 = vmatpush1.bf16.msra.mxu0 %v6401
  %9087 = vmatprep.subr.bf16.mxu0 %v6406
  %9088 = vmatpush1.bf16.msra.mxu0 %v6405
  %9089 = vmatprep.subr.bf16.mxu0 %v6410
  %9090 = vmatpush1.bf16.msra.mxu0 %v6409
  %9091 = vmatprep.subr.bf16.mxu0 %v6414
  %9092 = vmatpush1.bf16.msra.mxu0 %v6413
  %9093 = vmatprep.subr.bf16.mxu0 %v6418
  %9094 = vmatpush1.bf16.msra.mxu0 %v6417
  %9095 = vmatprep.subr.bf16.mxu0 %v6422
  %9096 = vmatpush1.bf16.msra.mxu0 %v6421
  %9097 = vmatprep.subr.bf16.mxu0 %v6426
  %9098 = vmatpush1.bf16.msra.mxu0 %v6425
  %9099 = vmatprep.subr.bf16.mxu0 %v6430
  %9100 = vmatpush1.bf16.msra.mxu0 %v6429
  %9101 = vmatprep.subr.bf16.mxu0 %v6434
  %9102 = vmatpush1.bf16.msra.mxu0 %v6433
  %9103 = vmatprep.subr.bf16.mxu0 %v6438
  %9104 = vmatpush1.bf16.msra.mxu0 %v6437
  %9105 = vmatprep.mubr.bf16.mxu0 %v77
  %9106 = vmatmul.mubr.bf16.gmra.mrb[0].mxu0 %v76
  %v9107 = vpop.f32.mrb[0].mxu0
  %v9108 = vadd.f32 %v9067, %v9107
  %v9109 = vpop.f32.mrb[0].mxu0
  %v9110 = vadd.f32 %v9069, %v9109
  %v9111 = vpop.f32.mrb[0].mxu0
  %v9112 = vpop.f32.mrb[0].mxu0
  %9113 = vdwg.mxu0
  %9114 = vmatprep.subr.bf16.mxu0 %v6442
  %9115 = vmatpush1.bf16.msra.mxu0 %v6441
  %9116 = vmatprep.subr.bf16.mxu0 %v6446
  %9117 = vmatpush1.bf16.msra.mxu0 %v6445
  %9118 = vmatprep.subr.bf16.mxu0 %v6450
  %9119 = vmatpush1.bf16.msra.mxu0 %v6449
  %9120 = vmatprep.subr.bf16.mxu0 %v6454
  %9121 = vmatpush1.bf16.msra.mxu0 %v6453
  %9122 = vmatprep.subr.bf16.mxu0 %v6458
  %9123 = vmatpush1.bf16.msra.mxu0 %v6457
  %9124 = vmatprep.subr.bf16.mxu0 %v6462
  %9125 = vmatpush1.bf16.msra.mxu0 %v6461
  %9126 = vmatprep.subr.bf16.mxu0 %v6466
  %9127 = vmatpush1.bf16.msra.mxu0 %v6465
  %9128 = vmatprep.subr.bf16.mxu0 %v6470
  %9129 = vmatpush1.bf16.msra.mxu0 %v6469
  %9130 = vmatprep.subr.bf16.mxu0 %v6474
  %9131 = vmatpush1.bf16.msra.mxu0 %v6473
  %9132 = vmatprep.subr.bf16.mxu0 %v6478
  %9133 = vmatpush1.bf16.msra.mxu0 %v6477
  %9134 = vmatprep.subr.bf16.mxu0 %v6482
  %9135 = vmatpush1.bf16.msra.mxu0 %v6481
  %9136 = vmatprep.subr.bf16.mxu0 %v6486
  %9137 = vmatpush1.bf16.msra.mxu0 %v6485
  %9138 = vmatprep.subr.bf16.mxu0 %v6490
  %9139 = vmatpush1.bf16.msra.mxu0 %v6489
  %9140 = vmatprep.subr.bf16.mxu0 %v6494
  %9141 = vmatpush1.bf16.msra.mxu0 %v6493
  %9142 = vmatprep.subr.bf16.mxu0 %v6498
  %9143 = vmatpush1.bf16.msra.mxu0 %v6497
  %9144 = vmatprep.subr.bf16.mxu0 %v6502
  %9145 = vmatpush1.bf16.msra.mxu0 %v6501
  %9146 = vmatprep.mubr.bf16.mxu0 %v79
  %9147 = vmatmul.mubr.bf16.gmra.mrb[0].mxu0 %v78
  %v9148 = vpop.f32.mrb[0].mxu0
  %v9149 = vadd.f32 %v9108, %v9148
  %v9150 = vpop.f32.mrb[0].mxu0
  %v9151 = vadd.f32 %v9110, %v9150
  %v9152 = vpop.f32.mrb[0].mxu0
  %v9153 = vpop.f32.mrb[0].mxu0
  %9154 = vdwg.mxu0
  %9155 = vmatprep.subr.bf16.mxu0 %v6506
  %9156 = vmatpush1.bf16.msra.mxu0 %v6505
  %9157 = vmatprep.subr.bf16.mxu0 %v6510
  %9158 = vmatpush1.bf16.msra.mxu0 %v6509
  %9159 = vmatprep.subr.bf16.mxu0 %v6514
  %9160 = vmatpush1.bf16.msra.mxu0 %v6513
  %9161 = vmatprep.subr.bf16.mxu0 %v6518
  %9162 = vmatpush1.bf16.msra.mxu0 %v6517
  %9163 = vmatprep.subr.bf16.mxu0 %v6522
  %9164 = vmatpush1.bf16.msra.mxu0 %v6521
  %9165 = vmatprep.subr.bf16.mxu0 %v6526
  %9166 = vmatpush1.bf16.msra.mxu0 %v6525
  %9167 = vmatprep.subr.bf16.mxu0 %v6530
  %9168 = vmatpush1.bf16.msra.mxu0 %v6529
  %9169 = vmatprep.subr.bf16.mxu0 %v6534
  %9170 = vmatpush1.bf16.msra.mxu0 %v6533
  %9171 = vmatprep.subr.bf16.mxu0 %v6538
  %9172 = vmatpush1.bf16.msra.mxu0 %v6537
  %9173 = vmatprep.subr.bf16.mxu0 %v6542
  %9174 = vmatpush1.bf16.msra.mxu0 %v6541
  %9175 = vmatprep.subr.bf16.mxu0 %v6546
  %9176 = vmatpush1.bf16.msra.mxu0 %v6545
  %9177 = vmatprep.subr.bf16.mxu0 %v6550
  %9178 = vmatpush1.bf16.msra.mxu0 %v6549
  %9179 = vmatprep.subr.bf16.mxu0 %v6554
  %9180 = vmatpush1.bf16.msra.mxu0 %v6553
  %9181 = vmatprep.subr.bf16.mxu0 %v6558
  %9182 = vmatpush1.bf16.msra.mxu0 %v6557
  %9183 = vmatprep.subr.bf16.mxu0 %v6562
  %9184 = vmatpush1.bf16.msra.mxu0 %v6561
  %9185 = vmatprep.subr.bf16.mxu0 %v6566
  %9186 = vmatpush1.bf16.msra.mxu0 %v6565
  %9187 = vmatprep.mubr.bf16.mxu0 %v81
  %9188 = vmatmul.mubr.bf16.gmra.mrb[0].mxu0 %v80
  %v9189 = vpop.f32.mrb[0].mxu0
  %v9190 = vadd.f32 %v9149, %v9189
  %v9191 = vpop.f32.mrb[0].mxu0
  %v9192 = vadd.f32 %v9151, %v9191
  %v9193 = vpop.f32.mrb[0].mxu0
  %v9194 = vpop.f32.mrb[0].mxu0
  %9195 = vdwg.mxu0
  %9196 = vmatprep.subr.bf16.mxu0 %v6570
  %9197 = vmatpush1.bf16.msra.mxu0 %v6569
  %9198 = vmatprep.subr.bf16.mxu0 %v6574
  %9199 = vmatpush1.bf16.msra.mxu0 %v6573
  %9200 = vmatprep.subr.bf16.mxu0 %v6578
  %9201 = vmatpush1.bf16.msra.mxu0 %v6577
  %9202 = vmatprep.subr.bf16.mxu0 %v6582
  %9203 = vmatpush1.bf16.msra.mxu0 %v6581
  %9204 = vmatprep.subr.bf16.mxu0 %v6586
  %9205 = vmatpush1.bf16.msra.mxu0 %v6585
  %9206 = vmatprep.subr.bf16.mxu0 %v6590
  %9207 = vmatpush1.bf16.msra.mxu0 %v6589
  %9208 = vmatprep.subr.bf16.mxu0 %v6594
  %9209 = vmatpush1.bf16.msra.mxu0 %v6593
  %9210 = vmatprep.subr.bf16.mxu0 %v6598
  %9211 = vmatpush1.bf16.msra.mxu0 %v6597
  %9212 = vmatprep.subr.bf16.mxu0 %v6602
  %9213 = vmatpush1.bf16.msra.mxu0 %v6601
  %9214 = vmatprep.subr.bf16.mxu0 %v6606
  %9215 = vmatpush1.bf16.msra.mxu0 %v6605
  %9216 = vmatprep.subr.bf16.mxu0 %v6610
  %9217 = vmatpush1.bf16.msra.mxu0 %v6609
  %9218 = vmatprep.subr.bf16.mxu0 %v6614
  %9219 = vmatpush1.bf16.msra.mxu0 %v6613
  %9220 = vmatprep.subr.bf16.mxu0 %v6618
  %9221 = vmatpush1.bf16.msra.mxu0 %v6617
  %9222 = vmatprep.subr.bf16.mxu0 %v6622
  %9223 = vmatpush1.bf16.msra.mxu0 %v6621
  %9224 = vmatprep.subr.bf16.mxu0 %v6626
  %9225 = vmatpush1.bf16.msra.mxu0 %v6625
  %9226 = vmatprep.subr.bf16.mxu0 %v6630
  %9227 = vmatpush1.bf16.msra.mxu0 %v6629
  %9228 = vmatprep.mubr.bf16.mxu0 %v83
  %9229 = vmatmul.mubr.bf16.gmra.mrb[0].mxu0 %v82
  %v9230 = vpop.f32.mrb[0].mxu0
  %v9231 = vadd.f32 %v9190, %v9230
  %v9232 = vpop.f32.mrb[0].mxu0
  %v9233 = vadd.f32 %v9192, %v9232
  %v9234 = vpop.f32.mrb[0].mxu0
  %v9235 = vpop.f32.mrb[0].mxu0
  %9236 = vdwg.mxu0
  %9237 = vmatprep.subr.bf16.mxu0 %v6634
  %9238 = vmatpush1.bf16.msra.mxu0 %v6633
  %9239 = vmatprep.subr.bf16.mxu0 %v6638
  %9240 = vmatpush1.bf16.msra.mxu0 %v6637
  %9241 = vmatprep.subr.bf16.mxu0 %v6642
  %9242 = vmatpush1.bf16.msra.mxu0 %v6641
  %9243 = vmatprep.subr.bf16.mxu0 %v6646
  %9244 = vmatpush1.bf16.msra.mxu0 %v6645
  %9245 = vmatprep.subr.bf16.mxu0 %v6650
  %9246 = vmatpush1.bf16.msra.mxu0 %v6649
  %9247 = vmatprep.subr.bf16.mxu0 %v6654
  %9248 = vmatpush1.bf16.msra.mxu0 %v6653
  %9249 = vmatprep.subr.bf16.mxu0 %v6658
  %9250 = vmatpush1.bf16.msra.mxu0 %v6657
  %9251 = vmatprep.subr.bf16.mxu0 %v6662
  %9252 = vmatpush1.bf16.msra.mxu0 %v6661
  %9253 = vmatprep.subr.bf16.mxu0 %v6666
  %9254 = vmatpush1.bf16.msra.mxu0 %v6665
  %9255 = vmatprep.subr.bf16.mxu0 %v6670
  %9256 = vmatpush1.bf16.msra.mxu0 %v6669
  %9257 = vmatprep.subr.bf16.mxu0 %v6674
  %9258 = vmatpush1.bf16.msra.mxu0 %v6673
  %9259 = vmatprep.subr.bf16.mxu0 %v6678
  %9260 = vmatpush1.bf16.msra.mxu0 %v6677
  %9261 = vmatprep.subr.bf16.mxu0 %v6682
  %9262 = vmatpush1.bf16.msra.mxu0 %v6681
  %9263 = vmatprep.subr.bf16.mxu0 %v6686
  %9264 = vmatpush1.bf16.msra.mxu0 %v6685
  %9265 = vmatprep.subr.bf16.mxu0 %v6690
  %9266 = vmatpush1.bf16.msra.mxu0 %v6689
  %9267 = vmatprep.subr.bf16.mxu0 %v6694
  %9268 = vmatpush1.bf16.msra.mxu0 %v6693
  %9269 = vmatprep.mubr.bf16.mxu0 %v85
  %9270 = vmatmul.mubr.bf16.gmra.mrb[0].mxu0 %v84
  %v9271 = vpop.f32.mrb[0].mxu0
  %v9272 = vadd.f32 %v9231, %v9271
  %v9273 = vpop.f32.mrb[0].mxu0
  %v9274 = vadd.f32 %v9233, %v9273
  %v9275 = vpop.f32.mrb[0].mxu0
  %v9276 = vpop.f32.mrb[0].mxu0
  %9277 = vdwg.mxu0
  %9278 = vmatprep.subr.bf16.mxu0 %v6698
  %9279 = vmatpush1.bf16.msra.mxu0 %v6697
  %9280 = vmatprep.subr.bf16.mxu0 %v6702
  %9281 = vmatpush1.bf16.msra.mxu0 %v6701
  %9282 = vmatprep.subr.bf16.mxu0 %v6706
  %9283 = vmatpush1.bf16.msra.mxu0 %v6705
  %9284 = vmatprep.subr.bf16.mxu0 %v6710
  %9285 = vmatpush1.bf16.msra.mxu0 %v6709
  %9286 = vmatprep.subr.bf16.mxu0 %v6714
  %9287 = vmatpush1.bf16.msra.mxu0 %v6713
  %9288 = vmatprep.subr.bf16.mxu0 %v6718
  %9289 = vmatpush1.bf16.msra.mxu0 %v6717
  %9290 = vmatprep.subr.bf16.mxu0 %v6722
  %9291 = vmatpush1.bf16.msra.mxu0 %v6721
  %9292 = vmatprep.subr.bf16.mxu0 %v6726
  %9293 = vmatpush1.bf16.msra.mxu0 %v6725
  %9294 = vmatprep.subr.bf16.mxu0 %v6730
  %9295 = vmatpush1.bf16.msra.mxu0 %v6729
  %9296 = vmatprep.subr.bf16.mxu0 %v6734
  %9297 = vmatpush1.bf16.msra.mxu0 %v6733
  %9298 = vmatprep.subr.bf16.mxu0 %v6738
  %9299 = vmatpush1.bf16.msra.mxu0 %v6737
  %9300 = vmatprep.subr.bf16.mxu0 %v6742
  %9301 = vmatpush1.bf16.msra.mxu0 %v6741
  %9302 = vmatprep.subr.bf16.mxu0 %v6746
  %9303 = vmatpush1.bf16.msra.mxu0 %v6745
  %9304 = vmatprep.subr.bf16.mxu0 %v6750
  %9305 = vmatpush1.bf16.msra.mxu0 %v6749
  %9306 = vmatprep.subr.bf16.mxu0 %v6754
  %9307 = vmatpush1.bf16.msra.mxu0 %v6753
  %9308 = vmatprep.subr.bf16.mxu0 %v6758
  %9309 = vmatpush1.bf16.msra.mxu0 %v6757
  %9310 = vmatprep.mubr.bf16.mxu0 %v87
  %9311 = vmatmul.mubr.bf16.gmra.mrb[0].mxu0 %v86
  %v9312 = vpop.f32.mrb[0].mxu0
  %v9313 = vadd.f32 %v9272, %v9312
  %v9314 = vpop.f32.mrb[0].mxu0
  %v9315 = vadd.f32 %v9274, %v9314
  %v9316 = vpop.f32.mrb[0].mxu0
  %v9317 = vpop.f32.mrb[0].mxu0
  %9318 = vdwg.mxu0
  %9319 = vmatprep.subr.bf16.mxu0 %v6762
  %9320 = vmatpush1.bf16.msra.mxu0 %v6761
  %9321 = vmatprep.subr.bf16.mxu0 %v6766
  %9322 = vmatpush1.bf16.msra.mxu0 %v6765
  %9323 = vmatprep.subr.bf16.mxu0 %v6770
  %9324 = vmatpush1.bf16.msra.mxu0 %v6769
  %9325 = vmatprep.subr.bf16.mxu0 %v6774
  %9326 = vmatpush1.bf16.msra.mxu0 %v6773
  %9327 = vmatprep.subr.bf16.mxu0 %v6778
  %9328 = vmatpush1.bf16.msra.mxu0 %v6777
  %9329 = vmatprep.subr.bf16.mxu0 %v6782
  %9330 = vmatpush1.bf16.msra.mxu0 %v6781
  %9331 = vmatprep.subr.bf16.mxu0 %v6786
  %9332 = vmatpush1.bf16.msra.mxu0 %v6785
  %9333 = vmatprep.subr.bf16.mxu0 %v6790
  %9334 = vmatpush1.bf16.msra.mxu0 %v6789
  %9335 = vmatprep.subr.bf16.mxu0 %v6794
  %9336 = vmatpush1.bf16.msra.mxu0 %v6793
  %9337 = vmatprep.subr.bf16.mxu0 %v6798
  %9338 = vmatpush1.bf16.msra.mxu0 %v6797
  %9339 = vmatprep.subr.bf16.mxu0 %v6802
  %9340 = vmatpush1.bf16.msra.mxu0 %v6801
  %9341 = vmatprep.subr.bf16.mxu0 %v6806
  %9342 = vmatpush1.bf16.msra.mxu0 %v6805
  %9343 = vmatprep.subr.bf16.mxu0 %v6810
  %9344 = vmatpush1.bf16.msra.mxu0 %v6809
  %9345 = vmatprep.subr.bf16.mxu0 %v6814
  %9346 = vmatpush1.bf16.msra.mxu0 %v6813
  %9347 = vmatprep.subr.bf16.mxu0 %v6818
  %9348 = vmatpush1.bf16.msra.mxu0 %v6817
  %9349 = vmatprep.subr.bf16.mxu0 %v6822
  %9350 = vmatpush1.bf16.msra.mxu0 %v6821
  %9351 = vmatprep.mubr.bf16.mxu0 %v89
  %9352 = vmatmul.mubr.bf16.gmra.mrb[0].mxu0 %v88
  %v9353 = vpop.f32.mrb[0].mxu0
  %v9354 = vadd.f32 %v9313, %v9353
  %v9355 = vpop.f32.mrb[0].mxu0
  %v9356 = vadd.f32 %v9315, %v9355
  %v9357 = vpop.f32.mrb[0].mxu0
  %v9358 = vpop.f32.mrb[0].mxu0
  %9359 = vdwg.mxu0
  %9360 = vmatprep.subr.bf16.mxu0 %v6826
  %9361 = vmatpush1.bf16.msra.mxu0 %v6825
  %9362 = vmatprep.subr.bf16.mxu0 %v6830
  %9363 = vmatpush1.bf16.msra.mxu0 %v6829
  %9364 = vmatprep.subr.bf16.mxu0 %v6834
  %9365 = vmatpush1.bf16.msra.mxu0 %v6833
  %9366 = vmatprep.subr.bf16.mxu0 %v6838
  %9367 = vmatpush1.bf16.msra.mxu0 %v6837
  %9368 = vmatprep.subr.bf16.mxu0 %v6842
  %9369 = vmatpush1.bf16.msra.mxu0 %v6841
  %9370 = vmatprep.subr.bf16.mxu0 %v6846
  %9371 = vmatpush1.bf16.msra.mxu0 %v6845
  %9372 = vmatprep.subr.bf16.mxu0 %v6850
  %9373 = vmatpush1.bf16.msra.mxu0 %v6849
  %9374 = vmatprep.subr.bf16.mxu0 %v6854
  %9375 = vmatpush1.bf16.msra.mxu0 %v6853
  %9376 = vmatprep.subr.bf16.mxu0 %v6858
  %9377 = vmatpush1.bf16.msra.mxu0 %v6857
  %9378 = vmatprep.subr.bf16.mxu0 %v6862
  %9379 = vmatpush1.bf16.msra.mxu0 %v6861
  %9380 = vmatprep.subr.bf16.mxu0 %v6866
  %9381 = vmatpush1.bf16.msra.mxu0 %v6865
  %9382 = vmatprep.subr.bf16.mxu0 %v6870
  %9383 = vmatpush1.bf16.msra.mxu0 %v6869
  %9384 = vmatprep.subr.bf16.mxu0 %v6874
  %9385 = vmatpush1.bf16.msra.mxu0 %v6873
  %9386 = vmatprep.subr.bf16.mxu0 %v6878
  %9387 = vmatpush1.bf16.msra.mxu0 %v6877
  %9388 = vmatprep.subr.bf16.mxu0 %v6882
  %9389 = vmatpush1.bf16.msra.mxu0 %v6881
  %9390 = vmatprep.subr.bf16.mxu0 %v6886
  %9391 = vmatpush1.bf16.msra.mxu0 %v6885
  %9392 = vmatprep.mubr.bf16.mxu0 %v91
  %9393 = vmatmul.mubr.bf16.gmra.mrb[0].mxu0 %v90
  %v9394 = vpop.f32.mrb[0].mxu0
  %v9395 = vadd.f32 %v9354, %v9394
  %v9396 = vpop.f32.mrb[0].mxu0
  %v9397 = vadd.f32 %v9356, %v9396
  %v9398 = vpop.f32.mrb[0].mxu0
  %v9399 = vpop.f32.mrb[0].mxu0
  %9400 = vdwg.mxu0
  %9401 = vmatprep.subr.bf16.mxu0 %v6890
  %9402 = vmatpush1.bf16.msra.mxu0 %v6889
  %9403 = vmatprep.subr.bf16.mxu0 %v6894
  %9404 = vmatpush1.bf16.msra.mxu0 %v6893
  %9405 = vmatprep.subr.bf16.mxu0 %v6898
  %9406 = vmatpush1.bf16.msra.mxu0 %v6897
  %9407 = vmatprep.subr.bf16.mxu0 %v6902
  %9408 = vmatpush1.bf16.msra.mxu0 %v6901
  %9409 = vmatprep.subr.bf16.mxu0 %v6906
  %9410 = vmatpush1.bf16.msra.mxu0 %v6905
  %9411 = vmatprep.subr.bf16.mxu0 %v6910
  %9412 = vmatpush1.bf16.msra.mxu0 %v6909
  %9413 = vmatprep.subr.bf16.mxu0 %v6914
  %9414 = vmatpush1.bf16.msra.mxu0 %v6913
  %9415 = vmatprep.subr.bf16.mxu0 %v6918
  %9416 = vmatpush1.bf16.msra.mxu0 %v6917
  %9417 = vmatprep.subr.bf16.mxu0 %v6922
  %9418 = vmatpush1.bf16.msra.mxu0 %v6921
  %9419 = vmatprep.subr.bf16.mxu0 %v6926
  %9420 = vmatpush1.bf16.msra.mxu0 %v6925
  %9421 = vmatprep.subr.bf16.mxu0 %v6930
  %9422 = vmatpush1.bf16.msra.mxu0 %v6929
  %9423 = vmatprep.subr.bf16.mxu0 %v6934
  %9424 = vmatpush1.bf16.msra.mxu0 %v6933
  %9425 = vmatprep.subr.bf16.mxu0 %v6938
  %9426 = vmatpush1.bf16.msra.mxu0 %v6937
  %9427 = vmatprep.subr.bf16.mxu0 %v6942
  %9428 = vmatpush1.bf16.msra.mxu0 %v6941
  %9429 = vmatprep.subr.bf16.mxu0 %v6946
  %9430 = vmatpush1.bf16.msra.mxu0 %v6945
  %9431 = vmatprep.subr.bf16.mxu0 %v6950
  %9432 = vmatpush1.bf16.msra.mxu0 %v6949
  %9433 = vmatprep.mubr.bf16.mxu0 %v93
  %9434 = vmatmul.mubr.bf16.gmra.mrb[0].mxu0 %v92
  %v9435 = vpop.f32.mrb[0].mxu0
  %v9436 = vadd.f32 %v9395, %v9435
  %v9437 = vpop.f32.mrb[0].mxu0
  %v9438 = vadd.f32 %v9397, %v9437
  %v9439 = vpop.f32.mrb[0].mxu0
  %v9440 = vpop.f32.mrb[0].mxu0
  %9441 = vdwg.mxu0
  %9442 = vmatprep.subr.bf16.mxu0 %v6954
  %9443 = vmatpush1.bf16.msra.mxu0 %v6953
  %9444 = vmatprep.subr.bf16.mxu0 %v6958
  %9445 = vmatpush1.bf16.msra.mxu0 %v6957
  %9446 = vmatprep.subr.bf16.mxu0 %v6962
  %9447 = vmatpush1.bf16.msra.mxu0 %v6961
  %9448 = vmatprep.subr.bf16.mxu0 %v6966
  %9449 = vmatpush1.bf16.msra.mxu0 %v6965
  %9450 = vmatprep.subr.bf16.mxu0 %v6970
  %9451 = vmatpush1.bf16.msra.mxu0 %v6969
  %9452 = vmatprep.subr.bf16.mxu0 %v6974
  %9453 = vmatpush1.bf16.msra.mxu0 %v6973
  %9454 = vmatprep.subr.bf16.mxu0 %v6978
  %9455 = vmatpush1.bf16.msra.mxu0 %v6977
  %9456 = vmatprep.subr.bf16.mxu0 %v6982
  %9457 = vmatpush1.bf16.msra.mxu0 %v6981
  %9458 = vmatprep.subr.bf16.mxu0 %v6986
  %9459 = vmatpush1.bf16.msra.mxu0 %v6985
  %9460 = vmatprep.subr.bf16.mxu0 %v6990
  %9461 = vmatpush1.bf16.msra.mxu0 %v6989
  %9462 = vmatprep.subr.bf16.mxu0 %v6994
  %9463 = vmatpush1.bf16.msra.mxu0 %v6993
  %9464 = vmatprep.subr.bf16.mxu0 %v6998
  %9465 = vmatpush1.bf16.msra.mxu0 %v6997
  %9466 = vmatprep.subr.bf16.mxu0 %v7002
  %9467 = vmatpush1.bf16.msra.mxu0 %v7001
  %9468 = vmatprep.subr.bf16.mxu0 %v7006
  %9469 = vmatpush1.bf16.msra.mxu0 %v7005
  %9470 = vmatprep.subr.bf16.mxu0 %v7010
  %9471 = vmatpush1.bf16.msra.mxu0 %v7009
  %9472 = vmatprep.subr.bf16.mxu0 %v7014
  %9473 = vmatpush1.bf16.msra.mxu0 %v7013
  %9474 = vmatprep.mubr.bf16.mxu0 %v95
  %9475 = vmatmul.mubr.bf16.gmra.mrb[0].mxu0 %v94
  %v9476 = vpop.f32.mrb[0].mxu0
  %v9477 = vadd.f32 %v9436, %v9476
  %v9478 = vpop.f32.mrb[0].mxu0
  %v9479 = vadd.f32 %v9438, %v9478
  %v9480 = vpop.f32.mrb[0].mxu0
  %v9481 = vpop.f32.mrb[0].mxu0
  %9482 = vdwg.mxu0
  %9483 = vmatprep.subr.bf16.mxu0 %v7018
  %9484 = vmatpush1.bf16.msra.mxu0 %v7017
  %9485 = vmatprep.subr.bf16.mxu0 %v7022
  %9486 = vmatpush1.bf16.msra.mxu0 %v7021
  %9487 = vmatprep.subr.bf16.mxu0 %v7026
  %9488 = vmatpush1.bf16.msra.mxu0 %v7025
  %9489 = vmatprep.subr.bf16.mxu0 %v7030
  %9490 = vmatpush1.bf16.msra.mxu0 %v7029
  %9491 = vmatprep.subr.bf16.mxu0 %v7034
  %9492 = vmatpush1.bf16.msra.mxu0 %v7033
  %9493 = vmatprep.subr.bf16.mxu0 %v7038
  %9494 = vmatpush1.bf16.msra.mxu0 %v7037
  %9495 = vmatprep.subr.bf16.mxu0 %v7042
  %9496 = vmatpush1.bf16.msra.mxu0 %v7041
  %9497 = vmatprep.subr.bf16.mxu0 %v7046
  %9498 = vmatpush1.bf16.msra.mxu0 %v7045
  %9499 = vmatprep.subr.bf16.mxu0 %v7050
  %9500 = vmatpush1.bf16.msra.mxu0 %v7049
  %9501 = vmatprep.subr.bf16.mxu0 %v7054
  %9502 = vmatpush1.bf16.msra.mxu0 %v7053
  %9503 = vmatprep.subr.bf16.mxu0 %v7058
  %9504 = vmatpush1.bf16.msra.mxu0 %v7057
  %9505 = vmatprep.subr.bf16.mxu0 %v7062
  %9506 = vmatpush1.bf16.msra.mxu0 %v7061
  %9507 = vmatprep.subr.bf16.mxu0 %v7066
  %9508 = vmatpush1.bf16.msra.mxu0 %v7065
  %9509 = vmatprep.subr.bf16.mxu0 %v7070
  %9510 = vmatpush1.bf16.msra.mxu0 %v7069
  %9511 = vmatprep.subr.bf16.mxu0 %v7074
  %9512 = vmatpush1.bf16.msra.mxu0 %v7073
  %9513 = vmatprep.subr.bf16.mxu0 %v7078
  %9514 = vmatpush1.bf16.msra.mxu0 %v7077
  %9515 = vmatprep.mubr.bf16.mxu0 %v97
  %9516 = vmatmul.mubr.bf16.gmra.mrb[0].mxu0 %v96
  %v9517 = vpop.f32.mrb[0].mxu0
  %v9518 = vadd.f32 %v9477, %v9517
  %v9519 = vpop.f32.mrb[0].mxu0
  %v9520 = vadd.f32 %v9479, %v9519
  %v9521 = vpop.f32.mrb[0].mxu0
  %v9522 = vpop.f32.mrb[0].mxu0
  %9523 = vdwg.mxu0
  %9524 = vmatprep.subr.bf16.mxu0 %v7082
  %9525 = vmatpush1.bf16.msra.mxu0 %v7081
  %9526 = vmatprep.subr.bf16.mxu0 %v7086
  %9527 = vmatpush1.bf16.msra.mxu0 %v7085
  %9528 = vmatprep.subr.bf16.mxu0 %v7090
  %9529 = vmatpush1.bf16.msra.mxu0 %v7089
  %9530 = vmatprep.subr.bf16.mxu0 %v7094
  %9531 = vmatpush1.bf16.msra.mxu0 %v7093
  %9532 = vmatprep.subr.bf16.mxu0 %v7098
  %9533 = vmatpush1.bf16.msra.mxu0 %v7097
  %9534 = vmatprep.subr.bf16.mxu0 %v7102
  %9535 = vmatpush1.bf16.msra.mxu0 %v7101
  %9536 = vmatprep.subr.bf16.mxu0 %v7106
  %9537 = vmatpush1.bf16.msra.mxu0 %v7105
  %9538 = vmatprep.subr.bf16.mxu0 %v7110
  %9539 = vmatpush1.bf16.msra.mxu0 %v7109
  %9540 = vmatprep.subr.bf16.mxu0 %v7114
  %9541 = vmatpush1.bf16.msra.mxu0 %v7113
  %9542 = vmatprep.subr.bf16.mxu0 %v7118
  %9543 = vmatpush1.bf16.msra.mxu0 %v7117
  %9544 = vmatprep.subr.bf16.mxu0 %v7122
  %9545 = vmatpush1.bf16.msra.mxu0 %v7121
  %9546 = vmatprep.subr.bf16.mxu0 %v7126
  %9547 = vmatpush1.bf16.msra.mxu0 %v7125
  %9548 = vmatprep.subr.bf16.mxu0 %v7130
  %9549 = vmatpush1.bf16.msra.mxu0 %v7129
  %9550 = vmatprep.subr.bf16.mxu0 %v7134
  %9551 = vmatpush1.bf16.msra.mxu0 %v7133
  %9552 = vmatprep.subr.bf16.mxu0 %v7138
  %9553 = vmatpush1.bf16.msra.mxu0 %v7137
  %9554 = vmatprep.subr.bf16.mxu0 %v7142
  %9555 = vmatpush1.bf16.msra.mxu0 %v7141
  %9556 = vmatprep.mubr.bf16.mxu0 %v99
  %9557 = vmatmul.mubr.bf16.gmra.mrb[0].mxu0 %v98
  %v9558 = vpop.f32.mrb[0].mxu0
  %v9559 = vadd.f32 %v9518, %v9558
  %v9560 = vpop.f32.mrb[0].mxu0
  %v9561 = vadd.f32 %v9520, %v9560
  %v9562 = vpop.f32.mrb[0].mxu0
  %v9563 = vpop.f32.mrb[0].mxu0
  %9564 = vdwg.mxu0
  %9565 = vmatprep.subr.bf16.mxu0 %v7146
  %9566 = vmatpush1.bf16.msra.mxu0 %v7145
  %9567 = vmatprep.subr.bf16.mxu0 %v7150
  %9568 = vmatpush1.bf16.msra.mxu0 %v7149
  %9569 = vmatprep.subr.bf16.mxu0 %v7154
  %9570 = vmatpush1.bf16.msra.mxu0 %v7153
  %9571 = vmatprep.subr.bf16.mxu0 %v7158
  %9572 = vmatpush1.bf16.msra.mxu0 %v7157
  %9573 = vmatprep.subr.bf16.mxu0 %v7162
  %9574 = vmatpush1.bf16.msra.mxu0 %v7161
  %9575 = vmatprep.subr.bf16.mxu0 %v7166
  %9576 = vmatpush1.bf16.msra.mxu0 %v7165
  %9577 = vmatprep.subr.bf16.mxu0 %v7170
  %9578 = vmatpush1.bf16.msra.mxu0 %v7169
  %9579 = vmatprep.subr.bf16.mxu0 %v7174
  %9580 = vmatpush1.bf16.msra.mxu0 %v7173
  %9581 = vmatprep.subr.bf16.mxu0 %v7178
  %9582 = vmatpush1.bf16.msra.mxu0 %v7177
  %9583 = vmatprep.subr.bf16.mxu0 %v7182
  %9584 = vmatpush1.bf16.msra.mxu0 %v7181
  %9585 = vmatprep.subr.bf16.mxu0 %v7186
  %9586 = vmatpush1.bf16.msra.mxu0 %v7185
  %9587 = vmatprep.subr.bf16.mxu0 %v7190
  %9588 = vmatpush1.bf16.msra.mxu0 %v7189
  %9589 = vmatprep.subr.bf16.mxu0 %v7194
  %9590 = vmatpush1.bf16.msra.mxu0 %v7193
  %9591 = vmatprep.subr.bf16.mxu0 %v7198
  %9592 = vmatpush1.bf16.msra.mxu0 %v7197
  %9593 = vmatprep.subr.bf16.mxu0 %v7202
  %9594 = vmatpush1.bf16.msra.mxu0 %v7201
  %9595 = vmatprep.subr.bf16.mxu0 %v7206
  %9596 = vmatpush1.bf16.msra.mxu0 %v7205
  %9597 = vmatprep.mubr.bf16.mxu0 %v101
  %9598 = vmatmul.mubr.bf16.gmra.mrb[0].mxu0 %v100
  %v9599 = vpop.f32.mrb[0].mxu0
  %v9600 = vadd.f32 %v9559, %v9599
  %v9601 = vpop.f32.mrb[0].mxu0
  %v9602 = vadd.f32 %v9561, %v9601
  %v9603 = vpop.f32.mrb[0].mxu0
  %v9604 = vpop.f32.mrb[0].mxu0
  %9605 = vdwg.mxu0
  %9606 = vmatprep.subr.bf16.mxu0 %v7210
  %9607 = vmatpush1.bf16.msra.mxu0 %v7209
  %9608 = vmatprep.subr.bf16.mxu0 %v7214
  %9609 = vmatpush1.bf16.msra.mxu0 %v7213
  %9610 = vmatprep.subr.bf16.mxu0 %v7218
  %9611 = vmatpush1.bf16.msra.mxu0 %v7217
  %9612 = vmatprep.subr.bf16.mxu0 %v7222
  %9613 = vmatpush1.bf16.msra.mxu0 %v7221
  %9614 = vmatprep.subr.bf16.mxu0 %v7226
  %9615 = vmatpush1.bf16.msra.mxu0 %v7225
  %9616 = vmatprep.subr.bf16.mxu0 %v7230
  %9617 = vmatpush1.bf16.msra.mxu0 %v7229
  %9618 = vmatprep.subr.bf16.mxu0 %v7234
  %9619 = vmatpush1.bf16.msra.mxu0 %v7233
  %9620 = vmatprep.subr.bf16.mxu0 %v7238
  %9621 = vmatpush1.bf16.msra.mxu0 %v7237
  %9622 = vmatprep.subr.bf16.mxu0 %v7242
  %9623 = vmatpush1.bf16.msra.mxu0 %v7241
  %9624 = vmatprep.subr.bf16.mxu0 %v7246
  %9625 = vmatpush1.bf16.msra.mxu0 %v7245
  %9626 = vmatprep.subr.bf16.mxu0 %v7250
  %9627 = vmatpush1.bf16.msra.mxu0 %v7249
  %9628 = vmatprep.subr.bf16.mxu0 %v7254
  %9629 = vmatpush1.bf16.msra.mxu0 %v7253
  %9630 = vmatprep.subr.bf16.mxu0 %v7258
  %9631 = vmatpush1.bf16.msra.mxu0 %v7257
  %9632 = vmatprep.subr.bf16.mxu0 %v7262
  %9633 = vmatpush1.bf16.msra.mxu0 %v7261
  %9634 = vmatprep.subr.bf16.mxu0 %v7266
  %9635 = vmatpush1.bf16.msra.mxu0 %v7265
  %9636 = vmatprep.subr.bf16.mxu0 %v7270
  %9637 = vmatpush1.bf16.msra.mxu0 %v7269
  %9638 = vmatprep.mubr.bf16.mxu0 %v103
  %9639 = vmatmul.mubr.bf16.gmra.mrb[0].mxu0 %v102
  %v9640 = vpop.f32.mrb[0].mxu0
  %v9641 = vadd.f32 %v9600, %v9640
  %v9642 = vpop.f32.mrb[0].mxu0
  %v9643 = vadd.f32 %v9602, %v9642
  %v9644 = vpop.f32.mrb[0].mxu0
  %v9645 = vpop.f32.mrb[0].mxu0
  %9646 = vdwg.mxu0
  %9647 = vmatprep.subr.bf16.mxu0 %v7274
  %9648 = vmatpush1.bf16.msra.mxu0 %v7273
  %9649 = vmatprep.subr.bf16.mxu0 %v7278
  %9650 = vmatpush1.bf16.msra.mxu0 %v7277
  %9651 = vmatprep.subr.bf16.mxu0 %v7282
  %9652 = vmatpush1.bf16.msra.mxu0 %v7281
  %9653 = vmatprep.subr.bf16.mxu0 %v7286
  %9654 = vmatpush1.bf16.msra.mxu0 %v7285
  %9655 = vmatprep.subr.bf16.mxu0 %v7290
  %9656 = vmatpush1.bf16.msra.mxu0 %v7289
  %9657 = vmatprep.subr.bf16.mxu0 %v7294
  %9658 = vmatpush1.bf16.msra.mxu0 %v7293
  %9659 = vmatprep.subr.bf16.mxu0 %v7298
  %9660 = vmatpush1.bf16.msra.mxu0 %v7297
  %9661 = vmatprep.subr.bf16.mxu0 %v7302
  %9662 = vmatpush1.bf16.msra.mxu0 %v7301
  %9663 = vmatprep.subr.bf16.mxu0 0
  %9664 = vmatpush1.bf16.msra.mxu0 0
  %9665 = vmatprep.subr.bf16.mxu0 0
  %9666 = vmatpush1.bf16.msra.mxu0 0
  %9667 = vmatprep.subr.bf16.mxu0 0
  %9668 = vmatpush1.bf16.msra.mxu0 0
  %9669 = vmatprep.subr.bf16.mxu0 0
  %9670 = vmatpush1.bf16.msra.mxu0 0
  %9671 = vmatprep.subr.bf16.mxu0 0
  %9672 = vmatpush1.bf16.msra.mxu0 0
  %9673 = vmatprep.subr.bf16.mxu0 0
  %9674 = vmatpush1.bf16.msra.mxu0 0
  %9675 = vmatprep.subr.bf16.mxu0 0
  %9676 = vmatpush1.bf16.msra.mxu0 0
  %9677 = vmatprep.subr.bf16.mxu0 0
  %9678 = vmatpush1.bf16.msra.mxu0 0
  %9679 = vmatprep.mubr.bf16.mxu0 0
  %9680 = vmatmul.mubr.bf16.gmra.mrb[0].mxu0 %v104
  %v9681 = vpop.f32.mrb[0].mxu0
  %v9682 = vadd.f32 %v9641, %v9681
  %v9683 = vpop.f32.mrb[0].mxu0
  %v9684 = vadd.f32 %v9643, %v9683
  %v9685 = vpop.f32.mrb[0].mxu0
  %v9686 = vpop.f32.mrb[0].mxu0
  %9687 = vdwg.mxu0
  %9688 = vmatprep.subr.bf16.mxu0 %v5868
  %9689 = vmatpush1.bf16.msra.mxu0 %v5867
  %9690 = vmatprep.subr.bf16.mxu0 %v5872
  %9691 = vmatpush1.bf16.msra.mxu0 %v5871
  %9692 = vmatprep.subr.bf16.mxu0 %v5876
  %9693 = vmatpush1.bf16.msra.mxu0 %v5875
  %9694 = vmatprep.subr.bf16.mxu0 %v5880
  %9695 = vmatpush1.bf16.msra.mxu0 %v5879
  %9696 = vmatprep.subr.bf16.mxu0 %v5884
  %9697 = vmatpush1.bf16.msra.mxu0 %v5883
  %9698 = vmatprep.subr.bf16.mxu0 %v5888
  %9699 = vmatpush1.bf16.msra.mxu0 %v5887
  %9700 = vmatprep.subr.bf16.mxu0 %v5892
  %9701 = vmatpush1.bf16.msra.mxu0 %v5891
  %9702 = vmatprep.subr.bf16.mxu0 %v5896
  %9703 = vmatpush1.bf16.msra.mxu0 %v5895
  %9704 = vmatprep.subr.bf16.mxu0 %v5900
  %9705 = vmatpush1.bf16.msra.mxu0 %v5899
  %9706 = vmatprep.subr.bf16.mxu0 %v5904
  %9707 = vmatpush1.bf16.msra.mxu0 %v5903
  %9708 = vmatprep.subr.bf16.mxu0 %v5908
  %9709 = vmatpush1.bf16.msra.mxu0 %v5907
  %9710 = vmatprep.subr.bf16.mxu0 %v5912
  %9711 = vmatpush1.bf16.msra.mxu0 %v5911
  %9712 = vmatprep.subr.bf16.mxu0 %v5916
  %9713 = vmatpush1.bf16.msra.mxu0 %v5915
  %9714 = vmatprep.subr.bf16.mxu0 %v5920
  %9715 = vmatpush1.bf16.msra.mxu0 %v5919
  %9716 = vmatprep.subr.bf16.mxu0 %v5924
  %9717 = vmatpush1.bf16.msra.mxu0 %v5923
  %9718 = vmatprep.subr.bf16.mxu0 %v5928
  %9719 = vmatpush1.bf16.msra.mxu0 %v5927
  %9720 = vmatprep.mubr.bf16.mxu0 %v61
  %9721 = vmatmul.mubr.bf16.gmra.mrb[0].mxu0 %v60
  %v9722 = vpop.f32.mrb[0].mxu0
  %v9723 = vadd.f32 0.0, %v9722
  %v9724 = vpop.f32.mrb[0].mxu0
  %v9725 = vadd.f32 0.0, %v9724
  %v9726 = vpop.f32.mrb[0].mxu0
  %v9727 = vpop.f32.mrb[0].mxu0
  %9728 = vdwg.mxu0
  %9729 = vmatprep.subr.bf16.mxu0 %v5932
  %9730 = vmatpush1.bf16.msra.mxu0 %v5931
  %9731 = vmatprep.subr.bf16.mxu0 %v5936
  %9732 = vmatpush1.bf16.msra.mxu0 %v5935
  %9733 = vmatprep.subr.bf16.mxu0 %v5940
  %9734 = vmatpush1.bf16.msra.mxu0 %v5939
  %9735 = vmatprep.subr.bf16.mxu0 %v5944
  %9736 = vmatpush1.bf16.msra.mxu0 %v5943
  %9737 = vmatprep.subr.bf16.mxu0 %v5948
  %9738 = vmatpush1.bf16.msra.mxu0 %v5947
  %9739 = vmatprep.subr.bf16.mxu0 %v5952
  %9740 = vmatpush1.bf16.msra.mxu0 %v5951
  %9741 = vmatprep.subr.bf16.mxu0 %v5956
  %9742 = vmatpush1.bf16.msra.mxu0 %v5955
  %9743 = vmatprep.subr.bf16.mxu0 %v5960
  %9744 = vmatpush1.bf16.msra.mxu0 %v5959
  %9745 = vmatprep.subr.bf16.mxu0 %v5964
  %9746 = vmatpush1.bf16.msra.mxu0 %v5963
  %9747 = vmatprep.subr.bf16.mxu0 %v5968
  %9748 = vmatpush1.bf16.msra.mxu0 %v5967
  %9749 = vmatprep.subr.bf16.mxu0 %v5972
  %9750 = vmatpush1.bf16.msra.mxu0 %v5971
  %9751 = vmatprep.subr.bf16.mxu0 %v5976
  %9752 = vmatpush1.bf16.msra.mxu0 %v5975
  %9753 = vmatprep.subr.bf16.mxu0 %v5980
  %9754 = vmatpush1.bf16.msra.mxu0 %v5979
  %9755 = vmatprep.subr.bf16.mxu0 %v5984
  %9756 = vmatpush1.bf16.msra.mxu0 %v5983
  %9757 = vmatprep.subr.bf16.mxu0 %v5988
  %9758 = vmatpush1.bf16.msra.mxu0 %v5987
  %9759 = vmatprep.subr.bf16.mxu0 %v5992
  %9760 = vmatpush1.bf16.msra.mxu0 %v5991
  %9761 = vmatprep.mubr.bf16.mxu0 %v63
  %9762 = vmatmul.mubr.bf16.gmra.mrb[0].mxu0 %v62
  %v9763 = vpop.f32.mrb[0].mxu0
  %v9764 = vadd.f32 %v9723, %v9763
  %v9765 = vpop.f32.mrb[0].mxu0
  %v9766 = vadd.f32 %v9725, %v9765
  %v9767 = vpop.f32.mrb[0].mxu0
  %v9768 = vpop.f32.mrb[0].mxu0
  %9769 = vdwg.mxu0
  %9770 = vmatprep.subr.bf16.mxu0 %v5996
  %9771 = vmatpush1.bf16.msra.mxu0 %v5995
  %9772 = vmatprep.subr.bf16.mxu0 %v6000
  %9773 = vmatpush1.bf16.msra.mxu0 %v5999
  %9774 = vmatprep.subr.bf16.mxu0 %v6004
  %9775 = vmatpush1.bf16.msra.mxu0 %v6003
  %9776 = vmatprep.subr.bf16.mxu0 %v6008
  %9777 = vmatpush1.bf16.msra.mxu0 %v6007
  %9778 = vmatprep.subr.bf16.mxu0 %v6012
  %9779 = vmatpush1.bf16.msra.mxu0 %v6011
  %9780 = vmatprep.subr.bf16.mxu0 %v6016
  %9781 = vmatpush1.bf16.msra.mxu0 %v6015
  %9782 = vmatprep.subr.bf16.mxu0 %v6020
  %9783 = vmatpush1.bf16.msra.mxu0 %v6019
  %9784 = vmatprep.subr.bf16.mxu0 %v6024
  %9785 = vmatpush1.bf16.msra.mxu0 %v6023
  %9786 = vmatprep.subr.bf16.mxu0 %v6028
  %9787 = vmatpush1.bf16.msra.mxu0 %v6027
  %9788 = vmatprep.subr.bf16.mxu0 %v6032
  %9789 = vmatpush1.bf16.msra.mxu0 %v6031
  %9790 = vmatprep.subr.bf16.mxu0 %v6036
  %9791 = vmatpush1.bf16.msra.mxu0 %v6035
  %9792 = vmatprep.subr.bf16.mxu0 %v6040
  %9793 = vmatpush1.bf16.msra.mxu0 %v6039
  %9794 = vmatprep.subr.bf16.mxu0 %v6044
  %9795 = vmatpush1.bf16.msra.mxu0 %v6043
  %9796 = vmatprep.subr.bf16.mxu0 %v6048
  %9797 = vmatpush1.bf16.msra.mxu0 %v6047
  %9798 = vmatprep.subr.bf16.mxu0 %v6052
  %9799 = vmatpush1.bf16.msra.mxu0 %v6051
  %9800 = vmatprep.subr.bf16.mxu0 %v6056
  %9801 = vmatpush1.bf16.msra.mxu0 %v6055
  %9802 = vmatprep.mubr.bf16.mxu0 %v65
  %9803 = vmatmul.mubr.bf16.gmra.mrb[0].mxu0 %v64
  %v9804 = vpop.f32.mrb[0].mxu0
  %v9805 = vadd.f32 %v9764, %v9804
  %v9806 = vpop.f32.mrb[0].mxu0
  %v9807 = vadd.f32 %v9766, %v9806
  %v9808 = vpop.f32.mrb[0].mxu0
  %v9809 = vpop.f32.mrb[0].mxu0
  %9810 = vdwg.mxu0
  %9811 = vmatprep.subr.bf16.mxu0 %v6060
  %9812 = vmatpush1.bf16.msra.mxu0 %v6059
  %9813 = vmatprep.subr.bf16.mxu0 %v6064
  %9814 = vmatpush1.bf16.msra.mxu0 %v6063
  %9815 = vmatprep.subr.bf16.mxu0 %v6068
  %9816 = vmatpush1.bf16.msra.mxu0 %v6067
  %9817 = vmatprep.subr.bf16.mxu0 %v6072
  %9818 = vmatpush1.bf16.msra.mxu0 %v6071
  %9819 = vmatprep.subr.bf16.mxu0 %v6076
  %9820 = vmatpush1.bf16.msra.mxu0 %v6075
  %9821 = vmatprep.subr.bf16.mxu0 %v6080
  %9822 = vmatpush1.bf16.msra.mxu0 %v6079
  %9823 = vmatprep.subr.bf16.mxu0 %v6084
  %9824 = vmatpush1.bf16.msra.mxu0 %v6083
  %9825 = vmatprep.subr.bf16.mxu0 %v6088
  %9826 = vmatpush1.bf16.msra.mxu0 %v6087
  %9827 = vmatprep.subr.bf16.mxu0 %v6092
  %9828 = vmatpush1.bf16.msra.mxu0 %v6091
  %9829 = vmatprep.subr.bf16.mxu0 %v6096
  %9830 = vmatpush1.bf16.msra.mxu0 %v6095
  %9831 = vmatprep.subr.bf16.mxu0 %v6100
  %9832 = vmatpush1.bf16.msra.mxu0 %v6099
  %9833 = vmatprep.subr.bf16.mxu0 %v6104
  %9834 = vmatpush1.bf16.msra.mxu0 %v6103
  %9835 = vmatprep.subr.bf16.mxu0 %v6108
  %9836 = vmatpush1.bf16.msra.mxu0 %v6107
  %9837 = vmatprep.subr.bf16.mxu0 %v6112
  %9838 = vmatpush1.bf16.msra.mxu0 %v6111
  %9839 = vmatprep.subr.bf16.mxu0 %v6116
  %9840 = vmatpush1.bf16.msra.mxu0 %v6115
  %9841 = vmatprep.subr.bf16.mxu0 %v6120
  %9842 = vmatpush1.bf16.msra.mxu0 %v6119
  %9843 = vmatprep.mubr.bf16.mxu0 %v67
  %9844 = vmatmul.mubr.bf16.gmra.mrb[0].mxu0 %v66
  %v9845 = vpop.f32.mrb[0].mxu0
  %v9846 = vadd.f32 %v9805, %v9845
  %v9847 = vpop.f32.mrb[0].mxu0
  %v9848 = vadd.f32 %v9807, %v9847
  %v9849 = vpop.f32.mrb[0].mxu0
  %v9850 = vpop.f32.mrb[0].mxu0
  %9851 = vdwg.mxu0
  %9852 = vmatprep.subr.bf16.mxu0 %v6124
  %9853 = vmatpush1.bf16.msra.mxu0 %v6123
  %9854 = vmatprep.subr.bf16.mxu0 %v6128
  %9855 = vmatpush1.bf16.msra.mxu0 %v6127
  %9856 = vmatprep.subr.bf16.mxu0 %v6132
  %9857 = vmatpush1.bf16.msra.mxu0 %v6131
  %9858 = vmatprep.subr.bf16.mxu0 %v6136
  %9859 = vmatpush1.bf16.msra.mxu0 %v6135
  %9860 = vmatprep.subr.bf16.mxu0 %v6140
  %9861 = vmatpush1.bf16.msra.mxu0 %v6139
  %9862 = vmatprep.subr.bf16.mxu0 %v6144
  %9863 = vmatpush1.bf16.msra.mxu0 %v6143
  %9864 = vmatprep.subr.bf16.mxu0 %v6148
  %9865 = vmatpush1.bf16.msra.mxu0 %v6147
  %9866 = vmatprep.subr.bf16.mxu0 %v6152
  %9867 = vmatpush1.bf16.msra.mxu0 %v6151
  %9868 = vmatprep.subr.bf16.mxu0 %v6156
  %9869 = vmatpush1.bf16.msra.mxu0 %v6155
  %9870 = vmatprep.subr.bf16.mxu0 %v6160
  %9871 = vmatpush1.bf16.msra.mxu0 %v6159
  %9872 = vmatprep.subr.bf16.mxu0 %v6164
  %9873 = vmatpush1.bf16.msra.mxu0 %v6163
  %9874 = vmatprep.subr.bf16.mxu0 %v6168
  %9875 = vmatpush1.bf16.msra.mxu0 %v6167
  %9876 = vmatprep.subr.bf16.mxu0 %v6172
  %9877 = vmatpush1.bf16.msra.mxu0 %v6171
  %9878 = vmatprep.subr.bf16.mxu0 %v6176
  %9879 = vmatpush1.bf16.msra.mxu0 %v6175
  %9880 = vmatprep.subr.bf16.mxu0 %v6180
  %9881 = vmatpush1.bf16.msra.mxu0 %v6179
  %9882 = vmatprep.subr.bf16.mxu0 %v6184
  %9883 = vmatpush1.bf16.msra.mxu0 %v6183
  %9884 = vmatprep.mubr.bf16.mxu0 %v69
  %9885 = vmatmul.mubr.bf16.gmra.mrb[0].mxu0 %v68
  %v9886 = vpop.f32.mrb[0].mxu0
  %v9887 = vadd.f32 %v9846, %v9886
  %v9888 = vpop.f32.mrb[0].mxu0
  %v9889 = vadd.f32 %v9848, %v9888
  %v9890 = vpop.f32.mrb[0].mxu0
  %v9891 = vpop.f32.mrb[0].mxu0
  %9892 = vdwg.mxu0
  %9893 = vmatprep.subr.bf16.mxu0 %v6188
  %9894 = vmatpush1.bf16.msra.mxu0 %v6187
  %9895 = vmatprep.subr.bf16.mxu0 %v6192
  %9896 = vmatpush1.bf16.msra.mxu0 %v6191
  %9897 = vmatprep.subr.bf16.mxu0 %v6196
  %9898 = vmatpush1.bf16.msra.mxu0 %v6195
  %9899 = vmatprep.subr.bf16.mxu0 %v6200
  %9900 = vmatpush1.bf16.msra.mxu0 %v6199
  %9901 = vmatprep.subr.bf16.mxu0 %v6204
  %9902 = vmatpush1.bf16.msra.mxu0 %v6203
  %9903 = vmatprep.subr.bf16.mxu0 %v6208
  %9904 = vmatpush1.bf16.msra.mxu0 %v6207
  %9905 = vmatprep.subr.bf16.mxu0 %v6212
  %9906 = vmatpush1.bf16.msra.mxu0 %v6211
  %9907 = vmatprep.subr.bf16.mxu0 %v6216
  %9908 = vmatpush1.bf16.msra.mxu0 %v6215
  %9909 = vmatprep.subr.bf16.mxu0 %v6220
  %9910 = vmatpush1.bf16.msra.mxu0 %v6219
  %9911 = vmatprep.subr.bf16.mxu0 %v6224
  %9912 = vmatpush1.bf16.msra.mxu0 %v6223
  %9913 = vmatprep.subr.bf16.mxu0 %v6228
  %9914 = vmatpush1.bf16.msra.mxu0 %v6227
  %9915 = vmatprep.subr.bf16.mxu0 %v6232
  %9916 = vmatpush1.bf16.msra.mxu0 %v6231
  %9917 = vmatprep.subr.bf16.mxu0 %v6236
  %9918 = vmatpush1.bf16.msra.mxu0 %v6235
  %9919 = vmatprep.subr.bf16.mxu0 %v6240
  %9920 = vmatpush1.bf16.msra.mxu0 %v6239
  %9921 = vmatprep.subr.bf16.mxu0 %v6244
  %9922 = vmatpush1.bf16.msra.mxu0 %v6243
  %9923 = vmatprep.subr.bf16.mxu0 %v6248
  %9924 = vmatpush1.bf16.msra.mxu0 %v6247
  %9925 = vmatprep.mubr.bf16.mxu0 %v71
  %9926 = vmatmul.mubr.bf16.gmra.mrb[0].mxu0 %v70
  %v9927 = vpop.f32.mrb[0].mxu0
  %v9928 = vadd.f32 %v9887, %v9927
  %v9929 = vpop.f32.mrb[0].mxu0
  %v9930 = vadd.f32 %v9889, %v9929
  %v9931 = vpop.f32.mrb[0].mxu0
  %v9932 = vpop.f32.mrb[0].mxu0
  %9933 = vdwg.mxu0
  %9934 = vmatprep.subr.bf16.mxu0 %v6252
  %9935 = vmatpush1.bf16.msra.mxu0 %v6251
  %9936 = vmatprep.subr.bf16.mxu0 %v6256
  %9937 = vmatpush1.bf16.msra.mxu0 %v6255
  %9938 = vmatprep.subr.bf16.mxu0 %v6260
  %9939 = vmatpush1.bf16.msra.mxu0 %v6259
  %9940 = vmatprep.subr.bf16.mxu0 %v6264
  %9941 = vmatpush1.bf16.msra.mxu0 %v6263
  %9942 = vmatprep.subr.bf16.mxu0 %v6268
  %9943 = vmatpush1.bf16.msra.mxu0 %v6267
  %9944 = vmatprep.subr.bf16.mxu0 %v6272
  %9945 = vmatpush1.bf16.msra.mxu0 %v6271
  %9946 = vmatprep.subr.bf16.mxu0 %v6276
  %9947 = vmatpush1.bf16.msra.mxu0 %v6275
  %9948 = vmatprep.subr.bf16.mxu0 %v6280
  %9949 = vmatpush1.bf16.msra.mxu0 %v6279
  %9950 = vmatprep.subr.bf16.mxu0 %v6284
  %9951 = vmatpush1.bf16.msra.mxu0 %v6283
  %9952 = vmatprep.subr.bf16.mxu0 %v6288
  %9953 = vmatpush1.bf16.msra.mxu0 %v6287
  %9954 = vmatprep.subr.bf16.mxu0 %v6292
  %9955 = vmatpush1.bf16.msra.mxu0 %v6291
  %9956 = vmatprep.subr.bf16.mxu0 %v6296
  %9957 = vmatpush1.bf16.msra.mxu0 %v6295
  %9958 = vmatprep.subr.bf16.mxu0 %v6300
  %9959 = vmatpush1.bf16.msra.mxu0 %v6299
  %9960 = vmatprep.subr.bf16.mxu0 %v6304
  %9961 = vmatpush1.bf16.msra.mxu0 %v6303
  %9962 = vmatprep.subr.bf16.mxu0 %v6308
  %9963 = vmatpush1.bf16.msra.mxu0 %v6307
  %9964 = vmatprep.subr.bf16.mxu0 %v6312
  %9965 = vmatpush1.bf16.msra.mxu0 %v6311
  %9966 = vmatprep.mubr.bf16.mxu0 %v73
  %9967 = vmatmul.mubr.bf16.gmra.mrb[0].mxu0 %v72
  %v9968 = vpop.f32.mrb[0].mxu0
  %v9969 = vadd.f32 %v9928, %v9968
  %v9970 = vpop.f32.mrb[0].mxu0
  %v9971 = vadd.f32 %v9930, %v9970
  %v9972 = vpop.f32.mrb[0].mxu0
  %v9973 = vpop.f32.mrb[0].mxu0
  %9974 = vdwg.mxu0
  %9975 = vmatprep.subr.bf16.mxu0 %v6316
  %9976 = vmatpush1.bf16.msra.mxu0 %v6315
  %9977 = vmatprep.subr.bf16.mxu0 %v6320
  %9978 = vmatpush1.bf16.msra.mxu0 %v6319
  %9979 = vmatprep.subr.bf16.mxu0 %v6324
  %9980 = vmatpush1.bf16.msra.mxu0 %v6323
  %9981 = vmatprep.subr.bf16.mxu0 %v6328
  %9982 = vmatpush1.bf16.msra.mxu0 %v6327
  %9983 = vmatprep.subr.bf16.mxu0 %v6332
  %9984 = vmatpush1.bf16.msra.mxu0 %v6331
  %9985 = vmatprep.subr.bf16.mxu0 %v6336
  %9986 = vmatpush1.bf16.msra.mxu0 %v6335
  %9987 = vmatprep.subr.bf16.mxu0 %v6340
  %9988 = vmatpush1.bf16.msra.mxu0 %v6339
  %9989 = vmatprep.subr.bf16.mxu0 %v6344
  %9990 = vmatpush1.bf16.msra.mxu0 %v6343
  %9991 = vmatprep.subr.bf16.mxu0 %v6348
  %9992 = vmatpush1.bf16.msra.mxu0 %v6347
  %9993 = vmatprep.subr.bf16.mxu0 %v6352
  %9994 = vmatpush1.bf16.msra.mxu0 %v6351
  %9995 = vmatprep.subr.bf16.mxu0 %v6356
  %9996 = vmatpush1.bf16.msra.mxu0 %v6355
  %9997 = vmatprep.subr.bf16.mxu0 %v6360
  %9998 = vmatpush1.bf16.msra.mxu0 %v6359
  %9999 = vmatprep.subr.bf16.mxu0 %v6364
  %10000 = vmatpush1.bf16.msra.mxu0 %v6363
  %10001 = vmatprep.subr.bf16.mxu0 %v6368
  %10002 = vmatpush1.bf16.msra.mxu0 %v6367
  %10003 = vmatprep.subr.bf16.mxu0 %v6372
  %10004 = vmatpush1.bf16.msra.mxu0 %v6371
  %10005 = vmatprep.subr.bf16.mxu0 %v6376
  %10006 = vmatpush1.bf16.msra.mxu0 %v6375
  %10007 = vmatprep.mubr.bf16.mxu0 %v75
  %10008 = vmatmul.mubr.bf16.gmra.mrb[0].mxu0 %v74
  %v10009 = vpop.f32.mrb[0].mxu0
  %v10010 = vadd.f32 %v9969, %v10009
  %v10011 = vpop.f32.mrb[0].mxu0
  %v10012 = vadd.f32 %v9971, %v10011
  %v10013 = vpop.f32.mrb[0].mxu0
  %v10014 = vpop.f32.mrb[0].mxu0
  %10015 = vdwg.mxu0
  %10016 = vmatprep.subr.bf16.mxu0 %v6380
  %10017 = vmatpush1.bf16.msra.mxu0 %v6379
  %10018 = vmatprep.subr.bf16.mxu0 %v6384
  %10019 = vmatpush1.bf16.msra.mxu0 %v6383
  %10020 = vmatprep.subr.bf16.mxu0 %v6388
  %10021 = vmatpush1.bf16.msra.mxu0 %v6387
  %10022 = vmatprep.subr.bf16.mxu0 %v6392
  %10023 = vmatpush1.bf16.msra.mxu0 %v6391
  %10024 = vmatprep.subr.bf16.mxu0 %v6396
  %10025 = vmatpush1.bf16.msra.mxu0 %v6395
  %10026 = vmatprep.subr.bf16.mxu0 %v6400
  %10027 = vmatpush1.bf16.msra.mxu0 %v6399
  %10028 = vmatprep.subr.bf16.mxu0 %v6404
  %10029 = vmatpush1.bf16.msra.mxu0 %v6403
  %10030 = vmatprep.subr.bf16.mxu0 %v6408
  %10031 = vmatpush1.bf16.msra.mxu0 %v6407
  %10032 = vmatprep.subr.bf16.mxu0 %v6412
  %10033 = vmatpush1.bf16.msra.mxu0 %v6411
  %10034 = vmatprep.subr.bf16.mxu0 %v6416
  %10035 = vmatpush1.bf16.msra.mxu0 %v6415
  %10036 = vmatprep.subr.bf16.mxu0 %v6420
  %10037 = vmatpush1.bf16.msra.mxu0 %v6419
  %10038 = vmatprep.subr.bf16.mxu0 %v6424
  %10039 = vmatpush1.bf16.msra.mxu0 %v6423
  %10040 = vmatprep.subr.bf16.mxu0 %v6428
  %10041 = vmatpush1.bf16.msra.mxu0 %v6427
  %10042 = vmatprep.subr.bf16.mxu0 %v6432
  %10043 = vmatpush1.bf16.msra.mxu0 %v6431
  %10044 = vmatprep.subr.bf16.mxu0 %v6436
  %10045 = vmatpush1.bf16.msra.mxu0 %v6435
  %10046 = vmatprep.subr.bf16.mxu0 %v6440
  %10047 = vmatpush1.bf16.msra.mxu0 %v6439
  %10048 = vmatprep.mubr.bf16.mxu0 %v77
  %10049 = vmatmul.mubr.bf16.gmra.mrb[0].mxu0 %v76
  %v10050 = vpop.f32.mrb[0].mxu0
  %v10051 = vadd.f32 %v10010, %v10050
  %v10052 = vpop.f32.mrb[0].mxu0
  %v10053 = vadd.f32 %v10012, %v10052
  %v10054 = vpop.f32.mrb[0].mxu0
  %v10055 = vpop.f32.mrb[0].mxu0
  %10056 = vdwg.mxu0
  %10057 = vmatprep.subr.bf16.mxu0 %v6444
  %10058 = vmatpush1.bf16.msra.mxu0 %v6443
  %10059 = vmatprep.subr.bf16.mxu0 %v6448
  %10060 = vmatpush1.bf16.msra.mxu0 %v6447
  %10061 = vmatprep.subr.bf16.mxu0 %v6452
  %10062 = vmatpush1.bf16.msra.mxu0 %v6451
  %10063 = vmatprep.subr.bf16.mxu0 %v6456
  %10064 = vmatpush1.bf16.msra.mxu0 %v6455
  %10065 = vmatprep.subr.bf16.mxu0 %v6460
  %10066 = vmatpush1.bf16.msra.mxu0 %v6459
  %10067 = vmatprep.subr.bf16.mxu0 %v6464
  %10068 = vmatpush1.bf16.msra.mxu0 %v6463
  %10069 = vmatprep.subr.bf16.mxu0 %v6468
  %10070 = vmatpush1.bf16.msra.mxu0 %v6467
  %10071 = vmatprep.subr.bf16.mxu0 %v6472
  %10072 = vmatpush1.bf16.msra.mxu0 %v6471
  %10073 = vmatprep.subr.bf16.mxu0 %v6476
  %10074 = vmatpush1.bf16.msra.mxu0 %v6475
  %10075 = vmatprep.subr.bf16.mxu0 %v6480
  %10076 = vmatpush1.bf16.msra.mxu0 %v6479
  %10077 = vmatprep.subr.bf16.mxu0 %v6484
  %10078 = vmatpush1.bf16.msra.mxu0 %v6483
  %10079 = vmatprep.subr.bf16.mxu0 %v6488
  %10080 = vmatpush1.bf16.msra.mxu0 %v6487
  %10081 = vmatprep.subr.bf16.mxu0 %v6492
  %10082 = vmatpush1.bf16.msra.mxu0 %v6491
  %10083 = vmatprep.subr.bf16.mxu0 %v6496
  %10084 = vmatpush1.bf16.msra.mxu0 %v6495
  %10085 = vmatprep.subr.bf16.mxu0 %v6500
  %10086 = vmatpush1.bf16.msra.mxu0 %v6499
  %10087 = vmatprep.subr.bf16.mxu0 %v6504
  %10088 = vmatpush1.bf16.msra.mxu0 %v6503
  %10089 = vmatprep.mubr.bf16.mxu0 %v79
  %10090 = vmatmul.mubr.bf16.gmra.mrb[0].mxu0 %v78
  %v10091 = vpop.f32.mrb[0].mxu0
  %v10092 = vadd.f32 %v10051, %v10091
  %v10093 = vpop.f32.mrb[0].mxu0
  %v10094 = vadd.f32 %v10053, %v10093
  %v10095 = vpop.f32.mrb[0].mxu0
  %v10096 = vpop.f32.mrb[0].mxu0
  %10097 = vdwg.mxu0
  %10098 = vmatprep.subr.bf16.mxu0 %v6508
  %10099 = vmatpush1.bf16.msra.mxu0 %v6507
  %10100 = vmatprep.subr.bf16.mxu0 %v6512
  %10101 = vmatpush1.bf16.msra.mxu0 %v6511
  %10102 = vmatprep.subr.bf16.mxu0 %v6516
  %10103 = vmatpush1.bf16.msra.mxu0 %v6515
  %10104 = vmatprep.subr.bf16.mxu0 %v6520
  %10105 = vmatpush1.bf16.msra.mxu0 %v6519
  %10106 = vmatprep.subr.bf16.mxu0 %v6524
  %10107 = vmatpush1.bf16.msra.mxu0 %v6523
  %10108 = vmatprep.subr.bf16.mxu0 %v6528
  %10109 = vmatpush1.bf16.msra.mxu0 %v6527
  %10110 = vmatprep.subr.bf16.mxu0 %v6532
  %10111 = vmatpush1.bf16.msra.mxu0 %v6531
  %10112 = vmatprep.subr.bf16.mxu0 %v6536
  %10113 = vmatpush1.bf16.msra.mxu0 %v6535
  %10114 = vmatprep.subr.bf16.mxu0 %v6540
  %10115 = vmatpush1.bf16.msra.mxu0 %v6539
  %10116 = vmatprep.subr.bf16.mxu0 %v6544
  %10117 = vmatpush1.bf16.msra.mxu0 %v6543
  %10118 = vmatprep.subr.bf16.mxu0 %v6548
  %10119 = vmatpush1.bf16.msra.mxu0 %v6547
  %10120 = vmatprep.subr.bf16.mxu0 %v6552
  %10121 = vmatpush1.bf16.msra.mxu0 %v6551
  %10122 = vmatprep.subr.bf16.mxu0 %v6556
  %10123 = vmatpush1.bf16.msra.mxu0 %v6555
  %10124 = vmatprep.subr.bf16.mxu0 %v6560
  %10125 = vmatpush1.bf16.msra.mxu0 %v6559
  %10126 = vmatprep.subr.bf16.mxu0 %v6564
  %10127 = vmatpush1.bf16.msra.mxu0 %v6563
  %10128 = vmatprep.subr.bf16.mxu0 %v6568
  %10129 = vmatpush1.bf16.msra.mxu0 %v6567
  %10130 = vmatprep.mubr.bf16.mxu0 %v81
  %10131 = vmatmul.mubr.bf16.gmra.mrb[0].mxu0 %v80
  %v10132 = vpop.f32.mrb[0].mxu0
  %v10133 = vadd.f32 %v10092, %v10132
  %v10134 = vpop.f32.mrb[0].mxu0
  %v10135 = vadd.f32 %v10094, %v10134
  %v10136 = vpop.f32.mrb[0].mxu0
  %v10137 = vpop.f32.mrb[0].mxu0
  %10138 = vdwg.mxu0
  %10139 = vmatprep.subr.bf16.mxu0 %v6572
  %10140 = vmatpush1.bf16.msra.mxu0 %v6571
  %10141 = vmatprep.subr.bf16.mxu0 %v6576
  %10142 = vmatpush1.bf16.msra.mxu0 %v6575
  %10143 = vmatprep.subr.bf16.mxu0 %v6580
  %10144 = vmatpush1.bf16.msra.mxu0 %v6579
  %10145 = vmatprep.subr.bf16.mxu0 %v6584
  %10146 = vmatpush1.bf16.msra.mxu0 %v6583
  %10147 = vmatprep.subr.bf16.mxu0 %v6588
  %10148 = vmatpush1.bf16.msra.mxu0 %v6587
  %10149 = vmatprep.subr.bf16.mxu0 %v6592
  %10150 = vmatpush1.bf16.msra.mxu0 %v6591
  %10151 = vmatprep.subr.bf16.mxu0 %v6596
  %10152 = vmatpush1.bf16.msra.mxu0 %v6595
  %10153 = vmatprep.subr.bf16.mxu0 %v6600
  %10154 = vmatpush1.bf16.msra.mxu0 %v6599
  %10155 = vmatprep.subr.bf16.mxu0 %v6604
  %10156 = vmatpush1.bf16.msra.mxu0 %v6603
  %10157 = vmatprep.subr.bf16.mxu0 %v6608
  %10158 = vmatpush1.bf16.msra.mxu0 %v6607
  %10159 = vmatprep.subr.bf16.mxu0 %v6612
  %10160 = vmatpush1.bf16.msra.mxu0 %v6611
  %10161 = vmatprep.subr.bf16.mxu0 %v6616
  %10162 = vmatpush1.bf16.msra.mxu0 %v6615
  %10163 = vmatprep.subr.bf16.mxu0 %v6620
  %10164 = vmatpush1.bf16.msra.mxu0 %v6619
  %10165 = vmatprep.subr.bf16.mxu0 %v6624
  %10166 = vmatpush1.bf16.msra.mxu0 %v6623
  %10167 = vmatprep.subr.bf16.mxu0 %v6628
  %10168 = vmatpush1.bf16.msra.mxu0 %v6627
  %10169 = vmatprep.subr.bf16.mxu0 %v6632
  %10170 = vmatpush1.bf16.msra.mxu0 %v6631
  %10171 = vmatprep.mubr.bf16.mxu0 %v83
  %10172 = vmatmul.mubr.bf16.gmra.mrb[0].mxu0 %v82
  %v10173 = vpop.f32.mrb[0].mxu0
  %v10174 = vadd.f32 %v10133, %v10173
  %v10175 = vpop.f32.mrb[0].mxu0
  %v10176 = vadd.f32 %v10135, %v10175
  %v10177 = vpop.f32.mrb[0].mxu0
  %v10178 = vpop.f32.mrb[0].mxu0
  %10179 = vdwg.mxu0
  %10180 = vmatprep.subr.bf16.mxu0 %v6636
  %10181 = vmatpush1.bf16.msra.mxu0 %v6635
  %10182 = vmatprep.subr.bf16.mxu0 %v6640
  %10183 = vmatpush1.bf16.msra.mxu0 %v6639
  %10184 = vmatprep.subr.bf16.mxu0 %v6644
  %10185 = vmatpush1.bf16.msra.mxu0 %v6643
  %10186 = vmatprep.subr.bf16.mxu0 %v6648
  %10187 = vmatpush1.bf16.msra.mxu0 %v6647
  %10188 = vmatprep.subr.bf16.mxu0 %v6652
  %10189 = vmatpush1.bf16.msra.mxu0 %v6651
  %10190 = vmatprep.subr.bf16.mxu0 %v6656
  %10191 = vmatpush1.bf16.msra.mxu0 %v6655
  %10192 = vmatprep.subr.bf16.mxu0 %v6660
  %10193 = vmatpush1.bf16.msra.mxu0 %v6659
  %10194 = vmatprep.subr.bf16.mxu0 %v6664
  %10195 = vmatpush1.bf16.msra.mxu0 %v6663
  %10196 = vmatprep.subr.bf16.mxu0 %v6668
  %10197 = vmatpush1.bf16.msra.mxu0 %v6667
  %10198 = vmatprep.subr.bf16.mxu0 %v6672
  %10199 = vmatpush1.bf16.msra.mxu0 %v6671
  %10200 = vmatprep.subr.bf16.mxu0 %v6676
  %10201 = vmatpush1.bf16.msra.mxu0 %v6675
  %10202 = vmatprep.subr.bf16.mxu0 %v6680
  %10203 = vmatpush1.bf16.msra.mxu0 %v6679
  %10204 = vmatprep.subr.bf16.mxu0 %v6684
  %10205 = vmatpush1.bf16.msra.mxu0 %v6683
  %10206 = vmatprep.subr.bf16.mxu0 %v6688
  %10207 = vmatpush1.bf16.msra.mxu0 %v6687
  %10208 = vmatprep.subr.bf16.mxu0 %v6692
  %10209 = vmatpush1.bf16.msra.mxu0 %v6691
  %10210 = vmatprep.subr.bf16.mxu0 %v6696
  %10211 = vmatpush1.bf16.msra.mxu0 %v6695
  %10212 = vmatprep.mubr.bf16.mxu0 %v85
  %10213 = vmatmul.mubr.bf16.gmra.mrb[0].mxu0 %v84
  %v10214 = vpop.f32.mrb[0].mxu0
  %v10215 = vadd.f32 %v10174, %v10214
  %v10216 = vpop.f32.mrb[0].mxu0
  %v10217 = vadd.f32 %v10176, %v10216
  %v10218 = vpop.f32.mrb[0].mxu0
  %v10219 = vpop.f32.mrb[0].mxu0
  %10220 = vdwg.mxu0
  %10221 = vmatprep.subr.bf16.mxu0 %v6700
  %10222 = vmatpush1.bf16.msra.mxu0 %v6699
  %10223 = vmatprep.subr.bf16.mxu0 %v6704
  %10224 = vmatpush1.bf16.msra.mxu0 %v6703
  %10225 = vmatprep.subr.bf16.mxu0 %v6708
  %10226 = vmatpush1.bf16.msra.mxu0 %v6707
  %10227 = vmatprep.subr.bf16.mxu0 %v6712
  %10228 = vmatpush1.bf16.msra.mxu0 %v6711
  %10229 = vmatprep.subr.bf16.mxu0 %v6716
  %10230 = vmatpush1.bf16.msra.mxu0 %v6715
  %10231 = vmatprep.subr.bf16.mxu0 %v6720
  %10232 = vmatpush1.bf16.msra.mxu0 %v6719
  %10233 = vmatprep.subr.bf16.mxu0 %v6724
  %10234 = vmatpush1.bf16.msra.mxu0 %v6723
  %10235 = vmatprep.subr.bf16.mxu0 %v6728
  %10236 = vmatpush1.bf16.msra.mxu0 %v6727
  %10237 = vmatprep.subr.bf16.mxu0 %v6732
  %10238 = vmatpush1.bf16.msra.mxu0 %v6731
  %10239 = vmatprep.subr.bf16.mxu0 %v6736
  %10240 = vmatpush1.bf16.msra.mxu0 %v6735
  %10241 = vmatprep.subr.bf16.mxu0 %v6740
  %10242 = vmatpush1.bf16.msra.mxu0 %v6739
  %10243 = vmatprep.subr.bf16.mxu0 %v6744
  %10244 = vmatpush1.bf16.msra.mxu0 %v6743
  %10245 = vmatprep.subr.bf16.mxu0 %v6748
  %10246 = vmatpush1.bf16.msra.mxu0 %v6747
  %10247 = vmatprep.subr.bf16.mxu0 %v6752
  %10248 = vmatpush1.bf16.msra.mxu0 %v6751
  %10249 = vmatprep.subr.bf16.mxu0 %v6756
  %10250 = vmatpush1.bf16.msra.mxu0 %v6755
  %10251 = vmatprep.subr.bf16.mxu0 %v6760
  %10252 = vmatpush1.bf16.msra.mxu0 %v6759
  %10253 = vmatprep.mubr.bf16.mxu0 %v87
  %10254 = vmatmul.mubr.bf16.gmra.mrb[0].mxu0 %v86
  %v10255 = vpop.f32.mrb[0].mxu0
  %v10256 = vadd.f32 %v10215, %v10255
  %v10257 = vpop.f32.mrb[0].mxu0
  %v10258 = vadd.f32 %v10217, %v10257
  %v10259 = vpop.f32.mrb[0].mxu0
  %v10260 = vpop.f32.mrb[0].mxu0
  %10261 = vdwg.mxu0
  %10262 = vmatprep.subr.bf16.mxu0 %v6764
  %10263 = vmatpush1.bf16.msra.mxu0 %v6763
  %10264 = vmatprep.subr.bf16.mxu0 %v6768
  %10265 = vmatpush1.bf16.msra.mxu0 %v6767
  %10266 = vmatprep.subr.bf16.mxu0 %v6772
  %10267 = vmatpush1.bf16.msra.mxu0 %v6771
  %10268 = vmatprep.subr.bf16.mxu0 %v6776
  %10269 = vmatpush1.bf16.msra.mxu0 %v6775
  %10270 = vmatprep.subr.bf16.mxu0 %v6780
  %10271 = vmatpush1.bf16.msra.mxu0 %v6779
  %10272 = vmatprep.subr.bf16.mxu0 %v6784
  %10273 = vmatpush1.bf16.msra.mxu0 %v6783
  %10274 = vmatprep.subr.bf16.mxu0 %v6788
  %10275 = vmatpush1.bf16.msra.mxu0 %v6787
  %10276 = vmatprep.subr.bf16.mxu0 %v6792
  %10277 = vmatpush1.bf16.msra.mxu0 %v6791
  %10278 = vmatprep.subr.bf16.mxu0 %v6796
  %10279 = vmatpush1.bf16.msra.mxu0 %v6795
  %10280 = vmatprep.subr.bf16.mxu0 %v6800
  %10281 = vmatpush1.bf16.msra.mxu0 %v6799
  %10282 = vmatprep.subr.bf16.mxu0 %v6804
  %10283 = vmatpush1.bf16.msra.mxu0 %v6803
  %10284 = vmatprep.subr.bf16.mxu0 %v6808
  %10285 = vmatpush1.bf16.msra.mxu0 %v6807
  %10286 = vmatprep.subr.bf16.mxu0 %v6812
  %10287 = vmatpush1.bf16.msra.mxu0 %v6811
  %10288 = vmatprep.subr.bf16.mxu0 %v6816
  %10289 = vmatpush1.bf16.msra.mxu0 %v6815
  %10290 = vmatprep.subr.bf16.mxu0 %v6820
  %10291 = vmatpush1.bf16.msra.mxu0 %v6819
  %10292 = vmatprep.subr.bf16.mxu0 %v6824
  %10293 = vmatpush1.bf16.msra.mxu0 %v6823
  %10294 = vmatprep.mubr.bf16.mxu0 %v89
  %10295 = vmatmul.mubr.bf16.gmra.mrb[0].mxu0 %v88
  %v10296 = vpop.f32.mrb[0].mxu0
  %v10297 = vadd.f32 %v10256, %v10296
  %v10298 = vpop.f32.mrb[0].mxu0
  %v10299 = vadd.f32 %v10258, %v10298
  %v10300 = vpop.f32.mrb[0].mxu0
  %v10301 = vpop.f32.mrb[0].mxu0
  %10302 = vdwg.mxu0
  %10303 = vmatprep.subr.bf16.mxu0 %v6828
  %10304 = vmatpush1.bf16.msra.mxu0 %v6827
  %10305 = vmatprep.subr.bf16.mxu0 %v6832
  %10306 = vmatpush1.bf16.msra.mxu0 %v6831
  %10307 = vmatprep.subr.bf16.mxu0 %v6836
  %10308 = vmatpush1.bf16.msra.mxu0 %v6835
  %10309 = vmatprep.subr.bf16.mxu0 %v6840
  %10310 = vmatpush1.bf16.msra.mxu0 %v6839
  %10311 = vmatprep.subr.bf16.mxu0 %v6844
  %10312 = vmatpush1.bf16.msra.mxu0 %v6843
  %10313 = vmatprep.subr.bf16.mxu0 %v6848
  %10314 = vmatpush1.bf16.msra.mxu0 %v6847
  %10315 = vmatprep.subr.bf16.mxu0 %v6852
  %10316 = vmatpush1.bf16.msra.mxu0 %v6851
  %10317 = vmatprep.subr.bf16.mxu0 %v6856
  %10318 = vmatpush1.bf16.msra.mxu0 %v6855
  %10319 = vmatprep.subr.bf16.mxu0 %v6860
  %10320 = vmatpush1.bf16.msra.mxu0 %v6859
  %10321 = vmatprep.subr.bf16.mxu0 %v6864
  %10322 = vmatpush1.bf16.msra.mxu0 %v6863
  %10323 = vmatprep.subr.bf16.mxu0 %v6868
  %10324 = vmatpush1.bf16.msra.mxu0 %v6867
  %10325 = vmatprep.subr.bf16.mxu0 %v6872
  %10326 = vmatpush1.bf16.msra.mxu0 %v6871
  %10327 = vmatprep.subr.bf16.mxu0 %v6876
  %10328 = vmatpush1.bf16.msra.mxu0 %v6875
  %10329 = vmatprep.subr.bf16.mxu0 %v6880
  %10330 = vmatpush1.bf16.msra.mxu0 %v6879
  %10331 = vmatprep.subr.bf16.mxu0 %v6884
  %10332 = vmatpush1.bf16.msra.mxu0 %v6883
  %10333 = vmatprep.subr.bf16.mxu0 %v6888
  %10334 = vmatpush1.bf16.msra.mxu0 %v6887
  %10335 = vmatprep.mubr.bf16.mxu0 %v91
  %10336 = vmatmul.mubr.bf16.gmra.mrb[0].mxu0 %v90
  %v10337 = vpop.f32.mrb[0].mxu0
  %v10338 = vadd.f32 %v10297, %v10337
  %v10339 = vpop.f32.mrb[0].mxu0
  %v10340 = vadd.f32 %v10299, %v10339
  %v10341 = vpop.f32.mrb[0].mxu0
  %v10342 = vpop.f32.mrb[0].mxu0
  %10343 = vdwg.mxu0
  %10344 = vmatprep.subr.bf16.mxu0 %v6892
  %10345 = vmatpush1.bf16.msra.mxu0 %v6891
  %10346 = vmatprep.subr.bf16.mxu0 %v6896
  %10347 = vmatpush1.bf16.msra.mxu0 %v6895
  %10348 = vmatprep.subr.bf16.mxu0 %v6900
  %10349 = vmatpush1.bf16.msra.mxu0 %v6899
  %10350 = vmatprep.subr.bf16.mxu0 %v6904
  %10351 = vmatpush1.bf16.msra.mxu0 %v6903
  %10352 = vmatprep.subr.bf16.mxu0 %v6908
  %10353 = vmatpush1.bf16.msra.mxu0 %v6907
  %10354 = vmatprep.subr.bf16.mxu0 %v6912
  %10355 = vmatpush1.bf16.msra.mxu0 %v6911
  %10356 = vmatprep.subr.bf16.mxu0 %v6916
  %10357 = vmatpush1.bf16.msra.mxu0 %v6915
  %10358 = vmatprep.subr.bf16.mxu0 %v6920
  %10359 = vmatpush1.bf16.msra.mxu0 %v6919
  %10360 = vmatprep.subr.bf16.mxu0 %v6924
  %10361 = vmatpush1.bf16.msra.mxu0 %v6923
  %10362 = vmatprep.subr.bf16.mxu0 %v6928
  %10363 = vmatpush1.bf16.msra.mxu0 %v6927
  %10364 = vmatprep.subr.bf16.mxu0 %v6932
  %10365 = vmatpush1.bf16.msra.mxu0 %v6931
  %10366 = vmatprep.subr.bf16.mxu0 %v6936
  %10367 = vmatpush1.bf16.msra.mxu0 %v6935
  %10368 = vmatprep.subr.bf16.mxu0 %v6940
  %10369 = vmatpush1.bf16.msra.mxu0 %v6939
  %10370 = vmatprep.subr.bf16.mxu0 %v6944
  %10371 = vmatpush1.bf16.msra.mxu0 %v6943
  %10372 = vmatprep.subr.bf16.mxu0 %v6948
  %10373 = vmatpush1.bf16.msra.mxu0 %v6947
  %10374 = vmatprep.subr.bf16.mxu0 %v6952
  %10375 = vmatpush1.bf16.msra.mxu0 %v6951
  %10376 = vmatprep.mubr.bf16.mxu0 %v93
  %10377 = vmatmul.mubr.bf16.gmra.mrb[0].mxu0 %v92
  %v10378 = vpop.f32.mrb[0].mxu0
  %v10379 = vadd.f32 %v10338, %v10378
  %v10380 = vpop.f32.mrb[0].mxu0
  %v10381 = vadd.f32 %v10340, %v10380
  %v10382 = vpop.f32.mrb[0].mxu0
  %v10383 = vpop.f32.mrb[0].mxu0
  %10384 = vdwg.mxu0
  %10385 = vmatprep.subr.bf16.mxu0 %v6956
  %10386 = vmatpush1.bf16.msra.mxu0 %v6955
  %10387 = vmatprep.subr.bf16.mxu0 %v6960
  %10388 = vmatpush1.bf16.msra.mxu0 %v6959
  %10389 = vmatprep.subr.bf16.mxu0 %v6964
  %10390 = vmatpush1.bf16.msra.mxu0 %v6963
  %10391 = vmatprep.subr.bf16.mxu0 %v6968
  %10392 = vmatpush1.bf16.msra.mxu0 %v6967
  %10393 = vmatprep.subr.bf16.mxu0 %v6972
  %10394 = vmatpush1.bf16.msra.mxu0 %v6971
  %10395 = vmatprep.subr.bf16.mxu0 %v6976
  %10396 = vmatpush1.bf16.msra.mxu0 %v6975
  %10397 = vmatprep.subr.bf16.mxu0 %v6980
  %10398 = vmatpush1.bf16.msra.mxu0 %v6979
  %10399 = vmatprep.subr.bf16.mxu0 %v6984
  %10400 = vmatpush1.bf16.msra.mxu0 %v6983
  %10401 = vmatprep.subr.bf16.mxu0 %v6988
  %10402 = vmatpush1.bf16.msra.mxu0 %v6987
  %10403 = vmatprep.subr.bf16.mxu0 %v6992
  %10404 = vmatpush1.bf16.msra.mxu0 %v6991
  %10405 = vmatprep.subr.bf16.mxu0 %v6996
  %10406 = vmatpush1.bf16.msra.mxu0 %v6995
  %10407 = vmatprep.subr.bf16.mxu0 %v7000
  %10408 = vmatpush1.bf16.msra.mxu0 %v6999
  %10409 = vmatprep.subr.bf16.mxu0 %v7004
  %10410 = vmatpush1.bf16.msra.mxu0 %v7003
  %10411 = vmatprep.subr.bf16.mxu0 %v7008
  %10412 = vmatpush1.bf16.msra.mxu0 %v7007
  %10413 = vmatprep.subr.bf16.mxu0 %v7012
  %10414 = vmatpush1.bf16.msra.mxu0 %v7011
  %10415 = vmatprep.subr.bf16.mxu0 %v7016
  %10416 = vmatpush1.bf16.msra.mxu0 %v7015
  %10417 = vmatprep.mubr.bf16.mxu0 %v95
  %10418 = vmatmul.mubr.bf16.gmra.mrb[0].mxu0 %v94
  %v10419 = vpop.f32.mrb[0].mxu0
  %v10420 = vadd.f32 %v10379, %v10419
  %v10421 = vpop.f32.mrb[0].mxu0
  %v10422 = vadd.f32 %v10381, %v10421
  %v10423 = vpop.f32.mrb[0].mxu0
  %v10424 = vpop.f32.mrb[0].mxu0
  %10425 = vdwg.mxu0
  %10426 = vmatprep.subr.bf16.mxu0 %v7020
  %10427 = vmatpush1.bf16.msra.mxu0 %v7019
  %10428 = vmatprep.subr.bf16.mxu0 %v7024
  %10429 = vmatpush1.bf16.msra.mxu0 %v7023
  %10430 = vmatprep.subr.bf16.mxu0 %v7028
  %10431 = vmatpush1.bf16.msra.mxu0 %v7027
  %10432 = vmatprep.subr.bf16.mxu0 %v7032
  %10433 = vmatpush1.bf16.msra.mxu0 %v7031
  %10434 = vmatprep.subr.bf16.mxu0 %v7036
  %10435 = vmatpush1.bf16.msra.mxu0 %v7035
  %10436 = vmatprep.subr.bf16.mxu0 %v7040
  %10437 = vmatpush1.bf16.msra.mxu0 %v7039
  %10438 = vmatprep.subr.bf16.mxu0 %v7044
  %10439 = vmatpush1.bf16.msra.mxu0 %v7043
  %10440 = vmatprep.subr.bf16.mxu0 %v7048
  %10441 = vmatpush1.bf16.msra.mxu0 %v7047
  %10442 = vmatprep.subr.bf16.mxu0 %v7052
  %10443 = vmatpush1.bf16.msra.mxu0 %v7051
  %10444 = vmatprep.subr.bf16.mxu0 %v7056
  %10445 = vmatpush1.bf16.msra.mxu0 %v7055
  %10446 = vmatprep.subr.bf16.mxu0 %v7060
  %10447 = vmatpush1.bf16.msra.mxu0 %v7059
  %10448 = vmatprep.subr.bf16.mxu0 %v7064
  %10449 = vmatpush1.bf16.msra.mxu0 %v7063
  %10450 = vmatprep.subr.bf16.mxu0 %v7068
  %10451 = vmatpush1.bf16.msra.mxu0 %v7067
  %10452 = vmatprep.subr.bf16.mxu0 %v7072
  %10453 = vmatpush1.bf16.msra.mxu0 %v7071
  %10454 = vmatprep.subr.bf16.mxu0 %v7076
  %10455 = vmatpush1.bf16.msra.mxu0 %v7075
  %10456 = vmatprep.subr.bf16.mxu0 %v7080
  %10457 = vmatpush1.bf16.msra.mxu0 %v7079
  %10458 = vmatprep.mubr.bf16.mxu0 %v97
  %10459 = vmatmul.mubr.bf16.gmra.mrb[0].mxu0 %v96
  %v10460 = vpop.f32.mrb[0].mxu0
  %v10461 = vadd.f32 %v10420, %v10460
  %v10462 = vpop.f32.mrb[0].mxu0
  %v10463 = vadd.f32 %v10422, %v10462
  %v10464 = vpop.f32.mrb[0].mxu0
  %v10465 = vpop.f32.mrb[0].mxu0
  %10466 = vdwg.mxu0
  %10467 = vmatprep.subr.bf16.mxu0 %v7084
  %10468 = vmatpush1.bf16.msra.mxu0 %v7083
  %10469 = vmatprep.subr.bf16.mxu0 %v7088
  %10470 = vmatpush1.bf16.msra.mxu0 %v7087
  %10471 = vmatprep.subr.bf16.mxu0 %v7092
  %10472 = vmatpush1.bf16.msra.mxu0 %v7091
  %10473 = vmatprep.subr.bf16.mxu0 %v7096
  %10474 = vmatpush1.bf16.msra.mxu0 %v7095
  %10475 = vmatprep.subr.bf16.mxu0 %v7100
  %10476 = vmatpush1.bf16.msra.mxu0 %v7099
  %10477 = vmatprep.subr.bf16.mxu0 %v7104
  %10478 = vmatpush1.bf16.msra.mxu0 %v7103
  %10479 = vmatprep.subr.bf16.mxu0 %v7108
  %10480 = vmatpush1.bf16.msra.mxu0 %v7107
  %10481 = vmatprep.subr.bf16.mxu0 %v7112
  %10482 = vmatpush1.bf16.msra.mxu0 %v7111
  %10483 = vmatprep.subr.bf16.mxu0 %v7116
  %10484 = vmatpush1.bf16.msra.mxu0 %v7115
  %10485 = vmatprep.subr.bf16.mxu0 %v7120
  %10486 = vmatpush1.bf16.msra.mxu0 %v7119
  %10487 = vmatprep.subr.bf16.mxu0 %v7124
  %10488 = vmatpush1.bf16.msra.mxu0 %v7123
  %10489 = vmatprep.subr.bf16.mxu0 %v7128
  %10490 = vmatpush1.bf16.msra.mxu0 %v7127
  %10491 = vmatprep.subr.bf16.mxu0 %v7132
  %10492 = vmatpush1.bf16.msra.mxu0 %v7131
  %10493 = vmatprep.subr.bf16.mxu0 %v7136
  %10494 = vmatpush1.bf16.msra.mxu0 %v7135
  %10495 = vmatprep.subr.bf16.mxu0 %v7140
  %10496 = vmatpush1.bf16.msra.mxu0 %v7139
  %10497 = vmatprep.subr.bf16.mxu0 %v7144
  %10498 = vmatpush1.bf16.msra.mxu0 %v7143
  %10499 = vmatprep.mubr.bf16.mxu0 %v99
  %10500 = vmatmul.mubr.bf16.gmra.mrb[0].mxu0 %v98
  %v10501 = vpop.f32.mrb[0].mxu0
  %v10502 = vadd.f32 %v10461, %v10501
  %v10503 = vpop.f32.mrb[0].mxu0
  %v10504 = vadd.f32 %v10463, %v10503
  %v10505 = vpop.f32.mrb[0].mxu0
  %v10506 = vpop.f32.mrb[0].mxu0
  %10507 = vdwg.mxu0
  %10508 = vmatprep.subr.bf16.mxu0 %v7148
  %10509 = vmatpush1.bf16.msra.mxu0 %v7147
  %10510 = vmatprep.subr.bf16.mxu0 %v7152
  %10511 = vmatpush1.bf16.msra.mxu0 %v7151
  %10512 = vmatprep.subr.bf16.mxu0 %v7156
  %10513 = vmatpush1.bf16.msra.mxu0 %v7155
  %10514 = vmatprep.subr.bf16.mxu0 %v7160
  %10515 = vmatpush1.bf16.msra.mxu0 %v7159
  %10516 = vmatprep.subr.bf16.mxu0 %v7164
  %10517 = vmatpush1.bf16.msra.mxu0 %v7163
  %10518 = vmatprep.subr.bf16.mxu0 %v7168
  %10519 = vmatpush1.bf16.msra.mxu0 %v7167
  %10520 = vmatprep.subr.bf16.mxu0 %v7172
  %10521 = vmatpush1.bf16.msra.mxu0 %v7171
  %10522 = vmatprep.subr.bf16.mxu0 %v7176
  %10523 = vmatpush1.bf16.msra.mxu0 %v7175
  %10524 = vmatprep.subr.bf16.mxu0 %v7180
  %10525 = vmatpush1.bf16.msra.mxu0 %v7179
  %10526 = vmatprep.subr.bf16.mxu0 %v7184
  %10527 = vmatpush1.bf16.msra.mxu0 %v7183
  %10528 = vmatprep.subr.bf16.mxu0 %v7188
  %10529 = vmatpush1.bf16.msra.mxu0 %v7187
  %10530 = vmatprep.subr.bf16.mxu0 %v7192
  %10531 = vmatpush1.bf16.msra.mxu0 %v7191
  %10532 = vmatprep.subr.bf16.mxu0 %v7196
  %10533 = vmatpush1.bf16.msra.mxu0 %v7195
  %10534 = vmatprep.subr.bf16.mxu0 %v7200
  %10535 = vmatpush1.bf16.msra.mxu0 %v7199
  %10536 = vmatprep.subr.bf16.mxu0 %v7204
  %10537 = vmatpush1.bf16.msra.mxu0 %v7203
  %10538 = vmatprep.subr.bf16.mxu0 %v7208
  %10539 = vmatpush1.bf16.msra.mxu0 %v7207
  %10540 = vmatprep.mubr.bf16.mxu0 %v101
  %10541 = vmatmul.mubr.bf16.gmra.mrb[0].mxu0 %v100
  %v10542 = vpop.f32.mrb[0].mxu0
  %v10543 = vadd.f32 %v10502, %v10542
  %v10544 = vpop.f32.mrb[0].mxu0
  %v10545 = vadd.f32 %v10504, %v10544
  %v10546 = vpop.f32.mrb[0].mxu0
  %v10547 = vpop.f32.mrb[0].mxu0
  %10548 = vdwg.mxu0
  %10549 = vmatprep.subr.bf16.mxu0 %v7212
  %10550 = vmatpush1.bf16.msra.mxu0 %v7211
  %10551 = vmatprep.subr.bf16.mxu0 %v7216
  %10552 = vmatpush1.bf16.msra.mxu0 %v7215
  %10553 = vmatprep.subr.bf16.mxu0 %v7220
  %10554 = vmatpush1.bf16.msra.mxu0 %v7219
  %10555 = vmatprep.subr.bf16.mxu0 %v7224
  %10556 = vmatpush1.bf16.msra.mxu0 %v7223
  %10557 = vmatprep.subr.bf16.mxu0 %v7228
  %10558 = vmatpush1.bf16.msra.mxu0 %v7227
  %10559 = vmatprep.subr.bf16.mxu0 %v7232
  %10560 = vmatpush1.bf16.msra.mxu0 %v7231
  %10561 = vmatprep.subr.bf16.mxu0 %v7236
  %10562 = vmatpush1.bf16.msra.mxu0 %v7235
  %10563 = vmatprep.subr.bf16.mxu0 %v7240
  %10564 = vmatpush1.bf16.msra.mxu0 %v7239
  %10565 = vmatprep.subr.bf16.mxu0 %v7244
  %10566 = vmatpush1.bf16.msra.mxu0 %v7243
  %10567 = vmatprep.subr.bf16.mxu0 %v7248
  %10568 = vmatpush1.bf16.msra.mxu0 %v7247
  %10569 = vmatprep.subr.bf16.mxu0 %v7252
  %10570 = vmatpush1.bf16.msra.mxu0 %v7251
  %10571 = vmatprep.subr.bf16.mxu0 %v7256
  %10572 = vmatpush1.bf16.msra.mxu0 %v7255
  %10573 = vmatprep.subr.bf16.mxu0 %v7260
  %10574 = vmatpush1.bf16.msra.mxu0 %v7259
  %10575 = vmatprep.subr.bf16.mxu0 %v7264
  %10576 = vmatpush1.bf16.msra.mxu0 %v7263
  %10577 = vmatprep.subr.bf16.mxu0 %v7268
  %10578 = vmatpush1.bf16.msra.mxu0 %v7267
  %10579 = vmatprep.subr.bf16.mxu0 %v7272
  %10580 = vmatpush1.bf16.msra.mxu0 %v7271
  %10581 = vmatprep.mubr.bf16.mxu0 %v103
  %10582 = vmatmul.mubr.bf16.gmra.mrb[0].mxu0 %v102
  %v10583 = vpop.f32.mrb[0].mxu0
  %v10584 = vadd.f32 %v10543, %v10583
  %v10585 = vpop.f32.mrb[0].mxu0
  %v10586 = vadd.f32 %v10545, %v10585
  %v10587 = vpop.f32.mrb[0].mxu0
  %v10588 = vpop.f32.mrb[0].mxu0
  %10589 = vdwg.mxu0
  %10590 = vmatprep.subr.bf16.mxu0 %v7276
  %10591 = vmatpush1.bf16.msra.mxu0 %v7275
  %10592 = vmatprep.subr.bf16.mxu0 %v7280
  %10593 = vmatpush1.bf16.msra.mxu0 %v7279
  %10594 = vmatprep.subr.bf16.mxu0 %v7284
  %10595 = vmatpush1.bf16.msra.mxu0 %v7283
  %10596 = vmatprep.subr.bf16.mxu0 %v7288
  %10597 = vmatpush1.bf16.msra.mxu0 %v7287
  %10598 = vmatprep.subr.bf16.mxu0 %v7292
  %10599 = vmatpush1.bf16.msra.mxu0 %v7291
  %10600 = vmatprep.subr.bf16.mxu0 %v7296
  %10601 = vmatpush1.bf16.msra.mxu0 %v7295
  %10602 = vmatprep.subr.bf16.mxu0 %v7300
  %10603 = vmatpush1.bf16.msra.mxu0 %v7299
  %10604 = vmatprep.subr.bf16.mxu0 %v7304
  %10605 = vmatpush1.bf16.msra.mxu0 %v7303
  %10606 = vmatprep.subr.bf16.mxu0 0
  %10607 = vmatpush1.bf16.msra.mxu0 0
  %10608 = vmatprep.subr.bf16.mxu0 0
  %10609 = vmatpush1.bf16.msra.mxu0 0
  %10610 = vmatprep.subr.bf16.mxu0 0
  %10611 = vmatpush1.bf16.msra.mxu0 0
  %10612 = vmatprep.subr.bf16.mxu0 0
  %10613 = vmatpush1.bf16.msra.mxu0 0
  %10614 = vmatprep.subr.bf16.mxu0 0
  %10615 = vmatpush1.bf16.msra.mxu0 0
  %10616 = vmatprep.subr.bf16.mxu0 0
  %10617 = vmatpush1.bf16.msra.mxu0 0
  %10618 = vmatprep.subr.bf16.mxu0 0
  %10619 = vmatpush1.bf16.msra.mxu0 0
  %10620 = vmatprep.subr.bf16.mxu0 0
  %10621 = vmatpush1.bf16.msra.mxu0 0
  %10622 = vmatprep.mubr.bf16.mxu0 0
  %10623 = vmatmul.mubr.bf16.gmra.mrb[0].mxu0 %v104
  %v10624 = vpop.f32.mrb[0].mxu0
  %v10625 = vadd.f32 %v10584, %v10624
  %v10626 = vpop.f32.mrb[0].mxu0
  %v10627 = vadd.f32 %v10586, %v10626
  %v10628 = vpop.f32.mrb[0].mxu0
  %v10629 = vpop.f32.mrb[0].mxu0
  %10630 = vdwg.mxu0
  %v10631 = vmax.f32 %v9682, 0.0
  %v10632 = vmax.f32 %v9684, 0.0
  %v10633 = vmax.f32 %v10625, 0.0
  %v10634 = vmax.f32 %v10627, 0.0
  %v10635 = vld [vmem:[%s2] sm:$0xff]
  %v10636 = vld [vmem:[%s2 + $0x8] sm:$0xff]
  %v10637 = vld [vmem:[%s2 + $0x10] sm:$0xff]
  %v10638 = vld [vmem:[%s2 + $0x18] sm:$0xff]
  %v10639 = vld [vmem:[%s2 + $0x20] sm:$0xff]
  %v10640 = vld [vmem:[%s2 + $0x28] sm:$0xff]
  %v10641 = vld [vmem:[%s2 + $0x30] sm:$0xff]
  %v10642 = vld [vmem:[%s2 + $0x38] sm:$0xff]
  %v10643 = vld [vmem:[%s2 + $0x40] sm:$0xff]
  %v10644 = vld [vmem:[%s2 + $0x48] sm:$0xff]
  %v10645 = vld [vmem:[%s2 + $0x50] sm:$0xff]
  %v10646 = vld [vmem:[%s2 + $0x58] sm:$0xff]
  %v10647 = vld [vmem:[%s2 + $0x60] sm:$0xff]
  %v10648 = vld [vmem:[%s2 + $0x68] sm:$0xff]
  %v10649 = vld [vmem:[%s2 + $0x70] sm:$0xff]
  %v10650 = vld [vmem:[%s2 + $0x78] sm:$0xff]
  %v10651 = vld [vmem:[%s2 + $0x80] sm:$0xff]
  %v10652 = vld [vmem:[%s2 + $0x88] sm:$0xff]
  %v10653 = vld [vmem:[%s2 + $0x90] sm:$0xff]
  %v10654 = vld [vmem:[%s2 + $0x98] sm:$0xff]
  %v10655 = vld [vmem:[%s2 + $0xa0] sm:$0xff]
  %v10656 = vld [vmem:[%s2 + $0xa8] sm:$0xff]
  %v10657 = vld [vmem:[%s2 + $0xb0] sm:$0xff]
  %v10658 = vld [vmem:[%s2 + $0xb8] sm:$0xff]
  %v10659 = vld [vmem:[%s2 + $0xc0] sm:$0xff]
  %v10660 = vld [vmem:[%s2 + $0xc8] sm:$0xff]
  %v10661 = vld [vmem:[%s2 + $0xd0] sm:$0xff]
  %v10662 = vld [vmem:[%s2 + $0xd8] sm:$0xff]
  %v10663 = vld [vmem:[%s2 + $0xe0] sm:$0xff]
  %v10664 = vld [vmem:[%s2 + $0xe8] sm:$0xff]
  %v10665 = vld [vmem:[%s2 + $0xf0] sm:$0xff]
  %v10666 = vld [vmem:[%s2 + $0xf8] sm:$0xff]
  %v10667 = vld [vmem:[%s2 + $0x100] sm:$0xff]
  %v10668 = vld [vmem:[%s2 + $0x108] sm:$0xff]
  %v10669 = vld [vmem:[%s2 + $0x110] sm:$0xff]
  %v10670 = vld [vmem:[%s2 + $0x118] sm:$0xff]
  %v10671 = vld [vmem:[%s2 + $0x120] sm:$0xff]
  %v10672 = vld [vmem:[%s2 + $0x128] sm:$0xff]
  %v10673 = vld [vmem:[%s2 + $0x130] sm:$0xff]
  %v10674 = vld [vmem:[%s2 + $0x138] sm:$0xff]
  %v10675 = vld [vmem:[%s2 + $0x140] sm:$0xff]
  %v10676 = vld [vmem:[%s2 + $0x148] sm:$0xff]
  %v10677 = vld [vmem:[%s2 + $0x150] sm:$0xff]
  %v10678 = vld [vmem:[%s2 + $0x158] sm:$0xff]
  %v10679 = vld [vmem:[%s2 + $0x160] sm:$0xff]
  %v10680 = vld [vmem:[%s2 + $0x168] sm:$0xff]
  %v10681 = vld [vmem:[%s2 + $0x170] sm:$0xff]
  %v10682 = vld [vmem:[%s2 + $0x178] sm:$0xff]
  %v10683 = vld [vmem:[%s2 + $0x180] sm:$0xff]
  %v10684 = vld [vmem:[%s2 + $0x188] sm:$0xff]
  %v10685 = vld [vmem:[%s2 + $0x190] sm:$0xff]
  %v10686 = vld [vmem:[%s2 + $0x198] sm:$0xff]
  %v10687 = vld [vmem:[%s2 + $0x1a0] sm:$0xff]
  %v10688 = vld [vmem:[%s2 + $0x1a8] sm:$0xff]
  %v10689 = vld [vmem:[%s2 + $0x1b0] sm:$0xff]
  %v10690 = vld [vmem:[%s2 + $0x1b8] sm:$0xff]
  %v10691 = vld [vmem:[%s2 + $0x1c0] sm:$0xff]
  %v10692 = vld [vmem:[%s2 + $0x1c8] sm:$0xff]
  %v10693 = vld [vmem:[%s2 + $0x1d0] sm:$0xff]
  %v10694 = vld [vmem:[%s2 + $0x1d8] sm:$0xff]
  %v10695 = vld [vmem:[%s2 + $0x1e0] sm:$0xff]
  %v10696 = vld [vmem:[%s2 + $0x1e8] sm:$0xff]
  %v10697 = vld [vmem:[%s2 + $0x1f0] sm:$0xff]
  %v10698 = vld [vmem:[%s2 + $0x1f8] sm:$0xff]
  %10699 = vmatprep.subr.mxu0 0.0
  %10700 = vmatpush1.msra.mxu0 %v10635
  %10701 = vmatprep.subr.mxu0 0.0
  %10702 = vmatpush1.msra.mxu0 %v10636
  %10703 = vmatprep.subr.mxu0 0.0
  %10704 = vmatpush1.msra.mxu0 %v10637
  %10705 = vmatprep.subr.mxu0 0.0
  %10706 = vmatpush1.msra.mxu0 %v10638
  %10707 = vmatprep.subr.mxu0 0.0
  %10708 = vmatpush1.msra.mxu0 %v10639
  %10709 = vmatprep.subr.mxu0 0.0
  %10710 = vmatpush1.msra.mxu0 %v10640
  %10711 = vmatprep.subr.mxu0 0.0
  %10712 = vmatpush1.msra.mxu0 %v10641
  %10713 = vmatprep.subr.mxu0 0.0
  %10714 = vmatpush1.msra.mxu0 %v10642
  %10715 = vmatprep.subr.mxu0 0.0
  %10716 = vmatpush1.msra.mxu0 %v10643
  %10717 = vmatprep.subr.mxu0 0.0
  %10718 = vmatpush1.msra.mxu0 %v10644
  %10719 = vmatprep.subr.mxu0 0.0
  %10720 = vmatpush1.msra.mxu0 %v10645
  %10721 = vmatprep.subr.mxu0 0.0
  %10722 = vmatpush1.msra.mxu0 %v10646
  %10723 = vmatprep.subr.mxu0 0.0
  %10724 = vmatpush1.msra.mxu0 %v10647
  %10725 = vmatprep.subr.mxu0 0.0
  %10726 = vmatpush1.msra.mxu0 %v10648
  %10727 = vmatprep.subr.mxu0 0.0
  %10728 = vmatpush1.msra.mxu0 %v10649
  %10729 = vmatprep.subr.mxu0 0.0
  %10730 = vmatpush1.msra.mxu0 %v10650
  %10731 = vmatprep.subr.mxu0 0.0
  %10732 = vmatpush1.msra.mxu0 %v10651
  %10733 = vmatprep.subr.mxu0 0.0
  %10734 = vmatpush1.msra.mxu0 %v10652
  %10735 = vmatprep.subr.mxu0 0.0
  %10736 = vmatpush1.msra.mxu0 %v10653
  %10737 = vmatprep.subr.mxu0 0.0
  %10738 = vmatpush1.msra.mxu0 %v10654
  %10739 = vmatprep.subr.mxu0 0.0
  %10740 = vmatpush1.msra.mxu0 %v10655
  %10741 = vmatprep.subr.mxu0 0.0
  %10742 = vmatpush1.msra.mxu0 %v10656
  %10743 = vmatprep.subr.mxu0 0.0
  %10744 = vmatpush1.msra.mxu0 %v10657
  %10745 = vmatprep.subr.mxu0 0.0
  %10746 = vmatpush1.msra.mxu0 %v10658
  %10747 = vmatprep.subr.mxu0 0.0
  %10748 = vmatpush1.msra.mxu0 %v10659
  %10749 = vmatprep.subr.mxu0 0.0
  %10750 = vmatpush1.msra.mxu0 %v10660
  %10751 = vmatprep.subr.mxu0 0.0
  %10752 = vmatpush1.msra.mxu0 %v10661
  %10753 = vmatprep.subr.mxu0 0.0
  %10754 = vmatpush1.msra.mxu0 %v10662
  %10755 = vmatprep.subr.mxu0 0.0
  %10756 = vmatpush1.msra.mxu0 %v10663
  %10757 = vmatprep.subr.mxu0 0.0
  %10758 = vmatpush1.msra.mxu0 %v10664
  %10759 = vmatprep.subr.mxu0 0.0
  %10760 = vmatpush1.msra.mxu0 %v10665
  %10761 = vmatprep.subr.mxu0 0.0
  %10762 = vmatpush1.msra.mxu0 %v10666
  %10763 = vmatprep.mubr.f32.mxu0 %v10632
  %10764 = vmatmul.mubr.f32.gmra.mrb[0].mxu0 %v10631
  %v10765 = vpop.f32.mrb[0].mxu0
  %v10766 = vadd.f32 0.0, %v10765
  %v10767 = vpop.f32.mrb[0].mxu0
  %10768 = vdwg.mxu0
  %10769 = vmatprep.subr.mxu0 0.0
  %10770 = vmatpush1.msra.mxu0 %v10667
  %10771 = vmatprep.subr.mxu0 0.0
  %10772 = vmatpush1.msra.mxu0 %v10668
  %10773 = vmatprep.subr.mxu0 0.0
  %10774 = vmatpush1.msra.mxu0 %v10669
  %10775 = vmatprep.subr.mxu0 0.0
  %10776 = vmatpush1.msra.mxu0 %v10670
  %10777 = vmatprep.subr.mxu0 0.0
  %10778 = vmatpush1.msra.mxu0 %v10671
  %10779 = vmatprep.subr.mxu0 0.0
  %10780 = vmatpush1.msra.mxu0 %v10672
  %10781 = vmatprep.subr.mxu0 0.0
  %10782 = vmatpush1.msra.mxu0 %v10673
  %10783 = vmatprep.subr.mxu0 0.0
  %10784 = vmatpush1.msra.mxu0 %v10674
  %10785 = vmatprep.subr.mxu0 0.0
  %10786 = vmatpush1.msra.mxu0 %v10675
  %10787 = vmatprep.subr.mxu0 0.0
  %10788 = vmatpush1.msra.mxu0 %v10676
  %10789 = vmatprep.subr.mxu0 0.0
  %10790 = vmatpush1.msra.mxu0 %v10677
  %10791 = vmatprep.subr.mxu0 0.0
  %10792 = vmatpush1.msra.mxu0 %v10678
  %10793 = vmatprep.subr.mxu0 0.0
  %10794 = vmatpush1.msra.mxu0 %v10679
  %10795 = vmatprep.subr.mxu0 0.0
  %10796 = vmatpush1.msra.mxu0 %v10680
  %10797 = vmatprep.subr.mxu0 0.0
  %10798 = vmatpush1.msra.mxu0 %v10681
  %10799 = vmatprep.subr.mxu0 0.0
  %10800 = vmatpush1.msra.mxu0 %v10682
  %10801 = vmatprep.subr.mxu0 0.0
  %10802 = vmatpush1.msra.mxu0 %v10683
  %10803 = vmatprep.subr.mxu0 0.0
  %10804 = vmatpush1.msra.mxu0 %v10684
  %10805 = vmatprep.subr.mxu0 0.0
  %10806 = vmatpush1.msra.mxu0 %v10685
  %10807 = vmatprep.subr.mxu0 0.0
  %10808 = vmatpush1.msra.mxu0 %v10686
  %10809 = vmatprep.subr.mxu0 0.0
  %10810 = vmatpush1.msra.mxu0 %v10687
  %10811 = vmatprep.subr.mxu0 0.0
  %10812 = vmatpush1.msra.mxu0 %v10688
  %10813 = vmatprep.subr.mxu0 0.0
  %10814 = vmatpush1.msra.mxu0 %v10689
  %10815 = vmatprep.subr.mxu0 0.0
  %10816 = vmatpush1.msra.mxu0 %v10690
  %10817 = vmatprep.subr.mxu0 0.0
  %10818 = vmatpush1.msra.mxu0 %v10691
  %10819 = vmatprep.subr.mxu0 0.0
  %10820 = vmatpush1.msra.mxu0 %v10692
  %10821 = vmatprep.subr.mxu0 0.0
  %10822 = vmatpush1.msra.mxu0 %v10693
  %10823 = vmatprep.subr.mxu0 0.0
  %10824 = vmatpush1.msra.mxu0 %v10694
  %10825 = vmatprep.subr.mxu0 0.0
  %10826 = vmatpush1.msra.mxu0 %v10695
  %10827 = vmatprep.subr.mxu0 0.0
  %10828 = vmatpush1.msra.mxu0 %v10696
  %10829 = vmatprep.subr.mxu0 0.0
  %10830 = vmatpush1.msra.mxu0 %v10697
  %10831 = vmatprep.subr.mxu0 0.0
  %10832 = vmatpush1.msra.mxu0 %v10698
  %10833 = vmatprep.mubr.f32.mxu0 %v10634
  %10834 = vmatmul.mubr.f32.gmra.mrb[0].mxu0 %v10633
  %v10835 = vpop.f32.mrb[0].mxu0
  %v10836 = vadd.f32 %v10766, %v10835
  %v10837 = vpop.f32.mrb[0].mxu0
  %10838 = vdwg.mxu0
  %10839 = vst [vmem:[%s3] sm:$0xff] %v10836
  // Predicated region
  $region14: #{deep_double_sarsa_forward.7} parent=0 // pred_check
    _
  $region15: #{deep_double_sarsa_forward.7} parent=0 // pred_check_branch
    %10841 = sbr.rel (0) target = $region17
  $region16: #{deep_double_sarsa_forward.7} parent=0 // pred_region
    _
  $region17: #{deep_double_sarsa_forward.7} parent=0 // pred_fallthru
    _
  // Predicated region
  $region18: #{deep_double_sarsa_forward.7} parent=0 // pred_check
    _
  $region19: #{deep_double_sarsa_forward.7} parent=0 // pred_check_branch
    %10843 = sbr.rel (0) target = $region21
  $region20: #{deep_double_sarsa_forward.7} parent=0 // pred_region
    _
  $region21: #{deep_double_sarsa_forward.7} parent=0 // pred_fallthru
    _

</llo_original>
